<compile_context>
chip_gen: v7x
topology: tpu7x:2x2x1
jax: 0.10.0
libtpu: 0.0.40
codegen_flags: <defaults>
</compile_context>

<pallas_src>
import numpy as np
import jax
import jax.numpy as jnp
from jax import lax
from jax.experimental import pallas as pl
from jax.experimental.pallas import tpu as pltpu

_PAD = 8  # W-axis start offset of the scratch interior (f32 sublane-tile aligned)


def _octave_basic_block_kernel(
        xh_ref, xl_ref, pool_ref, up_ref,
        w1hh_ref, w1l_ref, w1hl_ref, b1h_ref, b1l_ref,
        w2hh_ref, w2l_ref, w2hl_ref, b2h_ref, b2l_ref,
        oh_ref, ol_ref,
        padh_ref, padl_ref):
    N, Hp, Wp, C = padh_ref.shape
    H, W = Hp - 2, Wp - 2 * _PAD
    _, Hlp, Wlp, _ = padl_ref.shape
    Hl, Wl = Hlp - 2, Wlp - 2 * _PAD

    # Zero both padded scratches once.  Only their interiors are rewritten
    # below, so the halo stays zero and supplies the 3x3 "SAME" padding for
    # every reuse (2 octave convs x 3 tap builds each).
    padh_ref[...] = jnp.zeros_like(padh_ref)
    padl_ref[...] = jnp.zeros_like(padl_ref)

    def write_interior(pad_ref, v2d, h, w):
        pad_ref[:, 1:h + 1, _PAD:_PAD + w, :] = v2d.reshape(N, h, w, C)

    def taps(pad_ref, h, w):
        # im2col straight from the padded scratch: nine static slices
        # concatenated on the channel (lane) axis -> (N*h*w, 9*C).  Column
        # order (kh, kw, cin) matches the (9*C, Cout) weight reshape done in
        # the wrapper.  No roll / iota / masks.
        cols = jnp.concatenate(
            [pad_ref[:, dh:dh + h, _PAD - 1 + dw:_PAD - 1 + dw + w, :]
             for dh in range(3) for dw in range(3)],
            axis=-1)
        return cols.reshape(N * h * w, 9 * C)

    def octave_conv(xh2d, xl2d, whh_ref, wl_ref, whl_ref):
        # One 3x3 octave convolution.  Every branch is a single K=9*C im2col
        # matmul; l2h and l2l share one matmul (concatenated output channels).
        write_interior(padh_ref, xh2d, H, W)
        h2h = jnp.dot(taps(padh_ref, H, W), whh_ref[...],
                      preferred_element_type=jnp.float32)          # (N*H*W, C)

        write_interior(padl_ref, xl2d, Hl, Wl)
        l2x = jnp.dot(taps(padl_ref, Hl, Wl), wl_ref[...],
                      preferred_element_type=jnp.float32)          # (N*Hl*Wl, 2C)

        # h2l input: 2x2/2 average pool of the high branch, expressed as a
        # matmul with a constant 0.25-valued selection matrix (MXU is idle at
        # these channel widths; avoids strided sublane loads).
        xh_pool = jnp.dot(pool_ref[...], xh2d,
                          preferred_element_type=jnp.float32)      # (N*Hl*Wl, C)
        write_interior(padl_ref, xh_pool, Hl, Wl)
        h2l = jnp.dot(taps(padl_ref, Hl, Wl), whl_ref[...],
                      preferred_element_type=jnp.float32)          # (N*Hl*Wl, C)

        # Nearest 2x upsample of the l2h result, also a 0/1 selection matmul.
        l2h_up = jnp.dot(up_ref[...], l2x[:, :C],
                         preferred_element_type=jnp.float32)       # (N*H*W, C)
        return h2h + l2h_up, l2x[:, C:] + h2l

    x_h = xh_ref[...]           # (N*H*W, C)   channel-minor 2-D working layout
    x_l = xl_ref[...]           # (N*Hl*Wl, C)

    # ocb1 = OctaveCBR: octave conv -> BN -> ReLU (BN scale folded into weights)
    y_h, y_l = octave_conv(x_h, x_l, w1hh_ref, w1l_ref, w1hl_ref)
    y_h = jnp.maximum(y_h + b1h_ref[...], 0.0)
    y_l = jnp.maximum(y_l + b1l_ref[...], 0.0)

    # ocb2 = OctaveCB: octave conv -> BN (no ReLU before the residual)
    z_h, z_l = octave_conv(y_h, y_l, w2hh_ref, w2l_ref, w2hl_ref)

    # identity residual (downsample is None, inplanes == planes) + final ReLU
    oh_ref[...] = jnp.maximum(z_h + b2h_ref[...] + x_h, 0.0)
    ol_ref[...] = jnp.maximum(z_l + b2l_ref[...] + x_l, 0.0)


def _pool_upsample_mats(n, h, w):
    """Constant selection matrices acting on row-flattened (n*h*w, C) maps:
    pool = 2x2 stride-2 average pool, up = 2x nearest-neighbour upsample."""
    hl, wl = h // 2, w // 2
    pool = np.zeros((n * hl * wl, n * h * w), np.float32)
    up = np.zeros((n * h * w, n * hl * wl), np.float32)
    for nn in range(n):
        for y in range(h):
            for x in range(w):
                q = (nn * h + y) * w + x
                r = (nn * hl + y // 2) * wl + x // 2
                pool[r, q] = 0.25
                up[q, r] = 1.0
    return jnp.asarray(pool), jnp.asarray(up)


def _fold_w(w_hwio, scale):
    """Fold the per-output-channel BN scale into a (3,3,Cin,Cout) HWIO conv
    weight and reshape it to (9*Cin, Cout) im2col form."""
    kh, kw, cin, cout = w_hwio.shape
    return (w_hwio * scale[None, None, None, :]).reshape(kh * kw * cin, cout)


@jax.jit
def octave_basic_block(x_h, x_l, params):
    """Fused BasicBlock forward (first=False, stride=1, downsample=None).
    x_h: (N, H, W, C) high-frequency branch, x_l: (N, H/2, W/2, C) low branch."""
    N, H, W, C = x_h.shape
    Nl, Hl, Wl, Cl = x_l.shape
    assert Nl == N and Cl == C and Hl == H // 2 and Wl == W // 2
    p = params

    # BN-scale folding + im2col weight layout (once, outside the kernel).
    w1hh = _fold_w(p['w1_h2h'], p['s1_h'])
    w1l = jnp.concatenate([_fold_w(p['w1_l2h'], p['s1_h']),
                           _fold_w(p['w1_l2l'], p['s1_l'])], axis=1)
    w1hl = _fold_w(p['w1_h2l'], p['s1_l'])
    w2hh = _fold_w(p['w2_h2h'], p['s2_h'])
    w2l = jnp.concatenate([_fold_w(p['w2_l2h'], p['s2_h']),
                           _fold_w(p['w2_l2l'], p['s2_l'])], axis=1)
    w2hl = _fold_w(p['w2_h2l'], p['s2_l'])
    b1h, b1l = p['b1_h'].reshape(1, C), p['b1_l'].reshape(1, C)
    b2h, b2l = p['b2_h'].reshape(1, C), p['b2_l'].reshape(1, C)

    pool_mat, up_mat = _pool_upsample_mats(N, H, W)

    xh2 = x_h.reshape(N * H * W, C)        # single 2-D working layout end-to-end
    xl2 = x_l.reshape(N * Hl * Wl, C)

    vmem = pl.BlockSpec(memory_space=pltpu.MemorySpace.VMEM)
    out_h, out_l = pl.pallas_call(
        _octave_basic_block_kernel,
        out_shape=(jax.ShapeDtypeStruct((N * H * W, C), jnp.float32),
                   jax.ShapeDtypeStruct((N * Hl * Wl, C), jnp.float32)),
        in_specs=[vmem] * 14,
        out_specs=(vmem, vmem),
        scratch_shapes=[
            pltpu.VMEM((N, H + 2, W + 2 * _PAD, C), jnp.float32),    # padded hi-res
            pltpu.VMEM((N, Hl + 2, Wl + 2 * _PAD, C), jnp.float32),  # padded lo-res
        ],
        # Identity residual: outputs reuse the input HBM buffers.
        input_output_aliases={0: 0, 1: 1},
    )(xh2, xl2, pool_mat, up_mat,
      w1hh, w1l, w1hl, b1h, b1l,
      w2hh, w2l, w2hl, b2h, b2l)
    return out_h.reshape(N, H, W, C), out_l.reshape(N, Hl, Wl, C)


# TODO(synk): training-mode BatchNorm (batch statistics + running-stat updates)
# has no clean in-kernel equivalent here; inference-mode folding is used.
def fold_bn(gamma, beta, mean, var, eps=1e-5):
    scale = gamma / jnp.sqrt(var + eps)
    return scale, beta - mean * scale


def ref_forward(x_h, x_l, p):
    """Pure-JAX reference of the same forward pass (validation only)."""
    dn = ('NHWC', 'HWIO', 'NHWC')
    hi = lax.Precision.HIGHEST

    def conv3(v, w):
        return lax.conv_general_dilated(v, w, (1, 1), ((1, 1), (1, 1)),
                                        dimension_numbers=dn, precision=hi)

    def pool(v):   # AvgPool2d(kernel=2, stride=2)
        return 0.25 * (v[:, 0::2, 0::2] + v[:, 0::2, 1::2]
                       + v[:, 1::2, 0::2] + v[:, 1::2, 1::2])

    def up(v):     # Upsample(scale_factor=2, mode='nearest')
        return jnp.repeat(jnp.repeat(v, 2, axis=1), 2, axis=2)

    def octconv(xh, xl, whh, wlh, wll, whl):
        yh = conv3(xh, whh) + up(conv3(xl, wlh))
        yl = conv3(xl, wll) + conv3(pool(xh), whl)
        return yh, yl

    yh, yl = octconv(x_h, x_l, p['w1_h2h'], p['w1_l2h'], p['w1_l2l'], p['w1_h2l'])
    yh = jnp.maximum(yh * p['s1_h'] + p['b1_h'], 0.0)   # OctaveCBR: BN + ReLU
    yl = jnp.maximum(yl * p['s1_l'] + p['b1_l'], 0.0)
    zh, zl = octconv(yh, yl, p['w2_h2h'], p['w2_l2h'], p['w2_l2l'], p['w2_h2l'])
    zh = zh * p['s2_h'] + p['b2_h']                     # OctaveCB: BN only
    zl = zl * p['s2_l'] + p['b2_l']
    return jnp.maximum(zh + x_h, 0.0), jnp.maximum(zl + x_l, 0.0)


if __name__ == "__main__":
    # BasicBlock(inplanes=8, planes=8, stride=1, downsample=None, first=False)
    # with the standard octave alpha=0.5 split -> 4 high + 4 low channels.
    N, H, W = 2, 16, 16
    inplanes = planes = 8
    C = inplanes // 2
    Hl, Wl = H // 2, W // 2

    key = jax.random.PRNGKey(0)
    ks = jax.random.split(key, 14)
    x_h = jax.random.normal(ks[0], (N, H, W, C), jnp.float32)   # NHWC
    x_l = jax.random.normal(ks[1], (N, Hl, Wl, C), jnp.float32)

    def conv_w(k):
        return 0.2 * jax.random.normal(k, (3, 3, C, C), jnp.float32)  # HWIO

    def bn_params(k, c):
        k1, k2, k3, k4 = jax.random.split(k, 4)
        gamma = 1.0 + 0.1 * jax.random.normal(k1, (c,), jnp.float32)
        beta = 0.1 * jax.random.normal(k2, (c,), jnp.float32)
        mean = 0.1 * jax.random.normal(k3, (c,), jnp.float32)
        var = jax.random.uniform(k4, (c,), jnp.float32, 0.5, 1.5)
        return fold_bn(gamma, beta, mean, var)

    params = {
        'w1_h2h': conv_w(ks[2]), 'w1_l2h': conv_w(ks[3]),
        'w1_l2l': conv_w(ks[4]), 'w1_h2l': conv_w(ks[5]),
        'w2_h2h': conv_w(ks[6]), 'w2_l2h': conv_w(ks[7]),
        'w2_l2l': conv_w(ks[8]), 'w2_h2l': conv_w(ks[9]),
    }
    params['s1_h'], params['b1_h'] = bn_params(ks[10], C)
    params['s1_l'], params['b1_l'] = bn_params(ks[11], C)
    params['s2_h'], params['b2_h'] = bn_params(ks[12], C)
    params['s2_l'], params['b2_l'] = bn_params(ks[13], C)

    # Reference first (kernel inputs are aliased to its outputs).
    ref_h, ref_l = jax.block_until_ready(ref_forward(x_h, x_l, params))

    out_h, out_l = jax.block_until_ready(octave_basic_block(x_h, x_l, params))

    assert out_h.shape == (N, H, W, C) and out_l.shape == (N, Hl, Wl, C)
    assert jnp.allclose(out_h, ref_h, atol=1e-3, rtol=1e-3), "high-branch mismatch"
    assert jnp.allclose(out_l, ref_l, atol=1e-3, rtol=1e-3), "low-branch mismatch"
    print("KERNEL_OK")
</pallas_src>

<mosaic_0001>
module attributes {stable_mosaic.version = 11 : i64} {
  func.func @_octave_basic_block_kernel(%arg0: memref<512x4xf32, #tpu.memory_space<vmem>>, %arg1: memref<128x4xf32, #tpu.memory_space<vmem>>, %arg2: memref<128x512xf32, #tpu.memory_space<vmem>>, %arg3: memref<512x128xf32, #tpu.memory_space<vmem>>, %arg4: memref<36x4xf32, #tpu.memory_space<vmem>>, %arg5: memref<36x8xf32, #tpu.memory_space<vmem>>, %arg6: memref<36x4xf32, #tpu.memory_space<vmem>>, %arg7: memref<1x4xf32, #tpu.memory_space<vmem>>, %arg8: memref<1x4xf32, #tpu.memory_space<vmem>>, %arg9: memref<36x4xf32, #tpu.memory_space<vmem>>, %arg10: memref<36x8xf32, #tpu.memory_space<vmem>>, %arg11: memref<36x4xf32, #tpu.memory_space<vmem>>, %arg12: memref<1x4xf32, #tpu.memory_space<vmem>>, %arg13: memref<1x4xf32, #tpu.memory_space<vmem>>, %arg14: memref<512x4xf32, #tpu.memory_space<vmem>>, %arg15: memref<128x4xf32, #tpu.memory_space<vmem>>, %arg16: memref<2x18x32x4xf32, #tpu.memory_space<vmem>>, %arg17: memref<2x10x24x4xf32, #tpu.memory_space<vmem>>) attributes {dimension_semantics = [], scalar_prefetch = 0 : i64, scratch_operands = 2 : i64, tpu.core_type = #tpu.core_type<tc>} {
    %cst = arith.constant 0.000000e+00 : f32
    %0 = vector.broadcast %cst : f32 to vector<2x18x32x4xf32>
    %c0 = arith.constant 0 : index
    %c0_0 = arith.constant 0 : index
    %c0_1 = arith.constant 0 : index
    %c0_2 = arith.constant 0 : index
    %1 = vector.load %arg16[%c0, %c0_0, %c0_1, %c0_2] : memref<2x18x32x4xf32, #tpu.memory_space<vmem>>, vector<2x18x32x4xf32>
    tpu.vector_store %arg16[%c0, %c0_0, %c0_1, %c0_2], %0 {strides = array<i32>} : memref<2x18x32x4xf32, #tpu.memory_space<vmem>>, vector<2x18x32x4xf32>,
    %cst_3 = arith.constant 0.000000e+00 : f32
    %2 = vector.broadcast %cst_3 : f32 to vector<2x10x24x4xf32>
    %c0_4 = arith.constant 0 : index
    %c0_5 = arith.constant 0 : index
    %c0_6 = arith.constant 0 : index
    %c0_7 = arith.constant 0 : index
    %3 = vector.load %arg17[%c0_4, %c0_5, %c0_6, %c0_7] : memref<2x10x24x4xf32, #tpu.memory_space<vmem>>, vector<2x10x24x4xf32>
    tpu.vector_store %arg17[%c0_4, %c0_5, %c0_6, %c0_7], %2 {strides = array<i32>} : memref<2x10x24x4xf32, #tpu.memory_space<vmem>>, vector<2x10x24x4xf32>,
    %c0_8 = arith.constant 0 : index
    %c0_9 = arith.constant 0 : index
    %4 = vector.load %arg0[%c0_8, %c0_9] : memref<512x4xf32, #tpu.memory_space<vmem>>, vector<512x4xf32>
    %c0_10 = arith.constant 0 : index
    %c0_11 = arith.constant 0 : index
    %5 = vector.load %arg1[%c0_10, %c0_11] : memref<128x4xf32, #tpu.memory_space<vmem>>, vector<128x4xf32>
    %6 = vector.shape_cast %4 : vector<512x4xf32> to vector<2x16x16x4xf32>
    %c0_12 = arith.constant 0 : index
    %c1 = arith.constant 1 : index
    %c8 = arith.constant 8 : index
    %c0_13 = arith.constant 0 : index
    %7 = vector.load %arg16[%c0_12, %c1, %c8, %c0_13] : memref<2x18x32x4xf32, #tpu.memory_space<vmem>>, vector<2x16x16x4xf32>
    tpu.vector_store %arg16[%c0_12, %c1, %c8, %c0_13], %6 {strides = array<i32>} : memref<2x18x32x4xf32, #tpu.memory_space<vmem>>, vector<2x16x16x4xf32>,
    %c0_14 = arith.constant 0 : index
    %c0_15 = arith.constant 0 : index
    %c7 = arith.constant 7 : index
    %c0_16 = arith.constant 0 : index
    %8 = vector.load %arg16[%c0_14, %c0_15, %c7, %c0_16] : memref<2x18x32x4xf32, #tpu.memory_space<vmem>>, vector<2x16x16x4xf32>
    %c0_17 = arith.constant 0 : index
    %c0_18 = arith.constant 0 : index
    %c8_19 = arith.constant 8 : index
    %c0_20 = arith.constant 0 : index
    %9 = vector.load %arg16[%c0_17, %c0_18, %c8_19, %c0_20] : memref<2x18x32x4xf32, #tpu.memory_space<vmem>>, vector<2x16x16x4xf32>
    %c0_21 = arith.constant 0 : index
    %c0_22 = arith.constant 0 : index
    %c9 = arith.constant 9 : index
    %c0_23 = arith.constant 0 : index
    %10 = vector.load %arg16[%c0_21, %c0_22, %c9, %c0_23] : memref<2x18x32x4xf32, #tpu.memory_space<vmem>>, vector<2x16x16x4xf32>
    %c0_24 = arith.constant 0 : index
    %c1_25 = arith.constant 1 : index
    %c7_26 = arith.constant 7 : index
    %c0_27 = arith.constant 0 : index
    %11 = vector.load %arg16[%c0_24, %c1_25, %c7_26, %c0_27] : memref<2x18x32x4xf32, #tpu.memory_space<vmem>>, vector<2x16x16x4xf32>
    %c0_28 = arith.constant 0 : index
    %c1_29 = arith.constant 1 : index
    %c8_30 = arith.constant 8 : index
    %c0_31 = arith.constant 0 : index
    %12 = vector.load %arg16[%c0_28, %c1_29, %c8_30, %c0_31] : memref<2x18x32x4xf32, #tpu.memory_space<vmem>>, vector<2x16x16x4xf32>
    %c0_32 = arith.constant 0 : index
    %c1_33 = arith.constant 1 : index
    %c9_34 = arith.constant 9 : index
    %c0_35 = arith.constant 0 : index
    %13 = vector.load %arg16[%c0_32, %c1_33, %c9_34, %c0_35] : memref<2x18x32x4xf32, #tpu.memory_space<vmem>>, vector<2x16x16x4xf32>
    %c0_36 = arith.constant 0 : index
    %c2 = arith.constant 2 : index
    %c7_37 = arith.constant 7 : index
    %c0_38 = arith.constant 0 : index
    %14 = vector.load %arg16[%c0_36, %c2, %c7_37, %c0_38] : memref<2x18x32x4xf32, #tpu.memory_space<vmem>>, vector<2x16x16x4xf32>
    %c0_39 = arith.constant 0 : index
    %c2_40 = arith.constant 2 : index
    %c8_41 = arith.constant 8 : index
    %c0_42 = arith.constant 0 : index
    %15 = vector.load %arg16[%c0_39, %c2_40, %c8_41, %c0_42] : memref<2x18x32x4xf32, #tpu.memory_space<vmem>>, vector<2x16x16x4xf32>
    %c0_43 = arith.constant 0 : index
    %c2_44 = arith.constant 2 : index
    %c9_45 = arith.constant 9 : index
    %c0_46 = arith.constant 0 : index
    %16 = vector.load %arg16[%c0_43, %c2_44, %c9_45, %c0_46] : memref<2x18x32x4xf32, #tpu.memory_space<vmem>>, vector<2x16x16x4xf32>
    %17 = tpu.concatenate %8, %9, %10, %11, %12, %13, %14, %15, %16 in 3 : vector<2x16x16x4xf32>, vector<2x16x16x4xf32>, vector<2x16x16x4xf32>, vector<2x16x16x4xf32>, vector<2x16x16x4xf32>, vector<2x16x16x4xf32>, vector<2x16x16x4xf32>, vector<2x16x16x4xf32>, vector<2x16x16x4xf32> -> vector<2x16x16x36xf32>
    %18 = vector.shape_cast %17 : vector<2x16x16x36xf32> to vector<512x36xf32>
    %c0_47 = arith.constant 0 : index
    %c0_48 = arith.constant 0 : index
    %19 = vector.load %arg4[%c0_47, %c0_48] : memref<36x4xf32, #tpu.memory_space<vmem>>, vector<36x4xf32>
    %cst_49 = arith.constant dense<0.000000e+00> : vector<512x4xf32>
    %20 = tpu.matmul %18, %19, %cst_49 {dimension_numbers = #tpu.dot_dimension_numbers<[1], [0], [0], [1], [0, 0, 1, 1], [], []>} : vector<512x36xf32>, vector<36x4xf32>, vector<512x4xf32> -> vector<512x4xf32>
    %21 = vector.shape_cast %5 : vector<128x4xf32> to vector<2x8x8x4xf32>
    %c0_50 = arith.constant 0 : index
    %c1_51 = arith.constant 1 : index
    %c8_52 = arith.constant 8 : index
    %c0_53 = arith.constant 0 : index
    %22 = vector.load %arg17[%c0_50, %c1_51, %c8_52, %c0_53] : memref<2x10x24x4xf32, #tpu.memory_space<vmem>>, vector<2x8x8x4xf32>
    tpu.vector_store %arg17[%c0_50, %c1_51, %c8_52, %c0_53], %21 {strides = array<i32>} : memref<2x10x24x4xf32, #tpu.memory_space<vmem>>, vector<2x8x8x4xf32>,
    %c0_54 = arith.constant 0 : index
    %c0_55 = arith.constant 0 : index
    %c7_56 = arith.constant 7 : index
    %c0_57 = arith.constant 0 : index
    %23 = vector.load %arg17[%c0_54, %c0_55, %c7_56, %c0_57] : memref<2x10x24x4xf32, #tpu.memory_space<vmem>>, vector<2x8x8x4xf32>
    %c0_58 = arith.constant 0 : index
    %c0_59 = arith.constant 0 : index
    %c8_60 = arith.constant 8 : index
    %c0_61 = arith.constant 0 : index
    %24 = vector.load %arg17[%c0_58, %c0_59, %c8_60, %c0_61] : memref<2x10x24x4xf32, #tpu.memory_space<vmem>>, vector<2x8x8x4xf32>
    %c0_62 = arith.constant 0 : index
    %c0_63 = arith.constant 0 : index
    %c9_64 = arith.constant 9 : index
    %c0_65 = arith.constant 0 : index
    %25 = vector.load %arg17[%c0_62, %c0_63, %c9_64, %c0_65] : memref<2x10x24x4xf32, #tpu.memory_space<vmem>>, vector<2x8x8x4xf32>
    %c0_66 = arith.constant 0 : index
    %c1_67 = arith.constant 1 : index
    %c7_68 = arith.constant 7 : index
    %c0_69 = arith.constant 0 : index
    %26 = vector.load %arg17[%c0_66, %c1_67, %c7_68, %c0_69] : memref<2x10x24x4xf32, #tpu.memory_space<vmem>>, vector<2x8x8x4xf32>
    %c0_70 = arith.constant 0 : index
    %c1_71 = arith.constant 1 : index
    %c8_72 = arith.constant 8 : index
    %c0_73 = arith.constant 0 : index
    %27 = vector.load %arg17[%c0_70, %c1_71, %c8_72, %c0_73] : memref<2x10x24x4xf32, #tpu.memory_space<vmem>>, vector<2x8x8x4xf32>
    %c0_74 = arith.constant 0 : index
    %c1_75 = arith.constant 1 : index
    %c9_76 = arith.constant 9 : index
    %c0_77 = arith.constant 0 : index
    %28 = vector.load %arg17[%c0_74, %c1_75, %c9_76, %c0_77] : memref<2x10x24x4xf32, #tpu.memory_space<vmem>>, vector<2x8x8x4xf32>
    %c0_78 = arith.constant 0 : index
    %c2_79 = arith.constant 2 : index
    %c7_80 = arith.constant 7 : index
    %c0_81 = arith.constant 0 : index
    %29 = vector.load %arg17[%c0_78, %c2_79, %c7_80, %c0_81] : memref<2x10x24x4xf32, #tpu.memory_space<vmem>>, vector<2x8x8x4xf32>
    %c0_82 = arith.constant 0 : index
    %c2_83 = arith.constant 2 : index
    %c8_84 = arith.constant 8 : index
    %c0_85 = arith.constant 0 : index
    %30 = vector.load %arg17[%c0_82, %c2_83, %c8_84, %c0_85] : memref<2x10x24x4xf32, #tpu.memory_space<vmem>>, vector<2x8x8x4xf32>
    %c0_86 = arith.constant 0 : index
    %c2_87 = arith.constant 2 : index
    %c9_88 = arith.constant 9 : index
    %c0_89 = arith.constant 0 : index
    %31 = vector.load %arg17[%c0_86, %c2_87, %c9_88, %c0_89] : memref<2x10x24x4xf32, #tpu.memory_space<vmem>>, vector<2x8x8x4xf32>
    %32 = tpu.concatenate %23, %24, %25, %26, %27, %28, %29, %30, %31 in 3 : vector<2x8x8x4xf32>, vector<2x8x8x4xf32>, vector<2x8x8x4xf32>, vector<2x8x8x4xf32>, vector<2x8x8x4xf32>, vector<2x8x8x4xf32>, vector<2x8x8x4xf32>, vector<2x8x8x4xf32>, vector<2x8x8x4xf32> -> vector<2x8x8x36xf32>
    %33 = vector.shape_cast %32 : vector<2x8x8x36xf32> to vector<128x36xf32>
    %c0_90 = arith.constant 0 : index
    %c0_91 = arith.constant 0 : index
    %34 = vector.load %arg5[%c0_90, %c0_91] : memref<36x8xf32, #tpu.memory_space<vmem>>, vector<36x8xf32>
    %cst_92 = arith.constant dense<0.000000e+00> : vector<128x8xf32>
    %35 = tpu.matmul %33, %34, %cst_92 {dimension_numbers = #tpu.dot_dimension_numbers<[1], [0], [0], [1], [0, 0, 1, 1], [], []>} : vector<128x36xf32>, vector<36x8xf32>, vector<128x8xf32> -> vector<128x8xf32>
    %c0_93 = arith.constant 0 : index
    %c0_94 = arith.constant 0 : index
    %36 = vector.load %arg2[%c0_93, %c0_94] : memref<128x512xf32, #tpu.memory_space<vmem>>, vector<128x512xf32>
    %cst_95 = arith.constant dense<0.000000e+00> : vector<128x4xf32>
    %37 = tpu.matmul %36, %4, %cst_95 {dimension_numbers = #tpu.dot_dimension_numbers<[1], [0], [0], [1], [0, 0, 1, 1], [], []>} : vector<128x512xf32>, vector<512x4xf32>, vector<128x4xf32> -> vector<128x4xf32>
    %38 = vector.shape_cast %37 : vector<128x4xf32> to vector<2x8x8x4xf32>
    %c0_96 = arith.constant 0 : index
    %c1_97 = arith.constant 1 : index
    %c8_98 = arith.constant 8 : index
    %c0_99 = arith.constant 0 : index
    %39 = vector.load %arg17[%c0_96, %c1_97, %c8_98, %c0_99] : memref<2x10x24x4xf32, #tpu.memory_space<vmem>>, vector<2x8x8x4xf32>
    tpu.vector_store %arg17[%c0_96, %c1_97, %c8_98, %c0_99], %38 {strides = array<i32>} : memref<2x10x24x4xf32, #tpu.memory_space<vmem>>, vector<2x8x8x4xf32>,
    %c0_100 = arith.constant 0 : index
    %c0_101 = arith.constant 0 : index
    %c7_102 = arith.constant 7 : index
    %c0_103 = arith.constant 0 : index
    %40 = vector.load %arg17[%c0_100, %c0_101, %c7_102, %c0_103] : memref<2x10x24x4xf32, #tpu.memory_space<vmem>>, vector<2x8x8x4xf32>
    %c0_104 = arith.constant 0 : index
    %c0_105 = arith.constant 0 : index
    %c8_106 = arith.constant 8 : index
    %c0_107 = arith.constant 0 : index
    %41 = vector.load %arg17[%c0_104, %c0_105, %c8_106, %c0_107] : memref<2x10x24x4xf32, #tpu.memory_space<vmem>>, vector<2x8x8x4xf32>
    %c0_108 = arith.constant 0 : index
    %c0_109 = arith.constant 0 : index
    %c9_110 = arith.constant 9 : index
    %c0_111 = arith.constant 0 : index
    %42 = vector.load %arg17[%c0_108, %c0_109, %c9_110, %c0_111] : memref<2x10x24x4xf32, #tpu.memory_space<vmem>>, vector<2x8x8x4xf32>
    %c0_112 = arith.constant 0 : index
    %c1_113 = arith.constant 1 : index
    %c7_114 = arith.constant 7 : index
    %c0_115 = arith.constant 0 : index
    %43 = vector.load %arg17[%c0_112, %c1_113, %c7_114, %c0_115] : memref<2x10x24x4xf32, #tpu.memory_space<vmem>>, vector<2x8x8x4xf32>
    %c0_116 = arith.constant 0 : index
    %c1_117 = arith.constant 1 : index
    %c8_118 = arith.constant 8 : index
    %c0_119 = arith.constant 0 : index
    %44 = vector.load %arg17[%c0_116, %c1_117, %c8_118, %c0_119] : memref<2x10x24x4xf32, #tpu.memory_space<vmem>>, vector<2x8x8x4xf32>
    %c0_120 = arith.constant 0 : index
    %c1_121 = arith.constant 1 : index
    %c9_122 = arith.constant 9 : index
    %c0_123 = arith.constant 0 : index
    %45 = vector.load %arg17[%c0_120, %c1_121, %c9_122, %c0_123] : memref<2x10x24x4xf32, #tpu.memory_space<vmem>>, vector<2x8x8x4xf32>
    %c0_124 = arith.constant 0 : index
    %c2_125 = arith.constant 2 : index
    %c7_126 = arith.constant 7 : index
    %c0_127 = arith.constant 0 : index
    %46 = vector.load %arg17[%c0_124, %c2_125, %c7_126, %c0_127] : memref<2x10x24x4xf32, #tpu.memory_space<vmem>>, vector<2x8x8x4xf32>
    %c0_128 = arith.constant 0 : index
    %c2_129 = arith.constant 2 : index
    %c8_130 = arith.constant 8 : index
    %c0_131 = arith.constant 0 : index
    %47 = vector.load %arg17[%c0_128, %c2_129, %c8_130, %c0_131] : memref<2x10x24x4xf32, #tpu.memory_space<vmem>>, vector<2x8x8x4xf32>
    %c0_132 = arith.constant 0 : index
    %c2_133 = arith.constant 2 : index
    %c9_134 = arith.constant 9 : index
    %c0_135 = arith.constant 0 : index
    %48 = vector.load %arg17[%c0_132, %c2_133, %c9_134, %c0_135] : memref<2x10x24x4xf32, #tpu.memory_space<vmem>>, vector<2x8x8x4xf32>
    %49 = tpu.concatenate %40, %41, %42, %43, %44, %45, %46, %47, %48 in 3 : vector<2x8x8x4xf32>, vector<2x8x8x4xf32>, vector<2x8x8x4xf32>, vector<2x8x8x4xf32>, vector<2x8x8x4xf32>, vector<2x8x8x4xf32>, vector<2x8x8x4xf32>, vector<2x8x8x4xf32>, vector<2x8x8x4xf32> -> vector<2x8x8x36xf32>
    %50 = vector.shape_cast %49 : vector<2x8x8x36xf32> to vector<128x36xf32>
    %c0_136 = arith.constant 0 : index
    %c0_137 = arith.constant 0 : index
    %51 = vector.load %arg6[%c0_136, %c0_137] : memref<36x4xf32, #tpu.memory_space<vmem>>, vector<36x4xf32>
    %cst_138 = arith.constant dense<0.000000e+00> : vector<128x4xf32>
    %52 = tpu.matmul %50, %51, %cst_138 {dimension_numbers = #tpu.dot_dimension_numbers<[1], [0], [0], [1], [0, 0, 1, 1], [], []>} : vector<128x36xf32>, vector<36x4xf32>, vector<128x4xf32> -> vector<128x4xf32>
    %c0_139 = arith.constant 0 : index
    %c0_140 = arith.constant 0 : index
    %53 = vector.load %arg3[%c0_139, %c0_140] : memref<512x128xf32, #tpu.memory_space<vmem>>, vector<512x128xf32>
    %54 = vector.extract_strided_slice %35 {offsets = [0, 0], sizes = [128, 4], strides = [1, 1]} : vector<128x8xf32> to vector<128x4xf32>
    %cst_141 = arith.constant dense<0.000000e+00> : vector<512x4xf32>
    %55 = tpu.matmul %53, %54, %cst_141 {dimension_numbers = #tpu.dot_dimension_numbers<[1], [0], [0], [1], [0, 0, 1, 1], [], []>} : vector<512x128xf32>, vector<128x4xf32>, vector<512x4xf32> -> vector<512x4xf32>
    %56 = arith.addf %20, %55 : vector<512x4xf32>
    %57 = vector.extract_strided_slice %35 {offsets = [0, 4], sizes = [128, 4], strides = [1, 1]} : vector<128x8xf32> to vector<128x4xf32>
    %58 = arith.addf %57, %52 : vector<128x4xf32>
    %c0_142 = arith.constant 0 : index
    %c0_143 = arith.constant 0 : index
    %59 = vector.load %arg7[%c0_142, %c0_143] : memref<1x4xf32, #tpu.memory_space<vmem>>, vector<1x4xf32>
    %60 = vector.broadcast %59 : vector<1x4xf32> to vector<512x4xf32>
    %61 = arith.addf %56, %60 : vector<512x4xf32>
    %cst_144 = arith.constant 0.000000e+00 : f32
    %62 = vector.broadcast %cst_144 : f32 to vector<512x4xf32>
    %63 = arith.maximumf %61, %62 : vector<512x4xf32>
    %c0_145 = arith.constant 0 : index
    %c0_146 = arith.constant 0 : index
    %64 = vector.load %arg8[%c0_145, %c0_146] : memref<1x4xf32, #tpu.memory_space<vmem>>, vector<1x4xf32>
    %65 = vector.broadcast %64 : vector<1x4xf32> to vector<128x4xf32>
    %66 = arith.addf %58, %65 : vector<128x4xf32>
    %cst_147 = arith.constant 0.000000e+00 : f32
    %67 = vector.broadcast %cst_147 : f32 to vector<128x4xf32>
    %68 = arith.maximumf %66, %67 : vector<128x4xf32>
    %69 = vector.shape_cast %63 : vector<512x4xf32> to vector<2x16x16x4xf32>
    %c0_148 = arith.constant 0 : index
    %c1_149 = arith.constant 1 : index
    %c8_150 = arith.constant 8 : index
    %c0_151 = arith.constant 0 : index
    %70 = vector.load %arg16[%c0_148, %c1_149, %c8_150, %c0_151] : memref<2x18x32x4xf32, #tpu.memory_space<vmem>>, vector<2x16x16x4xf32>
    tpu.vector_store %arg16[%c0_148, %c1_149, %c8_150, %c0_151], %69 {strides = array<i32>} : memref<2x18x32x4xf32, #tpu.memory_space<vmem>>, vector<2x16x16x4xf32>,
    %c0_152 = arith.constant 0 : index
    %c0_153 = arith.constant 0 : index
    %c7_154 = arith.constant 7 : index
    %c0_155 = arith.constant 0 : index
    %71 = vector.load %arg16[%c0_152, %c0_153, %c7_154, %c0_155] : memref<2x18x32x4xf32, #tpu.memory_space<vmem>>, vector<2x16x16x4xf32>
    %c0_156 = arith.constant 0 : index
    %c0_157 = arith.constant 0 : index
    %c8_158 = arith.constant 8 : index
    %c0_159 = arith.constant 0 : index
    %72 = vector.load %arg16[%c0_156, %c0_157, %c8_158, %c0_159] : memref<2x18x32x4xf32, #tpu.memory_space<vmem>>, vector<2x16x16x4xf32>
    %c0_160 = arith.constant 0 : index
    %c0_161 = arith.constant 0 : index
    %c9_162 = arith.constant 9 : index
    %c0_163 = arith.constant 0 : index
    %73 = vector.load %arg16[%c0_160, %c0_161, %c9_162, %c0_163] : memref<2x18x32x4xf32, #tpu.memory_space<vmem>>, vector<2x16x16x4xf32>
    %c0_164 = arith.constant 0 : index
    %c1_165 = arith.constant 1 : index
    %c7_166 = arith.constant 7 : index
    %c0_167 = arith.constant 0 : index
    %74 = vector.load %arg16[%c0_164, %c1_165, %c7_166, %c0_167] : memref<2x18x32x4xf32, #tpu.memory_space<vmem>>, vector<2x16x16x4xf32>
    %c0_168 = arith.constant 0 : index
    %c1_169 = arith.constant 1 : index
    %c8_170 = arith.constant 8 : index
    %c0_171 = arith.constant 0 : index
    %75 = vector.load %arg16[%c0_168, %c1_169, %c8_170, %c0_171] : memref<2x18x32x4xf32, #tpu.memory_space<vmem>>, vector<2x16x16x4xf32>
    %c0_172 = arith.constant 0 : index
    %c1_173 = arith.constant 1 : index
    %c9_174 = arith.constant 9 : index
    %c0_175 = arith.constant 0 : index
    %76 = vector.load %arg16[%c0_172, %c1_173, %c9_174, %c0_175] : memref<2x18x32x4xf32, #tpu.memory_space<vmem>>, vector<2x16x16x4xf32>
    %c0_176 = arith.constant 0 : index
    %c2_177 = arith.constant 2 : index
    %c7_178 = arith.constant 7 : index
    %c0_179 = arith.constant 0 : index
    %77 = vector.load %arg16[%c0_176, %c2_177, %c7_178, %c0_179] : memref<2x18x32x4xf32, #tpu.memory_space<vmem>>, vector<2x16x16x4xf32>
    %c0_180 = arith.constant 0 : index
    %c2_181 = arith.constant 2 : index
    %c8_182 = arith.constant 8 : index
    %c0_183 = arith.constant 0 : index
    %78 = vector.load %arg16[%c0_180, %c2_181, %c8_182, %c0_183] : memref<2x18x32x4xf32, #tpu.memory_space<vmem>>, vector<2x16x16x4xf32>
    %c0_184 = arith.constant 0 : index
    %c2_185 = arith.constant 2 : index
    %c9_186 = arith.constant 9 : index
    %c0_187 = arith.constant 0 : index
    %79 = vector.load %arg16[%c0_184, %c2_185, %c9_186, %c0_187] : memref<2x18x32x4xf32, #tpu.memory_space<vmem>>, vector<2x16x16x4xf32>
    %80 = tpu.concatenate %71, %72, %73, %74, %75, %76, %77, %78, %79 in 3 : vector<2x16x16x4xf32>, vector<2x16x16x4xf32>, vector<2x16x16x4xf32>, vector<2x16x16x4xf32>, vector<2x16x16x4xf32>, vector<2x16x16x4xf32>, vector<2x16x16x4xf32>, vector<2x16x16x4xf32>, vector<2x16x16x4xf32> -> vector<2x16x16x36xf32>
    %81 = vector.shape_cast %80 : vector<2x16x16x36xf32> to vector<512x36xf32>
    %c0_188 = arith.constant 0 : index
    %c0_189 = arith.constant 0 : index
    %82 = vector.load %arg9[%c0_188, %c0_189] : memref<36x4xf32, #tpu.memory_space<vmem>>, vector<36x4xf32>
    %cst_190 = arith.constant dense<0.000000e+00> : vector<512x4xf32>
    %83 = tpu.matmul %81, %82, %cst_190 {dimension_numbers = #tpu.dot_dimension_numbers<[1], [0], [0], [1], [0, 0, 1, 1], [], []>} : vector<512x36xf32>, vector<36x4xf32>, vector<512x4xf32> -> vector<512x4xf32>
    %84 = vector.shape_cast %68 : vector<128x4xf32> to vector<2x8x8x4xf32>
    %c0_191 = arith.constant 0 : index
    %c1_192 = arith.constant 1 : index
    %c8_193 = arith.constant 8 : index
    %c0_194 = arith.constant 0 : index
    %85 = vector.load %arg17[%c0_191, %c1_192, %c8_193, %c0_194] : memref<2x10x24x4xf32, #tpu.memory_space<vmem>>, vector<2x8x8x4xf32>
    tpu.vector_store %arg17[%c0_191, %c1_192, %c8_193, %c0_194], %84 {strides = array<i32>} : memref<2x10x24x4xf32, #tpu.memory_space<vmem>>, vector<2x8x8x4xf32>,
    %c0_195 = arith.constant 0 : index
    %c0_196 = arith.constant 0 : index
    %c7_197 = arith.constant 7 : index
    %c0_198 = arith.constant 0 : index
    %86 = vector.load %arg17[%c0_195, %c0_196, %c7_197, %c0_198] : memref<2x10x24x4xf32, #tpu.memory_space<vmem>>, vector<2x8x8x4xf32>
    %c0_199 = arith.constant 0 : index
    %c0_200 = arith.constant 0 : index
    %c8_201 = arith.constant 8 : index
    %c0_202 = arith.constant 0 : index
    %87 = vector.load %arg17[%c0_199, %c0_200, %c8_201, %c0_202] : memref<2x10x24x4xf32, #tpu.memory_space<vmem>>, vector<2x8x8x4xf32>
    %c0_203 = arith.constant 0 : index
    %c0_204 = arith.constant 0 : index
    %c9_205 = arith.constant 9 : index
    %c0_206 = arith.constant 0 : index
    %88 = vector.load %arg17[%c0_203, %c0_204, %c9_205, %c0_206] : memref<2x10x24x4xf32, #tpu.memory_space<vmem>>, vector<2x8x8x4xf32>
    %c0_207 = arith.constant 0 : index
    %c1_208 = arith.constant 1 : index
    %c7_209 = arith.constant 7 : index
    %c0_210 = arith.constant 0 : index
    %89 = vector.load %arg17[%c0_207, %c1_208, %c7_209, %c0_210] : memref<2x10x24x4xf32, #tpu.memory_space<vmem>>, vector<2x8x8x4xf32>
    %c0_211 = arith.constant 0 : index
    %c1_212 = arith.constant 1 : index
    %c8_213 = arith.constant 8 : index
    %c0_214 = arith.constant 0 : index
    %90 = vector.load %arg17[%c0_211, %c1_212, %c8_213, %c0_214] : memref<2x10x24x4xf32, #tpu.memory_space<vmem>>, vector<2x8x8x4xf32>
    %c0_215 = arith.constant 0 : index
    %c1_216 = arith.constant 1 : index
    %c9_217 = arith.constant 9 : index
    %c0_218 = arith.constant 0 : index
    %91 = vector.load %arg17[%c0_215, %c1_216, %c9_217, %c0_218] : memref<2x10x24x4xf32, #tpu.memory_space<vmem>>, vector<2x8x8x4xf32>
    %c0_219 = arith.constant 0 : index
    %c2_220 = arith.constant 2 : index
    %c7_221 = arith.constant 7 : index
    %c0_222 = arith.constant 0 : index
    %92 = vector.load %arg17[%c0_219, %c2_220, %c7_221, %c0_222] : memref<2x10x24x4xf32, #tpu.memory_space<vmem>>, vector<2x8x8x4xf32>
    %c0_223 = arith.constant 0 : index
    %c2_224 = arith.constant 2 : index
    %c8_225 = arith.constant 8 : index
    %c0_226 = arith.constant 0 : index
    %93 = vector.load %arg17[%c0_223, %c2_224, %c8_225, %c0_226] : memref<2x10x24x4xf32, #tpu.memory_space<vmem>>, vector<2x8x8x4xf32>
    %c0_227 = arith.constant 0 : index
    %c2_228 = arith.constant 2 : index
    %c9_229 = arith.constant 9 : index
    %c0_230 = arith.constant 0 : index
    %94 = vector.load %arg17[%c0_227, %c2_228, %c9_229, %c0_230] : memref<2x10x24x4xf32, #tpu.memory_space<vmem>>, vector<2x8x8x4xf32>
    %95 = tpu.concatenate %86, %87, %88, %89, %90, %91, %92, %93, %94 in 3 : vector<2x8x8x4xf32>, vector<2x8x8x4xf32>, vector<2x8x8x4xf32>, vector<2x8x8x4xf32>, vector<2x8x8x4xf32>, vector<2x8x8x4xf32>, vector<2x8x8x4xf32>, vector<2x8x8x4xf32>, vector<2x8x8x4xf32> -> vector<2x8x8x36xf32>
    %96 = vector.shape_cast %95 : vector<2x8x8x36xf32> to vector<128x36xf32>
    %c0_231 = arith.constant 0 : index
    %c0_232 = arith.constant 0 : index
    %97 = vector.load %arg10[%c0_231, %c0_232] : memref<36x8xf32, #tpu.memory_space<vmem>>, vector<36x8xf32>
    %cst_233 = arith.constant dense<0.000000e+00> : vector<128x8xf32>
    %98 = tpu.matmul %96, %97, %cst_233 {dimension_numbers = #tpu.dot_dimension_numbers<[1], [0], [0], [1], [0, 0, 1, 1], [], []>} : vector<128x36xf32>, vector<36x8xf32>, vector<128x8xf32> -> vector<128x8xf32>
    %c0_234 = arith.constant 0 : index
    %c0_235 = arith.constant 0 : index
    %99 = vector.load %arg2[%c0_234, %c0_235] : memref<128x512xf32, #tpu.memory_space<vmem>>, vector<128x512xf32>
    %cst_236 = arith.constant dense<0.000000e+00> : vector<128x4xf32>
    %100 = tpu.matmul %99, %63, %cst_236 {dimension_numbers = #tpu.dot_dimension_numbers<[1], [0], [0], [1], [0, 0, 1, 1], [], []>} : vector<128x512xf32>, vector<512x4xf32>, vector<128x4xf32> -> vector<128x4xf32>
    %101 = vector.shape_cast %100 : vector<128x4xf32> to vector<2x8x8x4xf32>
    %c0_237 = arith.constant 0 : index
    %c1_238 = arith.constant 1 : index
    %c8_239 = arith.constant 8 : index
    %c0_240 = arith.constant 0 : index
    %102 = vector.load %arg17[%c0_237, %c1_238, %c8_239, %c0_240] : memref<2x10x24x4xf32, #tpu.memory_space<vmem>>, vector<2x8x8x4xf32>
    tpu.vector_store %arg17[%c0_237, %c1_238, %c8_239, %c0_240], %101 {strides = array<i32>} : memref<2x10x24x4xf32, #tpu.memory_space<vmem>>, vector<2x8x8x4xf32>,
    %c0_241 = arith.constant 0 : index
    %c0_242 = arith.constant 0 : index
    %c7_243 = arith.constant 7 : index
    %c0_244 = arith.constant 0 : index
    %103 = vector.load %arg17[%c0_241, %c0_242, %c7_243, %c0_244] : memref<2x10x24x4xf32, #tpu.memory_space<vmem>>, vector<2x8x8x4xf32>
    %c0_245 = arith.constant 0 : index
    %c0_246 = arith.constant 0 : index
    %c8_247 = arith.constant 8 : index
    %c0_248 = arith.constant 0 : index
    %104 = vector.load %arg17[%c0_245, %c0_246, %c8_247, %c0_248] : memref<2x10x24x4xf32, #tpu.memory_space<vmem>>, vector<2x8x8x4xf32>
    %c0_249 = arith.constant 0 : index
    %c0_250 = arith.constant 0 : index
    %c9_251 = arith.constant 9 : index
    %c0_252 = arith.constant 0 : index
    %105 = vector.load %arg17[%c0_249, %c0_250, %c9_251, %c0_252] : memref<2x10x24x4xf32, #tpu.memory_space<vmem>>, vector<2x8x8x4xf32>
    %c0_253 = arith.constant 0 : index
    %c1_254 = arith.constant 1 : index
    %c7_255 = arith.constant 7 : index
    %c0_256 = arith.constant 0 : index
    %106 = vector.load %arg17[%c0_253, %c1_254, %c7_255, %c0_256] : memref<2x10x24x4xf32, #tpu.memory_space<vmem>>, vector<2x8x8x4xf32>
    %c0_257 = arith.constant 0 : index
    %c1_258 = arith.constant 1 : index
    %c8_259 = arith.constant 8 : index
    %c0_260 = arith.constant 0 : index
    %107 = vector.load %arg17[%c0_257, %c1_258, %c8_259, %c0_260] : memref<2x10x24x4xf32, #tpu.memory_space<vmem>>, vector<2x8x8x4xf32>
    %c0_261 = arith.constant 0 : index
    %c1_262 = arith.constant 1 : index
    %c9_263 = arith.constant 9 : index
    %c0_264 = arith.constant 0 : index
    %108 = vector.load %arg17[%c0_261, %c1_262, %c9_263, %c0_264] : memref<2x10x24x4xf32, #tpu.memory_space<vmem>>, vector<2x8x8x4xf32>
    %c0_265 = arith.constant 0 : index
    %c2_266 = arith.constant 2 : index
    %c7_267 = arith.constant 7 : index
    %c0_268 = arith.constant 0 : index
    %109 = vector.load %arg17[%c0_265, %c2_266, %c7_267, %c0_268] : memref<2x10x24x4xf32, #tpu.memory_space<vmem>>, vector<2x8x8x4xf32>
    %c0_269 = arith.constant 0 : index
    %c2_270 = arith.constant 2 : index
    %c8_271 = arith.constant 8 : index
    %c0_272 = arith.constant 0 : index
    %110 = vector.load %arg17[%c0_269, %c2_270, %c8_271, %c0_272] : memref<2x10x24x4xf32, #tpu.memory_space<vmem>>, vector<2x8x8x4xf32>
    %c0_273 = arith.constant 0 : index
    %c2_274 = arith.constant 2 : index
    %c9_275 = arith.constant 9 : index
    %c0_276 = arith.constant 0 : index
    %111 = vector.load %arg17[%c0_273, %c2_274, %c9_275, %c0_276] : memref<2x10x24x4xf32, #tpu.memory_space<vmem>>, vector<2x8x8x4xf32>
    %112 = tpu.concatenate %103, %104, %105, %106, %107, %108, %109, %110, %111 in 3 : vector<2x8x8x4xf32>, vector<2x8x8x4xf32>, vector<2x8x8x4xf32>, vector<2x8x8x4xf32>, vector<2x8x8x4xf32>, vector<2x8x8x4xf32>, vector<2x8x8x4xf32>, vector<2x8x8x4xf32>, vector<2x8x8x4xf32> -> vector<2x8x8x36xf32>
    %113 = vector.shape_cast %112 : vector<2x8x8x36xf32> to vector<128x36xf32>
    %c0_277 = arith.constant 0 : index
    %c0_278 = arith.constant 0 : index
    %114 = vector.load %arg11[%c0_277, %c0_278] : memref<36x4xf32, #tpu.memory_space<vmem>>, vector<36x4xf32>
    %cst_279 = arith.constant dense<0.000000e+00> : vector<128x4xf32>
    %115 = tpu.matmul %113, %114, %cst_279 {dimension_numbers = #tpu.dot_dimension_numbers<[1], [0], [0], [1], [0, 0, 1, 1], [], []>} : vector<128x36xf32>, vector<36x4xf32>, vector<128x4xf32> -> vector<128x4xf32>
    %c0_280 = arith.constant 0 : index
    %c0_281 = arith.constant 0 : index
    %116 = vector.load %arg3[%c0_280, %c0_281] : memref<512x128xf32, #tpu.memory_space<vmem>>, vector<512x128xf32>
    %117 = vector.extract_strided_slice %98 {offsets = [0, 0], sizes = [128, 4], strides = [1, 1]} : vector<128x8xf32> to vector<128x4xf32>
    %cst_282 = arith.constant dense<0.000000e+00> : vector<512x4xf32>
    %118 = tpu.matmul %116, %117, %cst_282 {dimension_numbers = #tpu.dot_dimension_numbers<[1], [0], [0], [1], [0, 0, 1, 1], [], []>} : vector<512x128xf32>, vector<128x4xf32>, vector<512x4xf32> -> vector<512x4xf32>
    %119 = arith.addf %83, %118 : vector<512x4xf32>
    %120 = vector.extract_strided_slice %98 {offsets = [0, 4], sizes = [128, 4], strides = [1, 1]} : vector<128x8xf32> to vector<128x4xf32>
    %121 = arith.addf %120, %115 : vector<128x4xf32>
    %c0_283 = arith.constant 0 : index
    %c0_284 = arith.constant 0 : index
    %122 = vector.load %arg12[%c0_283, %c0_284] : memref<1x4xf32, #tpu.memory_space<vmem>>, vector<1x4xf32>
    %123 = vector.broadcast %122 : vector<1x4xf32> to vector<512x4xf32>
    %124 = arith.addf %119, %123 : vector<512x4xf32>
    %125 = arith.addf %124, %4 : vector<512x4xf32>
    %cst_285 = arith.constant 0.000000e+00 : f32
    %126 = vector.broadcast %cst_285 : f32 to vector<512x4xf32>
    %127 = arith.maximumf %125, %126 : vector<512x4xf32>
    %c0_286 = arith.constant 0 : index
    %c0_287 = arith.constant 0 : index
    %128 = vector.load %arg14[%c0_286, %c0_287] : memref<512x4xf32, #tpu.memory_space<vmem>>, vector<512x4xf32>
    tpu.vector_store %arg14[%c0_286, %c0_287], %127 {strides = array<i32>} : memref<512x4xf32, #tpu.memory_space<vmem>>, vector<512x4xf32>,
    %c0_288 = arith.constant 0 : index
    %c0_289 = arith.constant 0 : index
    %129 = vector.load %arg13[%c0_288, %c0_289] : memref<1x4xf32, #tpu.memory_space<vmem>>, vector<1x4xf32>
    %130 = vector.broadcast %129 : vector<1x4xf32> to vector<128x4xf32>
    %131 = arith.addf %121, %130 : vector<128x4xf32>
    %132 = arith.addf %131, %5 : vector<128x4xf32>
    %cst_290 = arith.constant 0.000000e+00 : f32
    %133 = vector.broadcast %cst_290 : f32 to vector<128x4xf32>
    %134 = arith.maximumf %132, %133 : vector<128x4xf32>
    %c0_291 = arith.constant 0 : index
    %c0_292 = arith.constant 0 : index
    %135 = vector.load %arg15[%c0_291, %c0_292] : memref<128x4xf32, #tpu.memory_space<vmem>>, vector<128x4xf32>
    tpu.vector_store %arg15[%c0_291, %c0_292], %134 {strides = array<i32>} : memref<128x4xf32, #tpu.memory_space<vmem>>, vector<128x4xf32>,
    return
  }
}

</mosaic_0001>

<llo_original>
// kernel: octave_basic_block.1
$region0: #{octave_basic_block.1}
  #allocation0 [shape = 'u32[]', space=smem, size = 0x4, offset = 0x4, fixed_abs, tag = 'smem constant byte address 0x4 - core index']
  #allocation1 [shape = 'u32[144,128]{1,0:T(1,128)}', space=vmem, size = 0x12000, scoped, tag = 'internal scratch']
  #allocation2 [shape = 'f32[2,18,32,4]{3,2,1,0:T(8,128)}', space=vmem, size = 0x90000, scoped, tag = 'scratch operand']
  #allocation3 [shape = 'f32[2,10,24,4]{3,2,1,0:T(8,128)}', space=vmem, size = 0x3c000, scoped, tag = 'scratch operand']
  %s0 = inlined_call_operand.vmem [shape: f32[512,4], index: 0, kind: input, shape index: {}, may-alias: {0,14}]
  %s1 = inlined_call_operand.vmem [shape: f32[128,4], index: 1, kind: input, shape index: {}, may-alias: {1,15}]
  %s2 = inlined_call_operand.vmem [shape: f32[128,512], index: 2, kind: input, shape index: {}]
  %s3 = inlined_call_operand.vmem [shape: f32[512,128], index: 3, kind: input, shape index: {}]
  %s4 = inlined_call_operand.vmem [shape: f32[36,4], index: 4, kind: input, shape index: {}]
  %s5 = inlined_call_operand.vmem [shape: f32[36,8], index: 5, kind: input, shape index: {}]
  %s6 = inlined_call_operand.vmem [shape: f32[36,4], index: 6, kind: input, shape index: {}]
  %s7 = inlined_call_operand.vmem [shape: f32[1,4], index: 7, kind: input, shape index: {}]
  %s8 = inlined_call_operand.vmem [shape: f32[1,4], index: 8, kind: input, shape index: {}]
  %s9 = inlined_call_operand.vmem [shape: f32[36,4], index: 9, kind: input, shape index: {}]
  %s10 = inlined_call_operand.vmem [shape: f32[36,8], index: 10, kind: input, shape index: {}]
  %s11 = inlined_call_operand.vmem [shape: f32[36,4], index: 11, kind: input, shape index: {}]
  %s12 = inlined_call_operand.vmem [shape: f32[1,4], index: 12, kind: input, shape index: {}]
  %s13 = inlined_call_operand.vmem [shape: f32[1,4], index: 13, kind: input, shape index: {}]
  %s14 = inlined_call_operand.vmem [shape: f32[512,4], index: 14, kind: output, shape index: {0}, may-alias: {0,14}]
  %s15 = inlined_call_operand.vmem [shape: f32[128,4], index: 15, kind: output, shape index: {1}, may-alias: {1,15}]
  %16 = xla_tuple %s14, %s15
  %s17 = sld [smem:[#allocation0]]
  $region74: #{octave_basic_block.1} parent=0
    _
  %s19 = ssub.s32 1, %s17
  %s20 = scalar_select 0, %s19, %s17
  // Predicated region
  $region2: #{octave_basic_block.1} parent=0 // pred_check
    _
  $region3: #{octave_basic_block.1} parent=0 // pred_check_branch
    %22 = sbr.rel (0) target = $region5
  $region4: #{octave_basic_block.1} parent=0 // pred_region
    _
  $region5: #{octave_basic_block.1} parent=0 // pred_fallthru
    _
  // Predicated region
  $region6: #{octave_basic_block.1} parent=0 // pred_check
    _
  $region7: #{octave_basic_block.1} parent=0 // pred_check_branch
    %24 = sbr.rel (0) target = $region9
  $region8: #{octave_basic_block.1} parent=0 // pred_region
    _
  $region9: #{octave_basic_block.1} parent=0 // pred_fallthru
    _
  // Predicated region
  $region10: #{octave_basic_block.1} parent=0 // pred_check
    _
  $region11: #{octave_basic_block.1} parent=0 // pred_check_branch
    %26 = sbr.rel (0) target = $region13
  $region12: #{octave_basic_block.1} parent=0 // pred_region
    _
  $region13: #{octave_basic_block.1} parent=0 // pred_fallthru
    _
  // Predicated region
  $region14: #{octave_basic_block.1} parent=0 // pred_check
    _
  $region15: #{octave_basic_block.1} parent=0 // pred_check_branch
    %28 = sbr.rel (0) target = $region17
  $region16: #{octave_basic_block.1} parent=0 // pred_region
    _
  $region17: #{octave_basic_block.1} parent=0 // pred_fallthru
    _
  // Predicated region
  $region18: #{octave_basic_block.1} parent=0 // pred_check
    _
  $region19: #{octave_basic_block.1} parent=0 // pred_check_branch
    %30 = sbr.rel (0) target = $region21
  $region20: #{octave_basic_block.1} parent=0 // pred_region
    _
  $region21: #{octave_basic_block.1} parent=0 // pred_fallthru
    _
  // Predicated region
  $region22: #{octave_basic_block.1} parent=0 // pred_check
    _
  $region23: #{octave_basic_block.1} parent=0 // pred_check_branch
    %32 = sbr.rel (0) target = $region25
  $region24: #{octave_basic_block.1} parent=0 // pred_region
    _
  $region25: #{octave_basic_block.1} parent=0 // pred_fallthru
    _
  // Predicated region
  $region26: #{octave_basic_block.1} parent=0 // pred_check
    _
  $region27: #{octave_basic_block.1} parent=0 // pred_check_branch
    %34 = sbr.rel (0) target = $region29
  $region28: #{octave_basic_block.1} parent=0 // pred_region
    _
  $region29: #{octave_basic_block.1} parent=0 // pred_fallthru
    _
  // Predicated region
  $region30: #{octave_basic_block.1} parent=0 // pred_check
    _
  $region31: #{octave_basic_block.1} parent=0 // pred_check_branch
    %36 = sbr.rel (0) target = $region33
  $region32: #{octave_basic_block.1} parent=0 // pred_region
    _
  $region33: #{octave_basic_block.1} parent=0 // pred_fallthru
    _
  // Predicated region
  $region34: #{octave_basic_block.1} parent=0 // pred_check
    _
  $region35: #{octave_basic_block.1} parent=0 // pred_check_branch
    %38 = sbr.rel (0) target = $region37
  $region36: #{octave_basic_block.1} parent=0 // pred_region
    _
  $region37: #{octave_basic_block.1} parent=0 // pred_fallthru
    _
  // Predicated region
  $region38: #{octave_basic_block.1} parent=0 // pred_check
    _
  $region39: #{octave_basic_block.1} parent=0 // pred_check_branch
    %40 = sbr.rel (0) target = $region41
  $region40: #{octave_basic_block.1} parent=0 // pred_region
    _
  $region41: #{octave_basic_block.1} parent=0 // pred_fallthru
    _
  // Predicated region
  $region42: #{octave_basic_block.1} parent=0 // pred_check
    _
  $region43: #{octave_basic_block.1} parent=0 // pred_check_branch
    %42 = sbr.rel (0) target = $region45
  $region44: #{octave_basic_block.1} parent=0 // pred_region
    _
  $region45: #{octave_basic_block.1} parent=0 // pred_fallthru
    _
  // Predicated region
  $region46: #{octave_basic_block.1} parent=0 // pred_check
    _
  $region47: #{octave_basic_block.1} parent=0 // pred_check_branch
    %44 = sbr.rel (0) target = $region49
  $region48: #{octave_basic_block.1} parent=0 // pred_region
    _
  $region49: #{octave_basic_block.1} parent=0 // pred_fallthru
    _
  // Predicated region
  $region50: #{octave_basic_block.1} parent=0 // pred_check
    _
  $region51: #{octave_basic_block.1} parent=0 // pred_check_branch
    %46 = sbr.rel (0) target = $region53
  $region52: #{octave_basic_block.1} parent=0 // pred_region
    _
  $region53: #{octave_basic_block.1} parent=0 // pred_fallthru
    _
  // Predicated region
  $region54: #{octave_basic_block.1} parent=0 // pred_check
    _
  $region55: #{octave_basic_block.1} parent=0 // pred_check_branch
    %48 = sbr.rel (0) target = $region57
  $region56: #{octave_basic_block.1} parent=0 // pred_region
    _
  $region57: #{octave_basic_block.1} parent=0 // pred_fallthru
    _
  %vm49 = vcmask 31744
  %50 = vst.msk [vmem:[#allocation2] sm:$0xff] %vm49, 0.0
  %51 = vst.msk [vmem:[#allocation2 + $0x8] sm:$0xff] %vm49, 0.0
  %52 = vst.msk [vmem:[#allocation2 + $0x10] sm:$0xff] %vm49, 0.0
  %53 = vst.msk [vmem:[#allocation2 + $0x18] sm:$0xff] %vm49, 0.0
  %54 = vst.msk [vmem:[#allocation2 + $0x20] sm:$0xff] %vm49, 0.0
  %55 = vst.msk [vmem:[#allocation2 + $0x28] sm:$0xff] %vm49, 0.0
  %56 = vst.msk [vmem:[#allocation2 + $0x30] sm:$0xff] %vm49, 0.0
  %57 = vst.msk [vmem:[#allocation2 + $0x38] sm:$0xff] %vm49, 0.0
  %58 = vst.msk [vmem:[#allocation2 + $0x40] sm:$0xff] %vm49, 0.0
  %59 = vst.msk [vmem:[#allocation2 + $0x48] sm:$0xff] %vm49, 0.0
  %60 = vst.msk [vmem:[#allocation2 + $0x50] sm:$0xff] %vm49, 0.0
  %61 = vst.msk [vmem:[#allocation2 + $0x58] sm:$0xff] %vm49, 0.0
  %62 = vst.msk [vmem:[#allocation2 + $0x60] sm:$0xff] %vm49, 0.0
  %63 = vst.msk [vmem:[#allocation2 + $0x68] sm:$0xff] %vm49, 0.0
  %64 = vst.msk [vmem:[#allocation2 + $0x70] sm:$0xff] %vm49, 0.0
  %65 = vst.msk [vmem:[#allocation2 + $0x78] sm:$0xff] %vm49, 0.0
  %66 = vst.msk [vmem:[#allocation2 + $0x80] sm:$0xff] %vm49, 0.0
  %67 = vst.msk [vmem:[#allocation2 + $0x88] sm:$0xff] %vm49, 0.0
  %68 = vst.msk [vmem:[#allocation2 + $0x90] sm:$0xff] %vm49, 0.0
  %69 = vst.msk [vmem:[#allocation2 + $0x98] sm:$0xff] %vm49, 0.0
  %70 = vst.msk [vmem:[#allocation2 + $0xa0] sm:$0xff] %vm49, 0.0
  %71 = vst.msk [vmem:[#allocation2 + $0xa8] sm:$0xff] %vm49, 0.0
  %72 = vst.msk [vmem:[#allocation2 + $0xb0] sm:$0xff] %vm49, 0.0
  %73 = vst.msk [vmem:[#allocation2 + $0xb8] sm:$0xff] %vm49, 0.0
  %74 = vst.msk [vmem:[#allocation2 + $0xc0] sm:$0xff] %vm49, 0.0
  %75 = vst.msk [vmem:[#allocation2 + $0xc8] sm:$0xff] %vm49, 0.0
  %76 = vst.msk [vmem:[#allocation2 + $0xd0] sm:$0xff] %vm49, 0.0
  %77 = vst.msk [vmem:[#allocation2 + $0xd8] sm:$0xff] %vm49, 0.0
  %78 = vst.msk [vmem:[#allocation2 + $0xe0] sm:$0xff] %vm49, 0.0
  %79 = vst.msk [vmem:[#allocation2 + $0xe8] sm:$0xff] %vm49, 0.0
  %80 = vst.msk [vmem:[#allocation2 + $0xf0] sm:$0xff] %vm49, 0.0
  %81 = vst.msk [vmem:[#allocation2 + $0xf8] sm:$0xff] %vm49, 0.0
  %82 = vst.msk [vmem:[#allocation2 + $0x100] sm:$0xff] %vm49, 0.0
  %83 = vst.msk [vmem:[#allocation2 + $0x108] sm:$0xff] %vm49, 0.0
  %84 = vst.msk [vmem:[#allocation2 + $0x110] sm:$0xff] %vm49, 0.0
  %85 = vst.msk [vmem:[#allocation2 + $0x118] sm:$0xff] %vm49, 0.0
  %86 = vst.msk [vmem:[#allocation2 + $0x120] sm:$0xff] %vm49, 0.0
  %87 = vst.msk [vmem:[#allocation2 + $0x128] sm:$0xff] %vm49, 0.0
  %88 = vst.msk [vmem:[#allocation2 + $0x130] sm:$0xff] %vm49, 0.0
  %89 = vst.msk [vmem:[#allocation2 + $0x138] sm:$0xff] %vm49, 0.0
  %90 = vst.msk [vmem:[#allocation2 + $0x140] sm:$0xff] %vm49, 0.0
  %91 = vst.msk [vmem:[#allocation2 + $0x148] sm:$0xff] %vm49, 0.0
  %92 = vst.msk [vmem:[#allocation2 + $0x150] sm:$0xff] %vm49, 0.0
  %93 = vst.msk [vmem:[#allocation2 + $0x158] sm:$0xff] %vm49, 0.0
  %94 = vst.msk [vmem:[#allocation2 + $0x160] sm:$0xff] %vm49, 0.0
  %95 = vst.msk [vmem:[#allocation2 + $0x168] sm:$0xff] %vm49, 0.0
  %96 = vst.msk [vmem:[#allocation2 + $0x170] sm:$0xff] %vm49, 0.0
  %97 = vst.msk [vmem:[#allocation2 + $0x178] sm:$0xff] %vm49, 0.0
  %98 = vst.msk [vmem:[#allocation2 + $0x180] sm:$0xff] %vm49, 0.0
  %99 = vst.msk [vmem:[#allocation2 + $0x188] sm:$0xff] %vm49, 0.0
  %100 = vst.msk [vmem:[#allocation2 + $0x190] sm:$0xff] %vm49, 0.0
  %101 = vst.msk [vmem:[#allocation2 + $0x198] sm:$0xff] %vm49, 0.0
  %102 = vst.msk [vmem:[#allocation2 + $0x1a0] sm:$0xff] %vm49, 0.0
  %103 = vst.msk [vmem:[#allocation2 + $0x1a8] sm:$0xff] %vm49, 0.0
  %104 = vst.msk [vmem:[#allocation2 + $0x1b0] sm:$0xff] %vm49, 0.0
  %105 = vst.msk [vmem:[#allocation2 + $0x1b8] sm:$0xff] %vm49, 0.0
  %106 = vst.msk [vmem:[#allocation2 + $0x1c0] sm:$0xff] %vm49, 0.0
  %107 = vst.msk [vmem:[#allocation2 + $0x1c8] sm:$0xff] %vm49, 0.0
  %108 = vst.msk [vmem:[#allocation2 + $0x1d0] sm:$0xff] %vm49, 0.0
  %109 = vst.msk [vmem:[#allocation2 + $0x1d8] sm:$0xff] %vm49, 0.0
  %110 = vst.msk [vmem:[#allocation2 + $0x1e0] sm:$0xff] %vm49, 0.0
  %111 = vst.msk [vmem:[#allocation2 + $0x1e8] sm:$0xff] %vm49, 0.0
  %112 = vst.msk [vmem:[#allocation2 + $0x1f0] sm:$0xff] %vm49, 0.0
  %113 = vst.msk [vmem:[#allocation2 + $0x1f8] sm:$0xff] %vm49, 0.0
  %114 = vst.msk [vmem:[#allocation2 + $0x200] sm:$0xff] %vm49, 0.0
  %115 = vst.msk [vmem:[#allocation2 + $0x208] sm:$0xff] %vm49, 0.0
  %116 = vst.msk [vmem:[#allocation2 + $0x210] sm:$0xff] %vm49, 0.0
  %117 = vst.msk [vmem:[#allocation2 + $0x218] sm:$0xff] %vm49, 0.0
  %118 = vst.msk [vmem:[#allocation2 + $0x220] sm:$0xff] %vm49, 0.0
  %119 = vst.msk [vmem:[#allocation2 + $0x228] sm:$0xff] %vm49, 0.0
  %120 = vst.msk [vmem:[#allocation2 + $0x230] sm:$0xff] %vm49, 0.0
  %121 = vst.msk [vmem:[#allocation2 + $0x238] sm:$0xff] %vm49, 0.0
  %122 = vst.msk [vmem:[#allocation2 + $0x240] sm:$0xff] %vm49, 0.0
  %123 = vst.msk [vmem:[#allocation2 + $0x248] sm:$0xff] %vm49, 0.0
  %124 = vst.msk [vmem:[#allocation2 + $0x250] sm:$0xff] %vm49, 0.0
  %125 = vst.msk [vmem:[#allocation2 + $0x258] sm:$0xff] %vm49, 0.0
  %126 = vst.msk [vmem:[#allocation2 + $0x260] sm:$0xff] %vm49, 0.0
  %127 = vst.msk [vmem:[#allocation2 + $0x268] sm:$0xff] %vm49, 0.0
  %128 = vst.msk [vmem:[#allocation2 + $0x270] sm:$0xff] %vm49, 0.0
  %129 = vst.msk [vmem:[#allocation2 + $0x278] sm:$0xff] %vm49, 0.0
  %130 = vst.msk [vmem:[#allocation2 + $0x280] sm:$0xff] %vm49, 0.0
  %131 = vst.msk [vmem:[#allocation2 + $0x288] sm:$0xff] %vm49, 0.0
  %132 = vst.msk [vmem:[#allocation2 + $0x290] sm:$0xff] %vm49, 0.0
  %133 = vst.msk [vmem:[#allocation2 + $0x298] sm:$0xff] %vm49, 0.0
  %134 = vst.msk [vmem:[#allocation2 + $0x2a0] sm:$0xff] %vm49, 0.0
  %135 = vst.msk [vmem:[#allocation2 + $0x2a8] sm:$0xff] %vm49, 0.0
  %136 = vst.msk [vmem:[#allocation2 + $0x2b0] sm:$0xff] %vm49, 0.0
  %137 = vst.msk [vmem:[#allocation2 + $0x2b8] sm:$0xff] %vm49, 0.0
  %138 = vst.msk [vmem:[#allocation2 + $0x2c0] sm:$0xff] %vm49, 0.0
  %139 = vst.msk [vmem:[#allocation2 + $0x2c8] sm:$0xff] %vm49, 0.0
  %140 = vst.msk [vmem:[#allocation2 + $0x2d0] sm:$0xff] %vm49, 0.0
  %141 = vst.msk [vmem:[#allocation2 + $0x2d8] sm:$0xff] %vm49, 0.0
  %142 = vst.msk [vmem:[#allocation2 + $0x2e0] sm:$0xff] %vm49, 0.0
  %143 = vst.msk [vmem:[#allocation2 + $0x2e8] sm:$0xff] %vm49, 0.0
  %144 = vst.msk [vmem:[#allocation2 + $0x2f0] sm:$0xff] %vm49, 0.0
  %145 = vst.msk [vmem:[#allocation2 + $0x2f8] sm:$0xff] %vm49, 0.0
  %146 = vst.msk [vmem:[#allocation2 + $0x300] sm:$0xff] %vm49, 0.0
  %147 = vst.msk [vmem:[#allocation2 + $0x308] sm:$0xff] %vm49, 0.0
  %148 = vst.msk [vmem:[#allocation2 + $0x310] sm:$0xff] %vm49, 0.0
  %149 = vst.msk [vmem:[#allocation2 + $0x318] sm:$0xff] %vm49, 0.0
  %150 = vst.msk [vmem:[#allocation2 + $0x320] sm:$0xff] %vm49, 0.0
  %151 = vst.msk [vmem:[#allocation2 + $0x328] sm:$0xff] %vm49, 0.0
  %152 = vst.msk [vmem:[#allocation2 + $0x330] sm:$0xff] %vm49, 0.0
  %153 = vst.msk [vmem:[#allocation2 + $0x338] sm:$0xff] %vm49, 0.0
  %154 = vst.msk [vmem:[#allocation2 + $0x340] sm:$0xff] %vm49, 0.0
  %155 = vst.msk [vmem:[#allocation2 + $0x348] sm:$0xff] %vm49, 0.0
  %156 = vst.msk [vmem:[#allocation2 + $0x350] sm:$0xff] %vm49, 0.0
  %157 = vst.msk [vmem:[#allocation2 + $0x358] sm:$0xff] %vm49, 0.0
  %158 = vst.msk [vmem:[#allocation2 + $0x360] sm:$0xff] %vm49, 0.0
  %159 = vst.msk [vmem:[#allocation2 + $0x368] sm:$0xff] %vm49, 0.0
  %160 = vst.msk [vmem:[#allocation2 + $0x370] sm:$0xff] %vm49, 0.0
  %161 = vst.msk [vmem:[#allocation2 + $0x378] sm:$0xff] %vm49, 0.0
  %162 = vst.msk [vmem:[#allocation2 + $0x380] sm:$0xff] %vm49, 0.0
  %163 = vst.msk [vmem:[#allocation2 + $0x388] sm:$0xff] %vm49, 0.0
  %164 = vst.msk [vmem:[#allocation2 + $0x390] sm:$0xff] %vm49, 0.0
  %165 = vst.msk [vmem:[#allocation2 + $0x398] sm:$0xff] %vm49, 0.0
  %166 = vst.msk [vmem:[#allocation2 + $0x3a0] sm:$0xff] %vm49, 0.0
  %167 = vst.msk [vmem:[#allocation2 + $0x3a8] sm:$0xff] %vm49, 0.0
  %168 = vst.msk [vmem:[#allocation2 + $0x3b0] sm:$0xff] %vm49, 0.0
  %169 = vst.msk [vmem:[#allocation2 + $0x3b8] sm:$0xff] %vm49, 0.0
  %170 = vst.msk [vmem:[#allocation2 + $0x3c0] sm:$0xff] %vm49, 0.0
  %171 = vst.msk [vmem:[#allocation2 + $0x3c8] sm:$0xff] %vm49, 0.0
  %172 = vst.msk [vmem:[#allocation2 + $0x3d0] sm:$0xff] %vm49, 0.0
  %173 = vst.msk [vmem:[#allocation2 + $0x3d8] sm:$0xff] %vm49, 0.0
  %174 = vst.msk [vmem:[#allocation2 + $0x3e0] sm:$0xff] %vm49, 0.0
  %175 = vst.msk [vmem:[#allocation2 + $0x3e8] sm:$0xff] %vm49, 0.0
  %176 = vst.msk [vmem:[#allocation2 + $0x3f0] sm:$0xff] %vm49, 0.0
  %177 = vst.msk [vmem:[#allocation2 + $0x3f8] sm:$0xff] %vm49, 0.0
  %178 = vst.msk [vmem:[#allocation2 + $0x400] sm:$0xff] %vm49, 0.0
  %179 = vst.msk [vmem:[#allocation2 + $0x408] sm:$0xff] %vm49, 0.0
  %180 = vst.msk [vmem:[#allocation2 + $0x410] sm:$0xff] %vm49, 0.0
  %181 = vst.msk [vmem:[#allocation2 + $0x418] sm:$0xff] %vm49, 0.0
  %182 = vst.msk [vmem:[#allocation2 + $0x420] sm:$0xff] %vm49, 0.0
  %183 = vst.msk [vmem:[#allocation2 + $0x428] sm:$0xff] %vm49, 0.0
  %184 = vst.msk [vmem:[#allocation2 + $0x430] sm:$0xff] %vm49, 0.0
  %185 = vst.msk [vmem:[#allocation2 + $0x438] sm:$0xff] %vm49, 0.0
  %186 = vst.msk [vmem:[#allocation2 + $0x440] sm:$0xff] %vm49, 0.0
  %187 = vst.msk [vmem:[#allocation2 + $0x448] sm:$0xff] %vm49, 0.0
  %188 = vst.msk [vmem:[#allocation2 + $0x450] sm:$0xff] %vm49, 0.0
  %189 = vst.msk [vmem:[#allocation2 + $0x458] sm:$0xff] %vm49, 0.0
  %190 = vst.msk [vmem:[#allocation2 + $0x460] sm:$0xff] %vm49, 0.0
  %191 = vst.msk [vmem:[#allocation2 + $0x468] sm:$0xff] %vm49, 0.0
  %192 = vst.msk [vmem:[#allocation2 + $0x470] sm:$0xff] %vm49, 0.0
  %193 = vst.msk [vmem:[#allocation2 + $0x478] sm:$0xff] %vm49, 0.0
  %194 = vst.msk [vmem:[#allocation3] sm:$0xff] %vm49, 0.0
  %195 = vst.msk [vmem:[#allocation3 + $0x8] sm:$0xff] %vm49, 0.0
  %196 = vst.msk [vmem:[#allocation3 + $0x10] sm:$0xff] %vm49, 0.0
  %197 = vst.msk [vmem:[#allocation3 + $0x18] sm:$0xff] %vm49, 0.0
  %198 = vst.msk [vmem:[#allocation3 + $0x20] sm:$0xff] %vm49, 0.0
  %199 = vst.msk [vmem:[#allocation3 + $0x28] sm:$0xff] %vm49, 0.0
  %200 = vst.msk [vmem:[#allocation3 + $0x30] sm:$0xff] %vm49, 0.0
  %201 = vst.msk [vmem:[#allocation3 + $0x38] sm:$0xff] %vm49, 0.0
  %202 = vst.msk [vmem:[#allocation3 + $0x40] sm:$0xff] %vm49, 0.0
  %203 = vst.msk [vmem:[#allocation3 + $0x48] sm:$0xff] %vm49, 0.0
  %204 = vst.msk [vmem:[#allocation3 + $0x50] sm:$0xff] %vm49, 0.0
  %205 = vst.msk [vmem:[#allocation3 + $0x58] sm:$0xff] %vm49, 0.0
  %206 = vst.msk [vmem:[#allocation3 + $0x60] sm:$0xff] %vm49, 0.0
  %207 = vst.msk [vmem:[#allocation3 + $0x68] sm:$0xff] %vm49, 0.0
  %208 = vst.msk [vmem:[#allocation3 + $0x70] sm:$0xff] %vm49, 0.0
  %209 = vst.msk [vmem:[#allocation3 + $0x78] sm:$0xff] %vm49, 0.0
  %210 = vst.msk [vmem:[#allocation3 + $0x80] sm:$0xff] %vm49, 0.0
  %211 = vst.msk [vmem:[#allocation3 + $0x88] sm:$0xff] %vm49, 0.0
  %212 = vst.msk [vmem:[#allocation3 + $0x90] sm:$0xff] %vm49, 0.0
  %213 = vst.msk [vmem:[#allocation3 + $0x98] sm:$0xff] %vm49, 0.0
  %214 = vst.msk [vmem:[#allocation3 + $0xa0] sm:$0xff] %vm49, 0.0
  %215 = vst.msk [vmem:[#allocation3 + $0xa8] sm:$0xff] %vm49, 0.0
  %216 = vst.msk [vmem:[#allocation3 + $0xb0] sm:$0xff] %vm49, 0.0
  %217 = vst.msk [vmem:[#allocation3 + $0xb8] sm:$0xff] %vm49, 0.0
  %218 = vst.msk [vmem:[#allocation3 + $0xc0] sm:$0xff] %vm49, 0.0
  %219 = vst.msk [vmem:[#allocation3 + $0xc8] sm:$0xff] %vm49, 0.0
  %220 = vst.msk [vmem:[#allocation3 + $0xd0] sm:$0xff] %vm49, 0.0
  %221 = vst.msk [vmem:[#allocation3 + $0xd8] sm:$0xff] %vm49, 0.0
  %222 = vst.msk [vmem:[#allocation3 + $0xe0] sm:$0xff] %vm49, 0.0
  %223 = vst.msk [vmem:[#allocation3 + $0xe8] sm:$0xff] %vm49, 0.0
  %224 = vst.msk [vmem:[#allocation3 + $0xf0] sm:$0xff] %vm49, 0.0
  %225 = vst.msk [vmem:[#allocation3 + $0xf8] sm:$0xff] %vm49, 0.0
  %226 = vst.msk [vmem:[#allocation3 + $0x100] sm:$0xff] %vm49, 0.0
  %227 = vst.msk [vmem:[#allocation3 + $0x108] sm:$0xff] %vm49, 0.0
  %228 = vst.msk [vmem:[#allocation3 + $0x110] sm:$0xff] %vm49, 0.0
  %229 = vst.msk [vmem:[#allocation3 + $0x118] sm:$0xff] %vm49, 0.0
  %230 = vst.msk [vmem:[#allocation3 + $0x120] sm:$0xff] %vm49, 0.0
  %231 = vst.msk [vmem:[#allocation3 + $0x128] sm:$0xff] %vm49, 0.0
  %232 = vst.msk [vmem:[#allocation3 + $0x130] sm:$0xff] %vm49, 0.0
  %233 = vst.msk [vmem:[#allocation3 + $0x138] sm:$0xff] %vm49, 0.0
  %234 = vst.msk [vmem:[#allocation3 + $0x140] sm:$0xff] %vm49, 0.0
  %235 = vst.msk [vmem:[#allocation3 + $0x148] sm:$0xff] %vm49, 0.0
  %236 = vst.msk [vmem:[#allocation3 + $0x150] sm:$0xff] %vm49, 0.0
  %237 = vst.msk [vmem:[#allocation3 + $0x158] sm:$0xff] %vm49, 0.0
  %238 = vst.msk [vmem:[#allocation3 + $0x160] sm:$0xff] %vm49, 0.0
  %239 = vst.msk [vmem:[#allocation3 + $0x168] sm:$0xff] %vm49, 0.0
  %240 = vst.msk [vmem:[#allocation3 + $0x170] sm:$0xff] %vm49, 0.0
  %241 = vst.msk [vmem:[#allocation3 + $0x178] sm:$0xff] %vm49, 0.0
  %242 = vst.msk [vmem:[#allocation3 + $0x180] sm:$0xff] %vm49, 0.0
  %243 = vst.msk [vmem:[#allocation3 + $0x188] sm:$0xff] %vm49, 0.0
  %244 = vst.msk [vmem:[#allocation3 + $0x190] sm:$0xff] %vm49, 0.0
  %245 = vst.msk [vmem:[#allocation3 + $0x198] sm:$0xff] %vm49, 0.0
  %246 = vst.msk [vmem:[#allocation3 + $0x1a0] sm:$0xff] %vm49, 0.0
  %247 = vst.msk [vmem:[#allocation3 + $0x1a8] sm:$0xff] %vm49, 0.0
  %248 = vst.msk [vmem:[#allocation3 + $0x1b0] sm:$0xff] %vm49, 0.0
  %249 = vst.msk [vmem:[#allocation3 + $0x1b8] sm:$0xff] %vm49, 0.0
  %250 = vst.msk [vmem:[#allocation3 + $0x1c0] sm:$0xff] %vm49, 0.0
  %251 = vst.msk [vmem:[#allocation3 + $0x1c8] sm:$0xff] %vm49, 0.0
  %252 = vst.msk [vmem:[#allocation3 + $0x1d0] sm:$0xff] %vm49, 0.0
  %253 = vst.msk [vmem:[#allocation3 + $0x1d8] sm:$0xff] %vm49, 0.0
  %v254 = vld [vmem:[%s0] sm:$0xff]
  %v255 = vld [vmem:[%s0 + $0x8] sm:$0xff]
  %v256 = vld [vmem:[%s0 + $0x10] sm:$0xff]
  %v257 = vld [vmem:[%s0 + $0x18] sm:$0xff]
  %v258 = vld [vmem:[%s0 + $0x20] sm:$0xff]
  %v259 = vld [vmem:[%s0 + $0x28] sm:$0xff]
  %v260 = vld [vmem:[%s0 + $0x30] sm:$0xff]
  %v261 = vld [vmem:[%s0 + $0x38] sm:$0xff]
  %v262 = vld [vmem:[%s0 + $0x40] sm:$0xff]
  %v263 = vld [vmem:[%s0 + $0x48] sm:$0xff]
  %v264 = vld [vmem:[%s0 + $0x50] sm:$0xff]
  %v265 = vld [vmem:[%s0 + $0x58] sm:$0xff]
  %v266 = vld [vmem:[%s0 + $0x60] sm:$0xff]
  %v267 = vld [vmem:[%s0 + $0x68] sm:$0xff]
  %v268 = vld [vmem:[%s0 + $0x70] sm:$0xff]
  %v269 = vld [vmem:[%s0 + $0x78] sm:$0xff]
  %v270 = vld [vmem:[%s0 + $0x80] sm:$0xff]
  %v271 = vld [vmem:[%s0 + $0x88] sm:$0xff]
  %v272 = vld [vmem:[%s0 + $0x90] sm:$0xff]
  %v273 = vld [vmem:[%s0 + $0x98] sm:$0xff]
  %v274 = vld [vmem:[%s0 + $0xa0] sm:$0xff]
  %v275 = vld [vmem:[%s0 + $0xa8] sm:$0xff]
  %v276 = vld [vmem:[%s0 + $0xb0] sm:$0xff]
  %v277 = vld [vmem:[%s0 + $0xb8] sm:$0xff]
  %v278 = vld [vmem:[%s0 + $0xc0] sm:$0xff]
  %v279 = vld [vmem:[%s0 + $0xc8] sm:$0xff]
  %v280 = vld [vmem:[%s0 + $0xd0] sm:$0xff]
  %v281 = vld [vmem:[%s0 + $0xd8] sm:$0xff]
  %v282 = vld [vmem:[%s0 + $0xe0] sm:$0xff]
  %v283 = vld [vmem:[%s0 + $0xe8] sm:$0xff]
  %v284 = vld [vmem:[%s0 + $0xf0] sm:$0xff]
  %v285 = vld [vmem:[%s0 + $0xf8] sm:$0xff]
  %v286 = vld [vmem:[%s0 + $0x100] sm:$0xff]
  %v287 = vld [vmem:[%s0 + $0x108] sm:$0xff]
  %v288 = vld [vmem:[%s0 + $0x110] sm:$0xff]
  %v289 = vld [vmem:[%s0 + $0x118] sm:$0xff]
  %v290 = vld [vmem:[%s0 + $0x120] sm:$0xff]
  %v291 = vld [vmem:[%s0 + $0x128] sm:$0xff]
  %v292 = vld [vmem:[%s0 + $0x130] sm:$0xff]
  %v293 = vld [vmem:[%s0 + $0x138] sm:$0xff]
  %v294 = vld [vmem:[%s0 + $0x140] sm:$0xff]
  %v295 = vld [vmem:[%s0 + $0x148] sm:$0xff]
  %v296 = vld [vmem:[%s0 + $0x150] sm:$0xff]
  %v297 = vld [vmem:[%s0 + $0x158] sm:$0xff]
  %v298 = vld [vmem:[%s0 + $0x160] sm:$0xff]
  %v299 = vld [vmem:[%s0 + $0x168] sm:$0xff]
  %v300 = vld [vmem:[%s0 + $0x170] sm:$0xff]
  %v301 = vld [vmem:[%s0 + $0x178] sm:$0xff]
  %v302 = vld [vmem:[%s0 + $0x180] sm:$0xff]
  %v303 = vld [vmem:[%s0 + $0x188] sm:$0xff]
  %v304 = vld [vmem:[%s0 + $0x190] sm:$0xff]
  %v305 = vld [vmem:[%s0 + $0x198] sm:$0xff]
  %v306 = vld [vmem:[%s0 + $0x1a0] sm:$0xff]
  %v307 = vld [vmem:[%s0 + $0x1a8] sm:$0xff]
  %v308 = vld [vmem:[%s0 + $0x1b0] sm:$0xff]
  %v309 = vld [vmem:[%s0 + $0x1b8] sm:$0xff]
  %v310 = vld [vmem:[%s0 + $0x1c0] sm:$0xff]
  %v311 = vld [vmem:[%s0 + $0x1c8] sm:$0xff]
  %v312 = vld [vmem:[%s0 + $0x1d0] sm:$0xff]
  %v313 = vld [vmem:[%s0 + $0x1d8] sm:$0xff]
  %v314 = vld [vmem:[%s0 + $0x1e0] sm:$0xff]
  %v315 = vld [vmem:[%s0 + $0x1e8] sm:$0xff]
  %v316 = vld [vmem:[%s0 + $0x1f0] sm:$0xff]
  %v317 = vld [vmem:[%s0 + $0x1f8] sm:$0xff]
  %v318 = vld [vmem:[%s1] sm:$0xff]
  %v319 = vld [vmem:[%s1 + $0x8] sm:$0xff]
  %v320 = vld [vmem:[%s1 + $0x10] sm:$0xff]
  %v321 = vld [vmem:[%s1 + $0x18] sm:$0xff]
  %v322 = vld [vmem:[%s1 + $0x20] sm:$0xff]
  %v323 = vld [vmem:[%s1 + $0x28] sm:$0xff]
  %v324 = vld [vmem:[%s1 + $0x30] sm:$0xff]
  %v325 = vld [vmem:[%s1 + $0x38] sm:$0xff]
  %v326 = vld [vmem:[%s1 + $0x40] sm:$0xff]
  %v327 = vld [vmem:[%s1 + $0x48] sm:$0xff]
  %v328 = vld [vmem:[%s1 + $0x50] sm:$0xff]
  %v329 = vld [vmem:[%s1 + $0x58] sm:$0xff]
  %v330 = vld [vmem:[%s1 + $0x60] sm:$0xff]
  %v331 = vld [vmem:[%s1 + $0x68] sm:$0xff]
  %v332 = vld [vmem:[%s1 + $0x70] sm:$0xff]
  %v333 = vld [vmem:[%s1 + $0x78] sm:$0xff]
  %s334 = scalar_lea.vmem [#allocation2], 32
  %335 = vst.msk [vmem:[%s334 + $0x8] sm:$0xff] %vm49, %v254
  %336 = vst.msk [vmem:[%s334 + $0x10] sm:$0xff] %vm49, %v255
  %337 = vst.msk [vmem:[%s334 + $0x28] sm:$0xff] %vm49, %v256
  %338 = vst.msk [vmem:[%s334 + $0x30] sm:$0xff] %vm49, %v257
  %339 = vst.msk [vmem:[%s334 + $0x48] sm:$0xff] %vm49, %v258
  %340 = vst.msk [vmem:[%s334 + $0x50] sm:$0xff] %vm49, %v259
  %341 = vst.msk [vmem:[%s334 + $0x68] sm:$0xff] %vm49, %v260
  %342 = vst.msk [vmem:[%s334 + $0x70] sm:$0xff] %vm49, %v261
  %343 = vst.msk [vmem:[%s334 + $0x88] sm:$0xff] %vm49, %v262
  %344 = vst.msk [vmem:[%s334 + $0x90] sm:$0xff] %vm49, %v263
  %345 = vst.msk [vmem:[%s334 + $0xa8] sm:$0xff] %vm49, %v264
  %346 = vst.msk [vmem:[%s334 + $0xb0] sm:$0xff] %vm49, %v265
  %347 = vst.msk [vmem:[%s334 + $0xc8] sm:$0xff] %vm49, %v266
  %348 = vst.msk [vmem:[%s334 + $0xd0] sm:$0xff] %vm49, %v267
  %349 = vst.msk [vmem:[%s334 + $0xe8] sm:$0xff] %vm49, %v268
  %350 = vst.msk [vmem:[%s334 + $0xf0] sm:$0xff] %vm49, %v269
  %351 = vst.msk [vmem:[%s334 + $0x108] sm:$0xff] %vm49, %v270
  %352 = vst.msk [vmem:[%s334 + $0x110] sm:$0xff] %vm49, %v271
  %353 = vst.msk [vmem:[%s334 + $0x128] sm:$0xff] %vm49, %v272
  %354 = vst.msk [vmem:[%s334 + $0x130] sm:$0xff] %vm49, %v273
  %355 = vst.msk [vmem:[%s334 + $0x148] sm:$0xff] %vm49, %v274
  %356 = vst.msk [vmem:[%s334 + $0x150] sm:$0xff] %vm49, %v275
  %357 = vst.msk [vmem:[%s334 + $0x168] sm:$0xff] %vm49, %v276
  %358 = vst.msk [vmem:[%s334 + $0x170] sm:$0xff] %vm49, %v277
  %359 = vst.msk [vmem:[%s334 + $0x188] sm:$0xff] %vm49, %v278
  %360 = vst.msk [vmem:[%s334 + $0x190] sm:$0xff] %vm49, %v279
  %361 = vst.msk [vmem:[%s334 + $0x1a8] sm:$0xff] %vm49, %v280
  %362 = vst.msk [vmem:[%s334 + $0x1b0] sm:$0xff] %vm49, %v281
  %363 = vst.msk [vmem:[%s334 + $0x1c8] sm:$0xff] %vm49, %v282
  %364 = vst.msk [vmem:[%s334 + $0x1d0] sm:$0xff] %vm49, %v283
  %365 = vst.msk [vmem:[%s334 + $0x1e8] sm:$0xff] %vm49, %v284
  %366 = vst.msk [vmem:[%s334 + $0x1f0] sm:$0xff] %vm49, %v285
  %367 = vst.msk [vmem:[%s334 + $0x248] sm:$0xff] %vm49, %v286
  %368 = vst.msk [vmem:[%s334 + $0x250] sm:$0xff] %vm49, %v287
  %369 = vst.msk [vmem:[%s334 + $0x268] sm:$0xff] %vm49, %v288
  %370 = vst.msk [vmem:[%s334 + $0x270] sm:$0xff] %vm49, %v289
  %371 = vst.msk [vmem:[%s334 + $0x288] sm:$0xff] %vm49, %v290
  %372 = vst.msk [vmem:[%s334 + $0x290] sm:$0xff] %vm49, %v291
  %373 = vst.msk [vmem:[%s334 + $0x2a8] sm:$0xff] %vm49, %v292
  %374 = vst.msk [vmem:[%s334 + $0x2b0] sm:$0xff] %vm49, %v293
  %375 = vst.msk [vmem:[%s334 + $0x2c8] sm:$0xff] %vm49, %v294
  %376 = vst.msk [vmem:[%s334 + $0x2d0] sm:$0xff] %vm49, %v295
  %377 = vst.msk [vmem:[%s334 + $0x2e8] sm:$0xff] %vm49, %v296
  %378 = vst.msk [vmem:[%s334 + $0x2f0] sm:$0xff] %vm49, %v297
  %379 = vst.msk [vmem:[%s334 + $0x308] sm:$0xff] %vm49, %v298
  %380 = vst.msk [vmem:[%s334 + $0x310] sm:$0xff] %vm49, %v299
  %381 = vst.msk [vmem:[%s334 + $0x328] sm:$0xff] %vm49, %v300
  %382 = vst.msk [vmem:[%s334 + $0x330] sm:$0xff] %vm49, %v301
  %383 = vst.msk [vmem:[%s334 + $0x348] sm:$0xff] %vm49, %v302
  %384 = vst.msk [vmem:[%s334 + $0x350] sm:$0xff] %vm49, %v303
  %385 = vst.msk [vmem:[%s334 + $0x368] sm:$0xff] %vm49, %v304
  %386 = vst.msk [vmem:[%s334 + $0x370] sm:$0xff] %vm49, %v305
  %387 = vst.msk [vmem:[%s334 + $0x388] sm:$0xff] %vm49, %v306
  %388 = vst.msk [vmem:[%s334 + $0x390] sm:$0xff] %vm49, %v307
  %389 = vst.msk [vmem:[%s334 + $0x3a8] sm:$0xff] %vm49, %v308
  %390 = vst.msk [vmem:[%s334 + $0x3b0] sm:$0xff] %vm49, %v309
  %391 = vst.msk [vmem:[%s334 + $0x3c8] sm:$0xff] %vm49, %v310
  %392 = vst.msk [vmem:[%s334 + $0x3d0] sm:$0xff] %vm49, %v311
  %393 = vst.msk [vmem:[%s334 + $0x3e8] sm:$0xff] %vm49, %v312
  %394 = vst.msk [vmem:[%s334 + $0x3f0] sm:$0xff] %vm49, %v313
  %395 = vst.msk [vmem:[%s334 + $0x408] sm:$0xff] %vm49, %v314
  %396 = vst.msk [vmem:[%s334 + $0x410] sm:$0xff] %vm49, %v315
  %397 = vst.msk [vmem:[%s334 + $0x428] sm:$0xff] %vm49, %v316
  %398 = vst.msk [vmem:[%s334 + $0x430] sm:$0xff] %vm49, %v317
  %v399 = vld [vmem:[#allocation2 + $0x7] sm:$0xff]
  %v400 = vld [vmem:[#allocation2 + $0xf] sm:$0xff]
  %v401 = vld [vmem:[#allocation2 + $0x27] sm:$0xff]
  %v402 = vld [vmem:[#allocation2 + $0x2f] sm:$0xff]
  %v403 = vld [vmem:[#allocation2 + $0x47] sm:$0xff]
  %v404 = vld [vmem:[#allocation2 + $0x4f] sm:$0xff]
  %v405 = vld [vmem:[#allocation2 + $0x67] sm:$0xff]
  %v406 = vld [vmem:[#allocation2 + $0x6f] sm:$0xff]
  %v407 = vld [vmem:[#allocation2 + $0x87] sm:$0xff]
  %v408 = vld [vmem:[#allocation2 + $0x8f] sm:$0xff]
  %v409 = vld [vmem:[#allocation2 + $0xa7] sm:$0xff]
  %v410 = vld [vmem:[#allocation2 + $0xaf] sm:$0xff]
  %v411 = vld [vmem:[#allocation2 + $0xc7] sm:$0xff]
  %v412 = vld [vmem:[#allocation2 + $0xcf] sm:$0xff]
  %v413 = vld [vmem:[#allocation2 + $0xe7] sm:$0xff]
  %v414 = vld [vmem:[#allocation2 + $0xef] sm:$0xff]
  %v415 = vld [vmem:[#allocation2 + $0x107] sm:$0xff]
  %v416 = vld [vmem:[#allocation2 + $0x10f] sm:$0xff]
  %v417 = vld [vmem:[#allocation2 + $0x127] sm:$0xff]
  %v418 = vld [vmem:[#allocation2 + $0x12f] sm:$0xff]
  %v419 = vld [vmem:[#allocation2 + $0x147] sm:$0xff]
  %v420 = vld [vmem:[#allocation2 + $0x14f] sm:$0xff]
  %v421 = vld [vmem:[#allocation2 + $0x167] sm:$0xff]
  %v422 = vld [vmem:[#allocation2 + $0x16f] sm:$0xff]
  %v423 = vld [vmem:[#allocation2 + $0x187] sm:$0xff]
  %v424 = vld [vmem:[#allocation2 + $0x18f] sm:$0xff]
  %v425 = vld [vmem:[#allocation2 + $0x1a7] sm:$0xff]
  %v426 = vld [vmem:[#allocation2 + $0x1af] sm:$0xff]
  %v427 = vld [vmem:[#allocation2 + $0x1c7] sm:$0xff]
  %v428 = vld [vmem:[#allocation2 + $0x1cf] sm:$0xff]
  %v429 = vld [vmem:[#allocation2 + $0x1e7] sm:$0xff]
  %v430 = vld [vmem:[#allocation2 + $0x1ef] sm:$0xff]
  %v431 = vld [vmem:[#allocation2 + $0x247] sm:$0xff]
  %v432 = vld [vmem:[#allocation2 + $0x24f] sm:$0xff]
  %v433 = vld [vmem:[#allocation2 + $0x267] sm:$0xff]
  %v434 = vld [vmem:[#allocation2 + $0x26f] sm:$0xff]
  %v435 = vld [vmem:[#allocation2 + $0x287] sm:$0xff]
  %v436 = vld [vmem:[#allocation2 + $0x28f] sm:$0xff]
  %v437 = vld [vmem:[#allocation2 + $0x2a7] sm:$0xff]
  %v438 = vld [vmem:[#allocation2 + $0x2af] sm:$0xff]
  %v439 = vld [vmem:[#allocation2 + $0x2c7] sm:$0xff]
  %v440 = vld [vmem:[#allocation2 + $0x2cf] sm:$0xff]
  %v441 = vld [vmem:[#allocation2 + $0x2e7] sm:$0xff]
  %v442 = vld [vmem:[#allocation2 + $0x2ef] sm:$0xff]
  %v443 = vld [vmem:[#allocation2 + $0x307] sm:$0xff]
  %v444 = vld [vmem:[#allocation2 + $0x30f] sm:$0xff]
  %v445 = vld [vmem:[#allocation2 + $0x327] sm:$0xff]
  %v446 = vld [vmem:[#allocation2 + $0x32f] sm:$0xff]
  %v447 = vld [vmem:[#allocation2 + $0x347] sm:$0xff]
  %v448 = vld [vmem:[#allocation2 + $0x34f] sm:$0xff]
  %v449 = vld [vmem:[#allocation2 + $0x367] sm:$0xff]
  %v450 = vld [vmem:[#allocation2 + $0x36f] sm:$0xff]
  %v451 = vld [vmem:[#allocation2 + $0x387] sm:$0xff]
  %v452 = vld [vmem:[#allocation2 + $0x38f] sm:$0xff]
  %v453 = vld [vmem:[#allocation2 + $0x3a7] sm:$0xff]
  %v454 = vld [vmem:[#allocation2 + $0x3af] sm:$0xff]
  %v455 = vld [vmem:[#allocation2 + $0x3c7] sm:$0xff]
  %v456 = vld [vmem:[#allocation2 + $0x3cf] sm:$0xff]
  %v457 = vld [vmem:[#allocation2 + $0x3e7] sm:$0xff]
  %v458 = vld [vmem:[#allocation2 + $0x3ef] sm:$0xff]
  %v459 = vld [vmem:[#allocation2 + $0x407] sm:$0xff]
  %v460 = vld [vmem:[#allocation2 + $0x40f] sm:$0xff]
  %v461 = vld [vmem:[#allocation2 + $0x427] sm:$0xff]
  %v462 = vld [vmem:[#allocation2 + $0x42f] sm:$0xff]
  %v463 = vld [vmem:[#allocation2 + $0x8] sm:$0xff]
  %v464 = vld [vmem:[#allocation2 + $0x10] sm:$0xff]
  %v465 = vld [vmem:[#allocation2 + $0x28] sm:$0xff]
  %v466 = vld [vmem:[#allocation2 + $0x30] sm:$0xff]
  %v467 = vld [vmem:[#allocation2 + $0x48] sm:$0xff]
  %v468 = vld [vmem:[#allocation2 + $0x50] sm:$0xff]
  %v469 = vld [vmem:[#allocation2 + $0x68] sm:$0xff]
  %v470 = vld [vmem:[#allocation2 + $0x70] sm:$0xff]
  %v471 = vld [vmem:[#allocation2 + $0x88] sm:$0xff]
  %v472 = vld [vmem:[#allocation2 + $0x90] sm:$0xff]
  %v473 = vld [vmem:[#allocation2 + $0xa8] sm:$0xff]
  %v474 = vld [vmem:[#allocation2 + $0xb0] sm:$0xff]
  %v475 = vld [vmem:[#allocation2 + $0xc8] sm:$0xff]
  %v476 = vld [vmem:[#allocation2 + $0xd0] sm:$0xff]
  %v477 = vld [vmem:[#allocation2 + $0xe8] sm:$0xff]
  %v478 = vld [vmem:[#allocation2 + $0xf0] sm:$0xff]
  %v479 = vld [vmem:[#allocation2 + $0x108] sm:$0xff]
  %v480 = vld [vmem:[#allocation2 + $0x110] sm:$0xff]
  %v481 = vld [vmem:[#allocation2 + $0x128] sm:$0xff]
  %v482 = vld [vmem:[#allocation2 + $0x130] sm:$0xff]
  %v483 = vld [vmem:[#allocation2 + $0x148] sm:$0xff]
  %v484 = vld [vmem:[#allocation2 + $0x150] sm:$0xff]
  %v485 = vld [vmem:[#allocation2 + $0x168] sm:$0xff]
  %v486 = vld [vmem:[#allocation2 + $0x170] sm:$0xff]
  %v487 = vld [vmem:[#allocation2 + $0x188] sm:$0xff]
  %v488 = vld [vmem:[#allocation2 + $0x190] sm:$0xff]
  %v489 = vld [vmem:[#allocation2 + $0x1a8] sm:$0xff]
  %v490 = vld [vmem:[#allocation2 + $0x1b0] sm:$0xff]
  %v491 = vld [vmem:[#allocation2 + $0x1c8] sm:$0xff]
  %v492 = vld [vmem:[#allocation2 + $0x1d0] sm:$0xff]
  %v493 = vld [vmem:[#allocation2 + $0x1e8] sm:$0xff]
  %v494 = vld [vmem:[#allocation2 + $0x1f0] sm:$0xff]
  %v495 = vld [vmem:[#allocation2 + $0x248] sm:$0xff]
  %v496 = vld [vmem:[#allocation2 + $0x250] sm:$0xff]
  %v497 = vld [vmem:[#allocation2 + $0x268] sm:$0xff]
  %v498 = vld [vmem:[#allocation2 + $0x270] sm:$0xff]
  %v499 = vld [vmem:[#allocation2 + $0x288] sm:$0xff]
  %v500 = vld [vmem:[#allocation2 + $0x290] sm:$0xff]
  %v501 = vld [vmem:[#allocation2 + $0x2a8] sm:$0xff]
  %v502 = vld [vmem:[#allocation2 + $0x2b0] sm:$0xff]
  %v503 = vld [vmem:[#allocation2 + $0x2c8] sm:$0xff]
  %v504 = vld [vmem:[#allocation2 + $0x2d0] sm:$0xff]
  %v505 = vld [vmem:[#allocation2 + $0x2e8] sm:$0xff]
  %v506 = vld [vmem:[#allocation2 + $0x2f0] sm:$0xff]
  %v507 = vld [vmem:[#allocation2 + $0x308] sm:$0xff]
  %v508 = vld [vmem:[#allocation2 + $0x310] sm:$0xff]
  %v509 = vld [vmem:[#allocation2 + $0x328] sm:$0xff]
  %v510 = vld [vmem:[#allocation2 + $0x330] sm:$0xff]
  %v511 = vld [vmem:[#allocation2 + $0x348] sm:$0xff]
  %v512 = vld [vmem:[#allocation2 + $0x350] sm:$0xff]
  %v513 = vld [vmem:[#allocation2 + $0x368] sm:$0xff]
  %v514 = vld [vmem:[#allocation2 + $0x370] sm:$0xff]
  %v515 = vld [vmem:[#allocation2 + $0x388] sm:$0xff]
  %v516 = vld [vmem:[#allocation2 + $0x390] sm:$0xff]
  %v517 = vld [vmem:[#allocation2 + $0x3a8] sm:$0xff]
  %v518 = vld [vmem:[#allocation2 + $0x3b0] sm:$0xff]
  %v519 = vld [vmem:[#allocation2 + $0x3c8] sm:$0xff]
  %v520 = vld [vmem:[#allocation2 + $0x3d0] sm:$0xff]
  %v521 = vld [vmem:[#allocation2 + $0x3e8] sm:$0xff]
  %v522 = vld [vmem:[#allocation2 + $0x3f0] sm:$0xff]
  %v523 = vld [vmem:[#allocation2 + $0x408] sm:$0xff]
  %v524 = vld [vmem:[#allocation2 + $0x410] sm:$0xff]
  %v525 = vld [vmem:[#allocation2 + $0x428] sm:$0xff]
  %v526 = vld [vmem:[#allocation2 + $0x430] sm:$0xff]
  %v527 = vld [vmem:[#allocation2 + $0x9] sm:$0xff]
  %v528 = vld [vmem:[#allocation2 + $0x11] sm:$0xff]
  %v529 = vld [vmem:[#allocation2 + $0x29] sm:$0xff]
  %v530 = vld [vmem:[#allocation2 + $0x31] sm:$0xff]
  %v531 = vld [vmem:[#allocation2 + $0x49] sm:$0xff]
  %v532 = vld [vmem:[#allocation2 + $0x51] sm:$0xff]
  %v533 = vld [vmem:[#allocation2 + $0x69] sm:$0xff]
  %v534 = vld [vmem:[#allocation2 + $0x71] sm:$0xff]
  %v535 = vld [vmem:[#allocation2 + $0x89] sm:$0xff]
  %v536 = vld [vmem:[#allocation2 + $0x91] sm:$0xff]
  %v537 = vld [vmem:[#allocation2 + $0xa9] sm:$0xff]
  %v538 = vld [vmem:[#allocation2 + $0xb1] sm:$0xff]
  %v539 = vld [vmem:[#allocation2 + $0xc9] sm:$0xff]
  %v540 = vld [vmem:[#allocation2 + $0xd1] sm:$0xff]
  %v541 = vld [vmem:[#allocation2 + $0xe9] sm:$0xff]
  %v542 = vld [vmem:[#allocation2 + $0xf1] sm:$0xff]
  %v543 = vld [vmem:[#allocation2 + $0x109] sm:$0xff]
  %v544 = vld [vmem:[#allocation2 + $0x111] sm:$0xff]
  %v545 = vld [vmem:[#allocation2 + $0x129] sm:$0xff]
  %v546 = vld [vmem:[#allocation2 + $0x131] sm:$0xff]
  %v547 = vld [vmem:[#allocation2 + $0x149] sm:$0xff]
  %v548 = vld [vmem:[#allocation2 + $0x151] sm:$0xff]
  %v549 = vld [vmem:[#allocation2 + $0x169] sm:$0xff]
  %v550 = vld [vmem:[#allocation2 + $0x171] sm:$0xff]
  %v551 = vld [vmem:[#allocation2 + $0x189] sm:$0xff]
  %v552 = vld [vmem:[#allocation2 + $0x191] sm:$0xff]
  %v553 = vld [vmem:[#allocation2 + $0x1a9] sm:$0xff]
  %v554 = vld [vmem:[#allocation2 + $0x1b1] sm:$0xff]
  %v555 = vld [vmem:[#allocation2 + $0x1c9] sm:$0xff]
  %v556 = vld [vmem:[#allocation2 + $0x1d1] sm:$0xff]
  %v557 = vld [vmem:[#allocation2 + $0x1e9] sm:$0xff]
  %v558 = vld [vmem:[#allocation2 + $0x1f1] sm:$0xff]
  %v559 = vld [vmem:[#allocation2 + $0x249] sm:$0xff]
  %v560 = vld [vmem:[#allocation2 + $0x251] sm:$0xff]
  %v561 = vld [vmem:[#allocation2 + $0x269] sm:$0xff]
  %v562 = vld [vmem:[#allocation2 + $0x271] sm:$0xff]
  %v563 = vld [vmem:[#allocation2 + $0x289] sm:$0xff]
  %v564 = vld [vmem:[#allocation2 + $0x291] sm:$0xff]
  %v565 = vld [vmem:[#allocation2 + $0x2a9] sm:$0xff]
  %v566 = vld [vmem:[#allocation2 + $0x2b1] sm:$0xff]
  %v567 = vld [vmem:[#allocation2 + $0x2c9] sm:$0xff]
  %v568 = vld [vmem:[#allocation2 + $0x2d1] sm:$0xff]
  %v569 = vld [vmem:[#allocation2 + $0x2e9] sm:$0xff]
  %v570 = vld [vmem:[#allocation2 + $0x2f1] sm:$0xff]
  %v571 = vld [vmem:[#allocation2 + $0x309] sm:$0xff]
  %v572 = vld [vmem:[#allocation2 + $0x311] sm:$0xff]
  %v573 = vld [vmem:[#allocation2 + $0x329] sm:$0xff]
  %v574 = vld [vmem:[#allocation2 + $0x331] sm:$0xff]
  %v575 = vld [vmem:[#allocation2 + $0x349] sm:$0xff]
  %v576 = vld [vmem:[#allocation2 + $0x351] sm:$0xff]
  %v577 = vld [vmem:[#allocation2 + $0x369] sm:$0xff]
  %v578 = vld [vmem:[#allocation2 + $0x371] sm:$0xff]
  %v579 = vld [vmem:[#allocation2 + $0x389] sm:$0xff]
  %v580 = vld [vmem:[#allocation2 + $0x391] sm:$0xff]
  %v581 = vld [vmem:[#allocation2 + $0x3a9] sm:$0xff]
  %v582 = vld [vmem:[#allocation2 + $0x3b1] sm:$0xff]
  %v583 = vld [vmem:[#allocation2 + $0x3c9] sm:$0xff]
  %v584 = vld [vmem:[#allocation2 + $0x3d1] sm:$0xff]
  %v585 = vld [vmem:[#allocation2 + $0x3e9] sm:$0xff]
  %v586 = vld [vmem:[#allocation2 + $0x3f1] sm:$0xff]
  %v587 = vld [vmem:[#allocation2 + $0x409] sm:$0xff]
  %v588 = vld [vmem:[#allocation2 + $0x411] sm:$0xff]
  %v589 = vld [vmem:[#allocation2 + $0x429] sm:$0xff]
  %v590 = vld [vmem:[#allocation2 + $0x431] sm:$0xff]
  %v591 = vld [vmem:[%s334 + $0x7] sm:$0xff]
  %v592 = vld [vmem:[%s334 + $0xf] sm:$0xff]
  %v593 = vld [vmem:[%s334 + $0x27] sm:$0xff]
  %v594 = vld [vmem:[%s334 + $0x2f] sm:$0xff]
  %v595 = vld [vmem:[%s334 + $0x47] sm:$0xff]
  %v596 = vld [vmem:[%s334 + $0x4f] sm:$0xff]
  %v597 = vld [vmem:[%s334 + $0x67] sm:$0xff]
  %v598 = vld [vmem:[%s334 + $0x6f] sm:$0xff]
  %v599 = vld [vmem:[%s334 + $0x87] sm:$0xff]
  %v600 = vld [vmem:[%s334 + $0x8f] sm:$0xff]
  %v601 = vld [vmem:[%s334 + $0xa7] sm:$0xff]
  %v602 = vld [vmem:[%s334 + $0xaf] sm:$0xff]
  %v603 = vld [vmem:[%s334 + $0xc7] sm:$0xff]
  %v604 = vld [vmem:[%s334 + $0xcf] sm:$0xff]
  %v605 = vld [vmem:[%s334 + $0xe7] sm:$0xff]
  %v606 = vld [vmem:[%s334 + $0xef] sm:$0xff]
  %v607 = vld [vmem:[%s334 + $0x107] sm:$0xff]
  %v608 = vld [vmem:[%s334 + $0x10f] sm:$0xff]
  %v609 = vld [vmem:[%s334 + $0x127] sm:$0xff]
  %v610 = vld [vmem:[%s334 + $0x12f] sm:$0xff]
  %v611 = vld [vmem:[%s334 + $0x147] sm:$0xff]
  %v612 = vld [vmem:[%s334 + $0x14f] sm:$0xff]
  %v613 = vld [vmem:[%s334 + $0x167] sm:$0xff]
  %v614 = vld [vmem:[%s334 + $0x16f] sm:$0xff]
  %v615 = vld [vmem:[%s334 + $0x187] sm:$0xff]
  %v616 = vld [vmem:[%s334 + $0x18f] sm:$0xff]
  %v617 = vld [vmem:[%s334 + $0x1a7] sm:$0xff]
  %v618 = vld [vmem:[%s334 + $0x1af] sm:$0xff]
  %v619 = vld [vmem:[%s334 + $0x1c7] sm:$0xff]
  %v620 = vld [vmem:[%s334 + $0x1cf] sm:$0xff]
  %v621 = vld [vmem:[%s334 + $0x1e7] sm:$0xff]
  %v622 = vld [vmem:[%s334 + $0x1ef] sm:$0xff]
  %v623 = vld [vmem:[%s334 + $0x247] sm:$0xff]
  %v624 = vld [vmem:[%s334 + $0x24f] sm:$0xff]
  %v625 = vld [vmem:[%s334 + $0x267] sm:$0xff]
  %v626 = vld [vmem:[%s334 + $0x26f] sm:$0xff]
  %v627 = vld [vmem:[%s334 + $0x287] sm:$0xff]
  %v628 = vld [vmem:[%s334 + $0x28f] sm:$0xff]
  %v629 = vld [vmem:[%s334 + $0x2a7] sm:$0xff]
  %v630 = vld [vmem:[%s334 + $0x2af] sm:$0xff]
  %v631 = vld [vmem:[%s334 + $0x2c7] sm:$0xff]
  %v632 = vld [vmem:[%s334 + $0x2cf] sm:$0xff]
  %v633 = vld [vmem:[%s334 + $0x2e7] sm:$0xff]
  %v634 = vld [vmem:[%s334 + $0x2ef] sm:$0xff]
  %v635 = vld [vmem:[%s334 + $0x307] sm:$0xff]
  %v636 = vld [vmem:[%s334 + $0x30f] sm:$0xff]
  %v637 = vld [vmem:[%s334 + $0x327] sm:$0xff]
  %v638 = vld [vmem:[%s334 + $0x32f] sm:$0xff]
  %v639 = vld [vmem:[%s334 + $0x347] sm:$0xff]
  %v640 = vld [vmem:[%s334 + $0x34f] sm:$0xff]
  %v641 = vld [vmem:[%s334 + $0x367] sm:$0xff]
  %v642 = vld [vmem:[%s334 + $0x36f] sm:$0xff]
  %v643 = vld [vmem:[%s334 + $0x387] sm:$0xff]
  %v644 = vld [vmem:[%s334 + $0x38f] sm:$0xff]
  %v645 = vld [vmem:[%s334 + $0x3a7] sm:$0xff]
  %v646 = vld [vmem:[%s334 + $0x3af] sm:$0xff]
  %v647 = vld [vmem:[%s334 + $0x3c7] sm:$0xff]
  %v648 = vld [vmem:[%s334 + $0x3cf] sm:$0xff]
  %v649 = vld [vmem:[%s334 + $0x3e7] sm:$0xff]
  %v650 = vld [vmem:[%s334 + $0x3ef] sm:$0xff]
  %v651 = vld [vmem:[%s334 + $0x407] sm:$0xff]
  %v652 = vld [vmem:[%s334 + $0x40f] sm:$0xff]
  %v653 = vld [vmem:[%s334 + $0x427] sm:$0xff]
  %v654 = vld [vmem:[%s334 + $0x42f] sm:$0xff]
  %v655 = vld [vmem:[%s334 + $0x8] sm:$0xff]
  %v656 = vld [vmem:[%s334 + $0x10] sm:$0xff]
  %v657 = vld [vmem:[%s334 + $0x28] sm:$0xff]
  %v658 = vld [vmem:[%s334 + $0x30] sm:$0xff]
  %v659 = vld [vmem:[%s334 + $0x48] sm:$0xff]
  %v660 = vld [vmem:[%s334 + $0x50] sm:$0xff]
  %v661 = vld [vmem:[%s334 + $0x68] sm:$0xff]
  %v662 = vld [vmem:[%s334 + $0x70] sm:$0xff]
  %v663 = vld [vmem:[%s334 + $0x88] sm:$0xff]
  %v664 = vld [vmem:[%s334 + $0x90] sm:$0xff]
  %v665 = vld [vmem:[%s334 + $0xa8] sm:$0xff]
  %v666 = vld [vmem:[%s334 + $0xb0] sm:$0xff]
  %v667 = vld [vmem:[%s334 + $0xc8] sm:$0xff]
  %v668 = vld [vmem:[%s334 + $0xd0] sm:$0xff]
  %v669 = vld [vmem:[%s334 + $0xe8] sm:$0xff]
  %v670 = vld [vmem:[%s334 + $0xf0] sm:$0xff]
  %v671 = vld [vmem:[%s334 + $0x108] sm:$0xff]
  %v672 = vld [vmem:[%s334 + $0x110] sm:$0xff]
  %v673 = vld [vmem:[%s334 + $0x128] sm:$0xff]
  %v674 = vld [vmem:[%s334 + $0x130] sm:$0xff]
  %v675 = vld [vmem:[%s334 + $0x148] sm:$0xff]
  %v676 = vld [vmem:[%s334 + $0x150] sm:$0xff]
  %v677 = vld [vmem:[%s334 + $0x168] sm:$0xff]
  %v678 = vld [vmem:[%s334 + $0x170] sm:$0xff]
  %v679 = vld [vmem:[%s334 + $0x188] sm:$0xff]
  %v680 = vld [vmem:[%s334 + $0x190] sm:$0xff]
  %v681 = vld [vmem:[%s334 + $0x1a8] sm:$0xff]
  %v682 = vld [vmem:[%s334 + $0x1b0] sm:$0xff]
  %v683 = vld [vmem:[%s334 + $0x1c8] sm:$0xff]
  %v684 = vld [vmem:[%s334 + $0x1d0] sm:$0xff]
  %v685 = vld [vmem:[%s334 + $0x1e8] sm:$0xff]
  %v686 = vld [vmem:[%s334 + $0x1f0] sm:$0xff]
  %v687 = vld [vmem:[%s334 + $0x248] sm:$0xff]
  %v688 = vld [vmem:[%s334 + $0x250] sm:$0xff]
  %v689 = vld [vmem:[%s334 + $0x268] sm:$0xff]
  %v690 = vld [vmem:[%s334 + $0x270] sm:$0xff]
  %v691 = vld [vmem:[%s334 + $0x288] sm:$0xff]
  %v692 = vld [vmem:[%s334 + $0x290] sm:$0xff]
  %v693 = vld [vmem:[%s334 + $0x2a8] sm:$0xff]
  %v694 = vld [vmem:[%s334 + $0x2b0] sm:$0xff]
  %v695 = vld [vmem:[%s334 + $0x2c8] sm:$0xff]
  %v696 = vld [vmem:[%s334 + $0x2d0] sm:$0xff]
  %v697 = vld [vmem:[%s334 + $0x2e8] sm:$0xff]
  %v698 = vld [vmem:[%s334 + $0x2f0] sm:$0xff]
  %v699 = vld [vmem:[%s334 + $0x308] sm:$0xff]
  %v700 = vld [vmem:[%s334 + $0x310] sm:$0xff]
  %v701 = vld [vmem:[%s334 + $0x328] sm:$0xff]
  %v702 = vld [vmem:[%s334 + $0x330] sm:$0xff]
  %v703 = vld [vmem:[%s334 + $0x348] sm:$0xff]
  %v704 = vld [vmem:[%s334 + $0x350] sm:$0xff]
  %v705 = vld [vmem:[%s334 + $0x368] sm:$0xff]
  %v706 = vld [vmem:[%s334 + $0x370] sm:$0xff]
  %v707 = vld [vmem:[%s334 + $0x388] sm:$0xff]
  %v708 = vld [vmem:[%s334 + $0x390] sm:$0xff]
  %v709 = vld [vmem:[%s334 + $0x3a8] sm:$0xff]
  %v710 = vld [vmem:[%s334 + $0x3b0] sm:$0xff]
  %v711 = vld [vmem:[%s334 + $0x3c8] sm:$0xff]
  %v712 = vld [vmem:[%s334 + $0x3d0] sm:$0xff]
  %v713 = vld [vmem:[%s334 + $0x3e8] sm:$0xff]
  %v714 = vld [vmem:[%s334 + $0x3f0] sm:$0xff]
  %v715 = vld [vmem:[%s334 + $0x408] sm:$0xff]
  %v716 = vld [vmem:[%s334 + $0x410] sm:$0xff]
  %v717 = vld [vmem:[%s334 + $0x428] sm:$0xff]
  %v718 = vld [vmem:[%s334 + $0x430] sm:$0xff]
  %v719 = vld [vmem:[%s334 + $0x9] sm:$0xff]
  %v720 = vld [vmem:[%s334 + $0x11] sm:$0xff]
  %v721 = vld [vmem:[%s334 + $0x29] sm:$0xff]
  %v722 = vld [vmem:[%s334 + $0x31] sm:$0xff]
  %v723 = vld [vmem:[%s334 + $0x49] sm:$0xff]
  %v724 = vld [vmem:[%s334 + $0x51] sm:$0xff]
  %v725 = vld [vmem:[%s334 + $0x69] sm:$0xff]
  %v726 = vld [vmem:[%s334 + $0x71] sm:$0xff]
  %v727 = vld [vmem:[%s334 + $0x89] sm:$0xff]
  %v728 = vld [vmem:[%s334 + $0x91] sm:$0xff]
  %v729 = vld [vmem:[%s334 + $0xa9] sm:$0xff]
  %v730 = vld [vmem:[%s334 + $0xb1] sm:$0xff]
  %v731 = vld [vmem:[%s334 + $0xc9] sm:$0xff]
  %v732 = vld [vmem:[%s334 + $0xd1] sm:$0xff]
  %v733 = vld [vmem:[%s334 + $0xe9] sm:$0xff]
  %v734 = vld [vmem:[%s334 + $0xf1] sm:$0xff]
  %v735 = vld [vmem:[%s334 + $0x109] sm:$0xff]
  %v736 = vld [vmem:[%s334 + $0x111] sm:$0xff]
  %v737 = vld [vmem:[%s334 + $0x129] sm:$0xff]
  %v738 = vld [vmem:[%s334 + $0x131] sm:$0xff]
  %v739 = vld [vmem:[%s334 + $0x149] sm:$0xff]
  %v740 = vld [vmem:[%s334 + $0x151] sm:$0xff]
  %v741 = vld [vmem:[%s334 + $0x169] sm:$0xff]
  %v742 = vld [vmem:[%s334 + $0x171] sm:$0xff]
  %v743 = vld [vmem:[%s334 + $0x189] sm:$0xff]
  %v744 = vld [vmem:[%s334 + $0x191] sm:$0xff]
  %v745 = vld [vmem:[%s334 + $0x1a9] sm:$0xff]
  %v746 = vld [vmem:[%s334 + $0x1b1] sm:$0xff]
  %v747 = vld [vmem:[%s334 + $0x1c9] sm:$0xff]
  %v748 = vld [vmem:[%s334 + $0x1d1] sm:$0xff]
  %v749 = vld [vmem:[%s334 + $0x1e9] sm:$0xff]
  %v750 = vld [vmem:[%s334 + $0x1f1] sm:$0xff]
  %v751 = vld [vmem:[%s334 + $0x249] sm:$0xff]
  %v752 = vld [vmem:[%s334 + $0x251] sm:$0xff]
  %v753 = vld [vmem:[%s334 + $0x269] sm:$0xff]
  %v754 = vld [vmem:[%s334 + $0x271] sm:$0xff]
  %v755 = vld [vmem:[%s334 + $0x289] sm:$0xff]
  %v756 = vld [vmem:[%s334 + $0x291] sm:$0xff]
  %v757 = vld [vmem:[%s334 + $0x2a9] sm:$0xff]
  %v758 = vld [vmem:[%s334 + $0x2b1] sm:$0xff]
  %v759 = vld [vmem:[%s334 + $0x2c9] sm:$0xff]
  %v760 = vld [vmem:[%s334 + $0x2d1] sm:$0xff]
  %v761 = vld [vmem:[%s334 + $0x2e9] sm:$0xff]
  %v762 = vld [vmem:[%s334 + $0x2f1] sm:$0xff]
  %v763 = vld [vmem:[%s334 + $0x309] sm:$0xff]
  %v764 = vld [vmem:[%s334 + $0x311] sm:$0xff]
  %v765 = vld [vmem:[%s334 + $0x329] sm:$0xff]
  %v766 = vld [vmem:[%s334 + $0x331] sm:$0xff]
  %v767 = vld [vmem:[%s334 + $0x349] sm:$0xff]
  %v768 = vld [vmem:[%s334 + $0x351] sm:$0xff]
  %v769 = vld [vmem:[%s334 + $0x369] sm:$0xff]
  %v770 = vld [vmem:[%s334 + $0x371] sm:$0xff]
  %v771 = vld [vmem:[%s334 + $0x389] sm:$0xff]
  %v772 = vld [vmem:[%s334 + $0x391] sm:$0xff]
  %v773 = vld [vmem:[%s334 + $0x3a9] sm:$0xff]
  %v774 = vld [vmem:[%s334 + $0x3b1] sm:$0xff]
  %v775 = vld [vmem:[%s334 + $0x3c9] sm:$0xff]
  %v776 = vld [vmem:[%s334 + $0x3d1] sm:$0xff]
  %v777 = vld [vmem:[%s334 + $0x3e9] sm:$0xff]
  %v778 = vld [vmem:[%s334 + $0x3f1] sm:$0xff]
  %v779 = vld [vmem:[%s334 + $0x409] sm:$0xff]
  %v780 = vld [vmem:[%s334 + $0x411] sm:$0xff]
  %v781 = vld [vmem:[%s334 + $0x429] sm:$0xff]
  %v782 = vld [vmem:[%s334 + $0x431] sm:$0xff]
  %s783 = scalar_lea.vmem [#allocation2], 64
  %v784 = vld [vmem:[%s783 + $0x7] sm:$0xff]
  %v785 = vld [vmem:[%s783 + $0xf] sm:$0xff]
  %v786 = vld [vmem:[%s783 + $0x27] sm:$0xff]
  %v787 = vld [vmem:[%s783 + $0x2f] sm:$0xff]
  %v788 = vld [vmem:[%s783 + $0x47] sm:$0xff]
  %v789 = vld [vmem:[%s783 + $0x4f] sm:$0xff]
  %v790 = vld [vmem:[%s783 + $0x67] sm:$0xff]
  %v791 = vld [vmem:[%s783 + $0x6f] sm:$0xff]
  %v792 = vld [vmem:[%s783 + $0x87] sm:$0xff]
  %v793 = vld [vmem:[%s783 + $0x8f] sm:$0xff]
  %v794 = vld [vmem:[%s783 + $0xa7] sm:$0xff]
  %v795 = vld [vmem:[%s783 + $0xaf] sm:$0xff]
  %v796 = vld [vmem:[%s783 + $0xc7] sm:$0xff]
  %v797 = vld [vmem:[%s783 + $0xcf] sm:$0xff]
  %v798 = vld [vmem:[%s783 + $0xe7] sm:$0xff]
  %v799 = vld [vmem:[%s783 + $0xef] sm:$0xff]
  %v800 = vld [vmem:[%s783 + $0x107] sm:$0xff]
  %v801 = vld [vmem:[%s783 + $0x10f] sm:$0xff]
  %v802 = vld [vmem:[%s783 + $0x127] sm:$0xff]
  %v803 = vld [vmem:[%s783 + $0x12f] sm:$0xff]
  %v804 = vld [vmem:[%s783 + $0x147] sm:$0xff]
  %v805 = vld [vmem:[%s783 + $0x14f] sm:$0xff]
  %v806 = vld [vmem:[%s783 + $0x167] sm:$0xff]
  %v807 = vld [vmem:[%s783 + $0x16f] sm:$0xff]
  %v808 = vld [vmem:[%s783 + $0x187] sm:$0xff]
  %v809 = vld [vmem:[%s783 + $0x18f] sm:$0xff]
  %v810 = vld [vmem:[%s783 + $0x1a7] sm:$0xff]
  %v811 = vld [vmem:[%s783 + $0x1af] sm:$0xff]
  %v812 = vld [vmem:[%s783 + $0x1c7] sm:$0xff]
  %v813 = vld [vmem:[%s783 + $0x1cf] sm:$0xff]
  %v814 = vld [vmem:[%s783 + $0x1e7] sm:$0xff]
  %v815 = vld [vmem:[%s783 + $0x1ef] sm:$0xff]
  %v816 = vld [vmem:[%s783 + $0x247] sm:$0xff]
  %v817 = vld [vmem:[%s783 + $0x24f] sm:$0xff]
  %v818 = vld [vmem:[%s783 + $0x267] sm:$0xff]
  %v819 = vld [vmem:[%s783 + $0x26f] sm:$0xff]
  %v820 = vld [vmem:[%s783 + $0x287] sm:$0xff]
  %v821 = vld [vmem:[%s783 + $0x28f] sm:$0xff]
  %v822 = vld [vmem:[%s783 + $0x2a7] sm:$0xff]
  %v823 = vld [vmem:[%s783 + $0x2af] sm:$0xff]
  %v824 = vld [vmem:[%s783 + $0x2c7] sm:$0xff]
  %v825 = vld [vmem:[%s783 + $0x2cf] sm:$0xff]
  %v826 = vld [vmem:[%s783 + $0x2e7] sm:$0xff]
  %v827 = vld [vmem:[%s783 + $0x2ef] sm:$0xff]
  %v828 = vld [vmem:[%s783 + $0x307] sm:$0xff]
  %v829 = vld [vmem:[%s783 + $0x30f] sm:$0xff]
  %v830 = vld [vmem:[%s783 + $0x327] sm:$0xff]
  %v831 = vld [vmem:[%s783 + $0x32f] sm:$0xff]
  %v832 = vld [vmem:[%s783 + $0x347] sm:$0xff]
  %v833 = vld [vmem:[%s783 + $0x34f] sm:$0xff]
  %v834 = vld [vmem:[%s783 + $0x367] sm:$0xff]
  %v835 = vld [vmem:[%s783 + $0x36f] sm:$0xff]
  %v836 = vld [vmem:[%s783 + $0x387] sm:$0xff]
  %v837 = vld [vmem:[%s783 + $0x38f] sm:$0xff]
  %v838 = vld [vmem:[%s783 + $0x3a7] sm:$0xff]
  %v839 = vld [vmem:[%s783 + $0x3af] sm:$0xff]
  %v840 = vld [vmem:[%s783 + $0x3c7] sm:$0xff]
  %v841 = vld [vmem:[%s783 + $0x3cf] sm:$0xff]
  %v842 = vld [vmem:[%s783 + $0x3e7] sm:$0xff]
  %v843 = vld [vmem:[%s783 + $0x3ef] sm:$0xff]
  %v844 = vld [vmem:[%s783 + $0x407] sm:$0xff]
  %v845 = vld [vmem:[%s783 + $0x40f] sm:$0xff]
  %v846 = vld [vmem:[%s783 + $0x427] sm:$0xff]
  %v847 = vld [vmem:[%s783 + $0x42f] sm:$0xff]
  %v848 = vld [vmem:[%s783 + $0x8] sm:$0xff]
  %v849 = vld [vmem:[%s783 + $0x10] sm:$0xff]
  %v850 = vld [vmem:[%s783 + $0x28] sm:$0xff]
  %v851 = vld [vmem:[%s783 + $0x30] sm:$0xff]
  %v852 = vld [vmem:[%s783 + $0x48] sm:$0xff]
  %v853 = vld [vmem:[%s783 + $0x50] sm:$0xff]
  %v854 = vld [vmem:[%s783 + $0x68] sm:$0xff]
  %v855 = vld [vmem:[%s783 + $0x70] sm:$0xff]
  %v856 = vld [vmem:[%s783 + $0x88] sm:$0xff]
  %v857 = vld [vmem:[%s783 + $0x90] sm:$0xff]
  %v858 = vld [vmem:[%s783 + $0xa8] sm:$0xff]
  %v859 = vld [vmem:[%s783 + $0xb0] sm:$0xff]
  %v860 = vld [vmem:[%s783 + $0xc8] sm:$0xff]
  %v861 = vld [vmem:[%s783 + $0xd0] sm:$0xff]
  %v862 = vld [vmem:[%s783 + $0xe8] sm:$0xff]
  %v863 = vld [vmem:[%s783 + $0xf0] sm:$0xff]
  %v864 = vld [vmem:[%s783 + $0x108] sm:$0xff]
  %v865 = vld [vmem:[%s783 + $0x110] sm:$0xff]
  %v866 = vld [vmem:[%s783 + $0x128] sm:$0xff]
  %v867 = vld [vmem:[%s783 + $0x130] sm:$0xff]
  %v868 = vld [vmem:[%s783 + $0x148] sm:$0xff]
  %v869 = vld [vmem:[%s783 + $0x150] sm:$0xff]
  %v870 = vld [vmem:[%s783 + $0x168] sm:$0xff]
  %v871 = vld [vmem:[%s783 + $0x170] sm:$0xff]
  %v872 = vld [vmem:[%s783 + $0x188] sm:$0xff]
  %v873 = vld [vmem:[%s783 + $0x190] sm:$0xff]
  %v874 = vld [vmem:[%s783 + $0x1a8] sm:$0xff]
  %v875 = vld [vmem:[%s783 + $0x1b0] sm:$0xff]
  %v876 = vld [vmem:[%s783 + $0x1c8] sm:$0xff]
  %v877 = vld [vmem:[%s783 + $0x1d0] sm:$0xff]
  %v878 = vld [vmem:[%s783 + $0x1e8] sm:$0xff]
  %v879 = vld [vmem:[%s783 + $0x1f0] sm:$0xff]
  %v880 = vld [vmem:[%s783 + $0x248] sm:$0xff]
  %v881 = vld [vmem:[%s783 + $0x250] sm:$0xff]
  %v882 = vld [vmem:[%s783 + $0x268] sm:$0xff]
  %v883 = vld [vmem:[%s783 + $0x270] sm:$0xff]
  %v884 = vld [vmem:[%s783 + $0x288] sm:$0xff]
  %v885 = vld [vmem:[%s783 + $0x290] sm:$0xff]
  %v886 = vld [vmem:[%s783 + $0x2a8] sm:$0xff]
  %v887 = vld [vmem:[%s783 + $0x2b0] sm:$0xff]
  %v888 = vld [vmem:[%s783 + $0x2c8] sm:$0xff]
  %v889 = vld [vmem:[%s783 + $0x2d0] sm:$0xff]
  %v890 = vld [vmem:[%s783 + $0x2e8] sm:$0xff]
  %v891 = vld [vmem:[%s783 + $0x2f0] sm:$0xff]
  %v892 = vld [vmem:[%s783 + $0x308] sm:$0xff]
  %v893 = vld [vmem:[%s783 + $0x310] sm:$0xff]
  %v894 = vld [vmem:[%s783 + $0x328] sm:$0xff]
  %v895 = vld [vmem:[%s783 + $0x330] sm:$0xff]
  %v896 = vld [vmem:[%s783 + $0x348] sm:$0xff]
  %v897 = vld [vmem:[%s783 + $0x350] sm:$0xff]
  %v898 = vld [vmem:[%s783 + $0x368] sm:$0xff]
  %v899 = vld [vmem:[%s783 + $0x370] sm:$0xff]
  %v900 = vld [vmem:[%s783 + $0x388] sm:$0xff]
  %v901 = vld [vmem:[%s783 + $0x390] sm:$0xff]
  %v902 = vld [vmem:[%s783 + $0x3a8] sm:$0xff]
  %v903 = vld [vmem:[%s783 + $0x3b0] sm:$0xff]
  %v904 = vld [vmem:[%s783 + $0x3c8] sm:$0xff]
  %v905 = vld [vmem:[%s783 + $0x3d0] sm:$0xff]
  %v906 = vld [vmem:[%s783 + $0x3e8] sm:$0xff]
  %v907 = vld [vmem:[%s783 + $0x3f0] sm:$0xff]
  %v908 = vld [vmem:[%s783 + $0x408] sm:$0xff]
  %v909 = vld [vmem:[%s783 + $0x410] sm:$0xff]
  %v910 = vld [vmem:[%s783 + $0x428] sm:$0xff]
  %v911 = vld [vmem:[%s783 + $0x430] sm:$0xff]
  %v912 = vld [vmem:[%s783 + $0x9] sm:$0xff]
  %v913 = vld [vmem:[%s783 + $0x11] sm:$0xff]
  %v914 = vld [vmem:[%s783 + $0x29] sm:$0xff]
  %v915 = vld [vmem:[%s783 + $0x31] sm:$0xff]
  %v916 = vld [vmem:[%s783 + $0x49] sm:$0xff]
  %v917 = vld [vmem:[%s783 + $0x51] sm:$0xff]
  %v918 = vld [vmem:[%s783 + $0x69] sm:$0xff]
  %v919 = vld [vmem:[%s783 + $0x71] sm:$0xff]
  %v920 = vld [vmem:[%s783 + $0x89] sm:$0xff]
  %v921 = vld [vmem:[%s783 + $0x91] sm:$0xff]
  %v922 = vld [vmem:[%s783 + $0xa9] sm:$0xff]
  %v923 = vld [vmem:[%s783 + $0xb1] sm:$0xff]
  %v924 = vld [vmem:[%s783 + $0xc9] sm:$0xff]
  %v925 = vld [vmem:[%s783 + $0xd1] sm:$0xff]
  %v926 = vld [vmem:[%s783 + $0xe9] sm:$0xff]
  %v927 = vld [vmem:[%s783 + $0xf1] sm:$0xff]
  %v928 = vld [vmem:[%s783 + $0x109] sm:$0xff]
  %v929 = vld [vmem:[%s783 + $0x111] sm:$0xff]
  %v930 = vld [vmem:[%s783 + $0x129] sm:$0xff]
  %v931 = vld [vmem:[%s783 + $0x131] sm:$0xff]
  %v932 = vld [vmem:[%s783 + $0x149] sm:$0xff]
  %v933 = vld [vmem:[%s783 + $0x151] sm:$0xff]
  %v934 = vld [vmem:[%s783 + $0x169] sm:$0xff]
  %v935 = vld [vmem:[%s783 + $0x171] sm:$0xff]
  %v936 = vld [vmem:[%s783 + $0x189] sm:$0xff]
  %v937 = vld [vmem:[%s783 + $0x191] sm:$0xff]
  %v938 = vld [vmem:[%s783 + $0x1a9] sm:$0xff]
  %v939 = vld [vmem:[%s783 + $0x1b1] sm:$0xff]
  %v940 = vld [vmem:[%s783 + $0x1c9] sm:$0xff]
  %v941 = vld [vmem:[%s783 + $0x1d1] sm:$0xff]
  %v942 = vld [vmem:[%s783 + $0x1e9] sm:$0xff]
  %v943 = vld [vmem:[%s783 + $0x1f1] sm:$0xff]
  %v944 = vld [vmem:[%s783 + $0x249] sm:$0xff]
  %v945 = vld [vmem:[%s783 + $0x251] sm:$0xff]
  %v946 = vld [vmem:[%s783 + $0x269] sm:$0xff]
  %v947 = vld [vmem:[%s783 + $0x271] sm:$0xff]
  %v948 = vld [vmem:[%s783 + $0x289] sm:$0xff]
  %v949 = vld [vmem:[%s783 + $0x291] sm:$0xff]
  %v950 = vld [vmem:[%s783 + $0x2a9] sm:$0xff]
  %v951 = vld [vmem:[%s783 + $0x2b1] sm:$0xff]
  %v952 = vld [vmem:[%s783 + $0x2c9] sm:$0xff]
  %v953 = vld [vmem:[%s783 + $0x2d1] sm:$0xff]
  %v954 = vld [vmem:[%s783 + $0x2e9] sm:$0xff]
  %v955 = vld [vmem:[%s783 + $0x2f1] sm:$0xff]
  %v956 = vld [vmem:[%s783 + $0x309] sm:$0xff]
  %v957 = vld [vmem:[%s783 + $0x311] sm:$0xff]
  %v958 = vld [vmem:[%s783 + $0x329] sm:$0xff]
  %v959 = vld [vmem:[%s783 + $0x331] sm:$0xff]
  %v960 = vld [vmem:[%s783 + $0x349] sm:$0xff]
  %v961 = vld [vmem:[%s783 + $0x351] sm:$0xff]
  %v962 = vld [vmem:[%s783 + $0x369] sm:$0xff]
  %v963 = vld [vmem:[%s783 + $0x371] sm:$0xff]
  %v964 = vld [vmem:[%s783 + $0x389] sm:$0xff]
  %v965 = vld [vmem:[%s783 + $0x391] sm:$0xff]
  %v966 = vld [vmem:[%s783 + $0x3a9] sm:$0xff]
  %v967 = vld [vmem:[%s783 + $0x3b1] sm:$0xff]
  %v968 = vld [vmem:[%s783 + $0x3c9] sm:$0xff]
  %v969 = vld [vmem:[%s783 + $0x3d1] sm:$0xff]
  %v970 = vld [vmem:[%s783 + $0x3e9] sm:$0xff]
  %v971 = vld [vmem:[%s783 + $0x3f1] sm:$0xff]
  %v972 = vld [vmem:[%s783 + $0x409] sm:$0xff]
  %v973 = vld [vmem:[%s783 + $0x411] sm:$0xff]
  %v974 = vld [vmem:[%s783 + $0x429] sm:$0xff]
  %v975 = vld [vmem:[%s783 + $0x431] sm:$0xff]
  %1040 = vrot.lane.b32.xlu0 %v463, 4
  %v1041 = vpop.permute.xlu0 %1040
  %1042 = vrot.lane.b32.xlu0 %v464, 4
  %v1043 = vpop.permute.xlu0 %1042
  %1044 = vrot.lane.b32.xlu0 %v465, 4
  %v1045 = vpop.permute.xlu0 %1044
  %1046 = vrot.lane.b32.xlu0 %v466, 4
  %v1047 = vpop.permute.xlu0 %1046
  %1048 = vrot.lane.b32.xlu0 %v467, 4
  %v1049 = vpop.permute.xlu0 %1048
  %1050 = vrot.lane.b32.xlu0 %v468, 4
  %v1051 = vpop.permute.xlu0 %1050
  %1052 = vrot.lane.b32.xlu0 %v469, 4
  %v1053 = vpop.permute.xlu0 %1052
  %1054 = vrot.lane.b32.xlu0 %v470, 4
  %v1055 = vpop.permute.xlu0 %1054
  %1056 = vrot.lane.b32.xlu0 %v471, 4
  %v1057 = vpop.permute.xlu0 %1056
  %1058 = vrot.lane.b32.xlu0 %v472, 4
  %v1059 = vpop.permute.xlu0 %1058
  %1060 = vrot.lane.b32.xlu0 %v473, 4
  %v1061 = vpop.permute.xlu0 %1060
  %1062 = vrot.lane.b32.xlu0 %v474, 4
  %v1063 = vpop.permute.xlu0 %1062
  %1064 = vrot.lane.b32.xlu0 %v475, 4
  %v1065 = vpop.permute.xlu0 %1064
  %1066 = vrot.lane.b32.xlu0 %v476, 4
  %v1067 = vpop.permute.xlu0 %1066
  %1068 = vrot.lane.b32.xlu0 %v477, 4
  %v1069 = vpop.permute.xlu0 %1068
  %1070 = vrot.lane.b32.xlu0 %v478, 4
  %v1071 = vpop.permute.xlu0 %1070
  %1072 = vrot.lane.b32.xlu0 %v479, 4
  %v1073 = vpop.permute.xlu0 %1072
  %1074 = vrot.lane.b32.xlu0 %v480, 4
  %v1075 = vpop.permute.xlu0 %1074
  %1076 = vrot.lane.b32.xlu0 %v481, 4
  %v1077 = vpop.permute.xlu0 %1076
  %1078 = vrot.lane.b32.xlu0 %v482, 4
  %v1079 = vpop.permute.xlu0 %1078
  %1080 = vrot.lane.b32.xlu0 %v483, 4
  %v1081 = vpop.permute.xlu0 %1080
  %1082 = vrot.lane.b32.xlu0 %v484, 4
  %v1083 = vpop.permute.xlu0 %1082
  %1084 = vrot.lane.b32.xlu0 %v485, 4
  %v1085 = vpop.permute.xlu0 %1084
  %1086 = vrot.lane.b32.xlu0 %v486, 4
  %v1087 = vpop.permute.xlu0 %1086
  %1088 = vrot.lane.b32.xlu0 %v487, 4
  %v1089 = vpop.permute.xlu0 %1088
  %1090 = vrot.lane.b32.xlu0 %v488, 4
  %v1091 = vpop.permute.xlu0 %1090
  %1092 = vrot.lane.b32.xlu0 %v489, 4
  %v1093 = vpop.permute.xlu0 %1092
  %1094 = vrot.lane.b32.xlu0 %v490, 4
  %v1095 = vpop.permute.xlu0 %1094
  %1096 = vrot.lane.b32.xlu0 %v491, 4
  %v1097 = vpop.permute.xlu0 %1096
  %1098 = vrot.lane.b32.xlu0 %v492, 4
  %v1099 = vpop.permute.xlu0 %1098
  %1100 = vrot.lane.b32.xlu0 %v493, 4
  %v1101 = vpop.permute.xlu0 %1100
  %1102 = vrot.lane.b32.xlu0 %v494, 4
  %v1103 = vpop.permute.xlu0 %1102
  %1104 = vrot.lane.b32.xlu0 %v495, 4
  %v1105 = vpop.permute.xlu0 %1104
  %1106 = vrot.lane.b32.xlu0 %v496, 4
  %v1107 = vpop.permute.xlu0 %1106
  %1108 = vrot.lane.b32.xlu0 %v497, 4
  %v1109 = vpop.permute.xlu0 %1108
  %1110 = vrot.lane.b32.xlu0 %v498, 4
  %v1111 = vpop.permute.xlu0 %1110
  %1112 = vrot.lane.b32.xlu0 %v499, 4
  %v1113 = vpop.permute.xlu0 %1112
  %1114 = vrot.lane.b32.xlu0 %v500, 4
  %v1115 = vpop.permute.xlu0 %1114
  %1116 = vrot.lane.b32.xlu0 %v501, 4
  %v1117 = vpop.permute.xlu0 %1116
  %1118 = vrot.lane.b32.xlu0 %v502, 4
  %v1119 = vpop.permute.xlu0 %1118
  %1120 = vrot.lane.b32.xlu0 %v503, 4
  %v1121 = vpop.permute.xlu0 %1120
  %1122 = vrot.lane.b32.xlu0 %v504, 4
  %v1123 = vpop.permute.xlu0 %1122
  %1124 = vrot.lane.b32.xlu0 %v505, 4
  %v1125 = vpop.permute.xlu0 %1124
  %1126 = vrot.lane.b32.xlu0 %v506, 4
  %v1127 = vpop.permute.xlu0 %1126
  %1128 = vrot.lane.b32.xlu0 %v507, 4
  %v1129 = vpop.permute.xlu0 %1128
  %1130 = vrot.lane.b32.xlu0 %v508, 4
  %v1131 = vpop.permute.xlu0 %1130
  %1132 = vrot.lane.b32.xlu0 %v509, 4
  %v1133 = vpop.permute.xlu0 %1132
  %1134 = vrot.lane.b32.xlu0 %v510, 4
  %v1135 = vpop.permute.xlu0 %1134
  %1136 = vrot.lane.b32.xlu0 %v511, 4
  %v1137 = vpop.permute.xlu0 %1136
  %1138 = vrot.lane.b32.xlu0 %v512, 4
  %v1139 = vpop.permute.xlu0 %1138
  %1140 = vrot.lane.b32.xlu0 %v513, 4
  %v1141 = vpop.permute.xlu0 %1140
  %1142 = vrot.lane.b32.xlu0 %v514, 4
  %v1143 = vpop.permute.xlu0 %1142
  %1144 = vrot.lane.b32.xlu0 %v515, 4
  %v1145 = vpop.permute.xlu0 %1144
  %1146 = vrot.lane.b32.xlu0 %v516, 4
  %v1147 = vpop.permute.xlu0 %1146
  %1148 = vrot.lane.b32.xlu0 %v517, 4
  %v1149 = vpop.permute.xlu0 %1148
  %1150 = vrot.lane.b32.xlu0 %v518, 4
  %v1151 = vpop.permute.xlu0 %1150
  %1152 = vrot.lane.b32.xlu0 %v519, 4
  %v1153 = vpop.permute.xlu0 %1152
  %1154 = vrot.lane.b32.xlu0 %v520, 4
  %v1155 = vpop.permute.xlu0 %1154
  %1156 = vrot.lane.b32.xlu0 %v521, 4
  %v1157 = vpop.permute.xlu0 %1156
  %1158 = vrot.lane.b32.xlu0 %v522, 4
  %v1159 = vpop.permute.xlu0 %1158
  %1160 = vrot.lane.b32.xlu0 %v523, 4
  %v1161 = vpop.permute.xlu0 %1160
  %1162 = vrot.lane.b32.xlu0 %v524, 4
  %v1163 = vpop.permute.xlu0 %1162
  %1164 = vrot.lane.b32.xlu0 %v525, 4
  %v1165 = vpop.permute.xlu0 %1164
  %1166 = vrot.lane.b32.xlu0 %v526, 4
  %v1167 = vpop.permute.xlu0 %1166
  %1296 = vrot.lane.b32.xlu0 %v527, 8
  %v1297 = vpop.permute.xlu0 %1296
  %1298 = vrot.lane.b32.xlu0 %v528, 8
  %v1299 = vpop.permute.xlu0 %1298
  %1300 = vrot.lane.b32.xlu0 %v529, 8
  %v1301 = vpop.permute.xlu0 %1300
  %1302 = vrot.lane.b32.xlu0 %v530, 8
  %v1303 = vpop.permute.xlu0 %1302
  %1304 = vrot.lane.b32.xlu0 %v531, 8
  %v1305 = vpop.permute.xlu0 %1304
  %1306 = vrot.lane.b32.xlu0 %v532, 8
  %v1307 = vpop.permute.xlu0 %1306
  %1308 = vrot.lane.b32.xlu0 %v533, 8
  %v1309 = vpop.permute.xlu0 %1308
  %1310 = vrot.lane.b32.xlu0 %v534, 8
  %v1311 = vpop.permute.xlu0 %1310
  %1312 = vrot.lane.b32.xlu0 %v535, 8
  %v1313 = vpop.permute.xlu0 %1312
  %1314 = vrot.lane.b32.xlu0 %v536, 8
  %v1315 = vpop.permute.xlu0 %1314
  %1316 = vrot.lane.b32.xlu0 %v537, 8
  %v1317 = vpop.permute.xlu0 %1316
  %1318 = vrot.lane.b32.xlu0 %v538, 8
  %v1319 = vpop.permute.xlu0 %1318
  %1320 = vrot.lane.b32.xlu0 %v539, 8
  %v1321 = vpop.permute.xlu0 %1320
  %1322 = vrot.lane.b32.xlu0 %v540, 8
  %v1323 = vpop.permute.xlu0 %1322
  %1324 = vrot.lane.b32.xlu0 %v541, 8
  %v1325 = vpop.permute.xlu0 %1324
  %1326 = vrot.lane.b32.xlu0 %v542, 8
  %v1327 = vpop.permute.xlu0 %1326
  %1328 = vrot.lane.b32.xlu0 %v543, 8
  %v1329 = vpop.permute.xlu0 %1328
  %1330 = vrot.lane.b32.xlu0 %v544, 8
  %v1331 = vpop.permute.xlu0 %1330
  %1332 = vrot.lane.b32.xlu0 %v545, 8
  %v1333 = vpop.permute.xlu0 %1332
  %1334 = vrot.lane.b32.xlu0 %v546, 8
  %v1335 = vpop.permute.xlu0 %1334
  %1336 = vrot.lane.b32.xlu0 %v547, 8
  %v1337 = vpop.permute.xlu0 %1336
  %1338 = vrot.lane.b32.xlu0 %v548, 8
  %v1339 = vpop.permute.xlu0 %1338
  %1340 = vrot.lane.b32.xlu0 %v549, 8
  %v1341 = vpop.permute.xlu0 %1340
  %1342 = vrot.lane.b32.xlu0 %v550, 8
  %v1343 = vpop.permute.xlu0 %1342
  %1344 = vrot.lane.b32.xlu0 %v551, 8
  %v1345 = vpop.permute.xlu0 %1344
  %1346 = vrot.lane.b32.xlu0 %v552, 8
  %v1347 = vpop.permute.xlu0 %1346
  %1348 = vrot.lane.b32.xlu0 %v553, 8
  %v1349 = vpop.permute.xlu0 %1348
  %1350 = vrot.lane.b32.xlu0 %v554, 8
  %v1351 = vpop.permute.xlu0 %1350
  %1352 = vrot.lane.b32.xlu0 %v555, 8
  %v1353 = vpop.permute.xlu0 %1352
  %1354 = vrot.lane.b32.xlu0 %v556, 8
  %v1355 = vpop.permute.xlu0 %1354
  %1356 = vrot.lane.b32.xlu0 %v557, 8
  %v1357 = vpop.permute.xlu0 %1356
  %1358 = vrot.lane.b32.xlu0 %v558, 8
  %v1359 = vpop.permute.xlu0 %1358
  %1360 = vrot.lane.b32.xlu0 %v559, 8
  %v1361 = vpop.permute.xlu0 %1360
  %1362 = vrot.lane.b32.xlu0 %v560, 8
  %v1363 = vpop.permute.xlu0 %1362
  %1364 = vrot.lane.b32.xlu0 %v561, 8
  %v1365 = vpop.permute.xlu0 %1364
  %1366 = vrot.lane.b32.xlu0 %v562, 8
  %v1367 = vpop.permute.xlu0 %1366
  %1368 = vrot.lane.b32.xlu0 %v563, 8
  %v1369 = vpop.permute.xlu0 %1368
  %1370 = vrot.lane.b32.xlu0 %v564, 8
  %v1371 = vpop.permute.xlu0 %1370
  %1372 = vrot.lane.b32.xlu0 %v565, 8
  %v1373 = vpop.permute.xlu0 %1372
  %1374 = vrot.lane.b32.xlu0 %v566, 8
  %v1375 = vpop.permute.xlu0 %1374
  %1376 = vrot.lane.b32.xlu0 %v567, 8
  %v1377 = vpop.permute.xlu0 %1376
  %1378 = vrot.lane.b32.xlu0 %v568, 8
  %v1379 = vpop.permute.xlu0 %1378
  %1380 = vrot.lane.b32.xlu0 %v569, 8
  %v1381 = vpop.permute.xlu0 %1380
  %1382 = vrot.lane.b32.xlu0 %v570, 8
  %v1383 = vpop.permute.xlu0 %1382
  %1384 = vrot.lane.b32.xlu0 %v571, 8
  %v1385 = vpop.permute.xlu0 %1384
  %1386 = vrot.lane.b32.xlu0 %v572, 8
  %v1387 = vpop.permute.xlu0 %1386
  %1388 = vrot.lane.b32.xlu0 %v573, 8
  %v1389 = vpop.permute.xlu0 %1388
  %1390 = vrot.lane.b32.xlu0 %v574, 8
  %v1391 = vpop.permute.xlu0 %1390
  %1392 = vrot.lane.b32.xlu0 %v575, 8
  %v1393 = vpop.permute.xlu0 %1392
  %1394 = vrot.lane.b32.xlu0 %v576, 8
  %v1395 = vpop.permute.xlu0 %1394
  %1396 = vrot.lane.b32.xlu0 %v577, 8
  %v1397 = vpop.permute.xlu0 %1396
  %1398 = vrot.lane.b32.xlu0 %v578, 8
  %v1399 = vpop.permute.xlu0 %1398
  %1400 = vrot.lane.b32.xlu0 %v579, 8
  %v1401 = vpop.permute.xlu0 %1400
  %1402 = vrot.lane.b32.xlu0 %v580, 8
  %v1403 = vpop.permute.xlu0 %1402
  %1404 = vrot.lane.b32.xlu0 %v581, 8
  %v1405 = vpop.permute.xlu0 %1404
  %1406 = vrot.lane.b32.xlu0 %v582, 8
  %v1407 = vpop.permute.xlu0 %1406
  %1408 = vrot.lane.b32.xlu0 %v583, 8
  %v1409 = vpop.permute.xlu0 %1408
  %1410 = vrot.lane.b32.xlu0 %v584, 8
  %v1411 = vpop.permute.xlu0 %1410
  %1412 = vrot.lane.b32.xlu0 %v585, 8
  %v1413 = vpop.permute.xlu0 %1412
  %1414 = vrot.lane.b32.xlu0 %v586, 8
  %v1415 = vpop.permute.xlu0 %1414
  %1416 = vrot.lane.b32.xlu0 %v587, 8
  %v1417 = vpop.permute.xlu0 %1416
  %1418 = vrot.lane.b32.xlu0 %v588, 8
  %v1419 = vpop.permute.xlu0 %1418
  %1420 = vrot.lane.b32.xlu0 %v589, 8
  %v1421 = vpop.permute.xlu0 %1420
  %1422 = vrot.lane.b32.xlu0 %v590, 8
  %v1423 = vpop.permute.xlu0 %1422
  %1552 = vrot.lane.b32.xlu0 %v591, 12
  %v1553 = vpop.permute.xlu0 %1552
  %1554 = vrot.lane.b32.xlu0 %v592, 12
  %v1555 = vpop.permute.xlu0 %1554
  %1556 = vrot.lane.b32.xlu0 %v593, 12
  %v1557 = vpop.permute.xlu0 %1556
  %1558 = vrot.lane.b32.xlu0 %v594, 12
  %v1559 = vpop.permute.xlu0 %1558
  %1560 = vrot.lane.b32.xlu0 %v595, 12
  %v1561 = vpop.permute.xlu0 %1560
  %1562 = vrot.lane.b32.xlu0 %v596, 12
  %v1563 = vpop.permute.xlu0 %1562
  %1564 = vrot.lane.b32.xlu0 %v597, 12
  %v1565 = vpop.permute.xlu0 %1564
  %1566 = vrot.lane.b32.xlu0 %v598, 12
  %v1567 = vpop.permute.xlu0 %1566
  %1568 = vrot.lane.b32.xlu0 %v599, 12
  %v1569 = vpop.permute.xlu0 %1568
  %1570 = vrot.lane.b32.xlu0 %v600, 12
  %v1571 = vpop.permute.xlu0 %1570
  %1572 = vrot.lane.b32.xlu0 %v601, 12
  %v1573 = vpop.permute.xlu0 %1572
  %1574 = vrot.lane.b32.xlu0 %v602, 12
  %v1575 = vpop.permute.xlu0 %1574
  %1576 = vrot.lane.b32.xlu0 %v603, 12
  %v1577 = vpop.permute.xlu0 %1576
  %1578 = vrot.lane.b32.xlu0 %v604, 12
  %v1579 = vpop.permute.xlu0 %1578
  %1580 = vrot.lane.b32.xlu0 %v605, 12
  %v1581 = vpop.permute.xlu0 %1580
  %1582 = vrot.lane.b32.xlu0 %v606, 12
  %v1583 = vpop.permute.xlu0 %1582
  %1584 = vrot.lane.b32.xlu0 %v607, 12
  %v1585 = vpop.permute.xlu0 %1584
  %1586 = vrot.lane.b32.xlu0 %v608, 12
  %v1587 = vpop.permute.xlu0 %1586
  %1588 = vrot.lane.b32.xlu0 %v609, 12
  %v1589 = vpop.permute.xlu0 %1588
  %1590 = vrot.lane.b32.xlu0 %v610, 12
  %v1591 = vpop.permute.xlu0 %1590
  %1592 = vrot.lane.b32.xlu0 %v611, 12
  %v1593 = vpop.permute.xlu0 %1592
  %1594 = vrot.lane.b32.xlu0 %v612, 12
  %v1595 = vpop.permute.xlu0 %1594
  %1596 = vrot.lane.b32.xlu0 %v613, 12
  %v1597 = vpop.permute.xlu0 %1596
  %1598 = vrot.lane.b32.xlu0 %v614, 12
  %v1599 = vpop.permute.xlu0 %1598
  %1600 = vrot.lane.b32.xlu0 %v615, 12
  %v1601 = vpop.permute.xlu0 %1600
  %1602 = vrot.lane.b32.xlu0 %v616, 12
  %v1603 = vpop.permute.xlu0 %1602
  %1604 = vrot.lane.b32.xlu0 %v617, 12
  %v1605 = vpop.permute.xlu0 %1604
  %1606 = vrot.lane.b32.xlu0 %v618, 12
  %v1607 = vpop.permute.xlu0 %1606
  %1608 = vrot.lane.b32.xlu0 %v619, 12
  %v1609 = vpop.permute.xlu0 %1608
  %1610 = vrot.lane.b32.xlu0 %v620, 12
  %v1611 = vpop.permute.xlu0 %1610
  %1612 = vrot.lane.b32.xlu0 %v621, 12
  %v1613 = vpop.permute.xlu0 %1612
  %1614 = vrot.lane.b32.xlu0 %v622, 12
  %v1615 = vpop.permute.xlu0 %1614
  %1616 = vrot.lane.b32.xlu0 %v623, 12
  %v1617 = vpop.permute.xlu0 %1616
  %1618 = vrot.lane.b32.xlu0 %v624, 12
  %v1619 = vpop.permute.xlu0 %1618
  %1620 = vrot.lane.b32.xlu0 %v625, 12
  %v1621 = vpop.permute.xlu0 %1620
  %1622 = vrot.lane.b32.xlu0 %v626, 12
  %v1623 = vpop.permute.xlu0 %1622
  %1624 = vrot.lane.b32.xlu0 %v627, 12
  %v1625 = vpop.permute.xlu0 %1624
  %1626 = vrot.lane.b32.xlu0 %v628, 12
  %v1627 = vpop.permute.xlu0 %1626
  %1628 = vrot.lane.b32.xlu0 %v629, 12
  %v1629 = vpop.permute.xlu0 %1628
  %1630 = vrot.lane.b32.xlu0 %v630, 12
  %v1631 = vpop.permute.xlu0 %1630
  %1632 = vrot.lane.b32.xlu0 %v631, 12
  %v1633 = vpop.permute.xlu0 %1632
  %1634 = vrot.lane.b32.xlu0 %v632, 12
  %v1635 = vpop.permute.xlu0 %1634
  %1636 = vrot.lane.b32.xlu0 %v633, 12
  %v1637 = vpop.permute.xlu0 %1636
  %1638 = vrot.lane.b32.xlu0 %v634, 12
  %v1639 = vpop.permute.xlu0 %1638
  %1640 = vrot.lane.b32.xlu0 %v635, 12
  %v1641 = vpop.permute.xlu0 %1640
  %1642 = vrot.lane.b32.xlu0 %v636, 12
  %v1643 = vpop.permute.xlu0 %1642
  %1644 = vrot.lane.b32.xlu0 %v637, 12
  %v1645 = vpop.permute.xlu0 %1644
  %1646 = vrot.lane.b32.xlu0 %v638, 12
  %v1647 = vpop.permute.xlu0 %1646
  %1648 = vrot.lane.b32.xlu0 %v639, 12
  %v1649 = vpop.permute.xlu0 %1648
  %1650 = vrot.lane.b32.xlu0 %v640, 12
  %v1651 = vpop.permute.xlu0 %1650
  %1652 = vrot.lane.b32.xlu0 %v641, 12
  %v1653 = vpop.permute.xlu0 %1652
  %1654 = vrot.lane.b32.xlu0 %v642, 12
  %v1655 = vpop.permute.xlu0 %1654
  %1656 = vrot.lane.b32.xlu0 %v643, 12
  %v1657 = vpop.permute.xlu0 %1656
  %1658 = vrot.lane.b32.xlu0 %v644, 12
  %v1659 = vpop.permute.xlu0 %1658
  %1660 = vrot.lane.b32.xlu0 %v645, 12
  %v1661 = vpop.permute.xlu0 %1660
  %1662 = vrot.lane.b32.xlu0 %v646, 12
  %v1663 = vpop.permute.xlu0 %1662
  %1664 = vrot.lane.b32.xlu0 %v647, 12
  %v1665 = vpop.permute.xlu0 %1664
  %1666 = vrot.lane.b32.xlu0 %v648, 12
  %v1667 = vpop.permute.xlu0 %1666
  %1668 = vrot.lane.b32.xlu0 %v649, 12
  %v1669 = vpop.permute.xlu0 %1668
  %1670 = vrot.lane.b32.xlu0 %v650, 12
  %v1671 = vpop.permute.xlu0 %1670
  %1672 = vrot.lane.b32.xlu0 %v651, 12
  %v1673 = vpop.permute.xlu0 %1672
  %1674 = vrot.lane.b32.xlu0 %v652, 12
  %v1675 = vpop.permute.xlu0 %1674
  %1676 = vrot.lane.b32.xlu0 %v653, 12
  %v1677 = vpop.permute.xlu0 %1676
  %1678 = vrot.lane.b32.xlu0 %v654, 12
  %v1679 = vpop.permute.xlu0 %1678
  %1808 = vrot.lane.b32.xlu0 %v655, 16
  %v1809 = vpop.permute.xlu0 %1808
  %1810 = vrot.lane.b32.xlu0 %v656, 16
  %v1811 = vpop.permute.xlu0 %1810
  %1812 = vrot.lane.b32.xlu0 %v657, 16
  %v1813 = vpop.permute.xlu0 %1812
  %1814 = vrot.lane.b32.xlu0 %v658, 16
  %v1815 = vpop.permute.xlu0 %1814
  %1816 = vrot.lane.b32.xlu0 %v659, 16
  %v1817 = vpop.permute.xlu0 %1816
  %1818 = vrot.lane.b32.xlu0 %v660, 16
  %v1819 = vpop.permute.xlu0 %1818
  %1820 = vrot.lane.b32.xlu0 %v661, 16
  %v1821 = vpop.permute.xlu0 %1820
  %1822 = vrot.lane.b32.xlu0 %v662, 16
  %v1823 = vpop.permute.xlu0 %1822
  %1824 = vrot.lane.b32.xlu0 %v663, 16
  %v1825 = vpop.permute.xlu0 %1824
  %1826 = vrot.lane.b32.xlu0 %v664, 16
  %v1827 = vpop.permute.xlu0 %1826
  %1828 = vrot.lane.b32.xlu0 %v665, 16
  %v1829 = vpop.permute.xlu0 %1828
  %1830 = vrot.lane.b32.xlu0 %v666, 16
  %v1831 = vpop.permute.xlu0 %1830
  %1832 = vrot.lane.b32.xlu0 %v667, 16
  %v1833 = vpop.permute.xlu0 %1832
  %1834 = vrot.lane.b32.xlu0 %v668, 16
  %v1835 = vpop.permute.xlu0 %1834
  %1836 = vrot.lane.b32.xlu0 %v669, 16
  %v1837 = vpop.permute.xlu0 %1836
  %1838 = vrot.lane.b32.xlu0 %v670, 16
  %v1839 = vpop.permute.xlu0 %1838
  %1840 = vrot.lane.b32.xlu0 %v671, 16
  %v1841 = vpop.permute.xlu0 %1840
  %1842 = vrot.lane.b32.xlu0 %v672, 16
  %v1843 = vpop.permute.xlu0 %1842
  %1844 = vrot.lane.b32.xlu0 %v673, 16
  %v1845 = vpop.permute.xlu0 %1844
  %1846 = vrot.lane.b32.xlu0 %v674, 16
  %v1847 = vpop.permute.xlu0 %1846
  %1848 = vrot.lane.b32.xlu0 %v675, 16
  %v1849 = vpop.permute.xlu0 %1848
  %1850 = vrot.lane.b32.xlu0 %v676, 16
  %v1851 = vpop.permute.xlu0 %1850
  %1852 = vrot.lane.b32.xlu0 %v677, 16
  %v1853 = vpop.permute.xlu0 %1852
  %1854 = vrot.lane.b32.xlu0 %v678, 16
  %v1855 = vpop.permute.xlu0 %1854
  %1856 = vrot.lane.b32.xlu0 %v679, 16
  %v1857 = vpop.permute.xlu0 %1856
  %1858 = vrot.lane.b32.xlu0 %v680, 16
  %v1859 = vpop.permute.xlu0 %1858
  %1860 = vrot.lane.b32.xlu0 %v681, 16
  %v1861 = vpop.permute.xlu0 %1860
  %1862 = vrot.lane.b32.xlu0 %v682, 16
  %v1863 = vpop.permute.xlu0 %1862
  %1864 = vrot.lane.b32.xlu0 %v683, 16
  %v1865 = vpop.permute.xlu0 %1864
  %1866 = vrot.lane.b32.xlu0 %v684, 16
  %v1867 = vpop.permute.xlu0 %1866
  %1868 = vrot.lane.b32.xlu0 %v685, 16
  %v1869 = vpop.permute.xlu0 %1868
  %1870 = vrot.lane.b32.xlu0 %v686, 16
  %v1871 = vpop.permute.xlu0 %1870
  %1872 = vrot.lane.b32.xlu0 %v687, 16
  %v1873 = vpop.permute.xlu0 %1872
  %1874 = vrot.lane.b32.xlu0 %v688, 16
  %v1875 = vpop.permute.xlu0 %1874
  %1876 = vrot.lane.b32.xlu0 %v689, 16
  %v1877 = vpop.permute.xlu0 %1876
  %1878 = vrot.lane.b32.xlu0 %v690, 16
  %v1879 = vpop.permute.xlu0 %1878
  %1880 = vrot.lane.b32.xlu0 %v691, 16
  %v1881 = vpop.permute.xlu0 %1880
  %1882 = vrot.lane.b32.xlu0 %v692, 16
  %v1883 = vpop.permute.xlu0 %1882
  %1884 = vrot.lane.b32.xlu0 %v693, 16
  %v1885 = vpop.permute.xlu0 %1884
  %1886 = vrot.lane.b32.xlu0 %v694, 16
  %v1887 = vpop.permute.xlu0 %1886
  %1888 = vrot.lane.b32.xlu0 %v695, 16
  %v1889 = vpop.permute.xlu0 %1888
  %1890 = vrot.lane.b32.xlu0 %v696, 16
  %v1891 = vpop.permute.xlu0 %1890
  %1892 = vrot.lane.b32.xlu0 %v697, 16
  %v1893 = vpop.permute.xlu0 %1892
  %1894 = vrot.lane.b32.xlu0 %v698, 16
  %v1895 = vpop.permute.xlu0 %1894
  %1896 = vrot.lane.b32.xlu0 %v699, 16
  %v1897 = vpop.permute.xlu0 %1896
  %1898 = vrot.lane.b32.xlu0 %v700, 16
  %v1899 = vpop.permute.xlu0 %1898
  %1900 = vrot.lane.b32.xlu0 %v701, 16
  %v1901 = vpop.permute.xlu0 %1900
  %1902 = vrot.lane.b32.xlu0 %v702, 16
  %v1903 = vpop.permute.xlu0 %1902
  %1904 = vrot.lane.b32.xlu0 %v703, 16
  %v1905 = vpop.permute.xlu0 %1904
  %1906 = vrot.lane.b32.xlu0 %v704, 16
  %v1907 = vpop.permute.xlu0 %1906
  %1908 = vrot.lane.b32.xlu0 %v705, 16
  %v1909 = vpop.permute.xlu0 %1908
  %1910 = vrot.lane.b32.xlu0 %v706, 16
  %v1911 = vpop.permute.xlu0 %1910
  %1912 = vrot.lane.b32.xlu0 %v707, 16
  %v1913 = vpop.permute.xlu0 %1912
  %1914 = vrot.lane.b32.xlu0 %v708, 16
  %v1915 = vpop.permute.xlu0 %1914
  %1916 = vrot.lane.b32.xlu0 %v709, 16
  %v1917 = vpop.permute.xlu0 %1916
  %1918 = vrot.lane.b32.xlu0 %v710, 16
  %v1919 = vpop.permute.xlu0 %1918
  %1920 = vrot.lane.b32.xlu0 %v711, 16
  %v1921 = vpop.permute.xlu0 %1920
  %1922 = vrot.lane.b32.xlu0 %v712, 16
  %v1923 = vpop.permute.xlu0 %1922
  %1924 = vrot.lane.b32.xlu0 %v713, 16
  %v1925 = vpop.permute.xlu0 %1924
  %1926 = vrot.lane.b32.xlu0 %v714, 16
  %v1927 = vpop.permute.xlu0 %1926
  %1928 = vrot.lane.b32.xlu0 %v715, 16
  %v1929 = vpop.permute.xlu0 %1928
  %1930 = vrot.lane.b32.xlu0 %v716, 16
  %v1931 = vpop.permute.xlu0 %1930
  %1932 = vrot.lane.b32.xlu0 %v717, 16
  %v1933 = vpop.permute.xlu0 %1932
  %1934 = vrot.lane.b32.xlu0 %v718, 16
  %v1935 = vpop.permute.xlu0 %1934
  %2064 = vrot.lane.b32.xlu0 %v719, 20
  %v2065 = vpop.permute.xlu0 %2064
  %2066 = vrot.lane.b32.xlu0 %v720, 20
  %v2067 = vpop.permute.xlu0 %2066
  %2068 = vrot.lane.b32.xlu0 %v721, 20
  %v2069 = vpop.permute.xlu0 %2068
  %2070 = vrot.lane.b32.xlu0 %v722, 20
  %v2071 = vpop.permute.xlu0 %2070
  %2072 = vrot.lane.b32.xlu0 %v723, 20
  %v2073 = vpop.permute.xlu0 %2072
  %2074 = vrot.lane.b32.xlu0 %v724, 20
  %v2075 = vpop.permute.xlu0 %2074
  %2076 = vrot.lane.b32.xlu0 %v725, 20
  %v2077 = vpop.permute.xlu0 %2076
  %2078 = vrot.lane.b32.xlu0 %v726, 20
  %v2079 = vpop.permute.xlu0 %2078
  %2080 = vrot.lane.b32.xlu0 %v727, 20
  %v2081 = vpop.permute.xlu0 %2080
  %2082 = vrot.lane.b32.xlu0 %v728, 20
  %v2083 = vpop.permute.xlu0 %2082
  %2084 = vrot.lane.b32.xlu0 %v729, 20
  %v2085 = vpop.permute.xlu0 %2084
  %2086 = vrot.lane.b32.xlu0 %v730, 20
  %v2087 = vpop.permute.xlu0 %2086
  %2088 = vrot.lane.b32.xlu0 %v731, 20
  %v2089 = vpop.permute.xlu0 %2088
  %2090 = vrot.lane.b32.xlu0 %v732, 20
  %v2091 = vpop.permute.xlu0 %2090
  %2092 = vrot.lane.b32.xlu0 %v733, 20
  %v2093 = vpop.permute.xlu0 %2092
  %2094 = vrot.lane.b32.xlu0 %v734, 20
  %v2095 = vpop.permute.xlu0 %2094
  %2096 = vrot.lane.b32.xlu0 %v735, 20
  %v2097 = vpop.permute.xlu0 %2096
  %2098 = vrot.lane.b32.xlu0 %v736, 20
  %v2099 = vpop.permute.xlu0 %2098
  %2100 = vrot.lane.b32.xlu0 %v737, 20
  %v2101 = vpop.permute.xlu0 %2100
  %2102 = vrot.lane.b32.xlu0 %v738, 20
  %v2103 = vpop.permute.xlu0 %2102
  %2104 = vrot.lane.b32.xlu0 %v739, 20
  %v2105 = vpop.permute.xlu0 %2104
  %2106 = vrot.lane.b32.xlu0 %v740, 20
  %v2107 = vpop.permute.xlu0 %2106
  %2108 = vrot.lane.b32.xlu0 %v741, 20
  %v2109 = vpop.permute.xlu0 %2108
  %2110 = vrot.lane.b32.xlu0 %v742, 20
  %v2111 = vpop.permute.xlu0 %2110
  %2112 = vrot.lane.b32.xlu0 %v743, 20
  %v2113 = vpop.permute.xlu0 %2112
  %2114 = vrot.lane.b32.xlu0 %v744, 20
  %v2115 = vpop.permute.xlu0 %2114
  %2116 = vrot.lane.b32.xlu0 %v745, 20
  %v2117 = vpop.permute.xlu0 %2116
  %2118 = vrot.lane.b32.xlu0 %v746, 20
  %v2119 = vpop.permute.xlu0 %2118
  %2120 = vrot.lane.b32.xlu0 %v747, 20
  %v2121 = vpop.permute.xlu0 %2120
  %2122 = vrot.lane.b32.xlu0 %v748, 20
  %v2123 = vpop.permute.xlu0 %2122
  %2124 = vrot.lane.b32.xlu0 %v749, 20
  %v2125 = vpop.permute.xlu0 %2124
  %2126 = vrot.lane.b32.xlu0 %v750, 20
  %v2127 = vpop.permute.xlu0 %2126
  %2128 = vrot.lane.b32.xlu0 %v751, 20
  %v2129 = vpop.permute.xlu0 %2128
  %2130 = vrot.lane.b32.xlu0 %v752, 20
  %v2131 = vpop.permute.xlu0 %2130
  %2132 = vrot.lane.b32.xlu0 %v753, 20
  %v2133 = vpop.permute.xlu0 %2132
  %2134 = vrot.lane.b32.xlu0 %v754, 20
  %v2135 = vpop.permute.xlu0 %2134
  %2136 = vrot.lane.b32.xlu0 %v755, 20
  %v2137 = vpop.permute.xlu0 %2136
  %2138 = vrot.lane.b32.xlu0 %v756, 20
  %v2139 = vpop.permute.xlu0 %2138
  %2140 = vrot.lane.b32.xlu0 %v757, 20
  %v2141 = vpop.permute.xlu0 %2140
  %2142 = vrot.lane.b32.xlu0 %v758, 20
  %v2143 = vpop.permute.xlu0 %2142
  %2144 = vrot.lane.b32.xlu0 %v759, 20
  %v2145 = vpop.permute.xlu0 %2144
  %2146 = vrot.lane.b32.xlu0 %v760, 20
  %v2147 = vpop.permute.xlu0 %2146
  %2148 = vrot.lane.b32.xlu0 %v761, 20
  %v2149 = vpop.permute.xlu0 %2148
  %2150 = vrot.lane.b32.xlu0 %v762, 20
  %v2151 = vpop.permute.xlu0 %2150
  %2152 = vrot.lane.b32.xlu0 %v763, 20
  %v2153 = vpop.permute.xlu0 %2152
  %2154 = vrot.lane.b32.xlu0 %v764, 20
  %v2155 = vpop.permute.xlu0 %2154
  %2156 = vrot.lane.b32.xlu0 %v765, 20
  %v2157 = vpop.permute.xlu0 %2156
  %2158 = vrot.lane.b32.xlu0 %v766, 20
  %v2159 = vpop.permute.xlu0 %2158
  %2160 = vrot.lane.b32.xlu0 %v767, 20
  %v2161 = vpop.permute.xlu0 %2160
  %2162 = vrot.lane.b32.xlu0 %v768, 20
  %v2163 = vpop.permute.xlu0 %2162
  %2164 = vrot.lane.b32.xlu0 %v769, 20
  %v2165 = vpop.permute.xlu0 %2164
  %2166 = vrot.lane.b32.xlu0 %v770, 20
  %v2167 = vpop.permute.xlu0 %2166
  %2168 = vrot.lane.b32.xlu0 %v771, 20
  %v2169 = vpop.permute.xlu0 %2168
  %2170 = vrot.lane.b32.xlu0 %v772, 20
  %v2171 = vpop.permute.xlu0 %2170
  %2172 = vrot.lane.b32.xlu0 %v773, 20
  %v2173 = vpop.permute.xlu0 %2172
  %2174 = vrot.lane.b32.xlu0 %v774, 20
  %v2175 = vpop.permute.xlu0 %2174
  %2176 = vrot.lane.b32.xlu0 %v775, 20
  %v2177 = vpop.permute.xlu0 %2176
  %2178 = vrot.lane.b32.xlu0 %v776, 20
  %v2179 = vpop.permute.xlu0 %2178
  %2180 = vrot.lane.b32.xlu0 %v777, 20
  %v2181 = vpop.permute.xlu0 %2180
  %2182 = vrot.lane.b32.xlu0 %v778, 20
  %v2183 = vpop.permute.xlu0 %2182
  %2184 = vrot.lane.b32.xlu0 %v779, 20
  %v2185 = vpop.permute.xlu0 %2184
  %2186 = vrot.lane.b32.xlu0 %v780, 20
  %v2187 = vpop.permute.xlu0 %2186
  %2188 = vrot.lane.b32.xlu0 %v781, 20
  %v2189 = vpop.permute.xlu0 %2188
  %2190 = vrot.lane.b32.xlu0 %v782, 20
  %v2191 = vpop.permute.xlu0 %2190
  %2320 = vrot.lane.b32.xlu0 %v784, 24
  %v2321 = vpop.permute.xlu0 %2320
  %2322 = vrot.lane.b32.xlu0 %v785, 24
  %v2323 = vpop.permute.xlu0 %2322
  %2324 = vrot.lane.b32.xlu0 %v786, 24
  %v2325 = vpop.permute.xlu0 %2324
  %2326 = vrot.lane.b32.xlu0 %v787, 24
  %v2327 = vpop.permute.xlu0 %2326
  %2328 = vrot.lane.b32.xlu0 %v788, 24
  %v2329 = vpop.permute.xlu0 %2328
  %2330 = vrot.lane.b32.xlu0 %v789, 24
  %v2331 = vpop.permute.xlu0 %2330
  %2332 = vrot.lane.b32.xlu0 %v790, 24
  %v2333 = vpop.permute.xlu0 %2332
  %2334 = vrot.lane.b32.xlu0 %v791, 24
  %v2335 = vpop.permute.xlu0 %2334
  %2336 = vrot.lane.b32.xlu0 %v792, 24
  %v2337 = vpop.permute.xlu0 %2336
  %2338 = vrot.lane.b32.xlu0 %v793, 24
  %v2339 = vpop.permute.xlu0 %2338
  %2340 = vrot.lane.b32.xlu0 %v794, 24
  %v2341 = vpop.permute.xlu0 %2340
  %2342 = vrot.lane.b32.xlu0 %v795, 24
  %v2343 = vpop.permute.xlu0 %2342
  %2344 = vrot.lane.b32.xlu0 %v796, 24
  %v2345 = vpop.permute.xlu0 %2344
  %2346 = vrot.lane.b32.xlu0 %v797, 24
  %v2347 = vpop.permute.xlu0 %2346
  %2348 = vrot.lane.b32.xlu0 %v798, 24
  %v2349 = vpop.permute.xlu0 %2348
  %2350 = vrot.lane.b32.xlu0 %v799, 24
  %v2351 = vpop.permute.xlu0 %2350
  %2352 = vrot.lane.b32.xlu0 %v800, 24
  %v2353 = vpop.permute.xlu0 %2352
  %2354 = vrot.lane.b32.xlu0 %v801, 24
  %v2355 = vpop.permute.xlu0 %2354
  %2356 = vrot.lane.b32.xlu0 %v802, 24
  %v2357 = vpop.permute.xlu0 %2356
  %2358 = vrot.lane.b32.xlu0 %v803, 24
  %v2359 = vpop.permute.xlu0 %2358
  %2360 = vrot.lane.b32.xlu0 %v804, 24
  %v2361 = vpop.permute.xlu0 %2360
  %2362 = vrot.lane.b32.xlu0 %v805, 24
  %v2363 = vpop.permute.xlu0 %2362
  %2364 = vrot.lane.b32.xlu0 %v806, 24
  %v2365 = vpop.permute.xlu0 %2364
  %2366 = vrot.lane.b32.xlu0 %v807, 24
  %v2367 = vpop.permute.xlu0 %2366
  %2368 = vrot.lane.b32.xlu0 %v808, 24
  %v2369 = vpop.permute.xlu0 %2368
  %2370 = vrot.lane.b32.xlu0 %v809, 24
  %v2371 = vpop.permute.xlu0 %2370
  %2372 = vrot.lane.b32.xlu0 %v810, 24
  %v2373 = vpop.permute.xlu0 %2372
  %2374 = vrot.lane.b32.xlu0 %v811, 24
  %v2375 = vpop.permute.xlu0 %2374
  %2376 = vrot.lane.b32.xlu0 %v812, 24
  %v2377 = vpop.permute.xlu0 %2376
  %2378 = vrot.lane.b32.xlu0 %v813, 24
  %v2379 = vpop.permute.xlu0 %2378
  %2380 = vrot.lane.b32.xlu0 %v814, 24
  %v2381 = vpop.permute.xlu0 %2380
  %2382 = vrot.lane.b32.xlu0 %v815, 24
  %v2383 = vpop.permute.xlu0 %2382
  %2384 = vrot.lane.b32.xlu0 %v816, 24
  %v2385 = vpop.permute.xlu0 %2384
  %2386 = vrot.lane.b32.xlu0 %v817, 24
  %v2387 = vpop.permute.xlu0 %2386
  %2388 = vrot.lane.b32.xlu0 %v818, 24
  %v2389 = vpop.permute.xlu0 %2388
  %2390 = vrot.lane.b32.xlu0 %v819, 24
  %v2391 = vpop.permute.xlu0 %2390
  %2392 = vrot.lane.b32.xlu0 %v820, 24
  %v2393 = vpop.permute.xlu0 %2392
  %2394 = vrot.lane.b32.xlu0 %v821, 24
  %v2395 = vpop.permute.xlu0 %2394
  %2396 = vrot.lane.b32.xlu0 %v822, 24
  %v2397 = vpop.permute.xlu0 %2396
  %2398 = vrot.lane.b32.xlu0 %v823, 24
  %v2399 = vpop.permute.xlu0 %2398
  %2400 = vrot.lane.b32.xlu0 %v824, 24
  %v2401 = vpop.permute.xlu0 %2400
  %2402 = vrot.lane.b32.xlu0 %v825, 24
  %v2403 = vpop.permute.xlu0 %2402
  %2404 = vrot.lane.b32.xlu0 %v826, 24
  %v2405 = vpop.permute.xlu0 %2404
  %2406 = vrot.lane.b32.xlu0 %v827, 24
  %v2407 = vpop.permute.xlu0 %2406
  %2408 = vrot.lane.b32.xlu0 %v828, 24
  %v2409 = vpop.permute.xlu0 %2408
  %2410 = vrot.lane.b32.xlu0 %v829, 24
  %v2411 = vpop.permute.xlu0 %2410
  %2412 = vrot.lane.b32.xlu0 %v830, 24
  %v2413 = vpop.permute.xlu0 %2412
  %2414 = vrot.lane.b32.xlu0 %v831, 24
  %v2415 = vpop.permute.xlu0 %2414
  %2416 = vrot.lane.b32.xlu0 %v832, 24
  %v2417 = vpop.permute.xlu0 %2416
  %2418 = vrot.lane.b32.xlu0 %v833, 24
  %v2419 = vpop.permute.xlu0 %2418
  %2420 = vrot.lane.b32.xlu0 %v834, 24
  %v2421 = vpop.permute.xlu0 %2420
  %2422 = vrot.lane.b32.xlu0 %v835, 24
  %v2423 = vpop.permute.xlu0 %2422
  %2424 = vrot.lane.b32.xlu0 %v836, 24
  %v2425 = vpop.permute.xlu0 %2424
  %2426 = vrot.lane.b32.xlu0 %v837, 24
  %v2427 = vpop.permute.xlu0 %2426
  %2428 = vrot.lane.b32.xlu0 %v838, 24
  %v2429 = vpop.permute.xlu0 %2428
  %2430 = vrot.lane.b32.xlu0 %v839, 24
  %v2431 = vpop.permute.xlu0 %2430
  %2432 = vrot.lane.b32.xlu0 %v840, 24
  %v2433 = vpop.permute.xlu0 %2432
  %2434 = vrot.lane.b32.xlu0 %v841, 24
  %v2435 = vpop.permute.xlu0 %2434
  %2436 = vrot.lane.b32.xlu0 %v842, 24
  %v2437 = vpop.permute.xlu0 %2436
  %2438 = vrot.lane.b32.xlu0 %v843, 24
  %v2439 = vpop.permute.xlu0 %2438
  %2440 = vrot.lane.b32.xlu0 %v844, 24
  %v2441 = vpop.permute.xlu0 %2440
  %2442 = vrot.lane.b32.xlu0 %v845, 24
  %v2443 = vpop.permute.xlu0 %2442
  %2444 = vrot.lane.b32.xlu0 %v846, 24
  %v2445 = vpop.permute.xlu0 %2444
  %2446 = vrot.lane.b32.xlu0 %v847, 24
  %v2447 = vpop.permute.xlu0 %2446
  %2576 = vrot.lane.b32.xlu0 %v848, 28
  %v2577 = vpop.permute.xlu0 %2576
  %2578 = vrot.lane.b32.xlu0 %v849, 28
  %v2579 = vpop.permute.xlu0 %2578
  %2580 = vrot.lane.b32.xlu0 %v850, 28
  %v2581 = vpop.permute.xlu0 %2580
  %2582 = vrot.lane.b32.xlu0 %v851, 28
  %v2583 = vpop.permute.xlu0 %2582
  %2584 = vrot.lane.b32.xlu0 %v852, 28
  %v2585 = vpop.permute.xlu0 %2584
  %2586 = vrot.lane.b32.xlu0 %v853, 28
  %v2587 = vpop.permute.xlu0 %2586
  %2588 = vrot.lane.b32.xlu0 %v854, 28
  %v2589 = vpop.permute.xlu0 %2588
  %2590 = vrot.lane.b32.xlu0 %v855, 28
  %v2591 = vpop.permute.xlu0 %2590
  %2592 = vrot.lane.b32.xlu0 %v856, 28
  %v2593 = vpop.permute.xlu0 %2592
  %2594 = vrot.lane.b32.xlu0 %v857, 28
  %v2595 = vpop.permute.xlu0 %2594
  %2596 = vrot.lane.b32.xlu0 %v858, 28
  %v2597 = vpop.permute.xlu0 %2596
  %2598 = vrot.lane.b32.xlu0 %v859, 28
  %v2599 = vpop.permute.xlu0 %2598
  %2600 = vrot.lane.b32.xlu0 %v860, 28
  %v2601 = vpop.permute.xlu0 %2600
  %2602 = vrot.lane.b32.xlu0 %v861, 28
  %v2603 = vpop.permute.xlu0 %2602
  %2604 = vrot.lane.b32.xlu0 %v862, 28
  %v2605 = vpop.permute.xlu0 %2604
  %2606 = vrot.lane.b32.xlu0 %v863, 28
  %v2607 = vpop.permute.xlu0 %2606
  %2608 = vrot.lane.b32.xlu0 %v864, 28
  %v2609 = vpop.permute.xlu0 %2608
  %2610 = vrot.lane.b32.xlu0 %v865, 28
  %v2611 = vpop.permute.xlu0 %2610
  %2612 = vrot.lane.b32.xlu0 %v866, 28
  %v2613 = vpop.permute.xlu0 %2612
  %2614 = vrot.lane.b32.xlu0 %v867, 28
  %v2615 = vpop.permute.xlu0 %2614
  %2616 = vrot.lane.b32.xlu0 %v868, 28
  %v2617 = vpop.permute.xlu0 %2616
  %2618 = vrot.lane.b32.xlu0 %v869, 28
  %v2619 = vpop.permute.xlu0 %2618
  %2620 = vrot.lane.b32.xlu0 %v870, 28
  %v2621 = vpop.permute.xlu0 %2620
  %2622 = vrot.lane.b32.xlu0 %v871, 28
  %v2623 = vpop.permute.xlu0 %2622
  %2624 = vrot.lane.b32.xlu0 %v872, 28
  %v2625 = vpop.permute.xlu0 %2624
  %2626 = vrot.lane.b32.xlu0 %v873, 28
  %v2627 = vpop.permute.xlu0 %2626
  %2628 = vrot.lane.b32.xlu0 %v874, 28
  %v2629 = vpop.permute.xlu0 %2628
  %2630 = vrot.lane.b32.xlu0 %v875, 28
  %v2631 = vpop.permute.xlu0 %2630
  %2632 = vrot.lane.b32.xlu0 %v876, 28
  %v2633 = vpop.permute.xlu0 %2632
  %2634 = vrot.lane.b32.xlu0 %v877, 28
  %v2635 = vpop.permute.xlu0 %2634
  %2636 = vrot.lane.b32.xlu0 %v878, 28
  %v2637 = vpop.permute.xlu0 %2636
  %2638 = vrot.lane.b32.xlu0 %v879, 28
  %v2639 = vpop.permute.xlu0 %2638
  %2640 = vrot.lane.b32.xlu0 %v880, 28
  %v2641 = vpop.permute.xlu0 %2640
  %2642 = vrot.lane.b32.xlu0 %v881, 28
  %v2643 = vpop.permute.xlu0 %2642
  %2644 = vrot.lane.b32.xlu0 %v882, 28
  %v2645 = vpop.permute.xlu0 %2644
  %2646 = vrot.lane.b32.xlu0 %v883, 28
  %v2647 = vpop.permute.xlu0 %2646
  %2648 = vrot.lane.b32.xlu0 %v884, 28
  %v2649 = vpop.permute.xlu0 %2648
  %2650 = vrot.lane.b32.xlu0 %v885, 28
  %v2651 = vpop.permute.xlu0 %2650
  %2652 = vrot.lane.b32.xlu0 %v886, 28
  %v2653 = vpop.permute.xlu0 %2652
  %2654 = vrot.lane.b32.xlu0 %v887, 28
  %v2655 = vpop.permute.xlu0 %2654
  %2656 = vrot.lane.b32.xlu0 %v888, 28
  %v2657 = vpop.permute.xlu0 %2656
  %2658 = vrot.lane.b32.xlu0 %v889, 28
  %v2659 = vpop.permute.xlu0 %2658
  %2660 = vrot.lane.b32.xlu0 %v890, 28
  %v2661 = vpop.permute.xlu0 %2660
  %2662 = vrot.lane.b32.xlu0 %v891, 28
  %v2663 = vpop.permute.xlu0 %2662
  %2664 = vrot.lane.b32.xlu0 %v892, 28
  %v2665 = vpop.permute.xlu0 %2664
  %2666 = vrot.lane.b32.xlu0 %v893, 28
  %v2667 = vpop.permute.xlu0 %2666
  %2668 = vrot.lane.b32.xlu0 %v894, 28
  %v2669 = vpop.permute.xlu0 %2668
  %2670 = vrot.lane.b32.xlu0 %v895, 28
  %v2671 = vpop.permute.xlu0 %2670
  %2672 = vrot.lane.b32.xlu0 %v896, 28
  %v2673 = vpop.permute.xlu0 %2672
  %2674 = vrot.lane.b32.xlu0 %v897, 28
  %v2675 = vpop.permute.xlu0 %2674
  %2676 = vrot.lane.b32.xlu0 %v898, 28
  %v2677 = vpop.permute.xlu0 %2676
  %2678 = vrot.lane.b32.xlu0 %v899, 28
  %v2679 = vpop.permute.xlu0 %2678
  %2680 = vrot.lane.b32.xlu0 %v900, 28
  %v2681 = vpop.permute.xlu0 %2680
  %2682 = vrot.lane.b32.xlu0 %v901, 28
  %v2683 = vpop.permute.xlu0 %2682
  %2684 = vrot.lane.b32.xlu0 %v902, 28
  %v2685 = vpop.permute.xlu0 %2684
  %2686 = vrot.lane.b32.xlu0 %v903, 28
  %v2687 = vpop.permute.xlu0 %2686
  %2688 = vrot.lane.b32.xlu0 %v904, 28
  %v2689 = vpop.permute.xlu0 %2688
  %2690 = vrot.lane.b32.xlu0 %v905, 28
  %v2691 = vpop.permute.xlu0 %2690
  %2692 = vrot.lane.b32.xlu0 %v906, 28
  %v2693 = vpop.permute.xlu0 %2692
  %2694 = vrot.lane.b32.xlu0 %v907, 28
  %v2695 = vpop.permute.xlu0 %2694
  %2696 = vrot.lane.b32.xlu0 %v908, 28
  %v2697 = vpop.permute.xlu0 %2696
  %2698 = vrot.lane.b32.xlu0 %v909, 28
  %v2699 = vpop.permute.xlu0 %2698
  %2700 = vrot.lane.b32.xlu0 %v910, 28
  %v2701 = vpop.permute.xlu0 %2700
  %2702 = vrot.lane.b32.xlu0 %v911, 28
  %v2703 = vpop.permute.xlu0 %2702
  %2832 = vrot.lane.b32.xlu0 %v912, 32
  %v2833 = vpop.permute.xlu0 %2832
  %2834 = vrot.lane.b32.xlu0 %v913, 32
  %v2835 = vpop.permute.xlu0 %2834
  %2836 = vrot.lane.b32.xlu0 %v914, 32
  %v2837 = vpop.permute.xlu0 %2836
  %2838 = vrot.lane.b32.xlu0 %v915, 32
  %v2839 = vpop.permute.xlu0 %2838
  %2840 = vrot.lane.b32.xlu0 %v916, 32
  %v2841 = vpop.permute.xlu0 %2840
  %2842 = vrot.lane.b32.xlu0 %v917, 32
  %v2843 = vpop.permute.xlu0 %2842
  %2844 = vrot.lane.b32.xlu0 %v918, 32
  %v2845 = vpop.permute.xlu0 %2844
  %2846 = vrot.lane.b32.xlu0 %v919, 32
  %v2847 = vpop.permute.xlu0 %2846
  %2848 = vrot.lane.b32.xlu0 %v920, 32
  %v2849 = vpop.permute.xlu0 %2848
  %2850 = vrot.lane.b32.xlu0 %v921, 32
  %v2851 = vpop.permute.xlu0 %2850
  %2852 = vrot.lane.b32.xlu0 %v922, 32
  %v2853 = vpop.permute.xlu0 %2852
  %2854 = vrot.lane.b32.xlu0 %v923, 32
  %v2855 = vpop.permute.xlu0 %2854
  %2856 = vrot.lane.b32.xlu0 %v924, 32
  %v2857 = vpop.permute.xlu0 %2856
  %2858 = vrot.lane.b32.xlu0 %v925, 32
  %v2859 = vpop.permute.xlu0 %2858
  %2860 = vrot.lane.b32.xlu0 %v926, 32
  %v2861 = vpop.permute.xlu0 %2860
  %2862 = vrot.lane.b32.xlu0 %v927, 32
  %v2863 = vpop.permute.xlu0 %2862
  %2864 = vrot.lane.b32.xlu0 %v928, 32
  %v2865 = vpop.permute.xlu0 %2864
  %2866 = vrot.lane.b32.xlu0 %v929, 32
  %v2867 = vpop.permute.xlu0 %2866
  %2868 = vrot.lane.b32.xlu0 %v930, 32
  %v2869 = vpop.permute.xlu0 %2868
  %2870 = vrot.lane.b32.xlu0 %v931, 32
  %v2871 = vpop.permute.xlu0 %2870
  %2872 = vrot.lane.b32.xlu0 %v932, 32
  %v2873 = vpop.permute.xlu0 %2872
  %2874 = vrot.lane.b32.xlu0 %v933, 32
  %v2875 = vpop.permute.xlu0 %2874
  %2876 = vrot.lane.b32.xlu0 %v934, 32
  %v2877 = vpop.permute.xlu0 %2876
  %2878 = vrot.lane.b32.xlu0 %v935, 32
  %v2879 = vpop.permute.xlu0 %2878
  %2880 = vrot.lane.b32.xlu0 %v936, 32
  %v2881 = vpop.permute.xlu0 %2880
  %2882 = vrot.lane.b32.xlu0 %v937, 32
  %v2883 = vpop.permute.xlu0 %2882
  %2884 = vrot.lane.b32.xlu0 %v938, 32
  %v2885 = vpop.permute.xlu0 %2884
  %2886 = vrot.lane.b32.xlu0 %v939, 32
  %v2887 = vpop.permute.xlu0 %2886
  %2888 = vrot.lane.b32.xlu0 %v940, 32
  %v2889 = vpop.permute.xlu0 %2888
  %2890 = vrot.lane.b32.xlu0 %v941, 32
  %v2891 = vpop.permute.xlu0 %2890
  %2892 = vrot.lane.b32.xlu0 %v942, 32
  %v2893 = vpop.permute.xlu0 %2892
  %2894 = vrot.lane.b32.xlu0 %v943, 32
  %v2895 = vpop.permute.xlu0 %2894
  %2896 = vrot.lane.b32.xlu0 %v944, 32
  %v2897 = vpop.permute.xlu0 %2896
  %2898 = vrot.lane.b32.xlu0 %v945, 32
  %v2899 = vpop.permute.xlu0 %2898
  %2900 = vrot.lane.b32.xlu0 %v946, 32
  %v2901 = vpop.permute.xlu0 %2900
  %2902 = vrot.lane.b32.xlu0 %v947, 32
  %v2903 = vpop.permute.xlu0 %2902
  %2904 = vrot.lane.b32.xlu0 %v948, 32
  %v2905 = vpop.permute.xlu0 %2904
  %2906 = vrot.lane.b32.xlu0 %v949, 32
  %v2907 = vpop.permute.xlu0 %2906
  %2908 = vrot.lane.b32.xlu0 %v950, 32
  %v2909 = vpop.permute.xlu0 %2908
  %2910 = vrot.lane.b32.xlu0 %v951, 32
  %v2911 = vpop.permute.xlu0 %2910
  %2912 = vrot.lane.b32.xlu0 %v952, 32
  %v2913 = vpop.permute.xlu0 %2912
  %2914 = vrot.lane.b32.xlu0 %v953, 32
  %v2915 = vpop.permute.xlu0 %2914
  %2916 = vrot.lane.b32.xlu0 %v954, 32
  %v2917 = vpop.permute.xlu0 %2916
  %2918 = vrot.lane.b32.xlu0 %v955, 32
  %v2919 = vpop.permute.xlu0 %2918
  %2920 = vrot.lane.b32.xlu0 %v956, 32
  %v2921 = vpop.permute.xlu0 %2920
  %2922 = vrot.lane.b32.xlu0 %v957, 32
  %v2923 = vpop.permute.xlu0 %2922
  %2924 = vrot.lane.b32.xlu0 %v958, 32
  %v2925 = vpop.permute.xlu0 %2924
  %2926 = vrot.lane.b32.xlu0 %v959, 32
  %v2927 = vpop.permute.xlu0 %2926
  %2928 = vrot.lane.b32.xlu0 %v960, 32
  %v2929 = vpop.permute.xlu0 %2928
  %2930 = vrot.lane.b32.xlu0 %v961, 32
  %v2931 = vpop.permute.xlu0 %2930
  %2932 = vrot.lane.b32.xlu0 %v962, 32
  %v2933 = vpop.permute.xlu0 %2932
  %2934 = vrot.lane.b32.xlu0 %v963, 32
  %v2935 = vpop.permute.xlu0 %2934
  %2936 = vrot.lane.b32.xlu0 %v964, 32
  %v2937 = vpop.permute.xlu0 %2936
  %2938 = vrot.lane.b32.xlu0 %v965, 32
  %v2939 = vpop.permute.xlu0 %2938
  %2940 = vrot.lane.b32.xlu0 %v966, 32
  %v2941 = vpop.permute.xlu0 %2940
  %2942 = vrot.lane.b32.xlu0 %v967, 32
  %v2943 = vpop.permute.xlu0 %2942
  %2944 = vrot.lane.b32.xlu0 %v968, 32
  %v2945 = vpop.permute.xlu0 %2944
  %2946 = vrot.lane.b32.xlu0 %v969, 32
  %v2947 = vpop.permute.xlu0 %2946
  %2948 = vrot.lane.b32.xlu0 %v970, 32
  %v2949 = vpop.permute.xlu0 %2948
  %2950 = vrot.lane.b32.xlu0 %v971, 32
  %v2951 = vpop.permute.xlu0 %2950
  %2952 = vrot.lane.b32.xlu0 %v972, 32
  %v2953 = vpop.permute.xlu0 %2952
  %2954 = vrot.lane.b32.xlu0 %v973, 32
  %v2955 = vpop.permute.xlu0 %2954
  %2956 = vrot.lane.b32.xlu0 %v974, 32
  %v2957 = vpop.permute.xlu0 %2956
  %2958 = vrot.lane.b32.xlu0 %v975, 32
  %v2959 = vpop.permute.xlu0 %2958
  %v3024 = vsel %vm49, %v399, %v1041
  %v3025 = vsel %vm49, %v400, %v1043
  %v3026 = vsel %vm49, %v401, %v1045
  %v3027 = vsel %vm49, %v402, %v1047
  %v3028 = vsel %vm49, %v403, %v1049
  %v3029 = vsel %vm49, %v404, %v1051
  %v3030 = vsel %vm49, %v405, %v1053
  %v3031 = vsel %vm49, %v406, %v1055
  %v3032 = vsel %vm49, %v407, %v1057
  %v3033 = vsel %vm49, %v408, %v1059
  %v3034 = vsel %vm49, %v409, %v1061
  %v3035 = vsel %vm49, %v410, %v1063
  %v3036 = vsel %vm49, %v411, %v1065
  %v3037 = vsel %vm49, %v412, %v1067
  %v3038 = vsel %vm49, %v413, %v1069
  %v3039 = vsel %vm49, %v414, %v1071
  %v3040 = vsel %vm49, %v415, %v1073
  %v3041 = vsel %vm49, %v416, %v1075
  %v3042 = vsel %vm49, %v417, %v1077
  %v3043 = vsel %vm49, %v418, %v1079
  %v3044 = vsel %vm49, %v419, %v1081
  %v3045 = vsel %vm49, %v420, %v1083
  %v3046 = vsel %vm49, %v421, %v1085
  %v3047 = vsel %vm49, %v422, %v1087
  %v3048 = vsel %vm49, %v423, %v1089
  %v3049 = vsel %vm49, %v424, %v1091
  %v3050 = vsel %vm49, %v425, %v1093
  %v3051 = vsel %vm49, %v426, %v1095
  %v3052 = vsel %vm49, %v427, %v1097
  %v3053 = vsel %vm49, %v428, %v1099
  %v3054 = vsel %vm49, %v429, %v1101
  %v3055 = vsel %vm49, %v430, %v1103
  %v3056 = vsel %vm49, %v431, %v1105
  %v3057 = vsel %vm49, %v432, %v1107
  %v3058 = vsel %vm49, %v433, %v1109
  %v3059 = vsel %vm49, %v434, %v1111
  %v3060 = vsel %vm49, %v435, %v1113
  %v3061 = vsel %vm49, %v436, %v1115
  %v3062 = vsel %vm49, %v437, %v1117
  %v3063 = vsel %vm49, %v438, %v1119
  %v3064 = vsel %vm49, %v439, %v1121
  %v3065 = vsel %vm49, %v440, %v1123
  %v3066 = vsel %vm49, %v441, %v1125
  %v3067 = vsel %vm49, %v442, %v1127
  %v3068 = vsel %vm49, %v443, %v1129
  %v3069 = vsel %vm49, %v444, %v1131
  %v3070 = vsel %vm49, %v445, %v1133
  %v3071 = vsel %vm49, %v446, %v1135
  %v3072 = vsel %vm49, %v447, %v1137
  %v3073 = vsel %vm49, %v448, %v1139
  %v3074 = vsel %vm49, %v449, %v1141
  %v3075 = vsel %vm49, %v450, %v1143
  %v3076 = vsel %vm49, %v451, %v1145
  %v3077 = vsel %vm49, %v452, %v1147
  %v3078 = vsel %vm49, %v453, %v1149
  %v3079 = vsel %vm49, %v454, %v1151
  %v3080 = vsel %vm49, %v455, %v1153
  %v3081 = vsel %vm49, %v456, %v1155
  %v3082 = vsel %vm49, %v457, %v1157
  %v3083 = vsel %vm49, %v458, %v1159
  %v3084 = vsel %vm49, %v459, %v1161
  %v3085 = vsel %vm49, %v460, %v1163
  %v3086 = vsel %vm49, %v461, %v1165
  %v3087 = vsel %vm49, %v462, %v1167
  %vm3088 = vcmask 64512
  %v3089 = vsel %vm3088, %v3024, %v1297
  %v3090 = vsel %vm3088, %v3025, %v1299
  %v3091 = vsel %vm3088, %v3026, %v1301
  %v3092 = vsel %vm3088, %v3027, %v1303
  %v3093 = vsel %vm3088, %v3028, %v1305
  %v3094 = vsel %vm3088, %v3029, %v1307
  %v3095 = vsel %vm3088, %v3030, %v1309
  %v3096 = vsel %vm3088, %v3031, %v1311
  %v3097 = vsel %vm3088, %v3032, %v1313
  %v3098 = vsel %vm3088, %v3033, %v1315
  %v3099 = vsel %vm3088, %v3034, %v1317
  %v3100 = vsel %vm3088, %v3035, %v1319
  %v3101 = vsel %vm3088, %v3036, %v1321
  %v3102 = vsel %vm3088, %v3037, %v1323
  %v3103 = vsel %vm3088, %v3038, %v1325
  %v3104 = vsel %vm3088, %v3039, %v1327
  %v3105 = vsel %vm3088, %v3040, %v1329
  %v3106 = vsel %vm3088, %v3041, %v1331
  %v3107 = vsel %vm3088, %v3042, %v1333
  %v3108 = vsel %vm3088, %v3043, %v1335
  %v3109 = vsel %vm3088, %v3044, %v1337
  %v3110 = vsel %vm3088, %v3045, %v1339
  %v3111 = vsel %vm3088, %v3046, %v1341
  %v3112 = vsel %vm3088, %v3047, %v1343
  %v3113 = vsel %vm3088, %v3048, %v1345
  %v3114 = vsel %vm3088, %v3049, %v1347
  %v3115 = vsel %vm3088, %v3050, %v1349
  %v3116 = vsel %vm3088, %v3051, %v1351
  %v3117 = vsel %vm3088, %v3052, %v1353
  %v3118 = vsel %vm3088, %v3053, %v1355
  %v3119 = vsel %vm3088, %v3054, %v1357
  %v3120 = vsel %vm3088, %v3055, %v1359
  %v3121 = vsel %vm3088, %v3056, %v1361
  %v3122 = vsel %vm3088, %v3057, %v1363
  %v3123 = vsel %vm3088, %v3058, %v1365
  %v3124 = vsel %vm3088, %v3059, %v1367
  %v3125 = vsel %vm3088, %v3060, %v1369
  %v3126 = vsel %vm3088, %v3061, %v1371
  %v3127 = vsel %vm3088, %v3062, %v1373
  %v3128 = vsel %vm3088, %v3063, %v1375
  %v3129 = vsel %vm3088, %v3064, %v1377
  %v3130 = vsel %vm3088, %v3065, %v1379
  %v3131 = vsel %vm3088, %v3066, %v1381
  %v3132 = vsel %vm3088, %v3067, %v1383
  %v3133 = vsel %vm3088, %v3068, %v1385
  %v3134 = vsel %vm3088, %v3069, %v1387
  %v3135 = vsel %vm3088, %v3070, %v1389
  %v3136 = vsel %vm3088, %v3071, %v1391
  %v3137 = vsel %vm3088, %v3072, %v1393
  %v3138 = vsel %vm3088, %v3073, %v1395
  %v3139 = vsel %vm3088, %v3074, %v1397
  %v3140 = vsel %vm3088, %v3075, %v1399
  %v3141 = vsel %vm3088, %v3076, %v1401
  %v3142 = vsel %vm3088, %v3077, %v1403
  %v3143 = vsel %vm3088, %v3078, %v1405
  %v3144 = vsel %vm3088, %v3079, %v1407
  %v3145 = vsel %vm3088, %v3080, %v1409
  %v3146 = vsel %vm3088, %v3081, %v1411
  %v3147 = vsel %vm3088, %v3082, %v1413
  %v3148 = vsel %vm3088, %v3083, %v1415
  %v3149 = vsel %vm3088, %v3084, %v1417
  %v3150 = vsel %vm3088, %v3085, %v1419
  %v3151 = vsel %vm3088, %v3086, %v1421
  %v3152 = vsel %vm3088, %v3087, %v1423
  %vm3153 = vcmask 97280
  %v3154 = vsel %vm3153, %v3089, %v1553
  %v3155 = vsel %vm3153, %v3090, %v1555
  %v3156 = vsel %vm3153, %v3091, %v1557
  %v3157 = vsel %vm3153, %v3092, %v1559
  %v3158 = vsel %vm3153, %v3093, %v1561
  %v3159 = vsel %vm3153, %v3094, %v1563
  %v3160 = vsel %vm3153, %v3095, %v1565
  %v3161 = vsel %vm3153, %v3096, %v1567
  %v3162 = vsel %vm3153, %v3097, %v1569
  %v3163 = vsel %vm3153, %v3098, %v1571
  %v3164 = vsel %vm3153, %v3099, %v1573
  %v3165 = vsel %vm3153, %v3100, %v1575
  %v3166 = vsel %vm3153, %v3101, %v1577
  %v3167 = vsel %vm3153, %v3102, %v1579
  %v3168 = vsel %vm3153, %v3103, %v1581
  %v3169 = vsel %vm3153, %v3104, %v1583
  %v3170 = vsel %vm3153, %v3105, %v1585
  %v3171 = vsel %vm3153, %v3106, %v1587
  %v3172 = vsel %vm3153, %v3107, %v1589
  %v3173 = vsel %vm3153, %v3108, %v1591
  %v3174 = vsel %vm3153, %v3109, %v1593
  %v3175 = vsel %vm3153, %v3110, %v1595
  %v3176 = vsel %vm3153, %v3111, %v1597
  %v3177 = vsel %vm3153, %v3112, %v1599
  %v3178 = vsel %vm3153, %v3113, %v1601
  %v3179 = vsel %vm3153, %v3114, %v1603
  %v3180 = vsel %vm3153, %v3115, %v1605
  %v3181 = vsel %vm3153, %v3116, %v1607
  %v3182 = vsel %vm3153, %v3117, %v1609
  %v3183 = vsel %vm3153, %v3118, %v1611
  %v3184 = vsel %vm3153, %v3119, %v1613
  %v3185 = vsel %vm3153, %v3120, %v1615
  %v3186 = vsel %vm3153, %v3121, %v1617
  %v3187 = vsel %vm3153, %v3122, %v1619
  %v3188 = vsel %vm3153, %v3123, %v1621
  %v3189 = vsel %vm3153, %v3124, %v1623
  %v3190 = vsel %vm3153, %v3125, %v1625
  %v3191 = vsel %vm3153, %v3126, %v1627
  %v3192 = vsel %vm3153, %v3127, %v1629
  %v3193 = vsel %vm3153, %v3128, %v1631
  %v3194 = vsel %vm3153, %v3129, %v1633
  %v3195 = vsel %vm3153, %v3130, %v1635
  %v3196 = vsel %vm3153, %v3131, %v1637
  %v3197 = vsel %vm3153, %v3132, %v1639
  %v3198 = vsel %vm3153, %v3133, %v1641
  %v3199 = vsel %vm3153, %v3134, %v1643
  %v3200 = vsel %vm3153, %v3135, %v1645
  %v3201 = vsel %vm3153, %v3136, %v1647
  %v3202 = vsel %vm3153, %v3137, %v1649
  %v3203 = vsel %vm3153, %v3138, %v1651
  %v3204 = vsel %vm3153, %v3139, %v1653
  %v3205 = vsel %vm3153, %v3140, %v1655
  %v3206 = vsel %vm3153, %v3141, %v1657
  %v3207 = vsel %vm3153, %v3142, %v1659
  %v3208 = vsel %vm3153, %v3143, %v1661
  %v3209 = vsel %vm3153, %v3144, %v1663
  %v3210 = vsel %vm3153, %v3145, %v1665
  %v3211 = vsel %vm3153, %v3146, %v1667
  %v3212 = vsel %vm3153, %v3147, %v1669
  %v3213 = vsel %vm3153, %v3148, %v1671
  %v3214 = vsel %vm3153, %v3149, %v1673
  %v3215 = vsel %vm3153, %v3150, %v1675
  %v3216 = vsel %vm3153, %v3151, %v1677
  %v3217 = vsel %vm3153, %v3152, %v1679
  %vm3218 = vcmask 130048
  %v3219 = vsel %vm3218, %v3154, %v1809
  %v3220 = vsel %vm3218, %v3155, %v1811
  %v3221 = vsel %vm3218, %v3156, %v1813
  %v3222 = vsel %vm3218, %v3157, %v1815
  %v3223 = vsel %vm3218, %v3158, %v1817
  %v3224 = vsel %vm3218, %v3159, %v1819
  %v3225 = vsel %vm3218, %v3160, %v1821
  %v3226 = vsel %vm3218, %v3161, %v1823
  %v3227 = vsel %vm3218, %v3162, %v1825
  %v3228 = vsel %vm3218, %v3163, %v1827
  %v3229 = vsel %vm3218, %v3164, %v1829
  %v3230 = vsel %vm3218, %v3165, %v1831
  %v3231 = vsel %vm3218, %v3166, %v1833
  %v3232 = vsel %vm3218, %v3167, %v1835
  %v3233 = vsel %vm3218, %v3168, %v1837
  %v3234 = vsel %vm3218, %v3169, %v1839
  %v3235 = vsel %vm3218, %v3170, %v1841
  %v3236 = vsel %vm3218, %v3171, %v1843
  %v3237 = vsel %vm3218, %v3172, %v1845
  %v3238 = vsel %vm3218, %v3173, %v1847
  %v3239 = vsel %vm3218, %v3174, %v1849
  %v3240 = vsel %vm3218, %v3175, %v1851
  %v3241 = vsel %vm3218, %v3176, %v1853
  %v3242 = vsel %vm3218, %v3177, %v1855
  %v3243 = vsel %vm3218, %v3178, %v1857
  %v3244 = vsel %vm3218, %v3179, %v1859
  %v3245 = vsel %vm3218, %v3180, %v1861
  %v3246 = vsel %vm3218, %v3181, %v1863
  %v3247 = vsel %vm3218, %v3182, %v1865
  %v3248 = vsel %vm3218, %v3183, %v1867
  %v3249 = vsel %vm3218, %v3184, %v1869
  %v3250 = vsel %vm3218, %v3185, %v1871
  %v3251 = vsel %vm3218, %v3186, %v1873
  %v3252 = vsel %vm3218, %v3187, %v1875
  %v3253 = vsel %vm3218, %v3188, %v1877
  %v3254 = vsel %vm3218, %v3189, %v1879
  %v3255 = vsel %vm3218, %v3190, %v1881
  %v3256 = vsel %vm3218, %v3191, %v1883
  %v3257 = vsel %vm3218, %v3192, %v1885
  %v3258 = vsel %vm3218, %v3193, %v1887
  %v3259 = vsel %vm3218, %v3194, %v1889
  %v3260 = vsel %vm3218, %v3195, %v1891
  %v3261 = vsel %vm3218, %v3196, %v1893
  %v3262 = vsel %vm3218, %v3197, %v1895
  %v3263 = vsel %vm3218, %v3198, %v1897
  %v3264 = vsel %vm3218, %v3199, %v1899
  %v3265 = vsel %vm3218, %v3200, %v1901
  %v3266 = vsel %vm3218, %v3201, %v1903
  %v3267 = vsel %vm3218, %v3202, %v1905
  %v3268 = vsel %vm3218, %v3203, %v1907
  %v3269 = vsel %vm3218, %v3204, %v1909
  %v3270 = vsel %vm3218, %v3205, %v1911
  %v3271 = vsel %vm3218, %v3206, %v1913
  %v3272 = vsel %vm3218, %v3207, %v1915
  %v3273 = vsel %vm3218, %v3208, %v1917
  %v3274 = vsel %vm3218, %v3209, %v1919
  %v3275 = vsel %vm3218, %v3210, %v1921
  %v3276 = vsel %vm3218, %v3211, %v1923
  %v3277 = vsel %vm3218, %v3212, %v1925
  %v3278 = vsel %vm3218, %v3213, %v1927
  %v3279 = vsel %vm3218, %v3214, %v1929
  %v3280 = vsel %vm3218, %v3215, %v1931
  %v3281 = vsel %vm3218, %v3216, %v1933
  %v3282 = vsel %vm3218, %v3217, %v1935
  %vm3283 = vcmask 162816
  %v3284 = vsel %vm3283, %v3219, %v2065
  %v3285 = vsel %vm3283, %v3220, %v2067
  %v3286 = vsel %vm3283, %v3221, %v2069
  %v3287 = vsel %vm3283, %v3222, %v2071
  %v3288 = vsel %vm3283, %v3223, %v2073
  %v3289 = vsel %vm3283, %v3224, %v2075
  %v3290 = vsel %vm3283, %v3225, %v2077
  %v3291 = vsel %vm3283, %v3226, %v2079
  %v3292 = vsel %vm3283, %v3227, %v2081
  %v3293 = vsel %vm3283, %v3228, %v2083
  %v3294 = vsel %vm3283, %v3229, %v2085
  %v3295 = vsel %vm3283, %v3230, %v2087
  %v3296 = vsel %vm3283, %v3231, %v2089
  %v3297 = vsel %vm3283, %v3232, %v2091
  %v3298 = vsel %vm3283, %v3233, %v2093
  %v3299 = vsel %vm3283, %v3234, %v2095
  %v3300 = vsel %vm3283, %v3235, %v2097
  %v3301 = vsel %vm3283, %v3236, %v2099
  %v3302 = vsel %vm3283, %v3237, %v2101
  %v3303 = vsel %vm3283, %v3238, %v2103
  %v3304 = vsel %vm3283, %v3239, %v2105
  %v3305 = vsel %vm3283, %v3240, %v2107
  %v3306 = vsel %vm3283, %v3241, %v2109
  %v3307 = vsel %vm3283, %v3242, %v2111
  %v3308 = vsel %vm3283, %v3243, %v2113
  %v3309 = vsel %vm3283, %v3244, %v2115
  %v3310 = vsel %vm3283, %v3245, %v2117
  %v3311 = vsel %vm3283, %v3246, %v2119
  %v3312 = vsel %vm3283, %v3247, %v2121
  %v3313 = vsel %vm3283, %v3248, %v2123
  %v3314 = vsel %vm3283, %v3249, %v2125
  %v3315 = vsel %vm3283, %v3250, %v2127
  %v3316 = vsel %vm3283, %v3251, %v2129
  %v3317 = vsel %vm3283, %v3252, %v2131
  %v3318 = vsel %vm3283, %v3253, %v2133
  %v3319 = vsel %vm3283, %v3254, %v2135
  %v3320 = vsel %vm3283, %v3255, %v2137
  %v3321 = vsel %vm3283, %v3256, %v2139
  %v3322 = vsel %vm3283, %v3257, %v2141
  %v3323 = vsel %vm3283, %v3258, %v2143
  %v3324 = vsel %vm3283, %v3259, %v2145
  %v3325 = vsel %vm3283, %v3260, %v2147
  %v3326 = vsel %vm3283, %v3261, %v2149
  %v3327 = vsel %vm3283, %v3262, %v2151
  %v3328 = vsel %vm3283, %v3263, %v2153
  %v3329 = vsel %vm3283, %v3264, %v2155
  %v3330 = vsel %vm3283, %v3265, %v2157
  %v3331 = vsel %vm3283, %v3266, %v2159
  %v3332 = vsel %vm3283, %v3267, %v2161
  %v3333 = vsel %vm3283, %v3268, %v2163
  %v3334 = vsel %vm3283, %v3269, %v2165
  %v3335 = vsel %vm3283, %v3270, %v2167
  %v3336 = vsel %vm3283, %v3271, %v2169
  %v3337 = vsel %vm3283, %v3272, %v2171
  %v3338 = vsel %vm3283, %v3273, %v2173
  %v3339 = vsel %vm3283, %v3274, %v2175
  %v3340 = vsel %vm3283, %v3275, %v2177
  %v3341 = vsel %vm3283, %v3276, %v2179
  %v3342 = vsel %vm3283, %v3277, %v2181
  %v3343 = vsel %vm3283, %v3278, %v2183
  %v3344 = vsel %vm3283, %v3279, %v2185
  %v3345 = vsel %vm3283, %v3280, %v2187
  %v3346 = vsel %vm3283, %v3281, %v2189
  %v3347 = vsel %vm3283, %v3282, %v2191
  %vm3348 = vcmask 195584
  %v3349 = vsel %vm3348, %v3284, %v2321
  %v3350 = vsel %vm3348, %v3285, %v2323
  %v3351 = vsel %vm3348, %v3286, %v2325
  %v3352 = vsel %vm3348, %v3287, %v2327
  %v3353 = vsel %vm3348, %v3288, %v2329
  %v3354 = vsel %vm3348, %v3289, %v2331
  %v3355 = vsel %vm3348, %v3290, %v2333
  %v3356 = vsel %vm3348, %v3291, %v2335
  %v3357 = vsel %vm3348, %v3292, %v2337
  %v3358 = vsel %vm3348, %v3293, %v2339
  %v3359 = vsel %vm3348, %v3294, %v2341
  %v3360 = vsel %vm3348, %v3295, %v2343
  %v3361 = vsel %vm3348, %v3296, %v2345
  %v3362 = vsel %vm3348, %v3297, %v2347
  %v3363 = vsel %vm3348, %v3298, %v2349
  %v3364 = vsel %vm3348, %v3299, %v2351
  %v3365 = vsel %vm3348, %v3300, %v2353
  %v3366 = vsel %vm3348, %v3301, %v2355
  %v3367 = vsel %vm3348, %v3302, %v2357
  %v3368 = vsel %vm3348, %v3303, %v2359
  %v3369 = vsel %vm3348, %v3304, %v2361
  %v3370 = vsel %vm3348, %v3305, %v2363
  %v3371 = vsel %vm3348, %v3306, %v2365
  %v3372 = vsel %vm3348, %v3307, %v2367
  %v3373 = vsel %vm3348, %v3308, %v2369
  %v3374 = vsel %vm3348, %v3309, %v2371
  %v3375 = vsel %vm3348, %v3310, %v2373
  %v3376 = vsel %vm3348, %v3311, %v2375
  %v3377 = vsel %vm3348, %v3312, %v2377
  %v3378 = vsel %vm3348, %v3313, %v2379
  %v3379 = vsel %vm3348, %v3314, %v2381
  %v3380 = vsel %vm3348, %v3315, %v2383
  %v3381 = vsel %vm3348, %v3316, %v2385
  %v3382 = vsel %vm3348, %v3317, %v2387
  %v3383 = vsel %vm3348, %v3318, %v2389
  %v3384 = vsel %vm3348, %v3319, %v2391
  %v3385 = vsel %vm3348, %v3320, %v2393
  %v3386 = vsel %vm3348, %v3321, %v2395
  %v3387 = vsel %vm3348, %v3322, %v2397
  %v3388 = vsel %vm3348, %v3323, %v2399
  %v3389 = vsel %vm3348, %v3324, %v2401
  %v3390 = vsel %vm3348, %v3325, %v2403
  %v3391 = vsel %vm3348, %v3326, %v2405
  %v3392 = vsel %vm3348, %v3327, %v2407
  %v3393 = vsel %vm3348, %v3328, %v2409
  %v3394 = vsel %vm3348, %v3329, %v2411
  %v3395 = vsel %vm3348, %v3330, %v2413
  %v3396 = vsel %vm3348, %v3331, %v2415
  %v3397 = vsel %vm3348, %v3332, %v2417
  %v3398 = vsel %vm3348, %v3333, %v2419
  %v3399 = vsel %vm3348, %v3334, %v2421
  %v3400 = vsel %vm3348, %v3335, %v2423
  %v3401 = vsel %vm3348, %v3336, %v2425
  %v3402 = vsel %vm3348, %v3337, %v2427
  %v3403 = vsel %vm3348, %v3338, %v2429
  %v3404 = vsel %vm3348, %v3339, %v2431
  %v3405 = vsel %vm3348, %v3340, %v2433
  %v3406 = vsel %vm3348, %v3341, %v2435
  %v3407 = vsel %vm3348, %v3342, %v2437
  %v3408 = vsel %vm3348, %v3343, %v2439
  %v3409 = vsel %vm3348, %v3344, %v2441
  %v3410 = vsel %vm3348, %v3345, %v2443
  %v3411 = vsel %vm3348, %v3346, %v2445
  %v3412 = vsel %vm3348, %v3347, %v2447
  %vm3413 = vcmask 228352
  %v3414 = vsel %vm3413, %v3349, %v2577
  %v3415 = vsel %vm3413, %v3350, %v2579
  %v3416 = vsel %vm3413, %v3351, %v2581
  %v3417 = vsel %vm3413, %v3352, %v2583
  %v3418 = vsel %vm3413, %v3353, %v2585
  %v3419 = vsel %vm3413, %v3354, %v2587
  %v3420 = vsel %vm3413, %v3355, %v2589
  %v3421 = vsel %vm3413, %v3356, %v2591
  %v3422 = vsel %vm3413, %v3357, %v2593
  %v3423 = vsel %vm3413, %v3358, %v2595
  %v3424 = vsel %vm3413, %v3359, %v2597
  %v3425 = vsel %vm3413, %v3360, %v2599
  %v3426 = vsel %vm3413, %v3361, %v2601
  %v3427 = vsel %vm3413, %v3362, %v2603
  %v3428 = vsel %vm3413, %v3363, %v2605
  %v3429 = vsel %vm3413, %v3364, %v2607
  %v3430 = vsel %vm3413, %v3365, %v2609
  %v3431 = vsel %vm3413, %v3366, %v2611
  %v3432 = vsel %vm3413, %v3367, %v2613
  %v3433 = vsel %vm3413, %v3368, %v2615
  %v3434 = vsel %vm3413, %v3369, %v2617
  %v3435 = vsel %vm3413, %v3370, %v2619
  %v3436 = vsel %vm3413, %v3371, %v2621
  %v3437 = vsel %vm3413, %v3372, %v2623
  %v3438 = vsel %vm3413, %v3373, %v2625
  %v3439 = vsel %vm3413, %v3374, %v2627
  %v3440 = vsel %vm3413, %v3375, %v2629
  %v3441 = vsel %vm3413, %v3376, %v2631
  %v3442 = vsel %vm3413, %v3377, %v2633
  %v3443 = vsel %vm3413, %v3378, %v2635
  %v3444 = vsel %vm3413, %v3379, %v2637
  %v3445 = vsel %vm3413, %v3380, %v2639
  %v3446 = vsel %vm3413, %v3381, %v2641
  %v3447 = vsel %vm3413, %v3382, %v2643
  %v3448 = vsel %vm3413, %v3383, %v2645
  %v3449 = vsel %vm3413, %v3384, %v2647
  %v3450 = vsel %vm3413, %v3385, %v2649
  %v3451 = vsel %vm3413, %v3386, %v2651
  %v3452 = vsel %vm3413, %v3387, %v2653
  %v3453 = vsel %vm3413, %v3388, %v2655
  %v3454 = vsel %vm3413, %v3389, %v2657
  %v3455 = vsel %vm3413, %v3390, %v2659
  %v3456 = vsel %vm3413, %v3391, %v2661
  %v3457 = vsel %vm3413, %v3392, %v2663
  %v3458 = vsel %vm3413, %v3393, %v2665
  %v3459 = vsel %vm3413, %v3394, %v2667
  %v3460 = vsel %vm3413, %v3395, %v2669
  %v3461 = vsel %vm3413, %v3396, %v2671
  %v3462 = vsel %vm3413, %v3397, %v2673
  %v3463 = vsel %vm3413, %v3398, %v2675
  %v3464 = vsel %vm3413, %v3399, %v2677
  %v3465 = vsel %vm3413, %v3400, %v2679
  %v3466 = vsel %vm3413, %v3401, %v2681
  %v3467 = vsel %vm3413, %v3402, %v2683
  %v3468 = vsel %vm3413, %v3403, %v2685
  %v3469 = vsel %vm3413, %v3404, %v2687
  %v3470 = vsel %vm3413, %v3405, %v2689
  %v3471 = vsel %vm3413, %v3406, %v2691
  %v3472 = vsel %vm3413, %v3407, %v2693
  %v3473 = vsel %vm3413, %v3408, %v2695
  %v3474 = vsel %vm3413, %v3409, %v2697
  %v3475 = vsel %vm3413, %v3410, %v2699
  %v3476 = vsel %vm3413, %v3411, %v2701
  %v3477 = vsel %vm3413, %v3412, %v2703
  %vm3478 = vcmask 261120
  %v3479 = vsel %vm3478, %v3414, %v2833
  %v3480 = vsel %vm3478, %v3415, %v2835
  %v3481 = vsel %vm3478, %v3416, %v2837
  %v3482 = vsel %vm3478, %v3417, %v2839
  %v3483 = vsel %vm3478, %v3418, %v2841
  %v3484 = vsel %vm3478, %v3419, %v2843
  %v3485 = vsel %vm3478, %v3420, %v2845
  %v3486 = vsel %vm3478, %v3421, %v2847
  %v3487 = vsel %vm3478, %v3422, %v2849
  %v3488 = vsel %vm3478, %v3423, %v2851
  %v3489 = vsel %vm3478, %v3424, %v2853
  %v3490 = vsel %vm3478, %v3425, %v2855
  %v3491 = vsel %vm3478, %v3426, %v2857
  %v3492 = vsel %vm3478, %v3427, %v2859
  %v3493 = vsel %vm3478, %v3428, %v2861
  %v3494 = vsel %vm3478, %v3429, %v2863
  %v3495 = vsel %vm3478, %v3430, %v2865
  %v3496 = vsel %vm3478, %v3431, %v2867
  %v3497 = vsel %vm3478, %v3432, %v2869
  %v3498 = vsel %vm3478, %v3433, %v2871
  %v3499 = vsel %vm3478, %v3434, %v2873
  %v3500 = vsel %vm3478, %v3435, %v2875
  %v3501 = vsel %vm3478, %v3436, %v2877
  %v3502 = vsel %vm3478, %v3437, %v2879
  %v3503 = vsel %vm3478, %v3438, %v2881
  %v3504 = vsel %vm3478, %v3439, %v2883
  %v3505 = vsel %vm3478, %v3440, %v2885
  %v3506 = vsel %vm3478, %v3441, %v2887
  %v3507 = vsel %vm3478, %v3442, %v2889
  %v3508 = vsel %vm3478, %v3443, %v2891
  %v3509 = vsel %vm3478, %v3444, %v2893
  %v3510 = vsel %vm3478, %v3445, %v2895
  %v3511 = vsel %vm3478, %v3446, %v2897
  %v3512 = vsel %vm3478, %v3447, %v2899
  %v3513 = vsel %vm3478, %v3448, %v2901
  %v3514 = vsel %vm3478, %v3449, %v2903
  %v3515 = vsel %vm3478, %v3450, %v2905
  %v3516 = vsel %vm3478, %v3451, %v2907
  %v3517 = vsel %vm3478, %v3452, %v2909
  %v3518 = vsel %vm3478, %v3453, %v2911
  %v3519 = vsel %vm3478, %v3454, %v2913
  %v3520 = vsel %vm3478, %v3455, %v2915
  %v3521 = vsel %vm3478, %v3456, %v2917
  %v3522 = vsel %vm3478, %v3457, %v2919
  %v3523 = vsel %vm3478, %v3458, %v2921
  %v3524 = vsel %vm3478, %v3459, %v2923
  %v3525 = vsel %vm3478, %v3460, %v2925
  %v3526 = vsel %vm3478, %v3461, %v2927
  %v3527 = vsel %vm3478, %v3462, %v2929
  %v3528 = vsel %vm3478, %v3463, %v2931
  %v3529 = vsel %vm3478, %v3464, %v2933
  %v3530 = vsel %vm3478, %v3465, %v2935
  %v3531 = vsel %vm3478, %v3466, %v2937
  %v3532 = vsel %vm3478, %v3467, %v2939
  %v3533 = vsel %vm3478, %v3468, %v2941
  %v3534 = vsel %vm3478, %v3469, %v2943
  %v3535 = vsel %vm3478, %v3470, %v2945
  %v3536 = vsel %vm3478, %v3471, %v2947
  %v3537 = vsel %vm3478, %v3472, %v2949
  %v3538 = vsel %vm3478, %v3473, %v2951
  %v3539 = vsel %vm3478, %v3474, %v2953
  %v3540 = vsel %vm3478, %v3475, %v2955
  %v3541 = vsel %vm3478, %v3476, %v2957
  %v3542 = vsel %vm3478, %v3477, %v2959
  %v3543 = vld [vmem:[%s4] sm:$0xff]
  %v3544 = vld [vmem:[%s4 + $0x8] sm:$0xff]
  %v3545 = vld [vmem:[%s4 + $0x10] sm:$0xff]
  %v3546 = vld [vmem:[%s4 + $0x18] sm:$0xff]
  %v3547 = vld [vmem:[%s4 + $0x20] sm:$0xf]
  %s3548 = scalar_lea.vmem [#allocation3], 24
  %3549 = vst.msk [vmem:[%s3548 + $0x8] sm:$0xff] %vm49, %v318
  %3550 = vst.msk [vmem:[%s3548 + $0x20] sm:$0xff] %vm49, %v319
  %3551 = vst.msk [vmem:[%s3548 + $0x38] sm:$0xff] %vm49, %v320
  %3552 = vst.msk [vmem:[%s3548 + $0x50] sm:$0xff] %vm49, %v321
  %3553 = vst.msk [vmem:[%s3548 + $0x68] sm:$0xff] %vm49, %v322
  %3554 = vst.msk [vmem:[%s3548 + $0x80] sm:$0xff] %vm49, %v323
  %3555 = vst.msk [vmem:[%s3548 + $0x98] sm:$0xff] %vm49, %v324
  %3556 = vst.msk [vmem:[%s3548 + $0xb0] sm:$0xff] %vm49, %v325
  %3557 = vst.msk [vmem:[%s3548 + $0xf8] sm:$0xff] %vm49, %v326
  %3558 = vst.msk [vmem:[%s3548 + $0x110] sm:$0xff] %vm49, %v327
  %3559 = vst.msk [vmem:[%s3548 + $0x128] sm:$0xff] %vm49, %v328
  %3560 = vst.msk [vmem:[%s3548 + $0x140] sm:$0xff] %vm49, %v329
  %3561 = vst.msk [vmem:[%s3548 + $0x158] sm:$0xff] %vm49, %v330
  %3562 = vst.msk [vmem:[%s3548 + $0x170] sm:$0xff] %vm49, %v331
  %3563 = vst.msk [vmem:[%s3548 + $0x188] sm:$0xff] %vm49, %v332
  %3564 = vst.msk [vmem:[%s3548 + $0x1a0] sm:$0xff] %vm49, %v333
  %v3565 = vld [vmem:[#allocation3 + $0x7] sm:$0xff]
  %v3566 = vld [vmem:[#allocation3 + $0x1f] sm:$0xff]
  %v3567 = vld [vmem:[#allocation3 + $0x37] sm:$0xff]
  %v3568 = vld [vmem:[#allocation3 + $0x4f] sm:$0xff]
  %v3569 = vld [vmem:[#allocation3 + $0x67] sm:$0xff]
  %v3570 = vld [vmem:[#allocation3 + $0x7f] sm:$0xff]
  %v3571 = vld [vmem:[#allocation3 + $0x97] sm:$0xff]
  %v3572 = vld [vmem:[#allocation3 + $0xaf] sm:$0xff]
  %v3573 = vld [vmem:[#allocation3 + $0xf7] sm:$0xff]
  %v3574 = vld [vmem:[#allocation3 + $0x10f] sm:$0xff]
  %v3575 = vld [vmem:[#allocation3 + $0x127] sm:$0xff]
  %v3576 = vld [vmem:[#allocation3 + $0x13f] sm:$0xff]
  %v3577 = vld [vmem:[#allocation3 + $0x157] sm:$0xff]
  %v3578 = vld [vmem:[#allocation3 + $0x16f] sm:$0xff]
  %v3579 = vld [vmem:[#allocation3 + $0x187] sm:$0xff]
  %v3580 = vld [vmem:[#allocation3 + $0x19f] sm:$0xff]
  %v3581 = vld [vmem:[#allocation3 + $0x8] sm:$0xff]
  %v3582 = vld [vmem:[#allocation3 + $0x20] sm:$0xff]
  %v3583 = vld [vmem:[#allocation3 + $0x38] sm:$0xff]
  %v3584 = vld [vmem:[#allocation3 + $0x50] sm:$0xff]
  %v3585 = vld [vmem:[#allocation3 + $0x68] sm:$0xff]
  %v3586 = vld [vmem:[#allocation3 + $0x80] sm:$0xff]
  %v3587 = vld [vmem:[#allocation3 + $0x98] sm:$0xff]
  %v3588 = vld [vmem:[#allocation3 + $0xb0] sm:$0xff]
  %v3589 = vld [vmem:[#allocation3 + $0xf8] sm:$0xff]
  %v3590 = vld [vmem:[#allocation3 + $0x110] sm:$0xff]
  %v3591 = vld [vmem:[#allocation3 + $0x128] sm:$0xff]
  %v3592 = vld [vmem:[#allocation3 + $0x140] sm:$0xff]
  %v3593 = vld [vmem:[#allocation3 + $0x158] sm:$0xff]
  %v3594 = vld [vmem:[#allocation3 + $0x170] sm:$0xff]
  %v3595 = vld [vmem:[#allocation3 + $0x188] sm:$0xff]
  %v3596 = vld [vmem:[#allocation3 + $0x1a0] sm:$0xff]
  %v3597 = vld [vmem:[#allocation3 + $0x9] sm:$0xff]
  %v3598 = vld [vmem:[#allocation3 + $0x21] sm:$0xff]
  %v3599 = vld [vmem:[#allocation3 + $0x39] sm:$0xff]
  %v3600 = vld [vmem:[#allocation3 + $0x51] sm:$0xff]
  %v3601 = vld [vmem:[#allocation3 + $0x69] sm:$0xff]
  %v3602 = vld [vmem:[#allocation3 + $0x81] sm:$0xff]
  %v3603 = vld [vmem:[#allocation3 + $0x99] sm:$0xff]
  %v3604 = vld [vmem:[#allocation3 + $0xb1] sm:$0xff]
  %v3605 = vld [vmem:[#allocation3 + $0xf9] sm:$0xff]
  %v3606 = vld [vmem:[#allocation3 + $0x111] sm:$0xff]
  %v3607 = vld [vmem:[#allocation3 + $0x129] sm:$0xff]
  %v3608 = vld [vmem:[#allocation3 + $0x141] sm:$0xff]
  %v3609 = vld [vmem:[#allocation3 + $0x159] sm:$0xff]
  %v3610 = vld [vmem:[#allocation3 + $0x171] sm:$0xff]
  %v3611 = vld [vmem:[#allocation3 + $0x189] sm:$0xff]
  %v3612 = vld [vmem:[#allocation3 + $0x1a1] sm:$0xff]
  %v3613 = vld [vmem:[%s3548 + $0x7] sm:$0xff]
  %v3614 = vld [vmem:[%s3548 + $0x1f] sm:$0xff]
  %v3615 = vld [vmem:[%s3548 + $0x37] sm:$0xff]
  %v3616 = vld [vmem:[%s3548 + $0x4f] sm:$0xff]
  %v3617 = vld [vmem:[%s3548 + $0x67] sm:$0xff]
  %v3618 = vld [vmem:[%s3548 + $0x7f] sm:$0xff]
  %v3619 = vld [vmem:[%s3548 + $0x97] sm:$0xff]
  %v3620 = vld [vmem:[%s3548 + $0xaf] sm:$0xff]
  %v3621 = vld [vmem:[%s3548 + $0xf7] sm:$0xff]
  %v3622 = vld [vmem:[%s3548 + $0x10f] sm:$0xff]
  %v3623 = vld [vmem:[%s3548 + $0x127] sm:$0xff]
  %v3624 = vld [vmem:[%s3548 + $0x13f] sm:$0xff]
  %v3625 = vld [vmem:[%s3548 + $0x157] sm:$0xff]
  %v3626 = vld [vmem:[%s3548 + $0x16f] sm:$0xff]
  %v3627 = vld [vmem:[%s3548 + $0x187] sm:$0xff]
  %v3628 = vld [vmem:[%s3548 + $0x19f] sm:$0xff]
  %v3629 = vld [vmem:[%s3548 + $0x8] sm:$0xff]
  %v3630 = vld [vmem:[%s3548 + $0x20] sm:$0xff]
  %v3631 = vld [vmem:[%s3548 + $0x38] sm:$0xff]
  %v3632 = vld [vmem:[%s3548 + $0x50] sm:$0xff]
  %v3633 = vld [vmem:[%s3548 + $0x68] sm:$0xff]
  %v3634 = vld [vmem:[%s3548 + $0x80] sm:$0xff]
  %v3635 = vld [vmem:[%s3548 + $0x98] sm:$0xff]
  %v3636 = vld [vmem:[%s3548 + $0xb0] sm:$0xff]
  %v3637 = vld [vmem:[%s3548 + $0xf8] sm:$0xff]
  %v3638 = vld [vmem:[%s3548 + $0x110] sm:$0xff]
  %v3639 = vld [vmem:[%s3548 + $0x128] sm:$0xff]
  %v3640 = vld [vmem:[%s3548 + $0x140] sm:$0xff]
  %v3641 = vld [vmem:[%s3548 + $0x158] sm:$0xff]
  %v3642 = vld [vmem:[%s3548 + $0x170] sm:$0xff]
  %v3643 = vld [vmem:[%s3548 + $0x188] sm:$0xff]
  %v3644 = vld [vmem:[%s3548 + $0x1a0] sm:$0xff]
  %v3645 = vld [vmem:[%s3548 + $0x9] sm:$0xff]
  %v3646 = vld [vmem:[%s3548 + $0x21] sm:$0xff]
  %v3647 = vld [vmem:[%s3548 + $0x39] sm:$0xff]
  %v3648 = vld [vmem:[%s3548 + $0x51] sm:$0xff]
  %v3649 = vld [vmem:[%s3548 + $0x69] sm:$0xff]
  %v3650 = vld [vmem:[%s3548 + $0x81] sm:$0xff]
  %v3651 = vld [vmem:[%s3548 + $0x99] sm:$0xff]
  %v3652 = vld [vmem:[%s3548 + $0xb1] sm:$0xff]
  %v3653 = vld [vmem:[%s3548 + $0xf9] sm:$0xff]
  %v3654 = vld [vmem:[%s3548 + $0x111] sm:$0xff]
  %v3655 = vld [vmem:[%s3548 + $0x129] sm:$0xff]
  %v3656 = vld [vmem:[%s3548 + $0x141] sm:$0xff]
  %v3657 = vld [vmem:[%s3548 + $0x159] sm:$0xff]
  %v3658 = vld [vmem:[%s3548 + $0x171] sm:$0xff]
  %v3659 = vld [vmem:[%s3548 + $0x189] sm:$0xff]
  %v3660 = vld [vmem:[%s3548 + $0x1a1] sm:$0xff]
  %s3661 = scalar_lea.vmem [#allocation3], 48
  %v3662 = vld [vmem:[%s3661 + $0x7] sm:$0xff]
  %v3663 = vld [vmem:[%s3661 + $0x1f] sm:$0xff]
  %v3664 = vld [vmem:[%s3661 + $0x37] sm:$0xff]
  %v3665 = vld [vmem:[%s3661 + $0x4f] sm:$0xff]
  %v3666 = vld [vmem:[%s3661 + $0x67] sm:$0xff]
  %v3667 = vld [vmem:[%s3661 + $0x7f] sm:$0xff]
  %v3668 = vld [vmem:[%s3661 + $0x97] sm:$0xff]
  %v3669 = vld [vmem:[%s3661 + $0xaf] sm:$0xff]
  %v3670 = vld [vmem:[%s3661 + $0xf7] sm:$0xff]
  %v3671 = vld [vmem:[%s3661 + $0x10f] sm:$0xff]
  %v3672 = vld [vmem:[%s3661 + $0x127] sm:$0xff]
  %v3673 = vld [vmem:[%s3661 + $0x13f] sm:$0xff]
  %v3674 = vld [vmem:[%s3661 + $0x157] sm:$0xff]
  %v3675 = vld [vmem:[%s3661 + $0x16f] sm:$0xff]
  %v3676 = vld [vmem:[%s3661 + $0x187] sm:$0xff]
  %v3677 = vld [vmem:[%s3661 + $0x19f] sm:$0xff]
  %v3678 = vld [vmem:[%s3661 + $0x8] sm:$0xff]
  %v3679 = vld [vmem:[%s3661 + $0x20] sm:$0xff]
  %v3680 = vld [vmem:[%s3661 + $0x38] sm:$0xff]
  %v3681 = vld [vmem:[%s3661 + $0x50] sm:$0xff]
  %v3682 = vld [vmem:[%s3661 + $0x68] sm:$0xff]
  %v3683 = vld [vmem:[%s3661 + $0x80] sm:$0xff]
  %v3684 = vld [vmem:[%s3661 + $0x98] sm:$0xff]
  %v3685 = vld [vmem:[%s3661 + $0xb0] sm:$0xff]
  %v3686 = vld [vmem:[%s3661 + $0xf8] sm:$0xff]
  %v3687 = vld [vmem:[%s3661 + $0x110] sm:$0xff]
  %v3688 = vld [vmem:[%s3661 + $0x128] sm:$0xff]
  %v3689 = vld [vmem:[%s3661 + $0x140] sm:$0xff]
  %v3690 = vld [vmem:[%s3661 + $0x158] sm:$0xff]
  %v3691 = vld [vmem:[%s3661 + $0x170] sm:$0xff]
  %v3692 = vld [vmem:[%s3661 + $0x188] sm:$0xff]
  %v3693 = vld [vmem:[%s3661 + $0x1a0] sm:$0xff]
  %v3694 = vld [vmem:[%s3661 + $0x9] sm:$0xff]
  %v3695 = vld [vmem:[%s3661 + $0x21] sm:$0xff]
  %v3696 = vld [vmem:[%s3661 + $0x39] sm:$0xff]
  %v3697 = vld [vmem:[%s3661 + $0x51] sm:$0xff]
  %v3698 = vld [vmem:[%s3661 + $0x69] sm:$0xff]
  %v3699 = vld [vmem:[%s3661 + $0x81] sm:$0xff]
  %v3700 = vld [vmem:[%s3661 + $0x99] sm:$0xff]
  %v3701 = vld [vmem:[%s3661 + $0xb1] sm:$0xff]
  %v3702 = vld [vmem:[%s3661 + $0xf9] sm:$0xff]
  %v3703 = vld [vmem:[%s3661 + $0x111] sm:$0xff]
  %v3704 = vld [vmem:[%s3661 + $0x129] sm:$0xff]
  %v3705 = vld [vmem:[%s3661 + $0x141] sm:$0xff]
  %v3706 = vld [vmem:[%s3661 + $0x159] sm:$0xff]
  %v3707 = vld [vmem:[%s3661 + $0x171] sm:$0xff]
  %v3708 = vld [vmem:[%s3661 + $0x189] sm:$0xff]
  %v3709 = vld [vmem:[%s3661 + $0x1a1] sm:$0xff]
  %3726 = vrot.lane.b32.xlu0 %v3581, 4
  %v3727 = vpop.permute.xlu0 %3726
  %3728 = vrot.lane.b32.xlu0 %v3582, 4
  %v3729 = vpop.permute.xlu0 %3728
  %3730 = vrot.lane.b32.xlu0 %v3583, 4
  %v3731 = vpop.permute.xlu0 %3730
  %3732 = vrot.lane.b32.xlu0 %v3584, 4
  %v3733 = vpop.permute.xlu0 %3732
  %3734 = vrot.lane.b32.xlu0 %v3585, 4
  %v3735 = vpop.permute.xlu0 %3734
  %3736 = vrot.lane.b32.xlu0 %v3586, 4
  %v3737 = vpop.permute.xlu0 %3736
  %3738 = vrot.lane.b32.xlu0 %v3587, 4
  %v3739 = vpop.permute.xlu0 %3738
  %3740 = vrot.lane.b32.xlu0 %v3588, 4
  %v3741 = vpop.permute.xlu0 %3740
  %3742 = vrot.lane.b32.xlu0 %v3589, 4
  %v3743 = vpop.permute.xlu0 %3742
  %3744 = vrot.lane.b32.xlu0 %v3590, 4
  %v3745 = vpop.permute.xlu0 %3744
  %3746 = vrot.lane.b32.xlu0 %v3591, 4
  %v3747 = vpop.permute.xlu0 %3746
  %3748 = vrot.lane.b32.xlu0 %v3592, 4
  %v3749 = vpop.permute.xlu0 %3748
  %3750 = vrot.lane.b32.xlu0 %v3593, 4
  %v3751 = vpop.permute.xlu0 %3750
  %3752 = vrot.lane.b32.xlu0 %v3594, 4
  %v3753 = vpop.permute.xlu0 %3752
  %3754 = vrot.lane.b32.xlu0 %v3595, 4
  %v3755 = vpop.permute.xlu0 %3754
  %3756 = vrot.lane.b32.xlu0 %v3596, 4
  %v3757 = vpop.permute.xlu0 %3756
  %3790 = vrot.lane.b32.xlu0 %v3597, 8
  %v3791 = vpop.permute.xlu0 %3790
  %3792 = vrot.lane.b32.xlu0 %v3598, 8
  %v3793 = vpop.permute.xlu0 %3792
  %3794 = vrot.lane.b32.xlu0 %v3599, 8
  %v3795 = vpop.permute.xlu0 %3794
  %3796 = vrot.lane.b32.xlu0 %v3600, 8
  %v3797 = vpop.permute.xlu0 %3796
  %3798 = vrot.lane.b32.xlu0 %v3601, 8
  %v3799 = vpop.permute.xlu0 %3798
  %3800 = vrot.lane.b32.xlu0 %v3602, 8
  %v3801 = vpop.permute.xlu0 %3800
  %3802 = vrot.lane.b32.xlu0 %v3603, 8
  %v3803 = vpop.permute.xlu0 %3802
  %3804 = vrot.lane.b32.xlu0 %v3604, 8
  %v3805 = vpop.permute.xlu0 %3804
  %3806 = vrot.lane.b32.xlu0 %v3605, 8
  %v3807 = vpop.permute.xlu0 %3806
  %3808 = vrot.lane.b32.xlu0 %v3606, 8
  %v3809 = vpop.permute.xlu0 %3808
  %3810 = vrot.lane.b32.xlu0 %v3607, 8
  %v3811 = vpop.permute.xlu0 %3810
  %3812 = vrot.lane.b32.xlu0 %v3608, 8
  %v3813 = vpop.permute.xlu0 %3812
  %3814 = vrot.lane.b32.xlu0 %v3609, 8
  %v3815 = vpop.permute.xlu0 %3814
  %3816 = vrot.lane.b32.xlu0 %v3610, 8
  %v3817 = vpop.permute.xlu0 %3816
  %3818 = vrot.lane.b32.xlu0 %v3611, 8
  %v3819 = vpop.permute.xlu0 %3818
  %3820 = vrot.lane.b32.xlu0 %v3612, 8
  %v3821 = vpop.permute.xlu0 %3820
  %3854 = vrot.lane.b32.xlu0 %v3613, 12
  %v3855 = vpop.permute.xlu0 %3854
  %3856 = vrot.lane.b32.xlu0 %v3614, 12
  %v3857 = vpop.permute.xlu0 %3856
  %3858 = vrot.lane.b32.xlu0 %v3615, 12
  %v3859 = vpop.permute.xlu0 %3858
  %3860 = vrot.lane.b32.xlu0 %v3616, 12
  %v3861 = vpop.permute.xlu0 %3860
  %3862 = vrot.lane.b32.xlu0 %v3617, 12
  %v3863 = vpop.permute.xlu0 %3862
  %3864 = vrot.lane.b32.xlu0 %v3618, 12
  %v3865 = vpop.permute.xlu0 %3864
  %3866 = vrot.lane.b32.xlu0 %v3619, 12
  %v3867 = vpop.permute.xlu0 %3866
  %3868 = vrot.lane.b32.xlu0 %v3620, 12
  %v3869 = vpop.permute.xlu0 %3868
  %3870 = vrot.lane.b32.xlu0 %v3621, 12
  %v3871 = vpop.permute.xlu0 %3870
  %3872 = vrot.lane.b32.xlu0 %v3622, 12
  %v3873 = vpop.permute.xlu0 %3872
  %3874 = vrot.lane.b32.xlu0 %v3623, 12
  %v3875 = vpop.permute.xlu0 %3874
  %3876 = vrot.lane.b32.xlu0 %v3624, 12
  %v3877 = vpop.permute.xlu0 %3876
  %3878 = vrot.lane.b32.xlu0 %v3625, 12
  %v3879 = vpop.permute.xlu0 %3878
  %3880 = vrot.lane.b32.xlu0 %v3626, 12
  %v3881 = vpop.permute.xlu0 %3880
  %3882 = vrot.lane.b32.xlu0 %v3627, 12
  %v3883 = vpop.permute.xlu0 %3882
  %3884 = vrot.lane.b32.xlu0 %v3628, 12
  %v3885 = vpop.permute.xlu0 %3884
  %3918 = vrot.lane.b32.xlu0 %v3629, 16
  %v3919 = vpop.permute.xlu0 %3918
  %3920 = vrot.lane.b32.xlu0 %v3630, 16
  %v3921 = vpop.permute.xlu0 %3920
  %3922 = vrot.lane.b32.xlu0 %v3631, 16
  %v3923 = vpop.permute.xlu0 %3922
  %3924 = vrot.lane.b32.xlu0 %v3632, 16
  %v3925 = vpop.permute.xlu0 %3924
  %3926 = vrot.lane.b32.xlu0 %v3633, 16
  %v3927 = vpop.permute.xlu0 %3926
  %3928 = vrot.lane.b32.xlu0 %v3634, 16
  %v3929 = vpop.permute.xlu0 %3928
  %3930 = vrot.lane.b32.xlu0 %v3635, 16
  %v3931 = vpop.permute.xlu0 %3930
  %3932 = vrot.lane.b32.xlu0 %v3636, 16
  %v3933 = vpop.permute.xlu0 %3932
  %3934 = vrot.lane.b32.xlu0 %v3637, 16
  %v3935 = vpop.permute.xlu0 %3934
  %3936 = vrot.lane.b32.xlu0 %v3638, 16
  %v3937 = vpop.permute.xlu0 %3936
  %3938 = vrot.lane.b32.xlu0 %v3639, 16
  %v3939 = vpop.permute.xlu0 %3938
  %3940 = vrot.lane.b32.xlu0 %v3640, 16
  %v3941 = vpop.permute.xlu0 %3940
  %3942 = vrot.lane.b32.xlu0 %v3641, 16
  %v3943 = vpop.permute.xlu0 %3942
  %3944 = vrot.lane.b32.xlu0 %v3642, 16
  %v3945 = vpop.permute.xlu0 %3944
  %3946 = vrot.lane.b32.xlu0 %v3643, 16
  %v3947 = vpop.permute.xlu0 %3946
  %3948 = vrot.lane.b32.xlu0 %v3644, 16
  %v3949 = vpop.permute.xlu0 %3948
  %3982 = vrot.lane.b32.xlu0 %v3645, 20
  %v3983 = vpop.permute.xlu0 %3982
  %3984 = vrot.lane.b32.xlu0 %v3646, 20
  %v3985 = vpop.permute.xlu0 %3984
  %3986 = vrot.lane.b32.xlu0 %v3647, 20
  %v3987 = vpop.permute.xlu0 %3986
  %3988 = vrot.lane.b32.xlu0 %v3648, 20
  %v3989 = vpop.permute.xlu0 %3988
  %3990 = vrot.lane.b32.xlu0 %v3649, 20
  %v3991 = vpop.permute.xlu0 %3990
  %3992 = vrot.lane.b32.xlu0 %v3650, 20
  %v3993 = vpop.permute.xlu0 %3992
  %3994 = vrot.lane.b32.xlu0 %v3651, 20
  %v3995 = vpop.permute.xlu0 %3994
  %3996 = vrot.lane.b32.xlu0 %v3652, 20
  %v3997 = vpop.permute.xlu0 %3996
  %3998 = vrot.lane.b32.xlu0 %v3653, 20
  %v3999 = vpop.permute.xlu0 %3998
  %4000 = vrot.lane.b32.xlu0 %v3654, 20
  %v4001 = vpop.permute.xlu0 %4000
  %4002 = vrot.lane.b32.xlu0 %v3655, 20
  %v4003 = vpop.permute.xlu0 %4002
  %4004 = vrot.lane.b32.xlu0 %v3656, 20
  %v4005 = vpop.permute.xlu0 %4004
  %4006 = vrot.lane.b32.xlu0 %v3657, 20
  %v4007 = vpop.permute.xlu0 %4006
  %4008 = vrot.lane.b32.xlu0 %v3658, 20
  %v4009 = vpop.permute.xlu0 %4008
  %4010 = vrot.lane.b32.xlu0 %v3659, 20
  %v4011 = vpop.permute.xlu0 %4010
  %4012 = vrot.lane.b32.xlu0 %v3660, 20
  %v4013 = vpop.permute.xlu0 %4012
  %4046 = vrot.lane.b32.xlu0 %v3662, 24
  %v4047 = vpop.permute.xlu0 %4046
  %4048 = vrot.lane.b32.xlu0 %v3663, 24
  %v4049 = vpop.permute.xlu0 %4048
  %4050 = vrot.lane.b32.xlu0 %v3664, 24
  %v4051 = vpop.permute.xlu0 %4050
  %4052 = vrot.lane.b32.xlu0 %v3665, 24
  %v4053 = vpop.permute.xlu0 %4052
  %4054 = vrot.lane.b32.xlu0 %v3666, 24
  %v4055 = vpop.permute.xlu0 %4054
  %4056 = vrot.lane.b32.xlu0 %v3667, 24
  %v4057 = vpop.permute.xlu0 %4056
  %4058 = vrot.lane.b32.xlu0 %v3668, 24
  %v4059 = vpop.permute.xlu0 %4058
  %4060 = vrot.lane.b32.xlu0 %v3669, 24
  %v4061 = vpop.permute.xlu0 %4060
  %4062 = vrot.lane.b32.xlu0 %v3670, 24
  %v4063 = vpop.permute.xlu0 %4062
  %4064 = vrot.lane.b32.xlu0 %v3671, 24
  %v4065 = vpop.permute.xlu0 %4064
  %4066 = vrot.lane.b32.xlu0 %v3672, 24
  %v4067 = vpop.permute.xlu0 %4066
  %4068 = vrot.lane.b32.xlu0 %v3673, 24
  %v4069 = vpop.permute.xlu0 %4068
  %4070 = vrot.lane.b32.xlu0 %v3674, 24
  %v4071 = vpop.permute.xlu0 %4070
  %4072 = vrot.lane.b32.xlu0 %v3675, 24
  %v4073 = vpop.permute.xlu0 %4072
  %4074 = vrot.lane.b32.xlu0 %v3676, 24
  %v4075 = vpop.permute.xlu0 %4074
  %4076 = vrot.lane.b32.xlu0 %v3677, 24
  %v4077 = vpop.permute.xlu0 %4076
  %4110 = vrot.lane.b32.xlu0 %v3678, 28
  %v4111 = vpop.permute.xlu0 %4110
  %4112 = vrot.lane.b32.xlu0 %v3679, 28
  %v4113 = vpop.permute.xlu0 %4112
  %4114 = vrot.lane.b32.xlu0 %v3680, 28
  %v4115 = vpop.permute.xlu0 %4114
  %4116 = vrot.lane.b32.xlu0 %v3681, 28
  %v4117 = vpop.permute.xlu0 %4116
  %4118 = vrot.lane.b32.xlu0 %v3682, 28
  %v4119 = vpop.permute.xlu0 %4118
  %4120 = vrot.lane.b32.xlu0 %v3683, 28
  %v4121 = vpop.permute.xlu0 %4120
  %4122 = vrot.lane.b32.xlu0 %v3684, 28
  %v4123 = vpop.permute.xlu0 %4122
  %4124 = vrot.lane.b32.xlu0 %v3685, 28
  %v4125 = vpop.permute.xlu0 %4124
  %4126 = vrot.lane.b32.xlu0 %v3686, 28
  %v4127 = vpop.permute.xlu0 %4126
  %4128 = vrot.lane.b32.xlu0 %v3687, 28
  %v4129 = vpop.permute.xlu0 %4128
  %4130 = vrot.lane.b32.xlu0 %v3688, 28
  %v4131 = vpop.permute.xlu0 %4130
  %4132 = vrot.lane.b32.xlu0 %v3689, 28
  %v4133 = vpop.permute.xlu0 %4132
  %4134 = vrot.lane.b32.xlu0 %v3690, 28
  %v4135 = vpop.permute.xlu0 %4134
  %4136 = vrot.lane.b32.xlu0 %v3691, 28
  %v4137 = vpop.permute.xlu0 %4136
  %4138 = vrot.lane.b32.xlu0 %v3692, 28
  %v4139 = vpop.permute.xlu0 %4138
  %4140 = vrot.lane.b32.xlu0 %v3693, 28
  %v4141 = vpop.permute.xlu0 %4140
  %4174 = vrot.lane.b32.xlu0 %v3694, 32
  %v4175 = vpop.permute.xlu0 %4174
  %4176 = vrot.lane.b32.xlu0 %v3695, 32
  %v4177 = vpop.permute.xlu0 %4176
  %4178 = vrot.lane.b32.xlu0 %v3696, 32
  %v4179 = vpop.permute.xlu0 %4178
  %4180 = vrot.lane.b32.xlu0 %v3697, 32
  %v4181 = vpop.permute.xlu0 %4180
  %4182 = vrot.lane.b32.xlu0 %v3698, 32
  %v4183 = vpop.permute.xlu0 %4182
  %4184 = vrot.lane.b32.xlu0 %v3699, 32
  %v4185 = vpop.permute.xlu0 %4184
  %4186 = vrot.lane.b32.xlu0 %v3700, 32
  %v4187 = vpop.permute.xlu0 %4186
  %4188 = vrot.lane.b32.xlu0 %v3701, 32
  %v4189 = vpop.permute.xlu0 %4188
  %4190 = vrot.lane.b32.xlu0 %v3702, 32
  %v4191 = vpop.permute.xlu0 %4190
  %4192 = vrot.lane.b32.xlu0 %v3703, 32
  %v4193 = vpop.permute.xlu0 %4192
  %4194 = vrot.lane.b32.xlu0 %v3704, 32
  %v4195 = vpop.permute.xlu0 %4194
  %4196 = vrot.lane.b32.xlu0 %v3705, 32
  %v4197 = vpop.permute.xlu0 %4196
  %4198 = vrot.lane.b32.xlu0 %v3706, 32
  %v4199 = vpop.permute.xlu0 %4198
  %4200 = vrot.lane.b32.xlu0 %v3707, 32
  %v4201 = vpop.permute.xlu0 %4200
  %4202 = vrot.lane.b32.xlu0 %v3708, 32
  %v4203 = vpop.permute.xlu0 %4202
  %4204 = vrot.lane.b32.xlu0 %v3709, 32
  %v4205 = vpop.permute.xlu0 %4204
  %v4222 = vsel %vm49, %v3565, %v3727
  %v4223 = vsel %vm49, %v3566, %v3729
  %v4224 = vsel %vm49, %v3567, %v3731
  %v4225 = vsel %vm49, %v3568, %v3733
  %v4226 = vsel %vm49, %v3569, %v3735
  %v4227 = vsel %vm49, %v3570, %v3737
  %v4228 = vsel %vm49, %v3571, %v3739
  %v4229 = vsel %vm49, %v3572, %v3741
  %v4230 = vsel %vm49, %v3573, %v3743
  %v4231 = vsel %vm49, %v3574, %v3745
  %v4232 = vsel %vm49, %v3575, %v3747
  %v4233 = vsel %vm49, %v3576, %v3749
  %v4234 = vsel %vm49, %v3577, %v3751
  %v4235 = vsel %vm49, %v3578, %v3753
  %v4236 = vsel %vm49, %v3579, %v3755
  %v4237 = vsel %vm49, %v3580, %v3757
  %v4238 = vsel %vm3088, %v4222, %v3791
  %v4239 = vsel %vm3088, %v4223, %v3793
  %v4240 = vsel %vm3088, %v4224, %v3795
  %v4241 = vsel %vm3088, %v4225, %v3797
  %v4242 = vsel %vm3088, %v4226, %v3799
  %v4243 = vsel %vm3088, %v4227, %v3801
  %v4244 = vsel %vm3088, %v4228, %v3803
  %v4245 = vsel %vm3088, %v4229, %v3805
  %v4246 = vsel %vm3088, %v4230, %v3807
  %v4247 = vsel %vm3088, %v4231, %v3809
  %v4248 = vsel %vm3088, %v4232, %v3811
  %v4249 = vsel %vm3088, %v4233, %v3813
  %v4250 = vsel %vm3088, %v4234, %v3815
  %v4251 = vsel %vm3088, %v4235, %v3817
  %v4252 = vsel %vm3088, %v4236, %v3819
  %v4253 = vsel %vm3088, %v4237, %v3821
  %v4254 = vsel %vm3153, %v4238, %v3855
  %v4255 = vsel %vm3153, %v4239, %v3857
  %v4256 = vsel %vm3153, %v4240, %v3859
  %v4257 = vsel %vm3153, %v4241, %v3861
  %v4258 = vsel %vm3153, %v4242, %v3863
  %v4259 = vsel %vm3153, %v4243, %v3865
  %v4260 = vsel %vm3153, %v4244, %v3867
  %v4261 = vsel %vm3153, %v4245, %v3869
  %v4262 = vsel %vm3153, %v4246, %v3871
  %v4263 = vsel %vm3153, %v4247, %v3873
  %v4264 = vsel %vm3153, %v4248, %v3875
  %v4265 = vsel %vm3153, %v4249, %v3877
  %v4266 = vsel %vm3153, %v4250, %v3879
  %v4267 = vsel %vm3153, %v4251, %v3881
  %v4268 = vsel %vm3153, %v4252, %v3883
  %v4269 = vsel %vm3153, %v4253, %v3885
  %v4270 = vsel %vm3218, %v4254, %v3919
  %v4271 = vsel %vm3218, %v4255, %v3921
  %v4272 = vsel %vm3218, %v4256, %v3923
  %v4273 = vsel %vm3218, %v4257, %v3925
  %v4274 = vsel %vm3218, %v4258, %v3927
  %v4275 = vsel %vm3218, %v4259, %v3929
  %v4276 = vsel %vm3218, %v4260, %v3931
  %v4277 = vsel %vm3218, %v4261, %v3933
  %v4278 = vsel %vm3218, %v4262, %v3935
  %v4279 = vsel %vm3218, %v4263, %v3937
  %v4280 = vsel %vm3218, %v4264, %v3939
  %v4281 = vsel %vm3218, %v4265, %v3941
  %v4282 = vsel %vm3218, %v4266, %v3943
  %v4283 = vsel %vm3218, %v4267, %v3945
  %v4284 = vsel %vm3218, %v4268, %v3947
  %v4285 = vsel %vm3218, %v4269, %v3949
  %v4286 = vsel %vm3283, %v4270, %v3983
  %v4287 = vsel %vm3283, %v4271, %v3985
  %v4288 = vsel %vm3283, %v4272, %v3987
  %v4289 = vsel %vm3283, %v4273, %v3989
  %v4290 = vsel %vm3283, %v4274, %v3991
  %v4291 = vsel %vm3283, %v4275, %v3993
  %v4292 = vsel %vm3283, %v4276, %v3995
  %v4293 = vsel %vm3283, %v4277, %v3997
  %v4294 = vsel %vm3283, %v4278, %v3999
  %v4295 = vsel %vm3283, %v4279, %v4001
  %v4296 = vsel %vm3283, %v4280, %v4003
  %v4297 = vsel %vm3283, %v4281, %v4005
  %v4298 = vsel %vm3283, %v4282, %v4007
  %v4299 = vsel %vm3283, %v4283, %v4009
  %v4300 = vsel %vm3283, %v4284, %v4011
  %v4301 = vsel %vm3283, %v4285, %v4013
  %v4302 = vsel %vm3348, %v4286, %v4047
  %v4303 = vsel %vm3348, %v4287, %v4049
  %v4304 = vsel %vm3348, %v4288, %v4051
  %v4305 = vsel %vm3348, %v4289, %v4053
  %v4306 = vsel %vm3348, %v4290, %v4055
  %v4307 = vsel %vm3348, %v4291, %v4057
  %v4308 = vsel %vm3348, %v4292, %v4059
  %v4309 = vsel %vm3348, %v4293, %v4061
  %v4310 = vsel %vm3348, %v4294, %v4063
  %v4311 = vsel %vm3348, %v4295, %v4065
  %v4312 = vsel %vm3348, %v4296, %v4067
  %v4313 = vsel %vm3348, %v4297, %v4069
  %v4314 = vsel %vm3348, %v4298, %v4071
  %v4315 = vsel %vm3348, %v4299, %v4073
  %v4316 = vsel %vm3348, %v4300, %v4075
  %v4317 = vsel %vm3348, %v4301, %v4077
  %v4318 = vsel %vm3413, %v4302, %v4111
  %v4319 = vsel %vm3413, %v4303, %v4113
  %v4320 = vsel %vm3413, %v4304, %v4115
  %v4321 = vsel %vm3413, %v4305, %v4117
  %v4322 = vsel %vm3413, %v4306, %v4119
  %v4323 = vsel %vm3413, %v4307, %v4121
  %v4324 = vsel %vm3413, %v4308, %v4123
  %v4325 = vsel %vm3413, %v4309, %v4125
  %v4326 = vsel %vm3413, %v4310, %v4127
  %v4327 = vsel %vm3413, %v4311, %v4129
  %v4328 = vsel %vm3413, %v4312, %v4131
  %v4329 = vsel %vm3413, %v4313, %v4133
  %v4330 = vsel %vm3413, %v4314, %v4135
  %v4331 = vsel %vm3413, %v4315, %v4137
  %v4332 = vsel %vm3413, %v4316, %v4139
  %v4333 = vsel %vm3413, %v4317, %v4141
  %v4334 = vsel %vm3478, %v4318, %v4175
  %v4335 = vsel %vm3478, %v4319, %v4177
  %v4336 = vsel %vm3478, %v4320, %v4179
  %v4337 = vsel %vm3478, %v4321, %v4181
  %v4338 = vsel %vm3478, %v4322, %v4183
  %v4339 = vsel %vm3478, %v4323, %v4185
  %v4340 = vsel %vm3478, %v4324, %v4187
  %v4341 = vsel %vm3478, %v4325, %v4189
  %v4342 = vsel %vm3478, %v4326, %v4191
  %v4343 = vsel %vm3478, %v4327, %v4193
  %v4344 = vsel %vm3478, %v4328, %v4195
  %v4345 = vsel %vm3478, %v4329, %v4197
  %v4346 = vsel %vm3478, %v4330, %v4199
  %v4347 = vsel %vm3478, %v4331, %v4201
  %v4348 = vsel %vm3478, %v4332, %v4203
  %v4349 = vsel %vm3478, %v4333, %v4205
  %v4350 = vld [vmem:[%s5] sm:$0xff]
  %v4351 = vld [vmem:[%s5 + $0x8] sm:$0xff]
  %v4352 = vld [vmem:[%s5 + $0x10] sm:$0xff]
  %v4353 = vld [vmem:[%s5 + $0x18] sm:$0xff]
  %v4354 = vld [vmem:[%s5 + $0x20] sm:$0xf]
  %vm4355 = vcmask 293888
  %v4357 = vsel %vm4355, %v4334, 0
  %v4360 = vsel %vm4355, %v4335, 0
  %v4363 = vsel %vm4355, %v4336, 0
  %v4366 = vsel %vm4355, %v4337, 0
  %v4369 = vsel %vm4355, %v4338, 0
  %v4372 = vsel %vm4355, %v4339, 0
  %v4375 = vsel %vm4355, %v4340, 0
  %v4378 = vsel %vm4355, %v4341, 0
  %v4381 = vsel %vm4355, %v4342, 0
  %v4384 = vsel %vm4355, %v4343, 0
  %v4387 = vsel %vm4355, %v4344, 0
  %v4390 = vsel %vm4355, %v4345, 0
  %v4393 = vsel %vm4355, %v4346, 0
  %v4396 = vsel %vm4355, %v4347, 0
  %v4399 = vsel %vm4355, %v4348, 0
  %v4402 = vsel %vm4355, %v4349, 0
  %vm4404 = vcmask 1043456
  %v4406 = vsel %vm4404, %v4354, 0
  %4408 = vmatprep.subr.mxu0 0.0
  %4409 = vmatpush1.msra.mxu0 %v4350
  %4410 = vmatprep.subr.mxu0 0.0
  %4411 = vmatpush1.msra.mxu0 %v4351
  %4412 = vmatprep.subr.mxu0 0.0
  %4413 = vmatpush1.msra.mxu0 %v4352
  %4414 = vmatprep.subr.mxu0 0.0
  %4415 = vmatpush1.msra.mxu0 %v4353
  %4416 = vmatprep.subr.mxu0 0.0
  %4417 = vmatpush1.msra.mxu0 %v4406
  %4418 = vmatprep.subr.mxu0 0.0
  %4419 = vmatpush1.msra.mxu0 0.0
  %4420 = vmatprep.subr.mxu0 0.0
  %4421 = vmatpush1.msra.mxu0 0.0
  %4422 = vmatprep.subr.mxu0 0.0
  %4423 = vmatpush1.msra.mxu0 0.0
  %4424 = vmatprep.subr.mxu0 0.0
  %4425 = vmatpush1.msra.mxu0 0.0
  %4426 = vmatprep.subr.mxu0 0.0
  %4427 = vmatpush1.msra.mxu0 0.0
  %4428 = vmatprep.subr.mxu0 0.0
  %4429 = vmatpush1.msra.mxu0 0.0
  %4430 = vmatprep.subr.mxu0 0.0
  %4431 = vmatpush1.msra.mxu0 0.0
  %4432 = vmatprep.subr.mxu0 0.0
  %4433 = vmatpush1.msra.mxu0 0.0
  %4434 = vmatprep.subr.mxu0 0.0
  %4435 = vmatpush1.msra.mxu0 0.0
  %4436 = vmatprep.subr.mxu0 0.0
  %4437 = vmatpush1.msra.mxu0 0.0
  %4438 = vmatprep.subr.mxu0 0.0
  %4439 = vmatpush1.msra.mxu0 0.0
  %4440 = vmatprep.subr.mxu0 0.0
  %4441 = vmatpush1.msra.mxu0 0.0
  %4442 = vmatprep.subr.mxu0 0.0
  %4443 = vmatpush1.msra.mxu0 0.0
  %4444 = vmatprep.subr.mxu0 0.0
  %4445 = vmatpush1.msra.mxu0 0.0
  %4446 = vmatprep.subr.mxu0 0.0
  %4447 = vmatpush1.msra.mxu0 0.0
  %4448 = vmatprep.subr.mxu0 0.0
  %4449 = vmatpush1.msra.mxu0 0.0
  %4450 = vmatprep.subr.mxu0 0.0
  %4451 = vmatpush1.msra.mxu0 0.0
  %4452 = vmatprep.subr.mxu0 0.0
  %4453 = vmatpush1.msra.mxu0 0.0
  %4454 = vmatprep.subr.mxu0 0.0
  %4455 = vmatpush1.msra.mxu0 0.0
  %4456 = vmatprep.subr.mxu0 0.0
  %4457 = vmatpush1.msra.mxu0 0.0
  %4458 = vmatprep.subr.mxu0 0.0
  %4459 = vmatpush1.msra.mxu0 0.0
  %4460 = vmatprep.subr.mxu0 0.0
  %4461 = vmatpush1.msra.mxu0 0.0
  %4462 = vmatprep.subr.mxu0 0.0
  %4463 = vmatpush1.msra.mxu0 0.0
  %4464 = vmatprep.subr.mxu0 0.0
  %4465 = vmatpush1.msra.mxu0 0.0
  %4466 = vmatprep.subr.mxu0 0.0
  %4467 = vmatpush1.msra.mxu0 0.0
  %4468 = vmatprep.subr.mxu0 0.0
  %4469 = vmatpush1.msra.mxu0 0.0
  %4470 = vmatprep.subr.mxu0 0.0
  %4471 = vmatpush1.msra.mxu0 0.0
  %4472 = vmatprep.mubr.f32.mxu0 0.0
  %4473 = vmatmul.mubr.f32.gmra.mrb[0].mxu0 %v4357
  %v4474 = vpop.f32.mrb[0].mxu0
  %v4475 = vadd.f32 0.0, %v4474
  %v4476 = vpop.f32.mrb[0].mxu0
  %4477 = vmatprep.mubr.f32.mxu0 0.0
  %4478 = vmatmul.mubr.f32.gmra.mrb[0].mxu0 %v4360
  %v4479 = vpop.f32.mrb[0].mxu0
  %v4480 = vadd.f32 0.0, %v4479
  %v4481 = vpop.f32.mrb[0].mxu0
  %4482 = vmatprep.mubr.f32.mxu0 0.0
  %4483 = vmatmul.mubr.f32.gmra.mrb[0].mxu0 %v4363
  %v4484 = vpop.f32.mrb[0].mxu0
  %v4485 = vadd.f32 0.0, %v4484
  %v4486 = vpop.f32.mrb[0].mxu0
  %4487 = vmatprep.mubr.f32.mxu0 0.0
  %4488 = vmatmul.mubr.f32.gmra.mrb[0].mxu0 %v4366
  %v4489 = vpop.f32.mrb[0].mxu0
  %v4490 = vadd.f32 0.0, %v4489
  %v4491 = vpop.f32.mrb[0].mxu0
  %4492 = vmatprep.mubr.f32.mxu0 0.0
  %4493 = vmatmul.mubr.f32.gmra.mrb[0].mxu0 %v4369
  %v4494 = vpop.f32.mrb[0].mxu0
  %v4495 = vadd.f32 0.0, %v4494
  %v4496 = vpop.f32.mrb[0].mxu0
  %4497 = vmatprep.mubr.f32.mxu0 0.0
  %4498 = vmatmul.mubr.f32.gmra.mrb[0].mxu0 %v4372
  %v4499 = vpop.f32.mrb[0].mxu0
  %v4500 = vadd.f32 0.0, %v4499
  %v4501 = vpop.f32.mrb[0].mxu0
  %4502 = vmatprep.mubr.f32.mxu0 0.0
  %4503 = vmatmul.mubr.f32.gmra.mrb[0].mxu0 %v4375
  %v4504 = vpop.f32.mrb[0].mxu0
  %v4505 = vadd.f32 0.0, %v4504
  %v4506 = vpop.f32.mrb[0].mxu0
  %4507 = vmatprep.mubr.f32.mxu0 0.0
  %4508 = vmatmul.mubr.f32.gmra.mrb[0].mxu0 %v4378
  %v4509 = vpop.f32.mrb[0].mxu0
  %v4510 = vadd.f32 0.0, %v4509
  %v4511 = vpop.f32.mrb[0].mxu0
  %4512 = vmatprep.mubr.f32.mxu0 0.0
  %4513 = vmatmul.mubr.f32.gmra.mrb[0].mxu0 %v4381
  %v4514 = vpop.f32.mrb[0].mxu0
  %v4515 = vadd.f32 0.0, %v4514
  %v4516 = vpop.f32.mrb[0].mxu0
  %4517 = vmatprep.mubr.f32.mxu0 0.0
  %4518 = vmatmul.mubr.f32.gmra.mrb[0].mxu0 %v4384
  %v4519 = vpop.f32.mrb[0].mxu0
  %v4520 = vadd.f32 0.0, %v4519
  %v4521 = vpop.f32.mrb[0].mxu0
  %4522 = vmatprep.mubr.f32.mxu0 0.0
  %4523 = vmatmul.mubr.f32.gmra.mrb[0].mxu0 %v4387
  %v4524 = vpop.f32.mrb[0].mxu0
  %v4525 = vadd.f32 0.0, %v4524
  %v4526 = vpop.f32.mrb[0].mxu0
  %4527 = vmatprep.mubr.f32.mxu0 0.0
  %4528 = vmatmul.mubr.f32.gmra.mrb[0].mxu0 %v4390
  %v4529 = vpop.f32.mrb[0].mxu0
  %v4530 = vadd.f32 0.0, %v4529
  %v4531 = vpop.f32.mrb[0].mxu0
  %4532 = vmatprep.mubr.f32.mxu0 0.0
  %4533 = vmatmul.mubr.f32.gmra.mrb[0].mxu0 %v4393
  %v4534 = vpop.f32.mrb[0].mxu0
  %v4535 = vadd.f32 0.0, %v4534
  %v4536 = vpop.f32.mrb[0].mxu0
  %4537 = vmatprep.mubr.f32.mxu0 0.0
  %4538 = vmatmul.mubr.f32.gmra.mrb[0].mxu0 %v4396
  %v4539 = vpop.f32.mrb[0].mxu0
  %v4540 = vadd.f32 0.0, %v4539
  %v4541 = vpop.f32.mrb[0].mxu0
  %4542 = vmatprep.mubr.f32.mxu0 0.0
  %4543 = vmatmul.mubr.f32.gmra.mrb[0].mxu0 %v4399
  %v4544 = vpop.f32.mrb[0].mxu0
  %v4545 = vadd.f32 0.0, %v4544
  %v4546 = vpop.f32.mrb[0].mxu0
  %4547 = vmatprep.mubr.f32.mxu0 0.0
  %4548 = vmatmul.mubr.f32.gmra.mrb[0].mxu0 %v4402
  %v4549 = vpop.f32.mrb[0].mxu0
  %v4550 = vadd.f32 0.0, %v4549
  %v4551 = vpop.f32.mrb[0].mxu0
  %4552 = vdwg.mxu0
  %v4553 = vld [vmem:[%s2] sm:$0xff]
  %v4554 = vld [vmem:[%s2 + $0x8] sm:$0xff]
  %v4555 = vld [vmem:[%s2 + $0x10] sm:$0xff]
  %v4556 = vld [vmem:[%s2 + $0x18] sm:$0xff]
  %v4557 = vld [vmem:[%s2 + $0x20] sm:$0xff]
  %v4558 = vld [vmem:[%s2 + $0x28] sm:$0xff]
  %v4559 = vld [vmem:[%s2 + $0x30] sm:$0xff]
  %v4560 = vld [vmem:[%s2 + $0x38] sm:$0xff]
  %v4561 = vld [vmem:[%s2 + $0x40] sm:$0xff]
  %v4562 = vld [vmem:[%s2 + $0x48] sm:$0xff]
  %v4563 = vld [vmem:[%s2 + $0x50] sm:$0xff]
  %v4564 = vld [vmem:[%s2 + $0x58] sm:$0xff]
  %v4565 = vld [vmem:[%s2 + $0x60] sm:$0xff]
  %v4566 = vld [vmem:[%s2 + $0x68] sm:$0xff]
  %v4567 = vld [vmem:[%s2 + $0x70] sm:$0xff]
  %v4568 = vld [vmem:[%s2 + $0x78] sm:$0xff]
  %v4569 = vld [vmem:[%s2 + $0x80] sm:$0xff]
  %v4570 = vld [vmem:[%s2 + $0x88] sm:$0xff]
  %v4571 = vld [vmem:[%s2 + $0x90] sm:$0xff]
  %v4572 = vld [vmem:[%s2 + $0x98] sm:$0xff]
  %v4573 = vld [vmem:[%s2 + $0xa0] sm:$0xff]
  %v4574 = vld [vmem:[%s2 + $0xa8] sm:$0xff]
  %v4575 = vld [vmem:[%s2 + $0xb0] sm:$0xff]
  %v4576 = vld [vmem:[%s2 + $0xb8] sm:$0xff]
  %v4577 = vld [vmem:[%s2 + $0xc0] sm:$0xff]
  %v4578 = vld [vmem:[%s2 + $0xc8] sm:$0xff]
  %v4579 = vld [vmem:[%s2 + $0xd0] sm:$0xff]
  %v4580 = vld [vmem:[%s2 + $0xd8] sm:$0xff]
  %v4581 = vld [vmem:[%s2 + $0xe0] sm:$0xff]
  %v4582 = vld [vmem:[%s2 + $0xe8] sm:$0xff]
  %v4583 = vld [vmem:[%s2 + $0xf0] sm:$0xff]
  %v4584 = vld [vmem:[%s2 + $0xf8] sm:$0xff]
  %v4585 = vld [vmem:[%s2 + $0x100] sm:$0xff]
  %v4586 = vld [vmem:[%s2 + $0x108] sm:$0xff]
  %v4587 = vld [vmem:[%s2 + $0x110] sm:$0xff]
  %v4588 = vld [vmem:[%s2 + $0x118] sm:$0xff]
  %v4589 = vld [vmem:[%s2 + $0x120] sm:$0xff]
  %v4590 = vld [vmem:[%s2 + $0x128] sm:$0xff]
  %v4591 = vld [vmem:[%s2 + $0x130] sm:$0xff]
  %v4592 = vld [vmem:[%s2 + $0x138] sm:$0xff]
  %v4593 = vld [vmem:[%s2 + $0x140] sm:$0xff]
  %v4594 = vld [vmem:[%s2 + $0x148] sm:$0xff]
  %v4595 = vld [vmem:[%s2 + $0x150] sm:$0xff]
  %v4596 = vld [vmem:[%s2 + $0x158] sm:$0xff]
  %v4597 = vld [vmem:[%s2 + $0x160] sm:$0xff]
  %v4598 = vld [vmem:[%s2 + $0x168] sm:$0xff]
  %v4599 = vld [vmem:[%s2 + $0x170] sm:$0xff]
  %v4600 = vld [vmem:[%s2 + $0x178] sm:$0xff]
  %v4601 = vld [vmem:[%s2 + $0x180] sm:$0xff]
  %v4602 = vld [vmem:[%s2 + $0x188] sm:$0xff]
  %v4603 = vld [vmem:[%s2 + $0x190] sm:$0xff]
  %v4604 = vld [vmem:[%s2 + $0x198] sm:$0xff]
  %v4605 = vld [vmem:[%s2 + $0x1a0] sm:$0xff]
  %v4606 = vld [vmem:[%s2 + $0x1a8] sm:$0xff]
  %v4607 = vld [vmem:[%s2 + $0x1b0] sm:$0xff]
  %v4608 = vld [vmem:[%s2 + $0x1b8] sm:$0xff]
  %v4609 = vld [vmem:[%s2 + $0x1c0] sm:$0xff]
  %v4610 = vld [vmem:[%s2 + $0x1c8] sm:$0xff]
  %v4611 = vld [vmem:[%s2 + $0x1d0] sm:$0xff]
  %v4612 = vld [vmem:[%s2 + $0x1d8] sm:$0xff]
  %v4613 = vld [vmem:[%s2 + $0x1e0] sm:$0xff]
  %v4614 = vld [vmem:[%s2 + $0x1e8] sm:$0xff]
  %v4615 = vld [vmem:[%s2 + $0x1f0] sm:$0xff]
  %v4616 = vld [vmem:[%s2 + $0x1f8] sm:$0xff]
  %4617 = vmatprep.subr.mxu0 0.0
  %4618 = vmatpush1.msra.mxu0 %v254
  %4619 = vmatprep.subr.mxu0 0.0
  %4620 = vmatpush1.msra.mxu0 %v255
  %4621 = vmatprep.subr.mxu0 0.0
  %4622 = vmatpush1.msra.mxu0 %v256
  %4623 = vmatprep.subr.mxu0 0.0
  %4624 = vmatpush1.msra.mxu0 %v257
  %4625 = vmatprep.subr.mxu0 0.0
  %4626 = vmatpush1.msra.mxu0 %v258
  %4627 = vmatprep.subr.mxu0 0.0
  %4628 = vmatpush1.msra.mxu0 %v259
  %4629 = vmatprep.subr.mxu0 0.0
  %4630 = vmatpush1.msra.mxu0 %v260
  %4631 = vmatprep.subr.mxu0 0.0
  %4632 = vmatpush1.msra.mxu0 %v261
  %4633 = vmatprep.subr.mxu0 0.0
  %4634 = vmatpush1.msra.mxu0 %v262
  %4635 = vmatprep.subr.mxu0 0.0
  %4636 = vmatpush1.msra.mxu0 %v263
  %4637 = vmatprep.subr.mxu0 0.0
  %4638 = vmatpush1.msra.mxu0 %v264
  %4639 = vmatprep.subr.mxu0 0.0
  %4640 = vmatpush1.msra.mxu0 %v265
  %4641 = vmatprep.subr.mxu0 0.0
  %4642 = vmatpush1.msra.mxu0 %v266
  %4643 = vmatprep.subr.mxu0 0.0
  %4644 = vmatpush1.msra.mxu0 %v267
  %4645 = vmatprep.subr.mxu0 0.0
  %4646 = vmatpush1.msra.mxu0 %v268
  %4647 = vmatprep.subr.mxu0 0.0
  %4648 = vmatpush1.msra.mxu0 %v269
  %4649 = vmatprep.subr.mxu0 0.0
  %4650 = vmatpush1.msra.mxu0 %v270
  %4651 = vmatprep.subr.mxu0 0.0
  %4652 = vmatpush1.msra.mxu0 %v271
  %4653 = vmatprep.subr.mxu0 0.0
  %4654 = vmatpush1.msra.mxu0 %v272
  %4655 = vmatprep.subr.mxu0 0.0
  %4656 = vmatpush1.msra.mxu0 %v273
  %4657 = vmatprep.subr.mxu0 0.0
  %4658 = vmatpush1.msra.mxu0 %v274
  %4659 = vmatprep.subr.mxu0 0.0
  %4660 = vmatpush1.msra.mxu0 %v275
  %4661 = vmatprep.subr.mxu0 0.0
  %4662 = vmatpush1.msra.mxu0 %v276
  %4663 = vmatprep.subr.mxu0 0.0
  %4664 = vmatpush1.msra.mxu0 %v277
  %4665 = vmatprep.subr.mxu0 0.0
  %4666 = vmatpush1.msra.mxu0 %v278
  %4667 = vmatprep.subr.mxu0 0.0
  %4668 = vmatpush1.msra.mxu0 %v279
  %4669 = vmatprep.subr.mxu0 0.0
  %4670 = vmatpush1.msra.mxu0 %v280
  %4671 = vmatprep.subr.mxu0 0.0
  %4672 = vmatpush1.msra.mxu0 %v281
  %4673 = vmatprep.subr.mxu0 0.0
  %4674 = vmatpush1.msra.mxu0 %v282
  %4675 = vmatprep.subr.mxu0 0.0
  %4676 = vmatpush1.msra.mxu0 %v283
  %4677 = vmatprep.subr.mxu0 0.0
  %4678 = vmatpush1.msra.mxu0 %v284
  %4679 = vmatprep.subr.mxu0 0.0
  %4680 = vmatpush1.msra.mxu0 %v285
  %4681 = vmatprep.mubr.f32.mxu0 %v4554
  %4682 = vmatmul.mubr.f32.gmra.mrb[0].mxu0 %v4553
  %v4683 = vpop.f32.mrb[0].mxu0
  %v4684 = vadd.f32 0.0, %v4683
  %v4685 = vpop.f32.mrb[0].mxu0
  %4686 = vmatprep.mubr.f32.mxu0 %v4558
  %4687 = vmatmul.mubr.f32.gmra.mrb[0].mxu0 %v4557
  %v4688 = vpop.f32.mrb[0].mxu0
  %v4689 = vadd.f32 0.0, %v4688
  %v4690 = vpop.f32.mrb[0].mxu0
  %4691 = vmatprep.mubr.f32.mxu0 %v4562
  %4692 = vmatmul.mubr.f32.gmra.mrb[0].mxu0 %v4561
  %v4693 = vpop.f32.mrb[0].mxu0
  %v4694 = vadd.f32 0.0, %v4693
  %v4695 = vpop.f32.mrb[0].mxu0
  %4696 = vmatprep.mubr.f32.mxu0 %v4566
  %4697 = vmatmul.mubr.f32.gmra.mrb[0].mxu0 %v4565
  %v4698 = vpop.f32.mrb[0].mxu0
  %v4699 = vadd.f32 0.0, %v4698
  %v4700 = vpop.f32.mrb[0].mxu0
  %4701 = vmatprep.mubr.f32.mxu0 %v4570
  %4702 = vmatmul.mubr.f32.gmra.mrb[0].mxu0 %v4569
  %v4703 = vpop.f32.mrb[0].mxu0
  %v4704 = vadd.f32 0.0, %v4703
  %v4705 = vpop.f32.mrb[0].mxu0
  %4706 = vmatprep.mubr.f32.mxu0 %v4574
  %4707 = vmatmul.mubr.f32.gmra.mrb[0].mxu0 %v4573
  %v4708 = vpop.f32.mrb[0].mxu0
  %v4709 = vadd.f32 0.0, %v4708
  %v4710 = vpop.f32.mrb[0].mxu0
  %4711 = vmatprep.mubr.f32.mxu0 %v4578
  %4712 = vmatmul.mubr.f32.gmra.mrb[0].mxu0 %v4577
  %v4713 = vpop.f32.mrb[0].mxu0
  %v4714 = vadd.f32 0.0, %v4713
  %v4715 = vpop.f32.mrb[0].mxu0
  %4716 = vmatprep.mubr.f32.mxu0 %v4582
  %4717 = vmatmul.mubr.f32.gmra.mrb[0].mxu0 %v4581
  %v4718 = vpop.f32.mrb[0].mxu0
  %v4719 = vadd.f32 0.0, %v4718
  %v4720 = vpop.f32.mrb[0].mxu0
  %4721 = vmatprep.mubr.f32.mxu0 %v4586
  %4722 = vmatmul.mubr.f32.gmra.mrb[0].mxu0 %v4585
  %v4723 = vpop.f32.mrb[0].mxu0
  %v4724 = vadd.f32 0.0, %v4723
  %v4725 = vpop.f32.mrb[0].mxu0
  %4726 = vmatprep.mubr.f32.mxu0 %v4590
  %4727 = vmatmul.mubr.f32.gmra.mrb[0].mxu0 %v4589
  %v4728 = vpop.f32.mrb[0].mxu0
  %v4729 = vadd.f32 0.0, %v4728
  %v4730 = vpop.f32.mrb[0].mxu0
  %4731 = vmatprep.mubr.f32.mxu0 %v4594
  %4732 = vmatmul.mubr.f32.gmra.mrb[0].mxu0 %v4593
  %v4733 = vpop.f32.mrb[0].mxu0
  %v4734 = vadd.f32 0.0, %v4733
  %v4735 = vpop.f32.mrb[0].mxu0
  %4736 = vmatprep.mubr.f32.mxu0 %v4598
  %4737 = vmatmul.mubr.f32.gmra.mrb[0].mxu0 %v4597
  %v4738 = vpop.f32.mrb[0].mxu0
  %v4739 = vadd.f32 0.0, %v4738
  %v4740 = vpop.f32.mrb[0].mxu0
  %4741 = vmatprep.mubr.f32.mxu0 %v4602
  %4742 = vmatmul.mubr.f32.gmra.mrb[0].mxu0 %v4601
  %v4743 = vpop.f32.mrb[0].mxu0
  %v4744 = vadd.f32 0.0, %v4743
  %v4745 = vpop.f32.mrb[0].mxu0
  %4746 = vmatprep.mubr.f32.mxu0 %v4606
  %4747 = vmatmul.mubr.f32.gmra.mrb[0].mxu0 %v4605
  %v4748 = vpop.f32.mrb[0].mxu0
  %v4749 = vadd.f32 0.0, %v4748
  %v4750 = vpop.f32.mrb[0].mxu0
  %4751 = vmatprep.mubr.f32.mxu0 %v4610
  %4752 = vmatmul.mubr.f32.gmra.mrb[0].mxu0 %v4609
  %v4753 = vpop.f32.mrb[0].mxu0
  %v4754 = vadd.f32 0.0, %v4753
  %v4755 = vpop.f32.mrb[0].mxu0
  %4756 = vmatprep.mubr.f32.mxu0 %v4614
  %4757 = vmatmul.mubr.f32.gmra.mrb[0].mxu0 %v4613
  %v4758 = vpop.f32.mrb[0].mxu0
  %v4759 = vadd.f32 0.0, %v4758
  %v4760 = vpop.f32.mrb[0].mxu0
  %4761 = vdwg.mxu0
  %4762 = vmatprep.subr.mxu0 0.0
  %4763 = vmatpush1.msra.mxu0 %v286
  %4764 = vmatprep.subr.mxu0 0.0
  %4765 = vmatpush1.msra.mxu0 %v287
  %4766 = vmatprep.subr.mxu0 0.0
  %4767 = vmatpush1.msra.mxu0 %v288
  %4768 = vmatprep.subr.mxu0 0.0
  %4769 = vmatpush1.msra.mxu0 %v289
  %4770 = vmatprep.subr.mxu0 0.0
  %4771 = vmatpush1.msra.mxu0 %v290
  %4772 = vmatprep.subr.mxu0 0.0
  %4773 = vmatpush1.msra.mxu0 %v291
  %4774 = vmatprep.subr.mxu0 0.0
  %4775 = vmatpush1.msra.mxu0 %v292
  %4776 = vmatprep.subr.mxu0 0.0
  %4777 = vmatpush1.msra.mxu0 %v293
  %4778 = vmatprep.subr.mxu0 0.0
  %4779 = vmatpush1.msra.mxu0 %v294
  %4780 = vmatprep.subr.mxu0 0.0
  %4781 = vmatpush1.msra.mxu0 %v295
  %4782 = vmatprep.subr.mxu0 0.0
  %4783 = vmatpush1.msra.mxu0 %v296
  %4784 = vmatprep.subr.mxu0 0.0
  %4785 = vmatpush1.msra.mxu0 %v297
  %4786 = vmatprep.subr.mxu0 0.0
  %4787 = vmatpush1.msra.mxu0 %v298
  %4788 = vmatprep.subr.mxu0 0.0
  %4789 = vmatpush1.msra.mxu0 %v299
  %4790 = vmatprep.subr.mxu0 0.0
  %4791 = vmatpush1.msra.mxu0 %v300
  %4792 = vmatprep.subr.mxu0 0.0
  %4793 = vmatpush1.msra.mxu0 %v301
  %4794 = vmatprep.subr.mxu0 0.0
  %4795 = vmatpush1.msra.mxu0 %v302
  %4796 = vmatprep.subr.mxu0 0.0
  %4797 = vmatpush1.msra.mxu0 %v303
  %4798 = vmatprep.subr.mxu0 0.0
  %4799 = vmatpush1.msra.mxu0 %v304
  %4800 = vmatprep.subr.mxu0 0.0
  %4801 = vmatpush1.msra.mxu0 %v305
  %4802 = vmatprep.subr.mxu0 0.0
  %4803 = vmatpush1.msra.mxu0 %v306
  %4804 = vmatprep.subr.mxu0 0.0
  %4805 = vmatpush1.msra.mxu0 %v307
  %4806 = vmatprep.subr.mxu0 0.0
  %4807 = vmatpush1.msra.mxu0 %v308
  %4808 = vmatprep.subr.mxu0 0.0
  %4809 = vmatpush1.msra.mxu0 %v309
  %4810 = vmatprep.subr.mxu0 0.0
  %4811 = vmatpush1.msra.mxu0 %v310
  %4812 = vmatprep.subr.mxu0 0.0
  %4813 = vmatpush1.msra.mxu0 %v311
  %4814 = vmatprep.subr.mxu0 0.0
  %4815 = vmatpush1.msra.mxu0 %v312
  %4816 = vmatprep.subr.mxu0 0.0
  %4817 = vmatpush1.msra.mxu0 %v313
  %4818 = vmatprep.subr.mxu0 0.0
  %4819 = vmatpush1.msra.mxu0 %v314
  %4820 = vmatprep.subr.mxu0 0.0
  %4821 = vmatpush1.msra.mxu0 %v315
  %4822 = vmatprep.subr.mxu0 0.0
  %4823 = vmatpush1.msra.mxu0 %v316
  %4824 = vmatprep.subr.mxu0 0.0
  %4825 = vmatpush1.msra.mxu0 %v317
  %4826 = vmatprep.mubr.f32.mxu0 %v4556
  %4827 = vmatmul.mubr.f32.gmra.mrb[0].mxu0 %v4555
  %v4828 = vpop.f32.mrb[0].mxu0
  %v4829 = vadd.f32 %v4684, %v4828
  %v4830 = vpop.f32.mrb[0].mxu0
  %4831 = vmatprep.mubr.f32.mxu0 %v4560
  %4832 = vmatmul.mubr.f32.gmra.mrb[0].mxu0 %v4559
  %v4833 = vpop.f32.mrb[0].mxu0
  %v4834 = vadd.f32 %v4689, %v4833
  %v4835 = vpop.f32.mrb[0].mxu0
  %4836 = vmatprep.mubr.f32.mxu0 %v4564
  %4837 = vmatmul.mubr.f32.gmra.mrb[0].mxu0 %v4563
  %v4838 = vpop.f32.mrb[0].mxu0
  %v4839 = vadd.f32 %v4694, %v4838
  %v4840 = vpop.f32.mrb[0].mxu0
  %4841 = vmatprep.mubr.f32.mxu0 %v4568
  %4842 = vmatmul.mubr.f32.gmra.mrb[0].mxu0 %v4567
  %v4843 = vpop.f32.mrb[0].mxu0
  %v4844 = vadd.f32 %v4699, %v4843
  %v4845 = vpop.f32.mrb[0].mxu0
  %4846 = vmatprep.mubr.f32.mxu0 %v4572
  %4847 = vmatmul.mubr.f32.gmra.mrb[0].mxu0 %v4571
  %v4848 = vpop.f32.mrb[0].mxu0
  %v4849 = vadd.f32 %v4704, %v4848
  %v4850 = vpop.f32.mrb[0].mxu0
  %4851 = vmatprep.mubr.f32.mxu0 %v4576
  %4852 = vmatmul.mubr.f32.gmra.mrb[0].mxu0 %v4575
  %v4853 = vpop.f32.mrb[0].mxu0
  %v4854 = vadd.f32 %v4709, %v4853
  %v4855 = vpop.f32.mrb[0].mxu0
  %4856 = vmatprep.mubr.f32.mxu0 %v4580
  %4857 = vmatmul.mubr.f32.gmra.mrb[0].mxu0 %v4579
  %v4858 = vpop.f32.mrb[0].mxu0
  %v4859 = vadd.f32 %v4714, %v4858
  %v4860 = vpop.f32.mrb[0].mxu0
  %4861 = vmatprep.mubr.f32.mxu0 %v4584
  %4862 = vmatmul.mubr.f32.gmra.mrb[0].mxu0 %v4583
  %v4863 = vpop.f32.mrb[0].mxu0
  %v4864 = vadd.f32 %v4719, %v4863
  %v4865 = vpop.f32.mrb[0].mxu0
  %4866 = vmatprep.mubr.f32.mxu0 %v4588
  %4867 = vmatmul.mubr.f32.gmra.mrb[0].mxu0 %v4587
  %v4868 = vpop.f32.mrb[0].mxu0
  %v4869 = vadd.f32 %v4724, %v4868
  %v4870 = vpop.f32.mrb[0].mxu0
  %4871 = vmatprep.mubr.f32.mxu0 %v4592
  %4872 = vmatmul.mubr.f32.gmra.mrb[0].mxu0 %v4591
  %v4873 = vpop.f32.mrb[0].mxu0
  %v4874 = vadd.f32 %v4729, %v4873
  %v4875 = vpop.f32.mrb[0].mxu0
  %4876 = vmatprep.mubr.f32.mxu0 %v4596
  %4877 = vmatmul.mubr.f32.gmra.mrb[0].mxu0 %v4595
  %v4878 = vpop.f32.mrb[0].mxu0
  %v4879 = vadd.f32 %v4734, %v4878
  %v4880 = vpop.f32.mrb[0].mxu0
  %4881 = vmatprep.mubr.f32.mxu0 %v4600
  %4882 = vmatmul.mubr.f32.gmra.mrb[0].mxu0 %v4599
  %v4883 = vpop.f32.mrb[0].mxu0
  %v4884 = vadd.f32 %v4739, %v4883
  %v4885 = vpop.f32.mrb[0].mxu0
  %4886 = vmatprep.mubr.f32.mxu0 %v4604
  %4887 = vmatmul.mubr.f32.gmra.mrb[0].mxu0 %v4603
  %v4888 = vpop.f32.mrb[0].mxu0
  %v4889 = vadd.f32 %v4744, %v4888
  %v4890 = vpop.f32.mrb[0].mxu0
  %4891 = vmatprep.mubr.f32.mxu0 %v4608
  %4892 = vmatmul.mubr.f32.gmra.mrb[0].mxu0 %v4607
  %v4893 = vpop.f32.mrb[0].mxu0
  %v4894 = vadd.f32 %v4749, %v4893
  %v4895 = vpop.f32.mrb[0].mxu0
  %4896 = vmatprep.mubr.f32.mxu0 %v4612
  %4897 = vmatmul.mubr.f32.gmra.mrb[0].mxu0 %v4611
  %v4898 = vpop.f32.mrb[0].mxu0
  %v4899 = vadd.f32 %v4754, %v4898
  %v4900 = vpop.f32.mrb[0].mxu0
  %4901 = vmatprep.mubr.f32.mxu0 %v4616
  %4902 = vmatmul.mubr.f32.gmra.mrb[0].mxu0 %v4615
  %v4903 = vpop.f32.mrb[0].mxu0
  %v4904 = vadd.f32 %v4759, %v4903
  %v4905 = vpop.f32.mrb[0].mxu0
  %4906 = vdwg.mxu0
  %4907 = vst.msk [vmem:[%s3548 + $0x8] sm:$0xff] %vm49, %v4829
  %4908 = vst.msk [vmem:[%s3548 + $0x20] sm:$0xff] %vm49, %v4834
  %4909 = vst.msk [vmem:[%s3548 + $0x38] sm:$0xff] %vm49, %v4839
  %4910 = vst.msk [vmem:[%s3548 + $0x50] sm:$0xff] %vm49, %v4844
  %4911 = vst.msk [vmem:[%s3548 + $0x68] sm:$0xff] %vm49, %v4849
  %4912 = vst.msk [vmem:[%s3548 + $0x80] sm:$0xff] %vm49, %v4854
  %4913 = vst.msk [vmem:[%s3548 + $0x98] sm:$0xff] %vm49, %v4859
  %4914 = vst.msk [vmem:[%s3548 + $0xb0] sm:$0xff] %vm49, %v4864
  %4915 = vst.msk [vmem:[%s3548 + $0xf8] sm:$0xff] %vm49, %v4869
  %4916 = vst.msk [vmem:[%s3548 + $0x110] sm:$0xff] %vm49, %v4874
  %4917 = vst.msk [vmem:[%s3548 + $0x128] sm:$0xff] %vm49, %v4879
  %4918 = vst.msk [vmem:[%s3548 + $0x140] sm:$0xff] %vm49, %v4884
  %4919 = vst.msk [vmem:[%s3548 + $0x158] sm:$0xff] %vm49, %v4889
  %4920 = vst.msk [vmem:[%s3548 + $0x170] sm:$0xff] %vm49, %v4894
  %4921 = vst.msk [vmem:[%s3548 + $0x188] sm:$0xff] %vm49, %v4899
  %4922 = vst.msk [vmem:[%s3548 + $0x1a0] sm:$0xff] %vm49, %v4904
  %v4923 = vld [vmem:[#allocation3 + $0x7] sm:$0xff]
  %v4924 = vld [vmem:[#allocation3 + $0x1f] sm:$0xff]
  %v4925 = vld [vmem:[#allocation3 + $0x37] sm:$0xff]
  %v4926 = vld [vmem:[#allocation3 + $0x4f] sm:$0xff]
  %v4927 = vld [vmem:[#allocation3 + $0x67] sm:$0xff]
  %v4928 = vld [vmem:[#allocation3 + $0x7f] sm:$0xff]
  %v4929 = vld [vmem:[#allocation3 + $0x97] sm:$0xff]
  %v4930 = vld [vmem:[#allocation3 + $0xaf] sm:$0xff]
  %v4931 = vld [vmem:[#allocation3 + $0xf7] sm:$0xff]
  %v4932 = vld [vmem:[#allocation3 + $0x10f] sm:$0xff]
  %v4933 = vld [vmem:[#allocation3 + $0x127] sm:$0xff]
  %v4934 = vld [vmem:[#allocation3 + $0x13f] sm:$0xff]
  %v4935 = vld [vmem:[#allocation3 + $0x157] sm:$0xff]
  %v4936 = vld [vmem:[#allocation3 + $0x16f] sm:$0xff]
  %v4937 = vld [vmem:[#allocation3 + $0x187] sm:$0xff]
  %v4938 = vld [vmem:[#allocation3 + $0x19f] sm:$0xff]
  %v4939 = vld [vmem:[#allocation3 + $0x8] sm:$0xff]
  %v4940 = vld [vmem:[#allocation3 + $0x20] sm:$0xff]
  %v4941 = vld [vmem:[#allocation3 + $0x38] sm:$0xff]
  %v4942 = vld [vmem:[#allocation3 + $0x50] sm:$0xff]
  %v4943 = vld [vmem:[#allocation3 + $0x68] sm:$0xff]
  %v4944 = vld [vmem:[#allocation3 + $0x80] sm:$0xff]
  %v4945 = vld [vmem:[#allocation3 + $0x98] sm:$0xff]
  %v4946 = vld [vmem:[#allocation3 + $0xb0] sm:$0xff]
  %v4947 = vld [vmem:[#allocation3 + $0xf8] sm:$0xff]
  %v4948 = vld [vmem:[#allocation3 + $0x110] sm:$0xff]
  %v4949 = vld [vmem:[#allocation3 + $0x128] sm:$0xff]
  %v4950 = vld [vmem:[#allocation3 + $0x140] sm:$0xff]
  %v4951 = vld [vmem:[#allocation3 + $0x158] sm:$0xff]
  %v4952 = vld [vmem:[#allocation3 + $0x170] sm:$0xff]
  %v4953 = vld [vmem:[#allocation3 + $0x188] sm:$0xff]
  %v4954 = vld [vmem:[#allocation3 + $0x1a0] sm:$0xff]
  %v4955 = vld [vmem:[#allocation3 + $0x9] sm:$0xff]
  %v4956 = vld [vmem:[#allocation3 + $0x21] sm:$0xff]
  %v4957 = vld [vmem:[#allocation3 + $0x39] sm:$0xff]
  %v4958 = vld [vmem:[#allocation3 + $0x51] sm:$0xff]
  %v4959 = vld [vmem:[#allocation3 + $0x69] sm:$0xff]
  %v4960 = vld [vmem:[#allocation3 + $0x81] sm:$0xff]
  %v4961 = vld [vmem:[#allocation3 + $0x99] sm:$0xff]
  %v4962 = vld [vmem:[#allocation3 + $0xb1] sm:$0xff]
  %v4963 = vld [vmem:[#allocation3 + $0xf9] sm:$0xff]
  %v4964 = vld [vmem:[#allocation3 + $0x111] sm:$0xff]
  %v4965 = vld [vmem:[#allocation3 + $0x129] sm:$0xff]
  %v4966 = vld [vmem:[#allocation3 + $0x141] sm:$0xff]
  %v4967 = vld [vmem:[#allocation3 + $0x159] sm:$0xff]
  %v4968 = vld [vmem:[#allocation3 + $0x171] sm:$0xff]
  %v4969 = vld [vmem:[#allocation3 + $0x189] sm:$0xff]
  %v4970 = vld [vmem:[#allocation3 + $0x1a1] sm:$0xff]
  %v4971 = vld [vmem:[%s3548 + $0x7] sm:$0xff]
  %v4972 = vld [vmem:[%s3548 + $0x1f] sm:$0xff]
  %v4973 = vld [vmem:[%s3548 + $0x37] sm:$0xff]
  %v4974 = vld [vmem:[%s3548 + $0x4f] sm:$0xff]
  %v4975 = vld [vmem:[%s3548 + $0x67] sm:$0xff]
  %v4976 = vld [vmem:[%s3548 + $0x7f] sm:$0xff]
  %v4977 = vld [vmem:[%s3548 + $0x97] sm:$0xff]
  %v4978 = vld [vmem:[%s3548 + $0xaf] sm:$0xff]
  %v4979 = vld [vmem:[%s3548 + $0xf7] sm:$0xff]
  %v4980 = vld [vmem:[%s3548 + $0x10f] sm:$0xff]
  %v4981 = vld [vmem:[%s3548 + $0x127] sm:$0xff]
  %v4982 = vld [vmem:[%s3548 + $0x13f] sm:$0xff]
  %v4983 = vld [vmem:[%s3548 + $0x157] sm:$0xff]
  %v4984 = vld [vmem:[%s3548 + $0x16f] sm:$0xff]
  %v4985 = vld [vmem:[%s3548 + $0x187] sm:$0xff]
  %v4986 = vld [vmem:[%s3548 + $0x19f] sm:$0xff]
  %v4987 = vld [vmem:[%s3548 + $0x8] sm:$0xff]
  %v4988 = vld [vmem:[%s3548 + $0x20] sm:$0xff]
  %v4989 = vld [vmem:[%s3548 + $0x38] sm:$0xff]
  %v4990 = vld [vmem:[%s3548 + $0x50] sm:$0xff]
  %v4991 = vld [vmem:[%s3548 + $0x68] sm:$0xff]
  %v4992 = vld [vmem:[%s3548 + $0x80] sm:$0xff]
  %v4993 = vld [vmem:[%s3548 + $0x98] sm:$0xff]
  %v4994 = vld [vmem:[%s3548 + $0xb0] sm:$0xff]
  %v4995 = vld [vmem:[%s3548 + $0xf8] sm:$0xff]
  %v4996 = vld [vmem:[%s3548 + $0x110] sm:$0xff]
  %v4997 = vld [vmem:[%s3548 + $0x128] sm:$0xff]
  %v4998 = vld [vmem:[%s3548 + $0x140] sm:$0xff]
  %v4999 = vld [vmem:[%s3548 + $0x158] sm:$0xff]
  %v5000 = vld [vmem:[%s3548 + $0x170] sm:$0xff]
  %v5001 = vld [vmem:[%s3548 + $0x188] sm:$0xff]
  %v5002 = vld [vmem:[%s3548 + $0x1a0] sm:$0xff]
  %v5003 = vld [vmem:[%s3548 + $0x9] sm:$0xff]
  %v5004 = vld [vmem:[%s3548 + $0x21] sm:$0xff]
  %v5005 = vld [vmem:[%s3548 + $0x39] sm:$0xff]
  %v5006 = vld [vmem:[%s3548 + $0x51] sm:$0xff]
  %v5007 = vld [vmem:[%s3548 + $0x69] sm:$0xff]
  %v5008 = vld [vmem:[%s3548 + $0x81] sm:$0xff]
  %v5009 = vld [vmem:[%s3548 + $0x99] sm:$0xff]
  %v5010 = vld [vmem:[%s3548 + $0xb1] sm:$0xff]
  %v5011 = vld [vmem:[%s3548 + $0xf9] sm:$0xff]
  %v5012 = vld [vmem:[%s3548 + $0x111] sm:$0xff]
  %v5013 = vld [vmem:[%s3548 + $0x129] sm:$0xff]
  %v5014 = vld [vmem:[%s3548 + $0x141] sm:$0xff]
  %v5015 = vld [vmem:[%s3548 + $0x159] sm:$0xff]
  %v5016 = vld [vmem:[%s3548 + $0x171] sm:$0xff]
  %v5017 = vld [vmem:[%s3548 + $0x189] sm:$0xff]
  %v5018 = vld [vmem:[%s3548 + $0x1a1] sm:$0xff]
  %v5019 = vld [vmem:[%s3661 + $0x7] sm:$0xff]
  %v5020 = vld [vmem:[%s3661 + $0x1f] sm:$0xff]
  %v5021 = vld [vmem:[%s3661 + $0x37] sm:$0xff]
  %v5022 = vld [vmem:[%s3661 + $0x4f] sm:$0xff]
  %v5023 = vld [vmem:[%s3661 + $0x67] sm:$0xff]
  %v5024 = vld [vmem:[%s3661 + $0x7f] sm:$0xff]
  %v5025 = vld [vmem:[%s3661 + $0x97] sm:$0xff]
  %v5026 = vld [vmem:[%s3661 + $0xaf] sm:$0xff]
  %v5027 = vld [vmem:[%s3661 + $0xf7] sm:$0xff]
  %v5028 = vld [vmem:[%s3661 + $0x10f] sm:$0xff]
  %v5029 = vld [vmem:[%s3661 + $0x127] sm:$0xff]
  %v5030 = vld [vmem:[%s3661 + $0x13f] sm:$0xff]
  %v5031 = vld [vmem:[%s3661 + $0x157] sm:$0xff]
  %v5032 = vld [vmem:[%s3661 + $0x16f] sm:$0xff]
  %v5033 = vld [vmem:[%s3661 + $0x187] sm:$0xff]
  %v5034 = vld [vmem:[%s3661 + $0x19f] sm:$0xff]
  %v5035 = vld [vmem:[%s3661 + $0x8] sm:$0xff]
  %v5036 = vld [vmem:[%s3661 + $0x20] sm:$0xff]
  %v5037 = vld [vmem:[%s3661 + $0x38] sm:$0xff]
  %v5038 = vld [vmem:[%s3661 + $0x50] sm:$0xff]
  %v5039 = vld [vmem:[%s3661 + $0x68] sm:$0xff]
  %v5040 = vld [vmem:[%s3661 + $0x80] sm:$0xff]
  %v5041 = vld [vmem:[%s3661 + $0x98] sm:$0xff]
  %v5042 = vld [vmem:[%s3661 + $0xb0] sm:$0xff]
  %v5043 = vld [vmem:[%s3661 + $0xf8] sm:$0xff]
  %v5044 = vld [vmem:[%s3661 + $0x110] sm:$0xff]
  %v5045 = vld [vmem:[%s3661 + $0x128] sm:$0xff]
  %v5046 = vld [vmem:[%s3661 + $0x140] sm:$0xff]
  %v5047 = vld [vmem:[%s3661 + $0x158] sm:$0xff]
  %v5048 = vld [vmem:[%s3661 + $0x170] sm:$0xff]
  %v5049 = vld [vmem:[%s3661 + $0x188] sm:$0xff]
  %v5050 = vld [vmem:[%s3661 + $0x1a0] sm:$0xff]
  %v5051 = vld [vmem:[%s3661 + $0x9] sm:$0xff]
  %v5052 = vld [vmem:[%s3661 + $0x21] sm:$0xff]
  %v5053 = vld [vmem:[%s3661 + $0x39] sm:$0xff]
  %v5054 = vld [vmem:[%s3661 + $0x51] sm:$0xff]
  %v5055 = vld [vmem:[%s3661 + $0x69] sm:$0xff]
  %v5056 = vld [vmem:[%s3661 + $0x81] sm:$0xff]
  %v5057 = vld [vmem:[%s3661 + $0x99] sm:$0xff]
  %v5058 = vld [vmem:[%s3661 + $0xb1] sm:$0xff]
  %v5059 = vld [vmem:[%s3661 + $0xf9] sm:$0xff]
  %v5060 = vld [vmem:[%s3661 + $0x111] sm:$0xff]
  %v5061 = vld [vmem:[%s3661 + $0x129] sm:$0xff]
  %v5062 = vld [vmem:[%s3661 + $0x141] sm:$0xff]
  %v5063 = vld [vmem:[%s3661 + $0x159] sm:$0xff]
  %v5064 = vld [vmem:[%s3661 + $0x171] sm:$0xff]
  %v5065 = vld [vmem:[%s3661 + $0x189] sm:$0xff]
  %v5066 = vld [vmem:[%s3661 + $0x1a1] sm:$0xff]
  %5083 = vrot.lane.b32.xlu0 %v4939, 4
  %v5084 = vpop.permute.xlu0 %5083
  %5085 = vrot.lane.b32.xlu0 %v4940, 4
  %v5086 = vpop.permute.xlu0 %5085
  %5087 = vrot.lane.b32.xlu0 %v4941, 4
  %v5088 = vpop.permute.xlu0 %5087
  %5089 = vrot.lane.b32.xlu0 %v4942, 4
  %v5090 = vpop.permute.xlu0 %5089
  %5091 = vrot.lane.b32.xlu0 %v4943, 4
  %v5092 = vpop.permute.xlu0 %5091
  %5093 = vrot.lane.b32.xlu0 %v4944, 4
  %v5094 = vpop.permute.xlu0 %5093
  %5095 = vrot.lane.b32.xlu0 %v4945, 4
  %v5096 = vpop.permute.xlu0 %5095
  %5097 = vrot.lane.b32.xlu0 %v4946, 4
  %v5098 = vpop.permute.xlu0 %5097
  %5099 = vrot.lane.b32.xlu0 %v4947, 4
  %v5100 = vpop.permute.xlu0 %5099
  %5101 = vrot.lane.b32.xlu0 %v4948, 4
  %v5102 = vpop.permute.xlu0 %5101
  %5103 = vrot.lane.b32.xlu0 %v4949, 4
  %v5104 = vpop.permute.xlu0 %5103
  %5105 = vrot.lane.b32.xlu0 %v4950, 4
  %v5106 = vpop.permute.xlu0 %5105
  %5107 = vrot.lane.b32.xlu0 %v4951, 4
  %v5108 = vpop.permute.xlu0 %5107
  %5109 = vrot.lane.b32.xlu0 %v4952, 4
  %v5110 = vpop.permute.xlu0 %5109
  %5111 = vrot.lane.b32.xlu0 %v4953, 4
  %v5112 = vpop.permute.xlu0 %5111
  %5113 = vrot.lane.b32.xlu0 %v4954, 4
  %v5114 = vpop.permute.xlu0 %5113
  %5147 = vrot.lane.b32.xlu0 %v4955, 8
  %v5148 = vpop.permute.xlu0 %5147
  %5149 = vrot.lane.b32.xlu0 %v4956, 8
  %v5150 = vpop.permute.xlu0 %5149
  %5151 = vrot.lane.b32.xlu0 %v4957, 8
  %v5152 = vpop.permute.xlu0 %5151
  %5153 = vrot.lane.b32.xlu0 %v4958, 8
  %v5154 = vpop.permute.xlu0 %5153
  %5155 = vrot.lane.b32.xlu0 %v4959, 8
  %v5156 = vpop.permute.xlu0 %5155
  %5157 = vrot.lane.b32.xlu0 %v4960, 8
  %v5158 = vpop.permute.xlu0 %5157
  %5159 = vrot.lane.b32.xlu0 %v4961, 8
  %v5160 = vpop.permute.xlu0 %5159
  %5161 = vrot.lane.b32.xlu0 %v4962, 8
  %v5162 = vpop.permute.xlu0 %5161
  %5163 = vrot.lane.b32.xlu0 %v4963, 8
  %v5164 = vpop.permute.xlu0 %5163
  %5165 = vrot.lane.b32.xlu0 %v4964, 8
  %v5166 = vpop.permute.xlu0 %5165
  %5167 = vrot.lane.b32.xlu0 %v4965, 8
  %v5168 = vpop.permute.xlu0 %5167
  %5169 = vrot.lane.b32.xlu0 %v4966, 8
  %v5170 = vpop.permute.xlu0 %5169
  %5171 = vrot.lane.b32.xlu0 %v4967, 8
  %v5172 = vpop.permute.xlu0 %5171
  %5173 = vrot.lane.b32.xlu0 %v4968, 8
  %v5174 = vpop.permute.xlu0 %5173
  %5175 = vrot.lane.b32.xlu0 %v4969, 8
  %v5176 = vpop.permute.xlu0 %5175
  %5177 = vrot.lane.b32.xlu0 %v4970, 8
  %v5178 = vpop.permute.xlu0 %5177
  %5211 = vrot.lane.b32.xlu0 %v4971, 12
  %v5212 = vpop.permute.xlu0 %5211
  %5213 = vrot.lane.b32.xlu0 %v4972, 12
  %v5214 = vpop.permute.xlu0 %5213
  %5215 = vrot.lane.b32.xlu0 %v4973, 12
  %v5216 = vpop.permute.xlu0 %5215
  %5217 = vrot.lane.b32.xlu0 %v4974, 12
  %v5218 = vpop.permute.xlu0 %5217
  %5219 = vrot.lane.b32.xlu0 %v4975, 12
  %v5220 = vpop.permute.xlu0 %5219
  %5221 = vrot.lane.b32.xlu0 %v4976, 12
  %v5222 = vpop.permute.xlu0 %5221
  %5223 = vrot.lane.b32.xlu0 %v4977, 12
  %v5224 = vpop.permute.xlu0 %5223
  %5225 = vrot.lane.b32.xlu0 %v4978, 12
  %v5226 = vpop.permute.xlu0 %5225
  %5227 = vrot.lane.b32.xlu0 %v4979, 12
  %v5228 = vpop.permute.xlu0 %5227
  %5229 = vrot.lane.b32.xlu0 %v4980, 12
  %v5230 = vpop.permute.xlu0 %5229
  %5231 = vrot.lane.b32.xlu0 %v4981, 12
  %v5232 = vpop.permute.xlu0 %5231
  %5233 = vrot.lane.b32.xlu0 %v4982, 12
  %v5234 = vpop.permute.xlu0 %5233
  %5235 = vrot.lane.b32.xlu0 %v4983, 12
  %v5236 = vpop.permute.xlu0 %5235
  %5237 = vrot.lane.b32.xlu0 %v4984, 12
  %v5238 = vpop.permute.xlu0 %5237
  %5239 = vrot.lane.b32.xlu0 %v4985, 12
  %v5240 = vpop.permute.xlu0 %5239
  %5241 = vrot.lane.b32.xlu0 %v4986, 12
  %v5242 = vpop.permute.xlu0 %5241
  %5275 = vrot.lane.b32.xlu0 %v4987, 16
  %v5276 = vpop.permute.xlu0 %5275
  %5277 = vrot.lane.b32.xlu0 %v4988, 16
  %v5278 = vpop.permute.xlu0 %5277
  %5279 = vrot.lane.b32.xlu0 %v4989, 16
  %v5280 = vpop.permute.xlu0 %5279
  %5281 = vrot.lane.b32.xlu0 %v4990, 16
  %v5282 = vpop.permute.xlu0 %5281
  %5283 = vrot.lane.b32.xlu0 %v4991, 16
  %v5284 = vpop.permute.xlu0 %5283
  %5285 = vrot.lane.b32.xlu0 %v4992, 16
  %v5286 = vpop.permute.xlu0 %5285
  %5287 = vrot.lane.b32.xlu0 %v4993, 16
  %v5288 = vpop.permute.xlu0 %5287
  %5289 = vrot.lane.b32.xlu0 %v4994, 16
  %v5290 = vpop.permute.xlu0 %5289
  %5291 = vrot.lane.b32.xlu0 %v4995, 16
  %v5292 = vpop.permute.xlu0 %5291
  %5293 = vrot.lane.b32.xlu0 %v4996, 16
  %v5294 = vpop.permute.xlu0 %5293
  %5295 = vrot.lane.b32.xlu0 %v4997, 16
  %v5296 = vpop.permute.xlu0 %5295
  %5297 = vrot.lane.b32.xlu0 %v4998, 16
  %v5298 = vpop.permute.xlu0 %5297
  %5299 = vrot.lane.b32.xlu0 %v4999, 16
  %v5300 = vpop.permute.xlu0 %5299
  %5301 = vrot.lane.b32.xlu0 %v5000, 16
  %v5302 = vpop.permute.xlu0 %5301
  %5303 = vrot.lane.b32.xlu0 %v5001, 16
  %v5304 = vpop.permute.xlu0 %5303
  %5305 = vrot.lane.b32.xlu0 %v5002, 16
  %v5306 = vpop.permute.xlu0 %5305
  %5339 = vrot.lane.b32.xlu0 %v5003, 20
  %v5340 = vpop.permute.xlu0 %5339
  %5341 = vrot.lane.b32.xlu0 %v5004, 20
  %v5342 = vpop.permute.xlu0 %5341
  %5343 = vrot.lane.b32.xlu0 %v5005, 20
  %v5344 = vpop.permute.xlu0 %5343
  %5345 = vrot.lane.b32.xlu0 %v5006, 20
  %v5346 = vpop.permute.xlu0 %5345
  %5347 = vrot.lane.b32.xlu0 %v5007, 20
  %v5348 = vpop.permute.xlu0 %5347
  %5349 = vrot.lane.b32.xlu0 %v5008, 20
  %v5350 = vpop.permute.xlu0 %5349
  %5351 = vrot.lane.b32.xlu0 %v5009, 20
  %v5352 = vpop.permute.xlu0 %5351
  %5353 = vrot.lane.b32.xlu0 %v5010, 20
  %v5354 = vpop.permute.xlu0 %5353
  %5355 = vrot.lane.b32.xlu0 %v5011, 20
  %v5356 = vpop.permute.xlu0 %5355
  %5357 = vrot.lane.b32.xlu0 %v5012, 20
  %v5358 = vpop.permute.xlu0 %5357
  %5359 = vrot.lane.b32.xlu0 %v5013, 20
  %v5360 = vpop.permute.xlu0 %5359
  %5361 = vrot.lane.b32.xlu0 %v5014, 20
  %v5362 = vpop.permute.xlu0 %5361
  %5363 = vrot.lane.b32.xlu0 %v5015, 20
  %v5364 = vpop.permute.xlu0 %5363
  %5365 = vrot.lane.b32.xlu0 %v5016, 20
  %v5366 = vpop.permute.xlu0 %5365
  %5367 = vrot.lane.b32.xlu0 %v5017, 20
  %v5368 = vpop.permute.xlu0 %5367
  %5369 = vrot.lane.b32.xlu0 %v5018, 20
  %v5370 = vpop.permute.xlu0 %5369
  %5403 = vrot.lane.b32.xlu0 %v5019, 24
  %v5404 = vpop.permute.xlu0 %5403
  %5405 = vrot.lane.b32.xlu0 %v5020, 24
  %v5406 = vpop.permute.xlu0 %5405
  %5407 = vrot.lane.b32.xlu0 %v5021, 24
  %v5408 = vpop.permute.xlu0 %5407
  %5409 = vrot.lane.b32.xlu0 %v5022, 24
  %v5410 = vpop.permute.xlu0 %5409
  %5411 = vrot.lane.b32.xlu0 %v5023, 24
  %v5412 = vpop.permute.xlu0 %5411
  %5413 = vrot.lane.b32.xlu0 %v5024, 24
  %v5414 = vpop.permute.xlu0 %5413
  %5415 = vrot.lane.b32.xlu0 %v5025, 24
  %v5416 = vpop.permute.xlu0 %5415
  %5417 = vrot.lane.b32.xlu0 %v5026, 24
  %v5418 = vpop.permute.xlu0 %5417
  %5419 = vrot.lane.b32.xlu0 %v5027, 24
  %v5420 = vpop.permute.xlu0 %5419
  %5421 = vrot.lane.b32.xlu0 %v5028, 24
  %v5422 = vpop.permute.xlu0 %5421
  %5423 = vrot.lane.b32.xlu0 %v5029, 24
  %v5424 = vpop.permute.xlu0 %5423
  %5425 = vrot.lane.b32.xlu0 %v5030, 24
  %v5426 = vpop.permute.xlu0 %5425
  %5427 = vrot.lane.b32.xlu0 %v5031, 24
  %v5428 = vpop.permute.xlu0 %5427
  %5429 = vrot.lane.b32.xlu0 %v5032, 24
  %v5430 = vpop.permute.xlu0 %5429
  %5431 = vrot.lane.b32.xlu0 %v5033, 24
  %v5432 = vpop.permute.xlu0 %5431
  %5433 = vrot.lane.b32.xlu0 %v5034, 24
  %v5434 = vpop.permute.xlu0 %5433
  %5467 = vrot.lane.b32.xlu0 %v5035, 28
  %v5468 = vpop.permute.xlu0 %5467
  %5469 = vrot.lane.b32.xlu0 %v5036, 28
  %v5470 = vpop.permute.xlu0 %5469
  %5471 = vrot.lane.b32.xlu0 %v5037, 28
  %v5472 = vpop.permute.xlu0 %5471
  %5473 = vrot.lane.b32.xlu0 %v5038, 28
  %v5474 = vpop.permute.xlu0 %5473
  %5475 = vrot.lane.b32.xlu0 %v5039, 28
  %v5476 = vpop.permute.xlu0 %5475
  %5477 = vrot.lane.b32.xlu0 %v5040, 28
  %v5478 = vpop.permute.xlu0 %5477
  %5479 = vrot.lane.b32.xlu0 %v5041, 28
  %v5480 = vpop.permute.xlu0 %5479
  %5481 = vrot.lane.b32.xlu0 %v5042, 28
  %v5482 = vpop.permute.xlu0 %5481
  %5483 = vrot.lane.b32.xlu0 %v5043, 28
  %v5484 = vpop.permute.xlu0 %5483
  %5485 = vrot.lane.b32.xlu0 %v5044, 28
  %v5486 = vpop.permute.xlu0 %5485
  %5487 = vrot.lane.b32.xlu0 %v5045, 28
  %v5488 = vpop.permute.xlu0 %5487
  %5489 = vrot.lane.b32.xlu0 %v5046, 28
  %v5490 = vpop.permute.xlu0 %5489
  %5491 = vrot.lane.b32.xlu0 %v5047, 28
  %v5492 = vpop.permute.xlu0 %5491
  %5493 = vrot.lane.b32.xlu0 %v5048, 28
  %v5494 = vpop.permute.xlu0 %5493
  %5495 = vrot.lane.b32.xlu0 %v5049, 28
  %v5496 = vpop.permute.xlu0 %5495
  %5497 = vrot.lane.b32.xlu0 %v5050, 28
  %v5498 = vpop.permute.xlu0 %5497
  %5531 = vrot.lane.b32.xlu0 %v5051, 32
  %v5532 = vpop.permute.xlu0 %5531
  %5533 = vrot.lane.b32.xlu0 %v5052, 32
  %v5534 = vpop.permute.xlu0 %5533
  %5535 = vrot.lane.b32.xlu0 %v5053, 32
  %v5536 = vpop.permute.xlu0 %5535
  %5537 = vrot.lane.b32.xlu0 %v5054, 32
  %v5538 = vpop.permute.xlu0 %5537
  %5539 = vrot.lane.b32.xlu0 %v5055, 32
  %v5540 = vpop.permute.xlu0 %5539
  %5541 = vrot.lane.b32.xlu0 %v5056, 32
  %v5542 = vpop.permute.xlu0 %5541
  %5543 = vrot.lane.b32.xlu0 %v5057, 32
  %v5544 = vpop.permute.xlu0 %5543
  %5545 = vrot.lane.b32.xlu0 %v5058, 32
  %v5546 = vpop.permute.xlu0 %5545
  %5547 = vrot.lane.b32.xlu0 %v5059, 32
  %v5548 = vpop.permute.xlu0 %5547
  %5549 = vrot.lane.b32.xlu0 %v5060, 32
  %v5550 = vpop.permute.xlu0 %5549
  %5551 = vrot.lane.b32.xlu0 %v5061, 32
  %v5552 = vpop.permute.xlu0 %5551
  %5553 = vrot.lane.b32.xlu0 %v5062, 32
  %v5554 = vpop.permute.xlu0 %5553
  %5555 = vrot.lane.b32.xlu0 %v5063, 32
  %v5556 = vpop.permute.xlu0 %5555
  %5557 = vrot.lane.b32.xlu0 %v5064, 32
  %v5558 = vpop.permute.xlu0 %5557
  %5559 = vrot.lane.b32.xlu0 %v5065, 32
  %v5560 = vpop.permute.xlu0 %5559
  %5561 = vrot.lane.b32.xlu0 %v5066, 32
  %v5562 = vpop.permute.xlu0 %5561
  %v5579 = vsel %vm49, %v4923, %v5084
  %v5580 = vsel %vm49, %v4924, %v5086
  %v5581 = vsel %vm49, %v4925, %v5088
  %v5582 = vsel %vm49, %v4926, %v5090
  %v5583 = vsel %vm49, %v4927, %v5092
  %v5584 = vsel %vm49, %v4928, %v5094
  %v5585 = vsel %vm49, %v4929, %v5096
  %v5586 = vsel %vm49, %v4930, %v5098
  %v5587 = vsel %vm49, %v4931, %v5100
  %v5588 = vsel %vm49, %v4932, %v5102
  %v5589 = vsel %vm49, %v4933, %v5104
  %v5590 = vsel %vm49, %v4934, %v5106
  %v5591 = vsel %vm49, %v4935, %v5108
  %v5592 = vsel %vm49, %v4936, %v5110
  %v5593 = vsel %vm49, %v4937, %v5112
  %v5594 = vsel %vm49, %v4938, %v5114
  %v5595 = vsel %vm3088, %v5579, %v5148
  %v5596 = vsel %vm3088, %v5580, %v5150
  %v5597 = vsel %vm3088, %v5581, %v5152
  %v5598 = vsel %vm3088, %v5582, %v5154
  %v5599 = vsel %vm3088, %v5583, %v5156
  %v5600 = vsel %vm3088, %v5584, %v5158
  %v5601 = vsel %vm3088, %v5585, %v5160
  %v5602 = vsel %vm3088, %v5586, %v5162
  %v5603 = vsel %vm3088, %v5587, %v5164
  %v5604 = vsel %vm3088, %v5588, %v5166
  %v5605 = vsel %vm3088, %v5589, %v5168
  %v5606 = vsel %vm3088, %v5590, %v5170
  %v5607 = vsel %vm3088, %v5591, %v5172
  %v5608 = vsel %vm3088, %v5592, %v5174
  %v5609 = vsel %vm3088, %v5593, %v5176
  %v5610 = vsel %vm3088, %v5594, %v5178
  %v5611 = vsel %vm3153, %v5595, %v5212
  %v5612 = vsel %vm3153, %v5596, %v5214
  %v5613 = vsel %vm3153, %v5597, %v5216
  %v5614 = vsel %vm3153, %v5598, %v5218
  %v5615 = vsel %vm3153, %v5599, %v5220
  %v5616 = vsel %vm3153, %v5600, %v5222
  %v5617 = vsel %vm3153, %v5601, %v5224
  %v5618 = vsel %vm3153, %v5602, %v5226
  %v5619 = vsel %vm3153, %v5603, %v5228
  %v5620 = vsel %vm3153, %v5604, %v5230
  %v5621 = vsel %vm3153, %v5605, %v5232
  %v5622 = vsel %vm3153, %v5606, %v5234
  %v5623 = vsel %vm3153, %v5607, %v5236
  %v5624 = vsel %vm3153, %v5608, %v5238
  %v5625 = vsel %vm3153, %v5609, %v5240
  %v5626 = vsel %vm3153, %v5610, %v5242
  %v5627 = vsel %vm3218, %v5611, %v5276
  %v5628 = vsel %vm3218, %v5612, %v5278
  %v5629 = vsel %vm3218, %v5613, %v5280
  %v5630 = vsel %vm3218, %v5614, %v5282
  %v5631 = vsel %vm3218, %v5615, %v5284
  %v5632 = vsel %vm3218, %v5616, %v5286
  %v5633 = vsel %vm3218, %v5617, %v5288
  %v5634 = vsel %vm3218, %v5618, %v5290
  %v5635 = vsel %vm3218, %v5619, %v5292
  %v5636 = vsel %vm3218, %v5620, %v5294
  %v5637 = vsel %vm3218, %v5621, %v5296
  %v5638 = vsel %vm3218, %v5622, %v5298
  %v5639 = vsel %vm3218, %v5623, %v5300
  %v5640 = vsel %vm3218, %v5624, %v5302
  %v5641 = vsel %vm3218, %v5625, %v5304
  %v5642 = vsel %vm3218, %v5626, %v5306
  %v5643 = vsel %vm3283, %v5627, %v5340
  %v5644 = vsel %vm3283, %v5628, %v5342
  %v5645 = vsel %vm3283, %v5629, %v5344
  %v5646 = vsel %vm3283, %v5630, %v5346
  %v5647 = vsel %vm3283, %v5631, %v5348
  %v5648 = vsel %vm3283, %v5632, %v5350
  %v5649 = vsel %vm3283, %v5633, %v5352
  %v5650 = vsel %vm3283, %v5634, %v5354
  %v5651 = vsel %vm3283, %v5635, %v5356
  %v5652 = vsel %vm3283, %v5636, %v5358
  %v5653 = vsel %vm3283, %v5637, %v5360
  %v5654 = vsel %vm3283, %v5638, %v5362
  %v5655 = vsel %vm3283, %v5639, %v5364
  %v5656 = vsel %vm3283, %v5640, %v5366
  %v5657 = vsel %vm3283, %v5641, %v5368
  %v5658 = vsel %vm3283, %v5642, %v5370
  %v5659 = vsel %vm3348, %v5643, %v5404
  %v5660 = vsel %vm3348, %v5644, %v5406
  %v5661 = vsel %vm3348, %v5645, %v5408
  %v5662 = vsel %vm3348, %v5646, %v5410
  %v5663 = vsel %vm3348, %v5647, %v5412
  %v5664 = vsel %vm3348, %v5648, %v5414
  %v5665 = vsel %vm3348, %v5649, %v5416
  %v5666 = vsel %vm3348, %v5650, %v5418
  %v5667 = vsel %vm3348, %v5651, %v5420
  %v5668 = vsel %vm3348, %v5652, %v5422
  %v5669 = vsel %vm3348, %v5653, %v5424
  %v5670 = vsel %vm3348, %v5654, %v5426
  %v5671 = vsel %vm3348, %v5655, %v5428
  %v5672 = vsel %vm3348, %v5656, %v5430
  %v5673 = vsel %vm3348, %v5657, %v5432
  %v5674 = vsel %vm3348, %v5658, %v5434
  %v5675 = vsel %vm3413, %v5659, %v5468
  %v5676 = vsel %vm3413, %v5660, %v5470
  %v5677 = vsel %vm3413, %v5661, %v5472
  %v5678 = vsel %vm3413, %v5662, %v5474
  %v5679 = vsel %vm3413, %v5663, %v5476
  %v5680 = vsel %vm3413, %v5664, %v5478
  %v5681 = vsel %vm3413, %v5665, %v5480
  %v5682 = vsel %vm3413, %v5666, %v5482
  %v5683 = vsel %vm3413, %v5667, %v5484
  %v5684 = vsel %vm3413, %v5668, %v5486
  %v5685 = vsel %vm3413, %v5669, %v5488
  %v5686 = vsel %vm3413, %v5670, %v5490
  %v5687 = vsel %vm3413, %v5671, %v5492
  %v5688 = vsel %vm3413, %v5672, %v5494
  %v5689 = vsel %vm3413, %v5673, %v5496
  %v5690 = vsel %vm3413, %v5674, %v5498
  %v5691 = vsel %vm3478, %v5675, %v5532
  %v5692 = vsel %vm3478, %v5676, %v5534
  %v5693 = vsel %vm3478, %v5677, %v5536
  %v5694 = vsel %vm3478, %v5678, %v5538
  %v5695 = vsel %vm3478, %v5679, %v5540
  %v5696 = vsel %vm3478, %v5680, %v5542
  %v5697 = vsel %vm3478, %v5681, %v5544
  %v5698 = vsel %vm3478, %v5682, %v5546
  %v5699 = vsel %vm3478, %v5683, %v5548
  %v5700 = vsel %vm3478, %v5684, %v5550
  %v5701 = vsel %vm3478, %v5685, %v5552
  %v5702 = vsel %vm3478, %v5686, %v5554
  %v5703 = vsel %vm3478, %v5687, %v5556
  %v5704 = vsel %vm3478, %v5688, %v5558
  %v5705 = vsel %vm3478, %v5689, %v5560
  %v5706 = vsel %vm3478, %v5690, %v5562
  %v5707 = vld [vmem:[%s6] sm:$0xff]
  %v5708 = vld [vmem:[%s6 + $0x8] sm:$0xff]
  %v5709 = vld [vmem:[%s6 + $0x10] sm:$0xff]
  %v5710 = vld [vmem:[%s6 + $0x18] sm:$0xff]
  %v5711 = vld [vmem:[%s6 + $0x20] sm:$0xf]
  %v5713 = vsel %vm4355, %v5691, 0
  %v5716 = vsel %vm4355, %v5692, 0
  %v5719 = vsel %vm4355, %v5693, 0
  %v5722 = vsel %vm4355, %v5694, 0
  %v5725 = vsel %vm4355, %v5695, 0
  %v5728 = vsel %vm4355, %v5696, 0
  %v5731 = vsel %vm4355, %v5697, 0
  %v5734 = vsel %vm4355, %v5698, 0
  %v5737 = vsel %vm4355, %v5699, 0
  %v5740 = vsel %vm4355, %v5700, 0
  %v5743 = vsel %vm4355, %v5701, 0
  %v5746 = vsel %vm4355, %v5702, 0
  %v5749 = vsel %vm4355, %v5703, 0
  %v5752 = vsel %vm4355, %v5704, 0
  %v5755 = vsel %vm4355, %v5705, 0
  %v5758 = vsel %vm4355, %v5706, 0
  %v5761 = vsel %vm4404, %v5711, 0
  %5763 = vmatprep.subr.mxu0 0.0
  %5764 = vmatpush1.msra.mxu0 %v5707
  %5765 = vmatprep.subr.mxu0 0.0
  %5766 = vmatpush1.msra.mxu0 %v5708
  %5767 = vmatprep.subr.mxu0 0.0
  %5768 = vmatpush1.msra.mxu0 %v5709
  %5769 = vmatprep.subr.mxu0 0.0
  %5770 = vmatpush1.msra.mxu0 %v5710
  %5771 = vmatprep.subr.mxu0 0.0
  %5772 = vmatpush1.msra.mxu0 %v5761
  %5773 = vmatprep.subr.mxu0 0.0
  %5774 = vmatpush1.msra.mxu0 0.0
  %5775 = vmatprep.subr.mxu0 0.0
  %5776 = vmatpush1.msra.mxu0 0.0
  %5777 = vmatprep.subr.mxu0 0.0
  %5778 = vmatpush1.msra.mxu0 0.0
  %5779 = vmatprep.subr.mxu0 0.0
  %5780 = vmatpush1.msra.mxu0 0.0
  %5781 = vmatprep.subr.mxu0 0.0
  %5782 = vmatpush1.msra.mxu0 0.0
  %5783 = vmatprep.subr.mxu0 0.0
  %5784 = vmatpush1.msra.mxu0 0.0
  %5785 = vmatprep.subr.mxu0 0.0
  %5786 = vmatpush1.msra.mxu0 0.0
  %5787 = vmatprep.subr.mxu0 0.0
  %5788 = vmatpush1.msra.mxu0 0.0
  %5789 = vmatprep.subr.mxu0 0.0
  %5790 = vmatpush1.msra.mxu0 0.0
  %5791 = vmatprep.subr.mxu0 0.0
  %5792 = vmatpush1.msra.mxu0 0.0
  %5793 = vmatprep.subr.mxu0 0.0
  %5794 = vmatpush1.msra.mxu0 0.0
  %5795 = vmatprep.subr.mxu0 0.0
  %5796 = vmatpush1.msra.mxu0 0.0
  %5797 = vmatprep.subr.mxu0 0.0
  %5798 = vmatpush1.msra.mxu0 0.0
  %5799 = vmatprep.subr.mxu0 0.0
  %5800 = vmatpush1.msra.mxu0 0.0
  %5801 = vmatprep.subr.mxu0 0.0
  %5802 = vmatpush1.msra.mxu0 0.0
  %5803 = vmatprep.subr.mxu0 0.0
  %5804 = vmatpush1.msra.mxu0 0.0
  %5805 = vmatprep.subr.mxu0 0.0
  %5806 = vmatpush1.msra.mxu0 0.0
  %5807 = vmatprep.subr.mxu0 0.0
  %5808 = vmatpush1.msra.mxu0 0.0
  %5809 = vmatprep.subr.mxu0 0.0
  %5810 = vmatpush1.msra.mxu0 0.0
  %5811 = vmatprep.subr.mxu0 0.0
  %5812 = vmatpush1.msra.mxu0 0.0
  %5813 = vmatprep.subr.mxu0 0.0
  %5814 = vmatpush1.msra.mxu0 0.0
  %5815 = vmatprep.subr.mxu0 0.0
  %5816 = vmatpush1.msra.mxu0 0.0
  %5817 = vmatprep.subr.mxu0 0.0
  %5818 = vmatpush1.msra.mxu0 0.0
  %5819 = vmatprep.subr.mxu0 0.0
  %5820 = vmatpush1.msra.mxu0 0.0
  %5821 = vmatprep.subr.mxu0 0.0
  %5822 = vmatpush1.msra.mxu0 0.0
  %5823 = vmatprep.subr.mxu0 0.0
  %5824 = vmatpush1.msra.mxu0 0.0
  %5825 = vmatprep.subr.mxu0 0.0
  %5826 = vmatpush1.msra.mxu0 0.0
  %5827 = vmatprep.mubr.f32.mxu0 0.0
  %5828 = vmatmul.mubr.f32.gmra.mrb[0].mxu0 %v5713
  %v5829 = vpop.f32.mrb[0].mxu0
  %v5830 = vadd.f32 0.0, %v5829
  %v5831 = vpop.f32.mrb[0].mxu0
  %5832 = vmatprep.mubr.f32.mxu0 0.0
  %5833 = vmatmul.mubr.f32.gmra.mrb[0].mxu0 %v5716
  %v5834 = vpop.f32.mrb[0].mxu0
  %v5835 = vadd.f32 0.0, %v5834
  %v5836 = vpop.f32.mrb[0].mxu0
  %5837 = vmatprep.mubr.f32.mxu0 0.0
  %5838 = vmatmul.mubr.f32.gmra.mrb[0].mxu0 %v5719
  %v5839 = vpop.f32.mrb[0].mxu0
  %v5840 = vadd.f32 0.0, %v5839
  %v5841 = vpop.f32.mrb[0].mxu0
  %5842 = vmatprep.mubr.f32.mxu0 0.0
  %5843 = vmatmul.mubr.f32.gmra.mrb[0].mxu0 %v5722
  %v5844 = vpop.f32.mrb[0].mxu0
  %v5845 = vadd.f32 0.0, %v5844
  %v5846 = vpop.f32.mrb[0].mxu0
  %5847 = vmatprep.mubr.f32.mxu0 0.0
  %5848 = vmatmul.mubr.f32.gmra.mrb[0].mxu0 %v5725
  %v5849 = vpop.f32.mrb[0].mxu0
  %v5850 = vadd.f32 0.0, %v5849
  %v5851 = vpop.f32.mrb[0].mxu0
  %5852 = vmatprep.mubr.f32.mxu0 0.0
  %5853 = vmatmul.mubr.f32.gmra.mrb[0].mxu0 %v5728
  %v5854 = vpop.f32.mrb[0].mxu0
  %v5855 = vadd.f32 0.0, %v5854
  %v5856 = vpop.f32.mrb[0].mxu0
  %5857 = vmatprep.mubr.f32.mxu0 0.0
  %5858 = vmatmul.mubr.f32.gmra.mrb[0].mxu0 %v5731
  %v5859 = vpop.f32.mrb[0].mxu0
  %v5860 = vadd.f32 0.0, %v5859
  %v5861 = vpop.f32.mrb[0].mxu0
  %5862 = vmatprep.mubr.f32.mxu0 0.0
  %5863 = vmatmul.mubr.f32.gmra.mrb[0].mxu0 %v5734
  %v5864 = vpop.f32.mrb[0].mxu0
  %v5865 = vadd.f32 0.0, %v5864
  %v5866 = vpop.f32.mrb[0].mxu0
  %5867 = vmatprep.mubr.f32.mxu0 0.0
  %5868 = vmatmul.mubr.f32.gmra.mrb[0].mxu0 %v5737
  %v5869 = vpop.f32.mrb[0].mxu0
  %v5870 = vadd.f32 0.0, %v5869
  %v5871 = vpop.f32.mrb[0].mxu0
  %5872 = vmatprep.mubr.f32.mxu0 0.0
  %5873 = vmatmul.mubr.f32.gmra.mrb[0].mxu0 %v5740
  %v5874 = vpop.f32.mrb[0].mxu0
  %v5875 = vadd.f32 0.0, %v5874
  %v5876 = vpop.f32.mrb[0].mxu0
  %5877 = vmatprep.mubr.f32.mxu0 0.0
  %5878 = vmatmul.mubr.f32.gmra.mrb[0].mxu0 %v5743
  %v5879 = vpop.f32.mrb[0].mxu0
  %v5880 = vadd.f32 0.0, %v5879
  %v5881 = vpop.f32.mrb[0].mxu0
  %5882 = vmatprep.mubr.f32.mxu0 0.0
  %5883 = vmatmul.mubr.f32.gmra.mrb[0].mxu0 %v5746
  %v5884 = vpop.f32.mrb[0].mxu0
  %v5885 = vadd.f32 0.0, %v5884
  %v5886 = vpop.f32.mrb[0].mxu0
  %5887 = vmatprep.mubr.f32.mxu0 0.0
  %5888 = vmatmul.mubr.f32.gmra.mrb[0].mxu0 %v5749
  %v5889 = vpop.f32.mrb[0].mxu0
  %v5890 = vadd.f32 0.0, %v5889
  %v5891 = vpop.f32.mrb[0].mxu0
  %5892 = vmatprep.mubr.f32.mxu0 0.0
  %5893 = vmatmul.mubr.f32.gmra.mrb[0].mxu0 %v5752
  %v5894 = vpop.f32.mrb[0].mxu0
  %v5895 = vadd.f32 0.0, %v5894
  %v5896 = vpop.f32.mrb[0].mxu0
  %5897 = vmatprep.mubr.f32.mxu0 0.0
  %5898 = vmatmul.mubr.f32.gmra.mrb[0].mxu0 %v5755
  %v5899 = vpop.f32.mrb[0].mxu0
  %v5900 = vadd.f32 0.0, %v5899
  %v5901 = vpop.f32.mrb[0].mxu0
  %5902 = vmatprep.mubr.f32.mxu0 0.0
  %5903 = vmatmul.mubr.f32.gmra.mrb[0].mxu0 %v5758
  %v5904 = vpop.f32.mrb[0].mxu0
  %v5905 = vadd.f32 0.0, %v5904
  %v5906 = vpop.f32.mrb[0].mxu0
  %5907 = vdwg.mxu0
  %v5908 = vld [vmem:[%s3] sm:$0xff]
  %v5909 = vld [vmem:[%s3 + $0x8] sm:$0xff]
  %v5910 = vld [vmem:[%s3 + $0x10] sm:$0xff]
  %v5911 = vld [vmem:[%s3 + $0x18] sm:$0xff]
  %v5912 = vld [vmem:[%s3 + $0x20] sm:$0xff]
  %v5913 = vld [vmem:[%s3 + $0x28] sm:$0xff]
  %v5914 = vld [vmem:[%s3 + $0x30] sm:$0xff]
  %v5915 = vld [vmem:[%s3 + $0x38] sm:$0xff]
  %v5916 = vld [vmem:[%s3 + $0x40] sm:$0xff]
  %v5917 = vld [vmem:[%s3 + $0x48] sm:$0xff]
  %v5918 = vld [vmem:[%s3 + $0x50] sm:$0xff]
  %v5919 = vld [vmem:[%s3 + $0x58] sm:$0xff]
  %v5920 = vld [vmem:[%s3 + $0x60] sm:$0xff]
  %v5921 = vld [vmem:[%s3 + $0x68] sm:$0xff]
  %v5922 = vld [vmem:[%s3 + $0x70] sm:$0xff]
  %v5923 = vld [vmem:[%s3 + $0x78] sm:$0xff]
  %v5924 = vld [vmem:[%s3 + $0x80] sm:$0xff]
  %v5925 = vld [vmem:[%s3 + $0x88] sm:$0xff]
  %v5926 = vld [vmem:[%s3 + $0x90] sm:$0xff]
  %v5927 = vld [vmem:[%s3 + $0x98] sm:$0xff]
  %v5928 = vld [vmem:[%s3 + $0xa0] sm:$0xff]
  %v5929 = vld [vmem:[%s3 + $0xa8] sm:$0xff]
  %v5930 = vld [vmem:[%s3 + $0xb0] sm:$0xff]
  %v5931 = vld [vmem:[%s3 + $0xb8] sm:$0xff]
  %v5932 = vld [vmem:[%s3 + $0xc0] sm:$0xff]
  %v5933 = vld [vmem:[%s3 + $0xc8] sm:$0xff]
  %v5934 = vld [vmem:[%s3 + $0xd0] sm:$0xff]
  %v5935 = vld [vmem:[%s3 + $0xd8] sm:$0xff]
  %v5936 = vld [vmem:[%s3 + $0xe0] sm:$0xff]
  %v5937 = vld [vmem:[%s3 + $0xe8] sm:$0xff]
  %v5938 = vld [vmem:[%s3 + $0xf0] sm:$0xff]
  %v5939 = vld [vmem:[%s3 + $0xf8] sm:$0xff]
  %v5940 = vld [vmem:[%s3 + $0x100] sm:$0xff]
  %v5941 = vld [vmem:[%s3 + $0x108] sm:$0xff]
  %v5942 = vld [vmem:[%s3 + $0x110] sm:$0xff]
  %v5943 = vld [vmem:[%s3 + $0x118] sm:$0xff]
  %v5944 = vld [vmem:[%s3 + $0x120] sm:$0xff]
  %v5945 = vld [vmem:[%s3 + $0x128] sm:$0xff]
  %v5946 = vld [vmem:[%s3 + $0x130] sm:$0xff]
  %v5947 = vld [vmem:[%s3 + $0x138] sm:$0xff]
  %v5948 = vld [vmem:[%s3 + $0x140] sm:$0xff]
  %v5949 = vld [vmem:[%s3 + $0x148] sm:$0xff]
  %v5950 = vld [vmem:[%s3 + $0x150] sm:$0xff]
  %v5951 = vld [vmem:[%s3 + $0x158] sm:$0xff]
  %v5952 = vld [vmem:[%s3 + $0x160] sm:$0xff]
  %v5953 = vld [vmem:[%s3 + $0x168] sm:$0xff]
  %v5954 = vld [vmem:[%s3 + $0x170] sm:$0xff]
  %v5955 = vld [vmem:[%s3 + $0x178] sm:$0xff]
  %v5956 = vld [vmem:[%s3 + $0x180] sm:$0xff]
  %v5957 = vld [vmem:[%s3 + $0x188] sm:$0xff]
  %v5958 = vld [vmem:[%s3 + $0x190] sm:$0xff]
  %v5959 = vld [vmem:[%s3 + $0x198] sm:$0xff]
  %v5960 = vld [vmem:[%s3 + $0x1a0] sm:$0xff]
  %v5961 = vld [vmem:[%s3 + $0x1a8] sm:$0xff]
  %v5962 = vld [vmem:[%s3 + $0x1b0] sm:$0xff]
  %v5963 = vld [vmem:[%s3 + $0x1b8] sm:$0xff]
  %v5964 = vld [vmem:[%s3 + $0x1c0] sm:$0xff]
  %v5965 = vld [vmem:[%s3 + $0x1c8] sm:$0xff]
  %v5966 = vld [vmem:[%s3 + $0x1d0] sm:$0xff]
  %v5967 = vld [vmem:[%s3 + $0x1d8] sm:$0xff]
  %v5968 = vld [vmem:[%s3 + $0x1e0] sm:$0xff]
  %v5969 = vld [vmem:[%s3 + $0x1e8] sm:$0xff]
  %v5970 = vld [vmem:[%s3 + $0x1f0] sm:$0xff]
  %v5971 = vld [vmem:[%s3 + $0x1f8] sm:$0xff]
  %5972 = vmatprep.subr.mxu0 0.0
  %5973 = vmatpush1.msra.mxu0 %v4475
  %5974 = vmatprep.subr.mxu0 0.0
  %5975 = vmatpush1.msra.mxu0 %v4480
  %5976 = vmatprep.subr.mxu0 0.0
  %5977 = vmatpush1.msra.mxu0 %v4485
  %5978 = vmatprep.subr.mxu0 0.0
  %5979 = vmatpush1.msra.mxu0 %v4490
  %5980 = vmatprep.subr.mxu0 0.0
  %5981 = vmatpush1.msra.mxu0 %v4495
  %5982 = vmatprep.subr.mxu0 0.0
  %5983 = vmatpush1.msra.mxu0 %v4500
  %5984 = vmatprep.subr.mxu0 0.0
  %5985 = vmatpush1.msra.mxu0 %v4505
  %5986 = vmatprep.subr.mxu0 0.0
  %5987 = vmatpush1.msra.mxu0 %v4510
  %5988 = vmatprep.subr.mxu0 0.0
  %5989 = vmatpush1.msra.mxu0 %v4515
  %5990 = vmatprep.subr.mxu0 0.0
  %5991 = vmatpush1.msra.mxu0 %v4520
  %5992 = vmatprep.subr.mxu0 0.0
  %5993 = vmatpush1.msra.mxu0 %v4525
  %5994 = vmatprep.subr.mxu0 0.0
  %5995 = vmatpush1.msra.mxu0 %v4530
  %5996 = vmatprep.subr.mxu0 0.0
  %5997 = vmatpush1.msra.mxu0 %v4535
  %5998 = vmatprep.subr.mxu0 0.0
  %5999 = vmatpush1.msra.mxu0 %v4540
  %6000 = vmatprep.subr.mxu0 0.0
  %6001 = vmatpush1.msra.mxu0 %v4545
  %6002 = vmatprep.subr.mxu0 0.0
  %6003 = vmatpush1.msra.mxu0 %v4550
  %6004 = vmatprep.subr.mxu0 0.0
  %6005 = vmatpush1.msra.mxu0 0.0
  %6006 = vmatprep.subr.mxu0 0.0
  %6007 = vmatpush1.msra.mxu0 0.0
  %6008 = vmatprep.subr.mxu0 0.0
  %6009 = vmatpush1.msra.mxu0 0.0
  %6010 = vmatprep.subr.mxu0 0.0
  %6011 = vmatpush1.msra.mxu0 0.0
  %6012 = vmatprep.subr.mxu0 0.0
  %6013 = vmatpush1.msra.mxu0 0.0
  %6014 = vmatprep.subr.mxu0 0.0
  %6015 = vmatpush1.msra.mxu0 0.0
  %6016 = vmatprep.subr.mxu0 0.0
  %6017 = vmatpush1.msra.mxu0 0.0
  %6018 = vmatprep.subr.mxu0 0.0
  %6019 = vmatpush1.msra.mxu0 0.0
  %6020 = vmatprep.subr.mxu0 0.0
  %6021 = vmatpush1.msra.mxu0 0.0
  %6022 = vmatprep.subr.mxu0 0.0
  %6023 = vmatpush1.msra.mxu0 0.0
  %6024 = vmatprep.subr.mxu0 0.0
  %6025 = vmatpush1.msra.mxu0 0.0
  %6026 = vmatprep.subr.mxu0 0.0
  %6027 = vmatpush1.msra.mxu0 0.0
  %6028 = vmatprep.subr.mxu0 0.0
  %6029 = vmatpush1.msra.mxu0 0.0
  %6030 = vmatprep.subr.mxu0 0.0
  %6031 = vmatpush1.msra.mxu0 0.0
  %6032 = vmatprep.subr.mxu0 0.0
  %6033 = vmatpush1.msra.mxu0 0.0
  %6034 = vmatprep.subr.mxu0 0.0
  %6035 = vmatpush1.msra.mxu0 0.0
  %6036 = vmatprep.mubr.f32.mxu0 0.0
  %6037 = vmatmul.mubr.f32.gmra.mrb[0].mxu0 %v5908
  %v6038 = vpop.f32.mrb[0].mxu0
  %v6039 = vadd.f32 0.0, %v6038
  %v6040 = vpop.f32.mrb[0].mxu0
  %6041 = vmatprep.mubr.f32.mxu0 0.0
  %6042 = vmatmul.mubr.f32.gmra.mrb[0].mxu0 %v5909
  %v6043 = vpop.f32.mrb[0].mxu0
  %v6044 = vadd.f32 0.0, %v6043
  %v6045 = vpop.f32.mrb[0].mxu0
  %6046 = vmatprep.mubr.f32.mxu0 0.0
  %6047 = vmatmul.mubr.f32.gmra.mrb[0].mxu0 %v5910
  %v6048 = vpop.f32.mrb[0].mxu0
  %v6049 = vadd.f32 0.0, %v6048
  %v6050 = vpop.f32.mrb[0].mxu0
  %6051 = vmatprep.mubr.f32.mxu0 0.0
  %6052 = vmatmul.mubr.f32.gmra.mrb[0].mxu0 %v5911
  %v6053 = vpop.f32.mrb[0].mxu0
  %v6054 = vadd.f32 0.0, %v6053
  %v6055 = vpop.f32.mrb[0].mxu0
  %6056 = vmatprep.mubr.f32.mxu0 0.0
  %6057 = vmatmul.mubr.f32.gmra.mrb[0].mxu0 %v5912
  %v6058 = vpop.f32.mrb[0].mxu0
  %v6059 = vadd.f32 0.0, %v6058
  %v6060 = vpop.f32.mrb[0].mxu0
  %6061 = vmatprep.mubr.f32.mxu0 0.0
  %6062 = vmatmul.mubr.f32.gmra.mrb[0].mxu0 %v5913
  %v6063 = vpop.f32.mrb[0].mxu0
  %v6064 = vadd.f32 0.0, %v6063
  %v6065 = vpop.f32.mrb[0].mxu0
  %6066 = vmatprep.mubr.f32.mxu0 0.0
  %6067 = vmatmul.mubr.f32.gmra.mrb[0].mxu0 %v5914
  %v6068 = vpop.f32.mrb[0].mxu0
  %v6069 = vadd.f32 0.0, %v6068
  %v6070 = vpop.f32.mrb[0].mxu0
  %6071 = vmatprep.mubr.f32.mxu0 0.0
  %6072 = vmatmul.mubr.f32.gmra.mrb[0].mxu0 %v5915
  %v6073 = vpop.f32.mrb[0].mxu0
  %v6074 = vadd.f32 0.0, %v6073
  %v6075 = vpop.f32.mrb[0].mxu0
  %6076 = vmatprep.mubr.f32.mxu0 0.0
  %6077 = vmatmul.mubr.f32.gmra.mrb[0].mxu0 %v5916
  %v6078 = vpop.f32.mrb[0].mxu0
  %v6079 = vadd.f32 0.0, %v6078
  %v6080 = vpop.f32.mrb[0].mxu0
  %6081 = vmatprep.mubr.f32.mxu0 0.0
  %6082 = vmatmul.mubr.f32.gmra.mrb[0].mxu0 %v5917
  %v6083 = vpop.f32.mrb[0].mxu0
  %v6084 = vadd.f32 0.0, %v6083
  %v6085 = vpop.f32.mrb[0].mxu0
  %6086 = vmatprep.mubr.f32.mxu0 0.0
  %6087 = vmatmul.mubr.f32.gmra.mrb[0].mxu0 %v5918
  %v6088 = vpop.f32.mrb[0].mxu0
  %v6089 = vadd.f32 0.0, %v6088
  %v6090 = vpop.f32.mrb[0].mxu0
  %6091 = vmatprep.mubr.f32.mxu0 0.0
  %6092 = vmatmul.mubr.f32.gmra.mrb[0].mxu0 %v5919
  %v6093 = vpop.f32.mrb[0].mxu0
  %v6094 = vadd.f32 0.0, %v6093
  %v6095 = vpop.f32.mrb[0].mxu0
  %6096 = vmatprep.mubr.f32.mxu0 0.0
  %6097 = vmatmul.mubr.f32.gmra.mrb[0].mxu0 %v5920
  %v6098 = vpop.f32.mrb[0].mxu0
  %v6099 = vadd.f32 0.0, %v6098
  %v6100 = vpop.f32.mrb[0].mxu0
  %6101 = vmatprep.mubr.f32.mxu0 0.0
  %6102 = vmatmul.mubr.f32.gmra.mrb[0].mxu0 %v5921
  %v6103 = vpop.f32.mrb[0].mxu0
  %v6104 = vadd.f32 0.0, %v6103
  %v6105 = vpop.f32.mrb[0].mxu0
  %6106 = vmatprep.mubr.f32.mxu0 0.0
  %6107 = vmatmul.mubr.f32.gmra.mrb[0].mxu0 %v5922
  %v6108 = vpop.f32.mrb[0].mxu0
  %v6109 = vadd.f32 0.0, %v6108
  %v6110 = vpop.f32.mrb[0].mxu0
  %6111 = vmatprep.mubr.f32.mxu0 0.0
  %6112 = vmatmul.mubr.f32.gmra.mrb[0].mxu0 %v5923
  %v6113 = vpop.f32.mrb[0].mxu0
  %v6114 = vadd.f32 0.0, %v6113
  %v6115 = vpop.f32.mrb[0].mxu0
  %6116 = vmatprep.mubr.f32.mxu0 0.0
  %6117 = vmatmul.mubr.f32.gmra.mrb[0].mxu0 %v5924
  %v6118 = vpop.f32.mrb[0].mxu0
  %v6119 = vadd.f32 0.0, %v6118
  %v6120 = vpop.f32.mrb[0].mxu0
  %6121 = vmatprep.mubr.f32.mxu0 0.0
  %6122 = vmatmul.mubr.f32.gmra.mrb[0].mxu0 %v5925
  %v6123 = vpop.f32.mrb[0].mxu0
  %v6124 = vadd.f32 0.0, %v6123
  %v6125 = vpop.f32.mrb[0].mxu0
  %6126 = vmatprep.mubr.f32.mxu0 0.0
  %6127 = vmatmul.mubr.f32.gmra.mrb[0].mxu0 %v5926
  %v6128 = vpop.f32.mrb[0].mxu0
  %v6129 = vadd.f32 0.0, %v6128
  %v6130 = vpop.f32.mrb[0].mxu0
  %6131 = vmatprep.mubr.f32.mxu0 0.0
  %6132 = vmatmul.mubr.f32.gmra.mrb[0].mxu0 %v5927
  %v6133 = vpop.f32.mrb[0].mxu0
  %v6134 = vadd.f32 0.0, %v6133
  %v6135 = vpop.f32.mrb[0].mxu0
  %6136 = vmatprep.mubr.f32.mxu0 0.0
  %6137 = vmatmul.mubr.f32.gmra.mrb[0].mxu0 %v5928
  %v6138 = vpop.f32.mrb[0].mxu0
  %v6139 = vadd.f32 0.0, %v6138
  %v6140 = vpop.f32.mrb[0].mxu0
  %6141 = vmatprep.mubr.f32.mxu0 0.0
  %6142 = vmatmul.mubr.f32.gmra.mrb[0].mxu0 %v5929
  %v6143 = vpop.f32.mrb[0].mxu0
  %v6144 = vadd.f32 0.0, %v6143
  %v6145 = vpop.f32.mrb[0].mxu0
  %6146 = vmatprep.mubr.f32.mxu0 0.0
  %6147 = vmatmul.mubr.f32.gmra.mrb[0].mxu0 %v5930
  %v6148 = vpop.f32.mrb[0].mxu0
  %v6149 = vadd.f32 0.0, %v6148
  %v6150 = vpop.f32.mrb[0].mxu0
  %6151 = vmatprep.mubr.f32.mxu0 0.0
  %6152 = vmatmul.mubr.f32.gmra.mrb[0].mxu0 %v5931
  %v6153 = vpop.f32.mrb[0].mxu0
  %v6154 = vadd.f32 0.0, %v6153
  %v6155 = vpop.f32.mrb[0].mxu0
  %6156 = vmatprep.mubr.f32.mxu0 0.0
  %6157 = vmatmul.mubr.f32.gmra.mrb[0].mxu0 %v5932
  %v6158 = vpop.f32.mrb[0].mxu0
  %v6159 = vadd.f32 0.0, %v6158
  %v6160 = vpop.f32.mrb[0].mxu0
  %6161 = vmatprep.mubr.f32.mxu0 0.0
  %6162 = vmatmul.mubr.f32.gmra.mrb[0].mxu0 %v5933
  %v6163 = vpop.f32.mrb[0].mxu0
  %v6164 = vadd.f32 0.0, %v6163
  %v6165 = vpop.f32.mrb[0].mxu0
  %6166 = vmatprep.mubr.f32.mxu0 0.0
  %6167 = vmatmul.mubr.f32.gmra.mrb[0].mxu0 %v5934
  %v6168 = vpop.f32.mrb[0].mxu0
  %v6169 = vadd.f32 0.0, %v6168
  %v6170 = vpop.f32.mrb[0].mxu0
  %6171 = vmatprep.mubr.f32.mxu0 0.0
  %6172 = vmatmul.mubr.f32.gmra.mrb[0].mxu0 %v5935
  %v6173 = vpop.f32.mrb[0].mxu0
  %v6174 = vadd.f32 0.0, %v6173
  %v6175 = vpop.f32.mrb[0].mxu0
  %6176 = vmatprep.mubr.f32.mxu0 0.0
  %6177 = vmatmul.mubr.f32.gmra.mrb[0].mxu0 %v5936
  %v6178 = vpop.f32.mrb[0].mxu0
  %v6179 = vadd.f32 0.0, %v6178
  %v6180 = vpop.f32.mrb[0].mxu0
  %6181 = vmatprep.mubr.f32.mxu0 0.0
  %6182 = vmatmul.mubr.f32.gmra.mrb[0].mxu0 %v5937
  %v6183 = vpop.f32.mrb[0].mxu0
  %v6184 = vadd.f32 0.0, %v6183
  %v6185 = vpop.f32.mrb[0].mxu0
  %6186 = vmatprep.mubr.f32.mxu0 0.0
  %6187 = vmatmul.mubr.f32.gmra.mrb[0].mxu0 %v5938
  %v6188 = vpop.f32.mrb[0].mxu0
  %v6189 = vadd.f32 0.0, %v6188
  %v6190 = vpop.f32.mrb[0].mxu0
  %6191 = vmatprep.mubr.f32.mxu0 0.0
  %6192 = vmatmul.mubr.f32.gmra.mrb[0].mxu0 %v5939
  %v6193 = vpop.f32.mrb[0].mxu0
  %v6194 = vadd.f32 0.0, %v6193
  %v6195 = vpop.f32.mrb[0].mxu0
  %6196 = vmatprep.mubr.f32.mxu0 0.0
  %6197 = vmatmul.mubr.f32.gmra.mrb[0].mxu0 %v5940
  %v6198 = vpop.f32.mrb[0].mxu0
  %v6199 = vadd.f32 0.0, %v6198
  %v6200 = vpop.f32.mrb[0].mxu0
  %6201 = vmatprep.mubr.f32.mxu0 0.0
  %6202 = vmatmul.mubr.f32.gmra.mrb[0].mxu0 %v5941
  %v6203 = vpop.f32.mrb[0].mxu0
  %v6204 = vadd.f32 0.0, %v6203
  %v6205 = vpop.f32.mrb[0].mxu0
  %6206 = vmatprep.mubr.f32.mxu0 0.0
  %6207 = vmatmul.mubr.f32.gmra.mrb[0].mxu0 %v5942
  %v6208 = vpop.f32.mrb[0].mxu0
  %v6209 = vadd.f32 0.0, %v6208
  %v6210 = vpop.f32.mrb[0].mxu0
  %6211 = vmatprep.mubr.f32.mxu0 0.0
  %6212 = vmatmul.mubr.f32.gmra.mrb[0].mxu0 %v5943
  %v6213 = vpop.f32.mrb[0].mxu0
  %v6214 = vadd.f32 0.0, %v6213
  %v6215 = vpop.f32.mrb[0].mxu0
  %6216 = vmatprep.mubr.f32.mxu0 0.0
  %6217 = vmatmul.mubr.f32.gmra.mrb[0].mxu0 %v5944
  %v6218 = vpop.f32.mrb[0].mxu0
  %v6219 = vadd.f32 0.0, %v6218
  %v6220 = vpop.f32.mrb[0].mxu0
  %6221 = vmatprep.mubr.f32.mxu0 0.0
  %6222 = vmatmul.mubr.f32.gmra.mrb[0].mxu0 %v5945
  %v6223 = vpop.f32.mrb[0].mxu0
  %v6224 = vadd.f32 0.0, %v6223
  %v6225 = vpop.f32.mrb[0].mxu0
  %6226 = vmatprep.mubr.f32.mxu0 0.0
  %6227 = vmatmul.mubr.f32.gmra.mrb[0].mxu0 %v5946
  %v6228 = vpop.f32.mrb[0].mxu0
  %v6229 = vadd.f32 0.0, %v6228
  %v6230 = vpop.f32.mrb[0].mxu0
  %6231 = vmatprep.mubr.f32.mxu0 0.0
  %6232 = vmatmul.mubr.f32.gmra.mrb[0].mxu0 %v5947
  %v6233 = vpop.f32.mrb[0].mxu0
  %v6234 = vadd.f32 0.0, %v6233
  %v6235 = vpop.f32.mrb[0].mxu0
  %6236 = vmatprep.mubr.f32.mxu0 0.0
  %6237 = vmatmul.mubr.f32.gmra.mrb[0].mxu0 %v5948
  %v6238 = vpop.f32.mrb[0].mxu0
  %v6239 = vadd.f32 0.0, %v6238
  %v6240 = vpop.f32.mrb[0].mxu0
  %6241 = vmatprep.mubr.f32.mxu0 0.0
  %6242 = vmatmul.mubr.f32.gmra.mrb[0].mxu0 %v5949
  %v6243 = vpop.f32.mrb[0].mxu0
  %v6244 = vadd.f32 0.0, %v6243
  %v6245 = vpop.f32.mrb[0].mxu0
  %6246 = vmatprep.mubr.f32.mxu0 0.0
  %6247 = vmatmul.mubr.f32.gmra.mrb[0].mxu0 %v5950
  %v6248 = vpop.f32.mrb[0].mxu0
  %v6249 = vadd.f32 0.0, %v6248
  %v6250 = vpop.f32.mrb[0].mxu0
  %6251 = vmatprep.mubr.f32.mxu0 0.0
  %6252 = vmatmul.mubr.f32.gmra.mrb[0].mxu0 %v5951
  %v6253 = vpop.f32.mrb[0].mxu0
  %v6254 = vadd.f32 0.0, %v6253
  %v6255 = vpop.f32.mrb[0].mxu0
  %6256 = vmatprep.mubr.f32.mxu0 0.0
  %6257 = vmatmul.mubr.f32.gmra.mrb[0].mxu0 %v5952
  %v6258 = vpop.f32.mrb[0].mxu0
  %v6259 = vadd.f32 0.0, %v6258
  %v6260 = vpop.f32.mrb[0].mxu0
  %6261 = vmatprep.mubr.f32.mxu0 0.0
  %6262 = vmatmul.mubr.f32.gmra.mrb[0].mxu0 %v5953
  %v6263 = vpop.f32.mrb[0].mxu0
  %v6264 = vadd.f32 0.0, %v6263
  %v6265 = vpop.f32.mrb[0].mxu0
  %6266 = vmatprep.mubr.f32.mxu0 0.0
  %6267 = vmatmul.mubr.f32.gmra.mrb[0].mxu0 %v5954
  %v6268 = vpop.f32.mrb[0].mxu0
  %v6269 = vadd.f32 0.0, %v6268
  %v6270 = vpop.f32.mrb[0].mxu0
  %6271 = vmatprep.mubr.f32.mxu0 0.0
  %6272 = vmatmul.mubr.f32.gmra.mrb[0].mxu0 %v5955
  %v6273 = vpop.f32.mrb[0].mxu0
  %v6274 = vadd.f32 0.0, %v6273
  %v6275 = vpop.f32.mrb[0].mxu0
  %6276 = vmatprep.mubr.f32.mxu0 0.0
  %6277 = vmatmul.mubr.f32.gmra.mrb[0].mxu0 %v5956
  %v6278 = vpop.f32.mrb[0].mxu0
  %v6279 = vadd.f32 0.0, %v6278
  %v6280 = vpop.f32.mrb[0].mxu0
  %6281 = vmatprep.mubr.f32.mxu0 0.0
  %6282 = vmatmul.mubr.f32.gmra.mrb[0].mxu0 %v5957
  %v6283 = vpop.f32.mrb[0].mxu0
  %v6284 = vadd.f32 0.0, %v6283
  %v6285 = vpop.f32.mrb[0].mxu0
  %6286 = vmatprep.mubr.f32.mxu0 0.0
  %6287 = vmatmul.mubr.f32.gmra.mrb[0].mxu0 %v5958
  %v6288 = vpop.f32.mrb[0].mxu0
  %v6289 = vadd.f32 0.0, %v6288
  %v6290 = vpop.f32.mrb[0].mxu0
  %6291 = vmatprep.mubr.f32.mxu0 0.0
  %6292 = vmatmul.mubr.f32.gmra.mrb[0].mxu0 %v5959
  %v6293 = vpop.f32.mrb[0].mxu0
  %v6294 = vadd.f32 0.0, %v6293
  %v6295 = vpop.f32.mrb[0].mxu0
  %6296 = vmatprep.mubr.f32.mxu0 0.0
  %6297 = vmatmul.mubr.f32.gmra.mrb[0].mxu0 %v5960
  %v6298 = vpop.f32.mrb[0].mxu0
  %v6299 = vadd.f32 0.0, %v6298
  %v6300 = vpop.f32.mrb[0].mxu0
  %6301 = vmatprep.mubr.f32.mxu0 0.0
  %6302 = vmatmul.mubr.f32.gmra.mrb[0].mxu0 %v5961
  %v6303 = vpop.f32.mrb[0].mxu0
  %v6304 = vadd.f32 0.0, %v6303
  %v6305 = vpop.f32.mrb[0].mxu0
  %6306 = vmatprep.mubr.f32.mxu0 0.0
  %6307 = vmatmul.mubr.f32.gmra.mrb[0].mxu0 %v5962
  %v6308 = vpop.f32.mrb[0].mxu0
  %v6309 = vadd.f32 0.0, %v6308
  %v6310 = vpop.f32.mrb[0].mxu0
  %6311 = vmatprep.mubr.f32.mxu0 0.0
  %6312 = vmatmul.mubr.f32.gmra.mrb[0].mxu0 %v5963
  %v6313 = vpop.f32.mrb[0].mxu0
  %v6314 = vadd.f32 0.0, %v6313
  %v6315 = vpop.f32.mrb[0].mxu0
  %6316 = vmatprep.mubr.f32.mxu0 0.0
  %6317 = vmatmul.mubr.f32.gmra.mrb[0].mxu0 %v5964
  %v6318 = vpop.f32.mrb[0].mxu0
  %v6319 = vadd.f32 0.0, %v6318
  %v6320 = vpop.f32.mrb[0].mxu0
  %6321 = vmatprep.mubr.f32.mxu0 0.0
  %6322 = vmatmul.mubr.f32.gmra.mrb[0].mxu0 %v5965
  %v6323 = vpop.f32.mrb[0].mxu0
  %v6324 = vadd.f32 0.0, %v6323
  %v6325 = vpop.f32.mrb[0].mxu0
  %6326 = vmatprep.mubr.f32.mxu0 0.0
  %6327 = vmatmul.mubr.f32.gmra.mrb[0].mxu0 %v5966
  %v6328 = vpop.f32.mrb[0].mxu0
  %v6329 = vadd.f32 0.0, %v6328
  %v6330 = vpop.f32.mrb[0].mxu0
  %6331 = vmatprep.mubr.f32.mxu0 0.0
  %6332 = vmatmul.mubr.f32.gmra.mrb[0].mxu0 %v5967
  %v6333 = vpop.f32.mrb[0].mxu0
  %v6334 = vadd.f32 0.0, %v6333
  %v6335 = vpop.f32.mrb[0].mxu0
  %6336 = vmatprep.mubr.f32.mxu0 0.0
  %6337 = vmatmul.mubr.f32.gmra.mrb[0].mxu0 %v5968
  %v6338 = vpop.f32.mrb[0].mxu0
  %v6339 = vadd.f32 0.0, %v6338
  %v6340 = vpop.f32.mrb[0].mxu0
  %6341 = vmatprep.mubr.f32.mxu0 0.0
  %6342 = vmatmul.mubr.f32.gmra.mrb[0].mxu0 %v5969
  %v6343 = vpop.f32.mrb[0].mxu0
  %v6344 = vadd.f32 0.0, %v6343
  %v6345 = vpop.f32.mrb[0].mxu0
  %6346 = vmatprep.mubr.f32.mxu0 0.0
  %6347 = vmatmul.mubr.f32.gmra.mrb[0].mxu0 %v5970
  %v6348 = vpop.f32.mrb[0].mxu0
  %v6349 = vadd.f32 0.0, %v6348
  %v6350 = vpop.f32.mrb[0].mxu0
  %6351 = vmatprep.mubr.f32.mxu0 0.0
  %6352 = vmatmul.mubr.f32.gmra.mrb[0].mxu0 %v5971
  %v6353 = vpop.f32.mrb[0].mxu0
  %v6354 = vadd.f32 0.0, %v6353
  %v6355 = vpop.f32.mrb[0].mxu0
  %6356 = vdwg.mxu0
  %v6358 = vsel %vm4355, %v3479, 0
  %v6361 = vsel %vm4355, %v3480, 0
  %v6364 = vsel %vm4355, %v3481, 0
  %v6367 = vsel %vm4355, %v3482, 0
  %v6370 = vsel %vm4355, %v3483, 0
  %v6373 = vsel %vm4355, %v3484, 0
  %v6376 = vsel %vm4355, %v3485, 0
  %v6379 = vsel %vm4355, %v3486, 0
  %v6382 = vsel %vm4355, %v3487, 0
  %v6385 = vsel %vm4355, %v3488, 0
  %v6388 = vsel %vm4355, %v3489, 0
  %v6391 = vsel %vm4355, %v3490, 0
  %v6394 = vsel %vm4355, %v3491, 0
  %v6397 = vsel %vm4355, %v3492, 0
  %v6400 = vsel %vm4355, %v3493, 0
  %v6403 = vsel %vm4355, %v3494, 0
  %v6406 = vsel %vm4355, %v3495, 0
  %v6409 = vsel %vm4355, %v3496, 0
  %v6412 = vsel %vm4355, %v3497, 0
  %v6415 = vsel %vm4355, %v3498, 0
  %v6418 = vsel %vm4355, %v3499, 0
  %v6421 = vsel %vm4355, %v3500, 0
  %v6424 = vsel %vm4355, %v3501, 0
  %v6427 = vsel %vm4355, %v3502, 0
  %v6430 = vsel %vm4355, %v3503, 0
  %v6433 = vsel %vm4355, %v3504, 0
  %v6436 = vsel %vm4355, %v3505, 0
  %v6439 = vsel %vm4355, %v3506, 0
  %v6442 = vsel %vm4355, %v3507, 0
  %v6445 = vsel %vm4355, %v3508, 0
  %v6448 = vsel %vm4355, %v3509, 0
  %v6451 = vsel %vm4355, %v3510, 0
  %v6454 = vsel %vm4355, %v3511, 0
  %v6457 = vsel %vm4355, %v3512, 0
  %v6460 = vsel %vm4355, %v3513, 0
  %v6463 = vsel %vm4355, %v3514, 0
  %v6466 = vsel %vm4355, %v3515, 0
  %v6469 = vsel %vm4355, %v3516, 0
  %v6472 = vsel %vm4355, %v3517, 0
  %v6475 = vsel %vm4355, %v3518, 0
  %v6478 = vsel %vm4355, %v3519, 0
  %v6481 = vsel %vm4355, %v3520, 0
  %v6484 = vsel %vm4355, %v3521, 0
  %v6487 = vsel %vm4355, %v3522, 0
  %v6490 = vsel %vm4355, %v3523, 0
  %v6493 = vsel %vm4355, %v3524, 0
  %v6496 = vsel %vm4355, %v3525, 0
  %v6499 = vsel %vm4355, %v3526, 0
  %v6502 = vsel %vm4355, %v3527, 0
  %v6505 = vsel %vm4355, %v3528, 0
  %v6508 = vsel %vm4355, %v3529, 0
  %v6511 = vsel %vm4355, %v3530, 0
  %v6514 = vsel %vm4355, %v3531, 0
  %v6517 = vsel %vm4355, %v3532, 0
  %v6520 = vsel %vm4355, %v3533, 0
  %v6523 = vsel %vm4355, %v3534, 0
  %v6526 = vsel %vm4355, %v3535, 0
  %v6529 = vsel %vm4355, %v3536, 0
  %v6532 = vsel %vm4355, %v3537, 0
  %v6535 = vsel %vm4355, %v3538, 0
  %v6538 = vsel %vm4355, %v3539, 0
  %v6541 = vsel %vm4355, %v3540, 0
  %v6544 = vsel %vm4355, %v3541, 0
  %v6547 = vsel %vm4355, %v3542, 0
  %v6550 = vsel %vm4404, %v3547, 0
  %6552 = vmatprep.subr.mxu0 0.0
  %6553 = vmatpush1.msra.mxu0 %v3543
  %6554 = vmatprep.subr.mxu0 0.0
  %6555 = vmatpush1.msra.mxu0 %v3544
  %6556 = vmatprep.subr.mxu0 0.0
  %6557 = vmatpush1.msra.mxu0 %v3545
  %6558 = vmatprep.subr.mxu0 0.0
  %6559 = vmatpush1.msra.mxu0 %v3546
  %6560 = vmatprep.subr.mxu0 0.0
  %6561 = vmatpush1.msra.mxu0 %v6550
  %6562 = vmatprep.subr.mxu0 0.0
  %6563 = vmatpush1.msra.mxu0 0.0
  %6564 = vmatprep.subr.mxu0 0.0
  %6565 = vmatpush1.msra.mxu0 0.0
  %6566 = vmatprep.subr.mxu0 0.0
  %6567 = vmatpush1.msra.mxu0 0.0
  %6568 = vmatprep.subr.mxu0 0.0
  %6569 = vmatpush1.msra.mxu0 0.0
  %6570 = vmatprep.subr.mxu0 0.0
  %6571 = vmatpush1.msra.mxu0 0.0
  %6572 = vmatprep.subr.mxu0 0.0
  %6573 = vmatpush1.msra.mxu0 0.0
  %6574 = vmatprep.subr.mxu0 0.0
  %6575 = vmatpush1.msra.mxu0 0.0
  %6576 = vmatprep.subr.mxu0 0.0
  %6577 = vmatpush1.msra.mxu0 0.0
  %6578 = vmatprep.subr.mxu0 0.0
  %6579 = vmatpush1.msra.mxu0 0.0
  %6580 = vmatprep.subr.mxu0 0.0
  %6581 = vmatpush1.msra.mxu0 0.0
  %6582 = vmatprep.subr.mxu0 0.0
  %6583 = vmatpush1.msra.mxu0 0.0
  %6584 = vmatprep.subr.mxu0 0.0
  %6585 = vmatpush1.msra.mxu0 0.0
  %6586 = vmatprep.subr.mxu0 0.0
  %6587 = vmatpush1.msra.mxu0 0.0
  %6588 = vmatprep.subr.mxu0 0.0
  %6589 = vmatpush1.msra.mxu0 0.0
  %6590 = vmatprep.subr.mxu0 0.0
  %6591 = vmatpush1.msra.mxu0 0.0
  %6592 = vmatprep.subr.mxu0 0.0
  %6593 = vmatpush1.msra.mxu0 0.0
  %6594 = vmatprep.subr.mxu0 0.0
  %6595 = vmatpush1.msra.mxu0 0.0
  %6596 = vmatprep.subr.mxu0 0.0
  %6597 = vmatpush1.msra.mxu0 0.0
  %6598 = vmatprep.subr.mxu0 0.0
  %6599 = vmatpush1.msra.mxu0 0.0
  %6600 = vmatprep.subr.mxu0 0.0
  %6601 = vmatpush1.msra.mxu0 0.0
  %6602 = vmatprep.subr.mxu0 0.0
  %6603 = vmatpush1.msra.mxu0 0.0
  %6604 = vmatprep.subr.mxu0 0.0
  %6605 = vmatpush1.msra.mxu0 0.0
  %6606 = vmatprep.subr.mxu0 0.0
  %6607 = vmatpush1.msra.mxu0 0.0
  %6608 = vmatprep.subr.mxu0 0.0
  %6609 = vmatpush1.msra.mxu0 0.0
  %6610 = vmatprep.subr.mxu0 0.0
  %6611 = vmatpush1.msra.mxu0 0.0
  %6612 = vmatprep.subr.mxu0 0.0
  %6613 = vmatpush1.msra.mxu0 0.0
  %6614 = vmatprep.subr.mxu0 0.0
  %6615 = vmatpush1.msra.mxu0 0.0
  %6616 = vmatprep.mubr.f32.mxu0 0.0
  %6617 = vmatmul.mubr.f32.gmra.mrb[0].mxu0 %v6358
  %v6618 = vpop.f32.mrb[0].mxu0
  %v6619 = vadd.f32 %v6039, %v6618
  %v6620 = vpop.f32.mrb[0].mxu0
  %6621 = vmatprep.mubr.f32.mxu0 0.0
  %6622 = vmatmul.mubr.f32.gmra.mrb[0].mxu0 %v6361
  %v6623 = vpop.f32.mrb[0].mxu0
  %v6624 = vadd.f32 %v6044, %v6623
  %v6625 = vpop.f32.mrb[0].mxu0
  %6626 = vmatprep.mubr.f32.mxu0 0.0
  %6627 = vmatmul.mubr.f32.gmra.mrb[0].mxu0 %v6364
  %v6628 = vpop.f32.mrb[0].mxu0
  %v6629 = vadd.f32 %v6049, %v6628
  %v6630 = vpop.f32.mrb[0].mxu0
  %6631 = vmatprep.mubr.f32.mxu0 0.0
  %6632 = vmatmul.mubr.f32.gmra.mrb[0].mxu0 %v6367
  %v6633 = vpop.f32.mrb[0].mxu0
  %v6634 = vadd.f32 %v6054, %v6633
  %v6635 = vpop.f32.mrb[0].mxu0
  %6636 = vmatprep.mubr.f32.mxu0 0.0
  %6637 = vmatmul.mubr.f32.gmra.mrb[0].mxu0 %v6370
  %v6638 = vpop.f32.mrb[0].mxu0
  %v6639 = vadd.f32 %v6059, %v6638
  %v6640 = vpop.f32.mrb[0].mxu0
  %6641 = vmatprep.mubr.f32.mxu0 0.0
  %6642 = vmatmul.mubr.f32.gmra.mrb[0].mxu0 %v6373
  %v6643 = vpop.f32.mrb[0].mxu0
  %v6644 = vadd.f32 %v6064, %v6643
  %v6645 = vpop.f32.mrb[0].mxu0
  %6646 = vmatprep.mubr.f32.mxu0 0.0
  %6647 = vmatmul.mubr.f32.gmra.mrb[0].mxu0 %v6376
  %v6648 = vpop.f32.mrb[0].mxu0
  %v6649 = vadd.f32 %v6069, %v6648
  %v6650 = vpop.f32.mrb[0].mxu0
  %6651 = vmatprep.mubr.f32.mxu0 0.0
  %6652 = vmatmul.mubr.f32.gmra.mrb[0].mxu0 %v6379
  %v6653 = vpop.f32.mrb[0].mxu0
  %v6654 = vadd.f32 %v6074, %v6653
  %v6655 = vpop.f32.mrb[0].mxu0
  %6656 = vmatprep.mubr.f32.mxu0 0.0
  %6657 = vmatmul.mubr.f32.gmra.mrb[0].mxu0 %v6382
  %v6658 = vpop.f32.mrb[0].mxu0
  %v6659 = vadd.f32 %v6079, %v6658
  %v6660 = vpop.f32.mrb[0].mxu0
  %6661 = vmatprep.mubr.f32.mxu0 0.0
  %6662 = vmatmul.mubr.f32.gmra.mrb[0].mxu0 %v6385
  %v6663 = vpop.f32.mrb[0].mxu0
  %v6664 = vadd.f32 %v6084, %v6663
  %v6665 = vpop.f32.mrb[0].mxu0
  %6666 = vmatprep.mubr.f32.mxu0 0.0
  %6667 = vmatmul.mubr.f32.gmra.mrb[0].mxu0 %v6388
  %v6668 = vpop.f32.mrb[0].mxu0
  %v6669 = vadd.f32 %v6089, %v6668
  %v6670 = vpop.f32.mrb[0].mxu0
  %6671 = vmatprep.mubr.f32.mxu0 0.0
  %6672 = vmatmul.mubr.f32.gmra.mrb[0].mxu0 %v6391
  %v6673 = vpop.f32.mrb[0].mxu0
  %v6674 = vadd.f32 %v6094, %v6673
  %v6675 = vpop.f32.mrb[0].mxu0
  %6676 = vmatprep.mubr.f32.mxu0 0.0
  %6677 = vmatmul.mubr.f32.gmra.mrb[0].mxu0 %v6394
  %v6678 = vpop.f32.mrb[0].mxu0
  %v6679 = vadd.f32 %v6099, %v6678
  %v6680 = vpop.f32.mrb[0].mxu0
  %6681 = vmatprep.mubr.f32.mxu0 0.0
  %6682 = vmatmul.mubr.f32.gmra.mrb[0].mxu0 %v6397
  %v6683 = vpop.f32.mrb[0].mxu0
  %v6684 = vadd.f32 %v6104, %v6683
  %v6685 = vpop.f32.mrb[0].mxu0
  %6686 = vmatprep.mubr.f32.mxu0 0.0
  %6687 = vmatmul.mubr.f32.gmra.mrb[0].mxu0 %v6400
  %v6688 = vpop.f32.mrb[0].mxu0
  %v6689 = vadd.f32 %v6109, %v6688
  %v6690 = vpop.f32.mrb[0].mxu0
  %6691 = vmatprep.mubr.f32.mxu0 0.0
  %6692 = vmatmul.mubr.f32.gmra.mrb[0].mxu0 %v6403
  %v6693 = vpop.f32.mrb[0].mxu0
  %v6694 = vadd.f32 %v6114, %v6693
  %v6695 = vpop.f32.mrb[0].mxu0
  %6696 = vmatprep.mubr.f32.mxu0 0.0
  %6697 = vmatmul.mubr.f32.gmra.mrb[0].mxu0 %v6406
  %v6698 = vpop.f32.mrb[0].mxu0
  %v6699 = vadd.f32 %v6119, %v6698
  %v6700 = vpop.f32.mrb[0].mxu0
  %6701 = vmatprep.mubr.f32.mxu0 0.0
  %6702 = vmatmul.mubr.f32.gmra.mrb[0].mxu0 %v6409
  %v6703 = vpop.f32.mrb[0].mxu0
  %v6704 = vadd.f32 %v6124, %v6703
  %v6705 = vpop.f32.mrb[0].mxu0
  %6706 = vmatprep.mubr.f32.mxu0 0.0
  %6707 = vmatmul.mubr.f32.gmra.mrb[0].mxu0 %v6412
  %v6708 = vpop.f32.mrb[0].mxu0
  %v6709 = vadd.f32 %v6129, %v6708
  %v6710 = vpop.f32.mrb[0].mxu0
  %6711 = vmatprep.mubr.f32.mxu0 0.0
  %6712 = vmatmul.mubr.f32.gmra.mrb[0].mxu0 %v6415
  %v6713 = vpop.f32.mrb[0].mxu0
  %v6714 = vadd.f32 %v6134, %v6713
  %v6715 = vpop.f32.mrb[0].mxu0
  %6716 = vmatprep.mubr.f32.mxu0 0.0
  %6717 = vmatmul.mubr.f32.gmra.mrb[0].mxu0 %v6418
  %v6718 = vpop.f32.mrb[0].mxu0
  %v6719 = vadd.f32 %v6139, %v6718
  %v6720 = vpop.f32.mrb[0].mxu0
  %6721 = vmatprep.mubr.f32.mxu0 0.0
  %6722 = vmatmul.mubr.f32.gmra.mrb[0].mxu0 %v6421
  %v6723 = vpop.f32.mrb[0].mxu0
  %v6724 = vadd.f32 %v6144, %v6723
  %v6725 = vpop.f32.mrb[0].mxu0
  %6726 = vmatprep.mubr.f32.mxu0 0.0
  %6727 = vmatmul.mubr.f32.gmra.mrb[0].mxu0 %v6424
  %v6728 = vpop.f32.mrb[0].mxu0
  %v6729 = vadd.f32 %v6149, %v6728
  %v6730 = vpop.f32.mrb[0].mxu0
  %6731 = vmatprep.mubr.f32.mxu0 0.0
  %6732 = vmatmul.mubr.f32.gmra.mrb[0].mxu0 %v6427
  %v6733 = vpop.f32.mrb[0].mxu0
  %v6734 = vadd.f32 %v6154, %v6733
  %v6735 = vpop.f32.mrb[0].mxu0
  %6736 = vmatprep.mubr.f32.mxu0 0.0
  %6737 = vmatmul.mubr.f32.gmra.mrb[0].mxu0 %v6430
  %v6738 = vpop.f32.mrb[0].mxu0
  %v6739 = vadd.f32 %v6159, %v6738
  %v6740 = vpop.f32.mrb[0].mxu0
  %6741 = vmatprep.mubr.f32.mxu0 0.0
  %6742 = vmatmul.mubr.f32.gmra.mrb[0].mxu0 %v6433
  %v6743 = vpop.f32.mrb[0].mxu0
  %v6744 = vadd.f32 %v6164, %v6743
  %v6745 = vpop.f32.mrb[0].mxu0
  %6746 = vmatprep.mubr.f32.mxu0 0.0
  %6747 = vmatmul.mubr.f32.gmra.mrb[0].mxu0 %v6436
  %v6748 = vpop.f32.mrb[0].mxu0
  %v6749 = vadd.f32 %v6169, %v6748
  %v6750 = vpop.f32.mrb[0].mxu0
  %6751 = vmatprep.mubr.f32.mxu0 0.0
  %6752 = vmatmul.mubr.f32.gmra.mrb[0].mxu0 %v6439
  %v6753 = vpop.f32.mrb[0].mxu0
  %v6754 = vadd.f32 %v6174, %v6753
  %v6755 = vpop.f32.mrb[0].mxu0
  %6756 = vmatprep.mubr.f32.mxu0 0.0
  %6757 = vmatmul.mubr.f32.gmra.mrb[0].mxu0 %v6442
  %v6758 = vpop.f32.mrb[0].mxu0
  %v6759 = vadd.f32 %v6179, %v6758
  %v6760 = vpop.f32.mrb[0].mxu0
  %6761 = vmatprep.mubr.f32.mxu0 0.0
  %6762 = vmatmul.mubr.f32.gmra.mrb[0].mxu0 %v6445
  %v6763 = vpop.f32.mrb[0].mxu0
  %v6764 = vadd.f32 %v6184, %v6763
  %v6765 = vpop.f32.mrb[0].mxu0
  %6766 = vmatprep.mubr.f32.mxu0 0.0
  %6767 = vmatmul.mubr.f32.gmra.mrb[0].mxu0 %v6448
  %v6768 = vpop.f32.mrb[0].mxu0
  %v6769 = vadd.f32 %v6189, %v6768
  %v6770 = vpop.f32.mrb[0].mxu0
  %6771 = vmatprep.mubr.f32.mxu0 0.0
  %6772 = vmatmul.mubr.f32.gmra.mrb[0].mxu0 %v6451
  %v6773 = vpop.f32.mrb[0].mxu0
  %v6774 = vadd.f32 %v6194, %v6773
  %v6775 = vpop.f32.mrb[0].mxu0
  %6776 = vmatprep.mubr.f32.mxu0 0.0
  %6777 = vmatmul.mubr.f32.gmra.mrb[0].mxu0 %v6454
  %v6778 = vpop.f32.mrb[0].mxu0
  %v6779 = vadd.f32 %v6199, %v6778
  %v6780 = vpop.f32.mrb[0].mxu0
  %6781 = vmatprep.mubr.f32.mxu0 0.0
  %6782 = vmatmul.mubr.f32.gmra.mrb[0].mxu0 %v6457
  %v6783 = vpop.f32.mrb[0].mxu0
  %v6784 = vadd.f32 %v6204, %v6783
  %v6785 = vpop.f32.mrb[0].mxu0
  %6786 = vmatprep.mubr.f32.mxu0 0.0
  %6787 = vmatmul.mubr.f32.gmra.mrb[0].mxu0 %v6460
  %v6788 = vpop.f32.mrb[0].mxu0
  %v6789 = vadd.f32 %v6209, %v6788
  %v6790 = vpop.f32.mrb[0].mxu0
  %6791 = vmatprep.mubr.f32.mxu0 0.0
  %6792 = vmatmul.mubr.f32.gmra.mrb[0].mxu0 %v6463
  %v6793 = vpop.f32.mrb[0].mxu0
  %v6794 = vadd.f32 %v6214, %v6793
  %v6795 = vpop.f32.mrb[0].mxu0
  %6796 = vmatprep.mubr.f32.mxu0 0.0
  %6797 = vmatmul.mubr.f32.gmra.mrb[0].mxu0 %v6466
  %v6798 = vpop.f32.mrb[0].mxu0
  %v6799 = vadd.f32 %v6219, %v6798
  %v6800 = vpop.f32.mrb[0].mxu0
  %6801 = vmatprep.mubr.f32.mxu0 0.0
  %6802 = vmatmul.mubr.f32.gmra.mrb[0].mxu0 %v6469
  %v6803 = vpop.f32.mrb[0].mxu0
  %v6804 = vadd.f32 %v6224, %v6803
  %v6805 = vpop.f32.mrb[0].mxu0
  %6806 = vmatprep.mubr.f32.mxu0 0.0
  %6807 = vmatmul.mubr.f32.gmra.mrb[0].mxu0 %v6472
  %v6808 = vpop.f32.mrb[0].mxu0
  %v6809 = vadd.f32 %v6229, %v6808
  %v6810 = vpop.f32.mrb[0].mxu0
  %6811 = vmatprep.mubr.f32.mxu0 0.0
  %6812 = vmatmul.mubr.f32.gmra.mrb[0].mxu0 %v6475
  %v6813 = vpop.f32.mrb[0].mxu0
  %v6814 = vadd.f32 %v6234, %v6813
  %v6815 = vpop.f32.mrb[0].mxu0
  %6816 = vmatprep.mubr.f32.mxu0 0.0
  %6817 = vmatmul.mubr.f32.gmra.mrb[0].mxu0 %v6478
  %v6818 = vpop.f32.mrb[0].mxu0
  %v6819 = vadd.f32 %v6239, %v6818
  %v6820 = vpop.f32.mrb[0].mxu0
  %6821 = vmatprep.mubr.f32.mxu0 0.0
  %6822 = vmatmul.mubr.f32.gmra.mrb[0].mxu0 %v6481
  %v6823 = vpop.f32.mrb[0].mxu0
  %v6824 = vadd.f32 %v6244, %v6823
  %v6825 = vpop.f32.mrb[0].mxu0
  %6826 = vmatprep.mubr.f32.mxu0 0.0
  %6827 = vmatmul.mubr.f32.gmra.mrb[0].mxu0 %v6484
  %v6828 = vpop.f32.mrb[0].mxu0
  %v6829 = vadd.f32 %v6249, %v6828
  %v6830 = vpop.f32.mrb[0].mxu0
  %6831 = vmatprep.mubr.f32.mxu0 0.0
  %6832 = vmatmul.mubr.f32.gmra.mrb[0].mxu0 %v6487
  %v6833 = vpop.f32.mrb[0].mxu0
  %v6834 = vadd.f32 %v6254, %v6833
  %v6835 = vpop.f32.mrb[0].mxu0
  %6836 = vmatprep.mubr.f32.mxu0 0.0
  %6837 = vmatmul.mubr.f32.gmra.mrb[0].mxu0 %v6490
  %v6838 = vpop.f32.mrb[0].mxu0
  %v6839 = vadd.f32 %v6259, %v6838
  %v6840 = vpop.f32.mrb[0].mxu0
  %6841 = vmatprep.mubr.f32.mxu0 0.0
  %6842 = vmatmul.mubr.f32.gmra.mrb[0].mxu0 %v6493
  %v6843 = vpop.f32.mrb[0].mxu0
  %v6844 = vadd.f32 %v6264, %v6843
  %v6845 = vpop.f32.mrb[0].mxu0
  %6846 = vmatprep.mubr.f32.mxu0 0.0
  %6847 = vmatmul.mubr.f32.gmra.mrb[0].mxu0 %v6496
  %v6848 = vpop.f32.mrb[0].mxu0
  %v6849 = vadd.f32 %v6269, %v6848
  %v6850 = vpop.f32.mrb[0].mxu0
  %6851 = vmatprep.mubr.f32.mxu0 0.0
  %6852 = vmatmul.mubr.f32.gmra.mrb[0].mxu0 %v6499
  %v6853 = vpop.f32.mrb[0].mxu0
  %v6854 = vadd.f32 %v6274, %v6853
  %v6855 = vpop.f32.mrb[0].mxu0
  %6856 = vmatprep.mubr.f32.mxu0 0.0
  %6857 = vmatmul.mubr.f32.gmra.mrb[0].mxu0 %v6502
  %v6858 = vpop.f32.mrb[0].mxu0
  %v6859 = vadd.f32 %v6279, %v6858
  %v6860 = vpop.f32.mrb[0].mxu0
  %6861 = vmatprep.mubr.f32.mxu0 0.0
  %6862 = vmatmul.mubr.f32.gmra.mrb[0].mxu0 %v6505
  %v6863 = vpop.f32.mrb[0].mxu0
  %v6864 = vadd.f32 %v6284, %v6863
  %v6865 = vpop.f32.mrb[0].mxu0
  %6866 = vmatprep.mubr.f32.mxu0 0.0
  %6867 = vmatmul.mubr.f32.gmra.mrb[0].mxu0 %v6508
  %v6868 = vpop.f32.mrb[0].mxu0
  %v6869 = vadd.f32 %v6289, %v6868
  %v6870 = vpop.f32.mrb[0].mxu0
  %6871 = vmatprep.mubr.f32.mxu0 0.0
  %6872 = vmatmul.mubr.f32.gmra.mrb[0].mxu0 %v6511
  %v6873 = vpop.f32.mrb[0].mxu0
  %v6874 = vadd.f32 %v6294, %v6873
  %v6875 = vpop.f32.mrb[0].mxu0
  %6876 = vmatprep.mubr.f32.mxu0 0.0
  %6877 = vmatmul.mubr.f32.gmra.mrb[0].mxu0 %v6514
  %v6878 = vpop.f32.mrb[0].mxu0
  %v6879 = vadd.f32 %v6299, %v6878
  %v6880 = vpop.f32.mrb[0].mxu0
  %6881 = vmatprep.mubr.f32.mxu0 0.0
  %6882 = vmatmul.mubr.f32.gmra.mrb[0].mxu0 %v6517
  %v6883 = vpop.f32.mrb[0].mxu0
  %v6884 = vadd.f32 %v6304, %v6883
  %v6885 = vpop.f32.mrb[0].mxu0
  %6886 = vmatprep.mubr.f32.mxu0 0.0
  %6887 = vmatmul.mubr.f32.gmra.mrb[0].mxu0 %v6520
  %v6888 = vpop.f32.mrb[0].mxu0
  %v6889 = vadd.f32 %v6309, %v6888
  %v6890 = vpop.f32.mrb[0].mxu0
  %6891 = vmatprep.mubr.f32.mxu0 0.0
  %6892 = vmatmul.mubr.f32.gmra.mrb[0].mxu0 %v6523
  %v6893 = vpop.f32.mrb[0].mxu0
  %v6894 = vadd.f32 %v6314, %v6893
  %v6895 = vpop.f32.mrb[0].mxu0
  %6896 = vmatprep.mubr.f32.mxu0 0.0
  %6897 = vmatmul.mubr.f32.gmra.mrb[0].mxu0 %v6526
  %v6898 = vpop.f32.mrb[0].mxu0
  %v6899 = vadd.f32 %v6319, %v6898
  %v6900 = vpop.f32.mrb[0].mxu0
  %6901 = vmatprep.mubr.f32.mxu0 0.0
  %6902 = vmatmul.mubr.f32.gmra.mrb[0].mxu0 %v6529
  %v6903 = vpop.f32.mrb[0].mxu0
  %v6904 = vadd.f32 %v6324, %v6903
  %v6905 = vpop.f32.mrb[0].mxu0
  %6906 = vmatprep.mubr.f32.mxu0 0.0
  %6907 = vmatmul.mubr.f32.gmra.mrb[0].mxu0 %v6532
  %v6908 = vpop.f32.mrb[0].mxu0
  %v6909 = vadd.f32 %v6329, %v6908
  %v6910 = vpop.f32.mrb[0].mxu0
  %6911 = vmatprep.mubr.f32.mxu0 0.0
  %6912 = vmatmul.mubr.f32.gmra.mrb[0].mxu0 %v6535
  %v6913 = vpop.f32.mrb[0].mxu0
  %v6914 = vadd.f32 %v6334, %v6913
  %v6915 = vpop.f32.mrb[0].mxu0
  %6916 = vmatprep.mubr.f32.mxu0 0.0
  %6917 = vmatmul.mubr.f32.gmra.mrb[0].mxu0 %v6538
  %v6918 = vpop.f32.mrb[0].mxu0
  %v6919 = vadd.f32 %v6339, %v6918
  %v6920 = vpop.f32.mrb[0].mxu0
  %6921 = vmatprep.mubr.f32.mxu0 0.0
  %6922 = vmatmul.mubr.f32.gmra.mrb[0].mxu0 %v6541
  %v6923 = vpop.f32.mrb[0].mxu0
  %v6924 = vadd.f32 %v6344, %v6923
  %v6925 = vpop.f32.mrb[0].mxu0
  %6926 = vmatprep.mubr.f32.mxu0 0.0
  %6927 = vmatmul.mubr.f32.gmra.mrb[0].mxu0 %v6544
  %v6928 = vpop.f32.mrb[0].mxu0
  %v6929 = vadd.f32 %v6349, %v6928
  %v6930 = vpop.f32.mrb[0].mxu0
  %6931 = vmatprep.mubr.f32.mxu0 0.0
  %6932 = vmatmul.mubr.f32.gmra.mrb[0].mxu0 %v6547
  %v6933 = vpop.f32.mrb[0].mxu0
  %v6934 = vadd.f32 %v6354, %v6933
  %v6935 = vpop.f32.mrb[0].mxu0
  %6936 = vdwg.mxu0
  %6953 = vrot.lane.b32.xlu0 %v5830, 4
  %v6954 = vpop.permute.xlu0 %6953
  %6955 = vrot.lane.b32.xlu0 %v5835, 4
  %v6956 = vpop.permute.xlu0 %6955
  %6957 = vrot.lane.b32.xlu0 %v5840, 4
  %v6958 = vpop.permute.xlu0 %6957
  %6959 = vrot.lane.b32.xlu0 %v5845, 4
  %v6960 = vpop.permute.xlu0 %6959
  %6961 = vrot.lane.b32.xlu0 %v5850, 4
  %v6962 = vpop.permute.xlu0 %6961
  %6963 = vrot.lane.b32.xlu0 %v5855, 4
  %v6964 = vpop.permute.xlu0 %6963
  %6965 = vrot.lane.b32.xlu0 %v5860, 4
  %v6966 = vpop.permute.xlu0 %6965
  %6967 = vrot.lane.b32.xlu0 %v5865, 4
  %v6968 = vpop.permute.xlu0 %6967
  %6969 = vrot.lane.b32.xlu0 %v5870, 4
  %v6970 = vpop.permute.xlu0 %6969
  %6971 = vrot.lane.b32.xlu0 %v5875, 4
  %v6972 = vpop.permute.xlu0 %6971
  %6973 = vrot.lane.b32.xlu0 %v5880, 4
  %v6974 = vpop.permute.xlu0 %6973
  %6975 = vrot.lane.b32.xlu0 %v5885, 4
  %v6976 = vpop.permute.xlu0 %6975
  %6977 = vrot.lane.b32.xlu0 %v5890, 4
  %v6978 = vpop.permute.xlu0 %6977
  %6979 = vrot.lane.b32.xlu0 %v5895, 4
  %v6980 = vpop.permute.xlu0 %6979
  %6981 = vrot.lane.b32.xlu0 %v5900, 4
  %v6982 = vpop.permute.xlu0 %6981
  %6983 = vrot.lane.b32.xlu0 %v5905, 4
  %v6984 = vpop.permute.xlu0 %6983
  %v7001 = vadd.f32 %v4475, %v6954
  %v7002 = vadd.f32 %v4480, %v6956
  %v7003 = vadd.f32 %v4485, %v6958
  %v7004 = vadd.f32 %v4490, %v6960
  %v7005 = vadd.f32 %v4495, %v6962
  %v7006 = vadd.f32 %v4500, %v6964
  %v7007 = vadd.f32 %v4505, %v6966
  %v7008 = vadd.f32 %v4510, %v6968
  %v7009 = vadd.f32 %v4515, %v6970
  %v7010 = vadd.f32 %v4520, %v6972
  %v7011 = vadd.f32 %v4525, %v6974
  %v7012 = vadd.f32 %v4530, %v6976
  %v7013 = vadd.f32 %v4535, %v6978
  %v7014 = vadd.f32 %v4540, %v6980
  %v7015 = vadd.f32 %v4545, %v6982
  %v7016 = vadd.f32 %v4550, %v6984
  %v7017 = vld [vmem:[%s7] sm:$0x1]
  %v7019 = vlaneseq
  %v7020 = vshrl.u32 %v7019, 7
  %v7021 = vsub.s32 0, %v7020
  %v7022 = vrot.slane %v7017, %v7021
  %v7024 = vadd.f32 %v6619, %v7022
  %v7025 = vadd.f32 %v6624, %v7022
  %v7026 = vadd.f32 %v6629, %v7022
  %v7027 = vadd.f32 %v6634, %v7022
  %v7028 = vadd.f32 %v6639, %v7022
  %v7029 = vadd.f32 %v6644, %v7022
  %v7030 = vadd.f32 %v6649, %v7022
  %v7031 = vadd.f32 %v6654, %v7022
  %v7032 = vadd.f32 %v6659, %v7022
  %v7033 = vadd.f32 %v6664, %v7022
  %v7034 = vadd.f32 %v6669, %v7022
  %v7035 = vadd.f32 %v6674, %v7022
  %v7036 = vadd.f32 %v6679, %v7022
  %v7037 = vadd.f32 %v6684, %v7022
  %v7038 = vadd.f32 %v6689, %v7022
  %v7039 = vadd.f32 %v6694, %v7022
  %v7040 = vadd.f32 %v6699, %v7022
  %v7041 = vadd.f32 %v6704, %v7022
  %v7042 = vadd.f32 %v6709, %v7022
  %v7043 = vadd.f32 %v6714, %v7022
  %v7044 = vadd.f32 %v6719, %v7022
  %v7045 = vadd.f32 %v6724, %v7022
  %v7046 = vadd.f32 %v6729, %v7022
  %v7047 = vadd.f32 %v6734, %v7022
  %v7048 = vadd.f32 %v6739, %v7022
  %v7049 = vadd.f32 %v6744, %v7022
  %v7050 = vadd.f32 %v6749, %v7022
  %v7051 = vadd.f32 %v6754, %v7022
  %v7052 = vadd.f32 %v6759, %v7022
  %v7053 = vadd.f32 %v6764, %v7022
  %v7054 = vadd.f32 %v6769, %v7022
  %v7055 = vadd.f32 %v6774, %v7022
  %v7056 = vadd.f32 %v6779, %v7022
  %v7057 = vadd.f32 %v6784, %v7022
  %v7058 = vadd.f32 %v6789, %v7022
  %v7059 = vadd.f32 %v6794, %v7022
  %v7060 = vadd.f32 %v6799, %v7022
  %v7061 = vadd.f32 %v6804, %v7022
  %v7062 = vadd.f32 %v6809, %v7022
  %v7063 = vadd.f32 %v6814, %v7022
  %v7064 = vadd.f32 %v6819, %v7022
  %v7065 = vadd.f32 %v6824, %v7022
  %v7066 = vadd.f32 %v6829, %v7022
  %v7067 = vadd.f32 %v6834, %v7022
  %v7068 = vadd.f32 %v6839, %v7022
  %v7069 = vadd.f32 %v6844, %v7022
  %v7070 = vadd.f32 %v6849, %v7022
  %v7071 = vadd.f32 %v6854, %v7022
  %v7072 = vadd.f32 %v6859, %v7022
  %v7073 = vadd.f32 %v6864, %v7022
  %v7074 = vadd.f32 %v6869, %v7022
  %v7075 = vadd.f32 %v6874, %v7022
  %v7076 = vadd.f32 %v6879, %v7022
  %v7077 = vadd.f32 %v6884, %v7022
  %v7078 = vadd.f32 %v6889, %v7022
  %v7079 = vadd.f32 %v6894, %v7022
  %v7080 = vadd.f32 %v6899, %v7022
  %v7081 = vadd.f32 %v6904, %v7022
  %v7082 = vadd.f32 %v6909, %v7022
  %v7083 = vadd.f32 %v6914, %v7022
  %v7084 = vadd.f32 %v6919, %v7022
  %v7085 = vadd.f32 %v6924, %v7022
  %v7086 = vadd.f32 %v6929, %v7022
  %v7087 = vadd.f32 %v6934, %v7022
  %v7088 = vmax.f32 %v7024, 0.0
  %v7089 = vmax.f32 %v7025, 0.0
  %v7090 = vmax.f32 %v7026, 0.0
  %v7091 = vmax.f32 %v7027, 0.0
  %v7092 = vmax.f32 %v7028, 0.0
  %v7093 = vmax.f32 %v7029, 0.0
  %v7094 = vmax.f32 %v7030, 0.0
  %v7095 = vmax.f32 %v7031, 0.0
  %v7096 = vmax.f32 %v7032, 0.0
  %v7097 = vmax.f32 %v7033, 0.0
  %v7098 = vmax.f32 %v7034, 0.0
  %v7099 = vmax.f32 %v7035, 0.0
  %v7100 = vmax.f32 %v7036, 0.0
  %v7101 = vmax.f32 %v7037, 0.0
  %v7102 = vmax.f32 %v7038, 0.0
  %v7103 = vmax.f32 %v7039, 0.0
  %v7104 = vmax.f32 %v7040, 0.0
  %v7105 = vmax.f32 %v7041, 0.0
  %v7106 = vmax.f32 %v7042, 0.0
  %v7107 = vmax.f32 %v7043, 0.0
  %v7108 = vmax.f32 %v7044, 0.0
  %v7109 = vmax.f32 %v7045, 0.0
  %v7110 = vmax.f32 %v7046, 0.0
  %v7111 = vmax.f32 %v7047, 0.0
  %v7112 = vmax.f32 %v7048, 0.0
  %v7113 = vmax.f32 %v7049, 0.0
  %v7114 = vmax.f32 %v7050, 0.0
  %v7115 = vmax.f32 %v7051, 0.0
  %v7116 = vmax.f32 %v7052, 0.0
  %v7117 = vmax.f32 %v7053, 0.0
  %v7118 = vmax.f32 %v7054, 0.0
  %v7119 = vmax.f32 %v7055, 0.0
  %v7120 = vmax.f32 %v7056, 0.0
  %v7121 = vmax.f32 %v7057, 0.0
  %v7122 = vmax.f32 %v7058, 0.0
  %v7123 = vmax.f32 %v7059, 0.0
  %v7124 = vmax.f32 %v7060, 0.0
  %v7125 = vmax.f32 %v7061, 0.0
  %v7126 = vmax.f32 %v7062, 0.0
  %v7127 = vmax.f32 %v7063, 0.0
  %v7128 = vmax.f32 %v7064, 0.0
  %v7129 = vmax.f32 %v7065, 0.0
  %v7130 = vmax.f32 %v7066, 0.0
  %v7131 = vmax.f32 %v7067, 0.0
  %v7132 = vmax.f32 %v7068, 0.0
  %v7133 = vmax.f32 %v7069, 0.0
  %v7134 = vmax.f32 %v7070, 0.0
  %v7135 = vmax.f32 %v7071, 0.0
  %v7136 = vmax.f32 %v7072, 0.0
  %v7137 = vmax.f32 %v7073, 0.0
  %v7138 = vmax.f32 %v7074, 0.0
  %v7139 = vmax.f32 %v7075, 0.0
  %v7140 = vmax.f32 %v7076, 0.0
  %v7141 = vmax.f32 %v7077, 0.0
  %v7142 = vmax.f32 %v7078, 0.0
  %v7143 = vmax.f32 %v7079, 0.0
  %v7144 = vmax.f32 %v7080, 0.0
  %v7145 = vmax.f32 %v7081, 0.0
  %v7146 = vmax.f32 %v7082, 0.0
  %v7147 = vmax.f32 %v7083, 0.0
  %v7148 = vmax.f32 %v7084, 0.0
  %v7149 = vmax.f32 %v7085, 0.0
  %v7150 = vmax.f32 %v7086, 0.0
  %v7151 = vmax.f32 %v7087, 0.0
  %v7152 = vld [vmem:[%s8] sm:$0x1]
  %v7154 = vlaneseq
  %v7155 = vshrl.u32 %v7154, 7
  %v7156 = vsub.s32 0, %v7155
  %v7157 = vrot.slane %v7152, %v7156
  %7158 = vrot.lane.b32.xlu0 %v7157, 4
  %v7159 = vpop.permute.xlu0 %7158
  %v7161 = vadd.f32 %v7001, %v7159
  %v7162 = vadd.f32 %v7002, %v7159
  %v7163 = vadd.f32 %v7003, %v7159
  %v7164 = vadd.f32 %v7004, %v7159
  %v7165 = vadd.f32 %v7005, %v7159
  %v7166 = vadd.f32 %v7006, %v7159
  %v7167 = vadd.f32 %v7007, %v7159
  %v7168 = vadd.f32 %v7008, %v7159
  %v7169 = vadd.f32 %v7009, %v7159
  %v7170 = vadd.f32 %v7010, %v7159
  %v7171 = vadd.f32 %v7011, %v7159
  %v7172 = vadd.f32 %v7012, %v7159
  %v7173 = vadd.f32 %v7013, %v7159
  %v7174 = vadd.f32 %v7014, %v7159
  %v7175 = vadd.f32 %v7015, %v7159
  %v7176 = vadd.f32 %v7016, %v7159
  %v7177 = vmax.f32 %v7161, 0.0
  %v7178 = vmax.f32 %v7162, 0.0
  %v7179 = vmax.f32 %v7163, 0.0
  %v7180 = vmax.f32 %v7164, 0.0
  %v7181 = vmax.f32 %v7165, 0.0
  %v7182 = vmax.f32 %v7166, 0.0
  %v7183 = vmax.f32 %v7167, 0.0
  %v7184 = vmax.f32 %v7168, 0.0
  %v7185 = vmax.f32 %v7169, 0.0
  %v7186 = vmax.f32 %v7170, 0.0
  %v7187 = vmax.f32 %v7171, 0.0
  %v7188 = vmax.f32 %v7172, 0.0
  %v7189 = vmax.f32 %v7173, 0.0
  %v7190 = vmax.f32 %v7174, 0.0
  %v7191 = vmax.f32 %v7175, 0.0
  %v7192 = vmax.f32 %v7176, 0.0
  %7193 = vst.msk [vmem:[%s334 + $0x8] sm:$0xff] %vm49, %v7088
  %7194 = vst.msk [vmem:[%s334 + $0x10] sm:$0xff] %vm49, %v7089
  %7195 = vst.msk [vmem:[%s334 + $0x28] sm:$0xff] %vm49, %v7090
  %7196 = vst.msk [vmem:[%s334 + $0x30] sm:$0xff] %vm49, %v7091
  %7197 = vst.msk [vmem:[%s334 + $0x48] sm:$0xff] %vm49, %v7092
  %7198 = vst.msk [vmem:[%s334 + $0x50] sm:$0xff] %vm49, %v7093
  %7199 = vst.msk [vmem:[%s334 + $0x68] sm:$0xff] %vm49, %v7094
  %7200 = vst.msk [vmem:[%s334 + $0x70] sm:$0xff] %vm49, %v7095
  %7201 = vst.msk [vmem:[%s334 + $0x88] sm:$0xff] %vm49, %v7096
  %7202 = vst.msk [vmem:[%s334 + $0x90] sm:$0xff] %vm49, %v7097
  %7203 = vst.msk [vmem:[%s334 + $0xa8] sm:$0xff] %vm49, %v7098
  %7204 = vst.msk [vmem:[%s334 + $0xb0] sm:$0xff] %vm49, %v7099
  %7205 = vst.msk [vmem:[%s334 + $0xc8] sm:$0xff] %vm49, %v7100
  %7206 = vst.msk [vmem:[%s334 + $0xd0] sm:$0xff] %vm49, %v7101
  %7207 = vst.msk [vmem:[%s334 + $0xe8] sm:$0xff] %vm49, %v7102
  %7208 = vst.msk [vmem:[%s334 + $0xf0] sm:$0xff] %vm49, %v7103
  %7209 = vst.msk [vmem:[%s334 + $0x108] sm:$0xff] %vm49, %v7104
  %7210 = vst.msk [vmem:[%s334 + $0x110] sm:$0xff] %vm49, %v7105
  %7211 = vst.msk [vmem:[%s334 + $0x128] sm:$0xff] %vm49, %v7106
  %7212 = vst.msk [vmem:[%s334 + $0x130] sm:$0xff] %vm49, %v7107
  %7213 = vst.msk [vmem:[%s334 + $0x148] sm:$0xff] %vm49, %v7108
  %7214 = vst.msk [vmem:[%s334 + $0x150] sm:$0xff] %vm49, %v7109
  %7215 = vst.msk [vmem:[%s334 + $0x168] sm:$0xff] %vm49, %v7110
  %7216 = vst.msk [vmem:[%s334 + $0x170] sm:$0xff] %vm49, %v7111
  %7217 = vst.msk [vmem:[%s334 + $0x188] sm:$0xff] %vm49, %v7112
  %7218 = vst.msk [vmem:[%s334 + $0x190] sm:$0xff] %vm49, %v7113
  %7219 = vst.msk [vmem:[%s334 + $0x1a8] sm:$0xff] %vm49, %v7114
  %7220 = vst.msk [vmem:[%s334 + $0x1b0] sm:$0xff] %vm49, %v7115
  %7221 = vst.msk [vmem:[%s334 + $0x1c8] sm:$0xff] %vm49, %v7116
  %7222 = vst.msk [vmem:[%s334 + $0x1d0] sm:$0xff] %vm49, %v7117
  %7223 = vst.msk [vmem:[%s334 + $0x1e8] sm:$0xff] %vm49, %v7118
  %7224 = vst.msk [vmem:[%s334 + $0x1f0] sm:$0xff] %vm49, %v7119
  %7225 = vst.msk [vmem:[%s334 + $0x248] sm:$0xff] %vm49, %v7120
  %7226 = vst.msk [vmem:[%s334 + $0x250] sm:$0xff] %vm49, %v7121
  %7227 = vst.msk [vmem:[%s334 + $0x268] sm:$0xff] %vm49, %v7122
  %7228 = vst.msk [vmem:[%s334 + $0x270] sm:$0xff] %vm49, %v7123
  %7229 = vst.msk [vmem:[%s334 + $0x288] sm:$0xff] %vm49, %v7124
  %7230 = vst.msk [vmem:[%s334 + $0x290] sm:$0xff] %vm49, %v7125
  %7231 = vst.msk [vmem:[%s334 + $0x2a8] sm:$0xff] %vm49, %v7126
  %7232 = vst.msk [vmem:[%s334 + $0x2b0] sm:$0xff] %vm49, %v7127
  %7233 = vst.msk [vmem:[%s334 + $0x2c8] sm:$0xff] %vm49, %v7128
  %7234 = vst.msk [vmem:[%s334 + $0x2d0] sm:$0xff] %vm49, %v7129
  %7235 = vst.msk [vmem:[%s334 + $0x2e8] sm:$0xff] %vm49, %v7130
  %7236 = vst.msk [vmem:[%s334 + $0x2f0] sm:$0xff] %vm49, %v7131
  %7237 = vst.msk [vmem:[%s334 + $0x308] sm:$0xff] %vm49, %v7132
  %7238 = vst.msk [vmem:[%s334 + $0x310] sm:$0xff] %vm49, %v7133
  %7239 = vst.msk [vmem:[%s334 + $0x328] sm:$0xff] %vm49, %v7134
  %7240 = vst.msk [vmem:[%s334 + $0x330] sm:$0xff] %vm49, %v7135
  %7241 = vst.msk [vmem:[%s334 + $0x348] sm:$0xff] %vm49, %v7136
  %7242 = vst.msk [vmem:[%s334 + $0x350] sm:$0xff] %vm49, %v7137
  %7243 = vst.msk [vmem:[%s334 + $0x368] sm:$0xff] %vm49, %v7138
  %7244 = vst.msk [vmem:[%s334 + $0x370] sm:$0xff] %vm49, %v7139
  %7245 = vst.msk [vmem:[%s334 + $0x388] sm:$0xff] %vm49, %v7140
  %7246 = vst.msk [vmem:[%s334 + $0x390] sm:$0xff] %vm49, %v7141
  %7247 = vst.msk [vmem:[%s334 + $0x3a8] sm:$0xff] %vm49, %v7142
  %7248 = vst.msk [vmem:[%s334 + $0x3b0] sm:$0xff] %vm49, %v7143
  %7249 = vst.msk [vmem:[%s334 + $0x3c8] sm:$0xff] %vm49, %v7144
  %7250 = vst.msk [vmem:[%s334 + $0x3d0] sm:$0xff] %vm49, %v7145
  %7251 = vst.msk [vmem:[%s334 + $0x3e8] sm:$0xff] %vm49, %v7146
  %7252 = vst.msk [vmem:[%s334 + $0x3f0] sm:$0xff] %vm49, %v7147
  %7253 = vst.msk [vmem:[%s334 + $0x408] sm:$0xff] %vm49, %v7148
  %7254 = vst.msk [vmem:[%s334 + $0x410] sm:$0xff] %vm49, %v7149
  %7255 = vst.msk [vmem:[%s334 + $0x428] sm:$0xff] %vm49, %v7150
  %7256 = vst.msk [vmem:[%s334 + $0x430] sm:$0xff] %vm49, %v7151
  %v7257 = vld [vmem:[#allocation2 + $0x7] sm:$0xff]
  %v7258 = vld [vmem:[#allocation2 + $0xf] sm:$0xff]
  %v7259 = vld [vmem:[#allocation2 + $0x27] sm:$0xff]
  %v7260 = vld [vmem:[#allocation2 + $0x2f] sm:$0xff]
  %v7261 = vld [vmem:[#allocation2 + $0x47] sm:$0xff]
  %v7262 = vld [vmem:[#allocation2 + $0x4f] sm:$0xff]
  %v7263 = vld [vmem:[#allocation2 + $0x67] sm:$0xff]
  %v7264 = vld [vmem:[#allocation2 + $0x6f] sm:$0xff]
  %v7265 = vld [vmem:[#allocation2 + $0x87] sm:$0xff]
  %v7266 = vld [vmem:[#allocation2 + $0x8f] sm:$0xff]
  %v7267 = vld [vmem:[#allocation2 + $0xa7] sm:$0xff]
  %v7268 = vld [vmem:[#allocation2 + $0xaf] sm:$0xff]
  %v7269 = vld [vmem:[#allocation2 + $0xc7] sm:$0xff]
  %v7270 = vld [vmem:[#allocation2 + $0xcf] sm:$0xff]
  %v7271 = vld [vmem:[#allocation2 + $0xe7] sm:$0xff]
  %v7272 = vld [vmem:[#allocation2 + $0xef] sm:$0xff]
  %v7273 = vld [vmem:[#allocation2 + $0x107] sm:$0xff]
  %v7274 = vld [vmem:[#allocation2 + $0x10f] sm:$0xff]
  %v7275 = vld [vmem:[#allocation2 + $0x127] sm:$0xff]
  %v7276 = vld [vmem:[#allocation2 + $0x12f] sm:$0xff]
  %v7277 = vld [vmem:[#allocation2 + $0x147] sm:$0xff]
  %v7278 = vld [vmem:[#allocation2 + $0x14f] sm:$0xff]
  %v7279 = vld [vmem:[#allocation2 + $0x167] sm:$0xff]
  %v7280 = vld [vmem:[#allocation2 + $0x16f] sm:$0xff]
  %v7281 = vld [vmem:[#allocation2 + $0x187] sm:$0xff]
  %v7282 = vld [vmem:[#allocation2 + $0x18f] sm:$0xff]
  %v7283 = vld [vmem:[#allocation2 + $0x1a7] sm:$0xff]
  %v7284 = vld [vmem:[#allocation2 + $0x1af] sm:$0xff]
  %v7285 = vld [vmem:[#allocation2 + $0x1c7] sm:$0xff]
  %v7286 = vld [vmem:[#allocation2 + $0x1cf] sm:$0xff]
  %v7287 = vld [vmem:[#allocation2 + $0x1e7] sm:$0xff]
  %v7288 = vld [vmem:[#allocation2 + $0x1ef] sm:$0xff]
  %v7289 = vld [vmem:[#allocation2 + $0x247] sm:$0xff]
  %v7290 = vld [vmem:[#allocation2 + $0x24f] sm:$0xff]
  %v7291 = vld [vmem:[#allocation2 + $0x267] sm:$0xff]
  %v7292 = vld [vmem:[#allocation2 + $0x26f] sm:$0xff]
  %v7293 = vld [vmem:[#allocation2 + $0x287] sm:$0xff]
  %v7294 = vld [vmem:[#allocation2 + $0x28f] sm:$0xff]
  %v7295 = vld [vmem:[#allocation2 + $0x2a7] sm:$0xff]
  %v7296 = vld [vmem:[#allocation2 + $0x2af] sm:$0xff]
  %v7297 = vld [vmem:[#allocation2 + $0x2c7] sm:$0xff]
  %v7298 = vld [vmem:[#allocation2 + $0x2cf] sm:$0xff]
  %v7299 = vld [vmem:[#allocation2 + $0x2e7] sm:$0xff]
  %v7300 = vld [vmem:[#allocation2 + $0x2ef] sm:$0xff]
  %v7301 = vld [vmem:[#allocation2 + $0x307] sm:$0xff]
  %v7302 = vld [vmem:[#allocation2 + $0x30f] sm:$0xff]
  %v7303 = vld [vmem:[#allocation2 + $0x327] sm:$0xff]
  %v7304 = vld [vmem:[#allocation2 + $0x32f] sm:$0xff]
  %v7305 = vld [vmem:[#allocation2 + $0x347] sm:$0xff]
  %v7306 = vld [vmem:[#allocation2 + $0x34f] sm:$0xff]
  %v7307 = vld [vmem:[#allocation2 + $0x367] sm:$0xff]
  %v7308 = vld [vmem:[#allocation2 + $0x36f] sm:$0xff]
  %v7309 = vld [vmem:[#allocation2 + $0x387] sm:$0xff]
  %v7310 = vld [vmem:[#allocation2 + $0x38f] sm:$0xff]
  %v7311 = vld [vmem:[#allocation2 + $0x3a7] sm:$0xff]
  %v7312 = vld [vmem:[#allocation2 + $0x3af] sm:$0xff]
  %v7313 = vld [vmem:[#allocation2 + $0x3c7] sm:$0xff]
  %v7314 = vld [vmem:[#allocation2 + $0x3cf] sm:$0xff]
  %v7315 = vld [vmem:[#allocation2 + $0x3e7] sm:$0xff]
  %v7316 = vld [vmem:[#allocation2 + $0x3ef] sm:$0xff]
  %v7317 = vld [vmem:[#allocation2 + $0x407] sm:$0xff]
  %v7318 = vld [vmem:[#allocation2 + $0x40f] sm:$0xff]
  %v7319 = vld [vmem:[#allocation2 + $0x427] sm:$0xff]
  %v7320 = vld [vmem:[#allocation2 + $0x42f] sm:$0xff]
  %v7321 = vld [vmem:[#allocation2 + $0x8] sm:$0xff]
  %v7322 = vld [vmem:[#allocation2 + $0x10] sm:$0xff]
  %v7323 = vld [vmem:[#allocation2 + $0x28] sm:$0xff]
  %v7324 = vld [vmem:[#allocation2 + $0x30] sm:$0xff]
  %v7325 = vld [vmem:[#allocation2 + $0x48] sm:$0xff]
  %v7326 = vld [vmem:[#allocation2 + $0x50] sm:$0xff]
  %v7327 = vld [vmem:[#allocation2 + $0x68] sm:$0xff]
  %v7328 = vld [vmem:[#allocation2 + $0x70] sm:$0xff]
  %v7329 = vld [vmem:[#allocation2 + $0x88] sm:$0xff]
  %v7330 = vld [vmem:[#allocation2 + $0x90] sm:$0xff]
  %v7331 = vld [vmem:[#allocation2 + $0xa8] sm:$0xff]
  %v7332 = vld [vmem:[#allocation2 + $0xb0] sm:$0xff]
  %v7333 = vld [vmem:[#allocation2 + $0xc8] sm:$0xff]
  %v7334 = vld [vmem:[#allocation2 + $0xd0] sm:$0xff]
  %v7335 = vld [vmem:[#allocation2 + $0xe8] sm:$0xff]
  %v7336 = vld [vmem:[#allocation2 + $0xf0] sm:$0xff]
  %v7337 = vld [vmem:[#allocation2 + $0x108] sm:$0xff]
  %v7338 = vld [vmem:[#allocation2 + $0x110] sm:$0xff]
  %v7339 = vld [vmem:[#allocation2 + $0x128] sm:$0xff]
  %v7340 = vld [vmem:[#allocation2 + $0x130] sm:$0xff]
  %v7341 = vld [vmem:[#allocation2 + $0x148] sm:$0xff]
  %v7342 = vld [vmem:[#allocation2 + $0x150] sm:$0xff]
  %v7343 = vld [vmem:[#allocation2 + $0x168] sm:$0xff]
  %v7344 = vld [vmem:[#allocation2 + $0x170] sm:$0xff]
  %v7345 = vld [vmem:[#allocation2 + $0x188] sm:$0xff]
  %v7346 = vld [vmem:[#allocation2 + $0x190] sm:$0xff]
  %v7347 = vld [vmem:[#allocation2 + $0x1a8] sm:$0xff]
  %v7348 = vld [vmem:[#allocation2 + $0x1b0] sm:$0xff]
  %v7349 = vld [vmem:[#allocation2 + $0x1c8] sm:$0xff]
  %v7350 = vld [vmem:[#allocation2 + $0x1d0] sm:$0xff]
  %v7351 = vld [vmem:[#allocation2 + $0x1e8] sm:$0xff]
  %v7352 = vld [vmem:[#allocation2 + $0x1f0] sm:$0xff]
  %v7353 = vld [vmem:[#allocation2 + $0x248] sm:$0xff]
  %v7354 = vld [vmem:[#allocation2 + $0x250] sm:$0xff]
  %v7355 = vld [vmem:[#allocation2 + $0x268] sm:$0xff]
  %v7356 = vld [vmem:[#allocation2 + $0x270] sm:$0xff]
  %v7357 = vld [vmem:[#allocation2 + $0x288] sm:$0xff]
  %v7358 = vld [vmem:[#allocation2 + $0x290] sm:$0xff]
  %v7359 = vld [vmem:[#allocation2 + $0x2a8] sm:$0xff]
  %v7360 = vld [vmem:[#allocation2 + $0x2b0] sm:$0xff]
  %v7361 = vld [vmem:[#allocation2 + $0x2c8] sm:$0xff]
  %v7362 = vld [vmem:[#allocation2 + $0x2d0] sm:$0xff]
  %v7363 = vld [vmem:[#allocation2 + $0x2e8] sm:$0xff]
  %v7364 = vld [vmem:[#allocation2 + $0x2f0] sm:$0xff]
  %v7365 = vld [vmem:[#allocation2 + $0x308] sm:$0xff]
  %v7366 = vld [vmem:[#allocation2 + $0x310] sm:$0xff]
  %v7367 = vld [vmem:[#allocation2 + $0x328] sm:$0xff]
  %v7368 = vld [vmem:[#allocation2 + $0x330] sm:$0xff]
  %v7369 = vld [vmem:[#allocation2 + $0x348] sm:$0xff]
  %v7370 = vld [vmem:[#allocation2 + $0x350] sm:$0xff]
  %v7371 = vld [vmem:[#allocation2 + $0x368] sm:$0xff]
  %v7372 = vld [vmem:[#allocation2 + $0x370] sm:$0xff]
  %v7373 = vld [vmem:[#allocation2 + $0x388] sm:$0xff]
  %v7374 = vld [vmem:[#allocation2 + $0x390] sm:$0xff]
  %v7375 = vld [vmem:[#allocation2 + $0x3a8] sm:$0xff]
  %v7376 = vld [vmem:[#allocation2 + $0x3b0] sm:$0xff]
  %v7377 = vld [vmem:[#allocation2 + $0x3c8] sm:$0xff]
  %v7378 = vld [vmem:[#allocation2 + $0x3d0] sm:$0xff]
  %v7379 = vld [vmem:[#allocation2 + $0x3e8] sm:$0xff]
  %v7380 = vld [vmem:[#allocation2 + $0x3f0] sm:$0xff]
  %v7381 = vld [vmem:[#allocation2 + $0x408] sm:$0xff]
  %v7382 = vld [vmem:[#allocation2 + $0x410] sm:$0xff]
  %v7383 = vld [vmem:[#allocation2 + $0x428] sm:$0xff]
  %v7384 = vld [vmem:[#allocation2 + $0x430] sm:$0xff]
  %v7385 = vld [vmem:[#allocation2 + $0x9] sm:$0xff]
  %v7386 = vld [vmem:[#allocation2 + $0x11] sm:$0xff]
  %v7387 = vld [vmem:[#allocation2 + $0x29] sm:$0xff]
  %v7388 = vld [vmem:[#allocation2 + $0x31] sm:$0xff]
  %v7389 = vld [vmem:[#allocation2 + $0x49] sm:$0xff]
  %v7390 = vld [vmem:[#allocation2 + $0x51] sm:$0xff]
  %v7391 = vld [vmem:[#allocation2 + $0x69] sm:$0xff]
  %v7392 = vld [vmem:[#allocation2 + $0x71] sm:$0xff]
  %v7393 = vld [vmem:[#allocation2 + $0x89] sm:$0xff]
  %v7394 = vld [vmem:[#allocation2 + $0x91] sm:$0xff]
  %v7395 = vld [vmem:[#allocation2 + $0xa9] sm:$0xff]
  %v7396 = vld [vmem:[#allocation2 + $0xb1] sm:$0xff]
  %v7397 = vld [vmem:[#allocation2 + $0xc9] sm:$0xff]
  %v7398 = vld [vmem:[#allocation2 + $0xd1] sm:$0xff]
  %v7399 = vld [vmem:[#allocation2 + $0xe9] sm:$0xff]
  %v7400 = vld [vmem:[#allocation2 + $0xf1] sm:$0xff]
  %v7401 = vld [vmem:[#allocation2 + $0x109] sm:$0xff]
  %v7402 = vld [vmem:[#allocation2 + $0x111] sm:$0xff]
  %v7403 = vld [vmem:[#allocation2 + $0x129] sm:$0xff]
  %v7404 = vld [vmem:[#allocation2 + $0x131] sm:$0xff]
  %v7405 = vld [vmem:[#allocation2 + $0x149] sm:$0xff]
  %v7406 = vld [vmem:[#allocation2 + $0x151] sm:$0xff]
  %v7407 = vld [vmem:[#allocation2 + $0x169] sm:$0xff]
  %v7408 = vld [vmem:[#allocation2 + $0x171] sm:$0xff]
  %v7409 = vld [vmem:[#allocation2 + $0x189] sm:$0xff]
  %v7410 = vld [vmem:[#allocation2 + $0x191] sm:$0xff]
  %v7411 = vld [vmem:[#allocation2 + $0x1a9] sm:$0xff]
  %v7412 = vld [vmem:[#allocation2 + $0x1b1] sm:$0xff]
  %v7413 = vld [vmem:[#allocation2 + $0x1c9] sm:$0xff]
  %v7414 = vld [vmem:[#allocation2 + $0x1d1] sm:$0xff]
  %v7415 = vld [vmem:[#allocation2 + $0x1e9] sm:$0xff]
  %v7416 = vld [vmem:[#allocation2 + $0x1f1] sm:$0xff]
  %v7417 = vld [vmem:[#allocation2 + $0x249] sm:$0xff]
  %v7418 = vld [vmem:[#allocation2 + $0x251] sm:$0xff]
  %v7419 = vld [vmem:[#allocation2 + $0x269] sm:$0xff]
  %v7420 = vld [vmem:[#allocation2 + $0x271] sm:$0xff]
  %v7421 = vld [vmem:[#allocation2 + $0x289] sm:$0xff]
  %v7422 = vld [vmem:[#allocation2 + $0x291] sm:$0xff]
  %v7423 = vld [vmem:[#allocation2 + $0x2a9] sm:$0xff]
  %v7424 = vld [vmem:[#allocation2 + $0x2b1] sm:$0xff]
  %v7425 = vld [vmem:[#allocation2 + $0x2c9] sm:$0xff]
  %v7426 = vld [vmem:[#allocation2 + $0x2d1] sm:$0xff]
  %v7427 = vld [vmem:[#allocation2 + $0x2e9] sm:$0xff]
  %v7428 = vld [vmem:[#allocation2 + $0x2f1] sm:$0xff]
  %v7429 = vld [vmem:[#allocation2 + $0x309] sm:$0xff]
  %v7430 = vld [vmem:[#allocation2 + $0x311] sm:$0xff]
  %v7431 = vld [vmem:[#allocation2 + $0x329] sm:$0xff]
  %v7432 = vld [vmem:[#allocation2 + $0x331] sm:$0xff]
  %v7433 = vld [vmem:[#allocation2 + $0x349] sm:$0xff]
  %v7434 = vld [vmem:[#allocation2 + $0x351] sm:$0xff]
  %v7435 = vld [vmem:[#allocation2 + $0x369] sm:$0xff]
  %v7436 = vld [vmem:[#allocation2 + $0x371] sm:$0xff]
  %v7437 = vld [vmem:[#allocation2 + $0x389] sm:$0xff]
  %v7438 = vld [vmem:[#allocation2 + $0x391] sm:$0xff]
  %v7439 = vld [vmem:[#allocation2 + $0x3a9] sm:$0xff]
  %v7440 = vld [vmem:[#allocation2 + $0x3b1] sm:$0xff]
  %v7441 = vld [vmem:[#allocation2 + $0x3c9] sm:$0xff]
  %v7442 = vld [vmem:[#allocation2 + $0x3d1] sm:$0xff]
  %v7443 = vld [vmem:[#allocation2 + $0x3e9] sm:$0xff]
  %v7444 = vld [vmem:[#allocation2 + $0x3f1] sm:$0xff]
  %v7445 = vld [vmem:[#allocation2 + $0x409] sm:$0xff]
  %v7446 = vld [vmem:[#allocation2 + $0x411] sm:$0xff]
  %v7447 = vld [vmem:[#allocation2 + $0x429] sm:$0xff]
  %v7448 = vld [vmem:[#allocation2 + $0x431] sm:$0xff]
  %v7449 = vld [vmem:[%s334 + $0x7] sm:$0xff]
  %v7450 = vld [vmem:[%s334 + $0xf] sm:$0xff]
  %v7451 = vld [vmem:[%s334 + $0x27] sm:$0xff]
  %v7452 = vld [vmem:[%s334 + $0x2f] sm:$0xff]
  %v7453 = vld [vmem:[%s334 + $0x47] sm:$0xff]
  %v7454 = vld [vmem:[%s334 + $0x4f] sm:$0xff]
  %v7455 = vld [vmem:[%s334 + $0x67] sm:$0xff]
  %v7456 = vld [vmem:[%s334 + $0x6f] sm:$0xff]
  %v7457 = vld [vmem:[%s334 + $0x87] sm:$0xff]
  %v7458 = vld [vmem:[%s334 + $0x8f] sm:$0xff]
  %v7459 = vld [vmem:[%s334 + $0xa7] sm:$0xff]
  %v7460 = vld [vmem:[%s334 + $0xaf] sm:$0xff]
  %v7461 = vld [vmem:[%s334 + $0xc7] sm:$0xff]
  %v7462 = vld [vmem:[%s334 + $0xcf] sm:$0xff]
  %v7463 = vld [vmem:[%s334 + $0xe7] sm:$0xff]
  %v7464 = vld [vmem:[%s334 + $0xef] sm:$0xff]
  %v7465 = vld [vmem:[%s334 + $0x107] sm:$0xff]
  %v7466 = vld [vmem:[%s334 + $0x10f] sm:$0xff]
  %v7467 = vld [vmem:[%s334 + $0x127] sm:$0xff]
  %v7468 = vld [vmem:[%s334 + $0x12f] sm:$0xff]
  %v7469 = vld [vmem:[%s334 + $0x147] sm:$0xff]
  %v7470 = vld [vmem:[%s334 + $0x14f] sm:$0xff]
  %v7471 = vld [vmem:[%s334 + $0x167] sm:$0xff]
  %v7472 = vld [vmem:[%s334 + $0x16f] sm:$0xff]
  %v7473 = vld [vmem:[%s334 + $0x187] sm:$0xff]
  %v7474 = vld [vmem:[%s334 + $0x18f] sm:$0xff]
  %v7475 = vld [vmem:[%s334 + $0x1a7] sm:$0xff]
  %v7476 = vld [vmem:[%s334 + $0x1af] sm:$0xff]
  %v7477 = vld [vmem:[%s334 + $0x1c7] sm:$0xff]
  %v7478 = vld [vmem:[%s334 + $0x1cf] sm:$0xff]
  %v7479 = vld [vmem:[%s334 + $0x1e7] sm:$0xff]
  %v7480 = vld [vmem:[%s334 + $0x1ef] sm:$0xff]
  %v7481 = vld [vmem:[%s334 + $0x247] sm:$0xff]
  %v7482 = vld [vmem:[%s334 + $0x24f] sm:$0xff]
  %v7483 = vld [vmem:[%s334 + $0x267] sm:$0xff]
  %v7484 = vld [vmem:[%s334 + $0x26f] sm:$0xff]
  %v7485 = vld [vmem:[%s334 + $0x287] sm:$0xff]
  %v7486 = vld [vmem:[%s334 + $0x28f] sm:$0xff]
  %v7487 = vld [vmem:[%s334 + $0x2a7] sm:$0xff]
  %v7488 = vld [vmem:[%s334 + $0x2af] sm:$0xff]
  %v7489 = vld [vmem:[%s334 + $0x2c7] sm:$0xff]
  %v7490 = vld [vmem:[%s334 + $0x2cf] sm:$0xff]
  %v7491 = vld [vmem:[%s334 + $0x2e7] sm:$0xff]
  %v7492 = vld [vmem:[%s334 + $0x2ef] sm:$0xff]
  %v7493 = vld [vmem:[%s334 + $0x307] sm:$0xff]
  %v7494 = vld [vmem:[%s334 + $0x30f] sm:$0xff]
  %v7495 = vld [vmem:[%s334 + $0x327] sm:$0xff]
  %v7496 = vld [vmem:[%s334 + $0x32f] sm:$0xff]
  %v7497 = vld [vmem:[%s334 + $0x347] sm:$0xff]
  %v7498 = vld [vmem:[%s334 + $0x34f] sm:$0xff]
  %v7499 = vld [vmem:[%s334 + $0x367] sm:$0xff]
  %v7500 = vld [vmem:[%s334 + $0x36f] sm:$0xff]
  %v7501 = vld [vmem:[%s334 + $0x387] sm:$0xff]
  %v7502 = vld [vmem:[%s334 + $0x38f] sm:$0xff]
  %v7503 = vld [vmem:[%s334 + $0x3a7] sm:$0xff]
  %v7504 = vld [vmem:[%s334 + $0x3af] sm:$0xff]
  %v7505 = vld [vmem:[%s334 + $0x3c7] sm:$0xff]
  %v7506 = vld [vmem:[%s334 + $0x3cf] sm:$0xff]
  %v7507 = vld [vmem:[%s334 + $0x3e7] sm:$0xff]
  %v7508 = vld [vmem:[%s334 + $0x3ef] sm:$0xff]
  %v7509 = vld [vmem:[%s334 + $0x407] sm:$0xff]
  %v7510 = vld [vmem:[%s334 + $0x40f] sm:$0xff]
  %v7511 = vld [vmem:[%s334 + $0x427] sm:$0xff]
  %v7512 = vld [vmem:[%s334 + $0x42f] sm:$0xff]
  %v7513 = vld [vmem:[%s334 + $0x8] sm:$0xff]
  %v7514 = vld [vmem:[%s334 + $0x10] sm:$0xff]
  %v7515 = vld [vmem:[%s334 + $0x28] sm:$0xff]
  %v7516 = vld [vmem:[%s334 + $0x30] sm:$0xff]
  %v7517 = vld [vmem:[%s334 + $0x48] sm:$0xff]
  %v7518 = vld [vmem:[%s334 + $0x50] sm:$0xff]
  %v7519 = vld [vmem:[%s334 + $0x68] sm:$0xff]
  %v7520 = vld [vmem:[%s334 + $0x70] sm:$0xff]
  %v7521 = vld [vmem:[%s334 + $0x88] sm:$0xff]
  %v7522 = vld [vmem:[%s334 + $0x90] sm:$0xff]
  %v7523 = vld [vmem:[%s334 + $0xa8] sm:$0xff]
  %v7524 = vld [vmem:[%s334 + $0xb0] sm:$0xff]
  %v7525 = vld [vmem:[%s334 + $0xc8] sm:$0xff]
  %v7526 = vld [vmem:[%s334 + $0xd0] sm:$0xff]
  %v7527 = vld [vmem:[%s334 + $0xe8] sm:$0xff]
  %v7528 = vld [vmem:[%s334 + $0xf0] sm:$0xff]
  %v7529 = vld [vmem:[%s334 + $0x108] sm:$0xff]
  %v7530 = vld [vmem:[%s334 + $0x110] sm:$0xff]
  %v7531 = vld [vmem:[%s334 + $0x128] sm:$0xff]
  %v7532 = vld [vmem:[%s334 + $0x130] sm:$0xff]
  %v7533 = vld [vmem:[%s334 + $0x148] sm:$0xff]
  %v7534 = vld [vmem:[%s334 + $0x150] sm:$0xff]
  %v7535 = vld [vmem:[%s334 + $0x168] sm:$0xff]
  %v7536 = vld [vmem:[%s334 + $0x170] sm:$0xff]
  %v7537 = vld [vmem:[%s334 + $0x188] sm:$0xff]
  %v7538 = vld [vmem:[%s334 + $0x190] sm:$0xff]
  %v7539 = vld [vmem:[%s334 + $0x1a8] sm:$0xff]
  %v7540 = vld [vmem:[%s334 + $0x1b0] sm:$0xff]
  %v7541 = vld [vmem:[%s334 + $0x1c8] sm:$0xff]
  %v7542 = vld [vmem:[%s334 + $0x1d0] sm:$0xff]
  %v7543 = vld [vmem:[%s334 + $0x1e8] sm:$0xff]
  %v7544 = vld [vmem:[%s334 + $0x1f0] sm:$0xff]
  %v7545 = vld [vmem:[%s334 + $0x248] sm:$0xff]
  %v7546 = vld [vmem:[%s334 + $0x250] sm:$0xff]
  %v7547 = vld [vmem:[%s334 + $0x268] sm:$0xff]
  %v7548 = vld [vmem:[%s334 + $0x270] sm:$0xff]
  %v7549 = vld [vmem:[%s334 + $0x288] sm:$0xff]
  %v7550 = vld [vmem:[%s334 + $0x290] sm:$0xff]
  %v7551 = vld [vmem:[%s334 + $0x2a8] sm:$0xff]
  %v7552 = vld [vmem:[%s334 + $0x2b0] sm:$0xff]
  %v7553 = vld [vmem:[%s334 + $0x2c8] sm:$0xff]
  %v7554 = vld [vmem:[%s334 + $0x2d0] sm:$0xff]
  %v7555 = vld [vmem:[%s334 + $0x2e8] sm:$0xff]
  %v7556 = vld [vmem:[%s334 + $0x2f0] sm:$0xff]
  %v7557 = vld [vmem:[%s334 + $0x308] sm:$0xff]
  %v7558 = vld [vmem:[%s334 + $0x310] sm:$0xff]
  %v7559 = vld [vmem:[%s334 + $0x328] sm:$0xff]
  %v7560 = vld [vmem:[%s334 + $0x330] sm:$0xff]
  %v7561 = vld [vmem:[%s334 + $0x348] sm:$0xff]
  %v7562 = vld [vmem:[%s334 + $0x350] sm:$0xff]
  %v7563 = vld [vmem:[%s334 + $0x368] sm:$0xff]
  %v7564 = vld [vmem:[%s334 + $0x370] sm:$0xff]
  %v7565 = vld [vmem:[%s334 + $0x388] sm:$0xff]
  %v7566 = vld [vmem:[%s334 + $0x390] sm:$0xff]
  %v7567 = vld [vmem:[%s334 + $0x3a8] sm:$0xff]
  %v7568 = vld [vmem:[%s334 + $0x3b0] sm:$0xff]
  %v7569 = vld [vmem:[%s334 + $0x3c8] sm:$0xff]
  %v7570 = vld [vmem:[%s334 + $0x3d0] sm:$0xff]
  %v7571 = vld [vmem:[%s334 + $0x3e8] sm:$0xff]
  %v7572 = vld [vmem:[%s334 + $0x3f0] sm:$0xff]
  %v7573 = vld [vmem:[%s334 + $0x408] sm:$0xff]
  %v7574 = vld [vmem:[%s334 + $0x410] sm:$0xff]
  %v7575 = vld [vmem:[%s334 + $0x428] sm:$0xff]
  %v7576 = vld [vmem:[%s334 + $0x430] sm:$0xff]
  %v7577 = vld [vmem:[%s334 + $0x9] sm:$0xff]
  %v7578 = vld [vmem:[%s334 + $0x11] sm:$0xff]
  %v7579 = vld [vmem:[%s334 + $0x29] sm:$0xff]
  %v7580 = vld [vmem:[%s334 + $0x31] sm:$0xff]
  %v7581 = vld [vmem:[%s334 + $0x49] sm:$0xff]
  %v7582 = vld [vmem:[%s334 + $0x51] sm:$0xff]
  %v7583 = vld [vmem:[%s334 + $0x69] sm:$0xff]
  %v7584 = vld [vmem:[%s334 + $0x71] sm:$0xff]
  %v7585 = vld [vmem:[%s334 + $0x89] sm:$0xff]
  %v7586 = vld [vmem:[%s334 + $0x91] sm:$0xff]
  %v7587 = vld [vmem:[%s334 + $0xa9] sm:$0xff]
  %v7588 = vld [vmem:[%s334 + $0xb1] sm:$0xff]
  %v7589 = vld [vmem:[%s334 + $0xc9] sm:$0xff]
  %v7590 = vld [vmem:[%s334 + $0xd1] sm:$0xff]
  %v7591 = vld [vmem:[%s334 + $0xe9] sm:$0xff]
  %v7592 = vld [vmem:[%s334 + $0xf1] sm:$0xff]
  %v7593 = vld [vmem:[%s334 + $0x109] sm:$0xff]
  %v7594 = vld [vmem:[%s334 + $0x111] sm:$0xff]
  %v7595 = vld [vmem:[%s334 + $0x129] sm:$0xff]
  %v7596 = vld [vmem:[%s334 + $0x131] sm:$0xff]
  %v7597 = vld [vmem:[%s334 + $0x149] sm:$0xff]
  %v7598 = vld [vmem:[%s334 + $0x151] sm:$0xff]
  %v7599 = vld [vmem:[%s334 + $0x169] sm:$0xff]
  %v7600 = vld [vmem:[%s334 + $0x171] sm:$0xff]
  %v7601 = vld [vmem:[%s334 + $0x189] sm:$0xff]
  %v7602 = vld [vmem:[%s334 + $0x191] sm:$0xff]
  %v7603 = vld [vmem:[%s334 + $0x1a9] sm:$0xff]
  %v7604 = vld [vmem:[%s334 + $0x1b1] sm:$0xff]
  %v7605 = vld [vmem:[%s334 + $0x1c9] sm:$0xff]
  %v7606 = vld [vmem:[%s334 + $0x1d1] sm:$0xff]
  %v7607 = vld [vmem:[%s334 + $0x1e9] sm:$0xff]
  %v7608 = vld [vmem:[%s334 + $0x1f1] sm:$0xff]
  %v7609 = vld [vmem:[%s334 + $0x249] sm:$0xff]
  %v7610 = vld [vmem:[%s334 + $0x251] sm:$0xff]
  %v7611 = vld [vmem:[%s334 + $0x269] sm:$0xff]
  %v7612 = vld [vmem:[%s334 + $0x271] sm:$0xff]
  %v7613 = vld [vmem:[%s334 + $0x289] sm:$0xff]
  %v7614 = vld [vmem:[%s334 + $0x291] sm:$0xff]
  %v7615 = vld [vmem:[%s334 + $0x2a9] sm:$0xff]
  %v7616 = vld [vmem:[%s334 + $0x2b1] sm:$0xff]
  %v7617 = vld [vmem:[%s334 + $0x2c9] sm:$0xff]
  %v7618 = vld [vmem:[%s334 + $0x2d1] sm:$0xff]
  %v7619 = vld [vmem:[%s334 + $0x2e9] sm:$0xff]
  %v7620 = vld [vmem:[%s334 + $0x2f1] sm:$0xff]
  %v7621 = vld [vmem:[%s334 + $0x309] sm:$0xff]
  %v7622 = vld [vmem:[%s334 + $0x311] sm:$0xff]
  %v7623 = vld [vmem:[%s334 + $0x329] sm:$0xff]
  %v7624 = vld [vmem:[%s334 + $0x331] sm:$0xff]
  %v7625 = vld [vmem:[%s334 + $0x349] sm:$0xff]
  %v7626 = vld [vmem:[%s334 + $0x351] sm:$0xff]
  %v7627 = vld [vmem:[%s334 + $0x369] sm:$0xff]
  %v7628 = vld [vmem:[%s334 + $0x371] sm:$0xff]
  %v7629 = vld [vmem:[%s334 + $0x389] sm:$0xff]
  %v7630 = vld [vmem:[%s334 + $0x391] sm:$0xff]
  %v7631 = vld [vmem:[%s334 + $0x3a9] sm:$0xff]
  %v7632 = vld [vmem:[%s334 + $0x3b1] sm:$0xff]
  %v7633 = vld [vmem:[%s334 + $0x3c9] sm:$0xff]
  %v7634 = vld [vmem:[%s334 + $0x3d1] sm:$0xff]
  %v7635 = vld [vmem:[%s334 + $0x3e9] sm:$0xff]
  %v7636 = vld [vmem:[%s334 + $0x3f1] sm:$0xff]
  %v7637 = vld [vmem:[%s334 + $0x409] sm:$0xff]
  %v7638 = vld [vmem:[%s334 + $0x411] sm:$0xff]
  %v7639 = vld [vmem:[%s334 + $0x429] sm:$0xff]
  %v7640 = vld [vmem:[%s334 + $0x431] sm:$0xff]
  %v7641 = vld [vmem:[%s783 + $0x7] sm:$0xff]
  %v7642 = vld [vmem:[%s783 + $0xf] sm:$0xff]
  %v7643 = vld [vmem:[%s783 + $0x27] sm:$0xff]
  %v7644 = vld [vmem:[%s783 + $0x2f] sm:$0xff]
  %v7645 = vld [vmem:[%s783 + $0x47] sm:$0xff]
  %v7646 = vld [vmem:[%s783 + $0x4f] sm:$0xff]
  %v7647 = vld [vmem:[%s783 + $0x67] sm:$0xff]
  %v7648 = vld [vmem:[%s783 + $0x6f] sm:$0xff]
  %v7649 = vld [vmem:[%s783 + $0x87] sm:$0xff]
  %v7650 = vld [vmem:[%s783 + $0x8f] sm:$0xff]
  %v7651 = vld [vmem:[%s783 + $0xa7] sm:$0xff]
  %v7652 = vld [vmem:[%s783 + $0xaf] sm:$0xff]
  %v7653 = vld [vmem:[%s783 + $0xc7] sm:$0xff]
  %v7654 = vld [vmem:[%s783 + $0xcf] sm:$0xff]
  %v7655 = vld [vmem:[%s783 + $0xe7] sm:$0xff]
  %v7656 = vld [vmem:[%s783 + $0xef] sm:$0xff]
  %v7657 = vld [vmem:[%s783 + $0x107] sm:$0xff]
  %v7658 = vld [vmem:[%s783 + $0x10f] sm:$0xff]
  %v7659 = vld [vmem:[%s783 + $0x127] sm:$0xff]
  %v7660 = vld [vmem:[%s783 + $0x12f] sm:$0xff]
  %v7661 = vld [vmem:[%s783 + $0x147] sm:$0xff]
  %v7662 = vld [vmem:[%s783 + $0x14f] sm:$0xff]
  %v7663 = vld [vmem:[%s783 + $0x167] sm:$0xff]
  %v7664 = vld [vmem:[%s783 + $0x16f] sm:$0xff]
  %v7665 = vld [vmem:[%s783 + $0x187] sm:$0xff]
  %v7666 = vld [vmem:[%s783 + $0x18f] sm:$0xff]
  %v7667 = vld [vmem:[%s783 + $0x1a7] sm:$0xff]
  %v7668 = vld [vmem:[%s783 + $0x1af] sm:$0xff]
  %v7669 = vld [vmem:[%s783 + $0x1c7] sm:$0xff]
  %v7670 = vld [vmem:[%s783 + $0x1cf] sm:$0xff]
  %v7671 = vld [vmem:[%s783 + $0x1e7] sm:$0xff]
  %v7672 = vld [vmem:[%s783 + $0x1ef] sm:$0xff]
  %v7673 = vld [vmem:[%s783 + $0x247] sm:$0xff]
  %v7674 = vld [vmem:[%s783 + $0x24f] sm:$0xff]
  %v7675 = vld [vmem:[%s783 + $0x267] sm:$0xff]
  %v7676 = vld [vmem:[%s783 + $0x26f] sm:$0xff]
  %v7677 = vld [vmem:[%s783 + $0x287] sm:$0xff]
  %v7678 = vld [vmem:[%s783 + $0x28f] sm:$0xff]
  %v7679 = vld [vmem:[%s783 + $0x2a7] sm:$0xff]
  %v7680 = vld [vmem:[%s783 + $0x2af] sm:$0xff]
  %v7681 = vld [vmem:[%s783 + $0x2c7] sm:$0xff]
  %v7682 = vld [vmem:[%s783 + $0x2cf] sm:$0xff]
  %v7683 = vld [vmem:[%s783 + $0x2e7] sm:$0xff]
  %v7684 = vld [vmem:[%s783 + $0x2ef] sm:$0xff]
  %v7685 = vld [vmem:[%s783 + $0x307] sm:$0xff]
  %v7686 = vld [vmem:[%s783 + $0x30f] sm:$0xff]
  %v7687 = vld [vmem:[%s783 + $0x327] sm:$0xff]
  %v7688 = vld [vmem:[%s783 + $0x32f] sm:$0xff]
  %v7689 = vld [vmem:[%s783 + $0x347] sm:$0xff]
  %v7690 = vld [vmem:[%s783 + $0x34f] sm:$0xff]
  %v7691 = vld [vmem:[%s783 + $0x367] sm:$0xff]
  %v7692 = vld [vmem:[%s783 + $0x36f] sm:$0xff]
  %v7693 = vld [vmem:[%s783 + $0x387] sm:$0xff]
  %v7694 = vld [vmem:[%s783 + $0x38f] sm:$0xff]
  %v7695 = vld [vmem:[%s783 + $0x3a7] sm:$0xff]
  %v7696 = vld [vmem:[%s783 + $0x3af] sm:$0xff]
  %v7697 = vld [vmem:[%s783 + $0x3c7] sm:$0xff]
  %v7698 = vld [vmem:[%s783 + $0x3cf] sm:$0xff]
  %v7699 = vld [vmem:[%s783 + $0x3e7] sm:$0xff]
  %v7700 = vld [vmem:[%s783 + $0x3ef] sm:$0xff]
  %v7701 = vld [vmem:[%s783 + $0x407] sm:$0xff]
  %v7702 = vld [vmem:[%s783 + $0x40f] sm:$0xff]
  %v7703 = vld [vmem:[%s783 + $0x427] sm:$0xff]
  %v7704 = vld [vmem:[%s783 + $0x42f] sm:$0xff]
  %v7705 = vld [vmem:[%s783 + $0x8] sm:$0xff]
  %v7706 = vld [vmem:[%s783 + $0x10] sm:$0xff]
  %v7707 = vld [vmem:[%s783 + $0x28] sm:$0xff]
  %v7708 = vld [vmem:[%s783 + $0x30] sm:$0xff]
  %v7709 = vld [vmem:[%s783 + $0x48] sm:$0xff]
  %v7710 = vld [vmem:[%s783 + $0x50] sm:$0xff]
  %v7711 = vld [vmem:[%s783 + $0x68] sm:$0xff]
  %v7712 = vld [vmem:[%s783 + $0x70] sm:$0xff]
  %v7713 = vld [vmem:[%s783 + $0x88] sm:$0xff]
  %v7714 = vld [vmem:[%s783 + $0x90] sm:$0xff]
  %v7715 = vld [vmem:[%s783 + $0xa8] sm:$0xff]
  %v7716 = vld [vmem:[%s783 + $0xb0] sm:$0xff]
  %v7717 = vld [vmem:[%s783 + $0xc8] sm:$0xff]
  %v7718 = vld [vmem:[%s783 + $0xd0] sm:$0xff]
  %v7719 = vld [vmem:[%s783 + $0xe8] sm:$0xff]
  %v7720 = vld [vmem:[%s783 + $0xf0] sm:$0xff]
  %v7721 = vld [vmem:[%s783 + $0x108] sm:$0xff]
  %v7722 = vld [vmem:[%s783 + $0x110] sm:$0xff]
  %v7723 = vld [vmem:[%s783 + $0x128] sm:$0xff]
  %v7724 = vld [vmem:[%s783 + $0x130] sm:$0xff]
  %v7725 = vld [vmem:[%s783 + $0x148] sm:$0xff]
  %v7726 = vld [vmem:[%s783 + $0x150] sm:$0xff]
  %v7727 = vld [vmem:[%s783 + $0x168] sm:$0xff]
  %v7728 = vld [vmem:[%s783 + $0x170] sm:$0xff]
  %v7729 = vld [vmem:[%s783 + $0x188] sm:$0xff]
  %v7730 = vld [vmem:[%s783 + $0x190] sm:$0xff]
  %v7731 = vld [vmem:[%s783 + $0x1a8] sm:$0xff]
  %v7732 = vld [vmem:[%s783 + $0x1b0] sm:$0xff]
  %v7733 = vld [vmem:[%s783 + $0x1c8] sm:$0xff]
  %v7734 = vld [vmem:[%s783 + $0x1d0] sm:$0xff]
  %v7735 = vld [vmem:[%s783 + $0x1e8] sm:$0xff]
  %v7736 = vld [vmem:[%s783 + $0x1f0] sm:$0xff]
  %v7737 = vld [vmem:[%s783 + $0x248] sm:$0xff]
  %v7738 = vld [vmem:[%s783 + $0x250] sm:$0xff]
  %v7739 = vld [vmem:[%s783 + $0x268] sm:$0xff]
  %v7740 = vld [vmem:[%s783 + $0x270] sm:$0xff]
  %v7741 = vld [vmem:[%s783 + $0x288] sm:$0xff]
  %v7742 = vld [vmem:[%s783 + $0x290] sm:$0xff]
  %v7743 = vld [vmem:[%s783 + $0x2a8] sm:$0xff]
  %v7744 = vld [vmem:[%s783 + $0x2b0] sm:$0xff]
  %v7745 = vld [vmem:[%s783 + $0x2c8] sm:$0xff]
  %v7746 = vld [vmem:[%s783 + $0x2d0] sm:$0xff]
  %v7747 = vld [vmem:[%s783 + $0x2e8] sm:$0xff]
  %v7748 = vld [vmem:[%s783 + $0x2f0] sm:$0xff]
  %v7749 = vld [vmem:[%s783 + $0x308] sm:$0xff]
  %v7750 = vld [vmem:[%s783 + $0x310] sm:$0xff]
  %v7751 = vld [vmem:[%s783 + $0x328] sm:$0xff]
  %v7752 = vld [vmem:[%s783 + $0x330] sm:$0xff]
  %v7753 = vld [vmem:[%s783 + $0x348] sm:$0xff]
  %v7754 = vld [vmem:[%s783 + $0x350] sm:$0xff]
  %v7755 = vld [vmem:[%s783 + $0x368] sm:$0xff]
  %v7756 = vld [vmem:[%s783 + $0x370] sm:$0xff]
  %v7757 = vld [vmem:[%s783 + $0x388] sm:$0xff]
  %v7758 = vld [vmem:[%s783 + $0x390] sm:$0xff]
  %v7759 = vld [vmem:[%s783 + $0x3a8] sm:$0xff]
  %v7760 = vld [vmem:[%s783 + $0x3b0] sm:$0xff]
  %v7761 = vld [vmem:[%s783 + $0x3c8] sm:$0xff]
  %v7762 = vld [vmem:[%s783 + $0x3d0] sm:$0xff]
  %v7763 = vld [vmem:[%s783 + $0x3e8] sm:$0xff]
  %v7764 = vld [vmem:[%s783 + $0x3f0] sm:$0xff]
  %v7765 = vld [vmem:[%s783 + $0x408] sm:$0xff]
  %v7766 = vld [vmem:[%s783 + $0x410] sm:$0xff]
  %v7767 = vld [vmem:[%s783 + $0x428] sm:$0xff]
  %v7768 = vld [vmem:[%s783 + $0x430] sm:$0xff]
  %v7769 = vld [vmem:[%s783 + $0x9] sm:$0xff]
  %v7770 = vld [vmem:[%s783 + $0x11] sm:$0xff]
  %v7771 = vld [vmem:[%s783 + $0x29] sm:$0xff]
  %v7772 = vld [vmem:[%s783 + $0x31] sm:$0xff]
  %v7773 = vld [vmem:[%s783 + $0x49] sm:$0xff]
  %v7774 = vld [vmem:[%s783 + $0x51] sm:$0xff]
  %v7775 = vld [vmem:[%s783 + $0x69] sm:$0xff]
  %v7776 = vld [vmem:[%s783 + $0x71] sm:$0xff]
  %v7777 = vld [vmem:[%s783 + $0x89] sm:$0xff]
  %v7778 = vld [vmem:[%s783 + $0x91] sm:$0xff]
  %v7779 = vld [vmem:[%s783 + $0xa9] sm:$0xff]
  %v7780 = vld [vmem:[%s783 + $0xb1] sm:$0xff]
  %v7781 = vld [vmem:[%s783 + $0xc9] sm:$0xff]
  %v7782 = vld [vmem:[%s783 + $0xd1] sm:$0xff]
  %v7783 = vld [vmem:[%s783 + $0xe9] sm:$0xff]
  %v7784 = vld [vmem:[%s783 + $0xf1] sm:$0xff]
  %v7785 = vld [vmem:[%s783 + $0x109] sm:$0xff]
  %v7786 = vld [vmem:[%s783 + $0x111] sm:$0xff]
  %v7787 = vld [vmem:[%s783 + $0x129] sm:$0xff]
  %v7788 = vld [vmem:[%s783 + $0x131] sm:$0xff]
  %v7789 = vld [vmem:[%s783 + $0x149] sm:$0xff]
  %v7790 = vld [vmem:[%s783 + $0x151] sm:$0xff]
  %v7791 = vld [vmem:[%s783 + $0x169] sm:$0xff]
  %v7792 = vld [vmem:[%s783 + $0x171] sm:$0xff]
  %v7793 = vld [vmem:[%s783 + $0x189] sm:$0xff]
  %v7794 = vld [vmem:[%s783 + $0x191] sm:$0xff]
  %v7795 = vld [vmem:[%s783 + $0x1a9] sm:$0xff]
  %v7796 = vld [vmem:[%s783 + $0x1b1] sm:$0xff]
  %v7797 = vld [vmem:[%s783 + $0x1c9] sm:$0xff]
  %v7798 = vld [vmem:[%s783 + $0x1d1] sm:$0xff]
  %v7799 = vld [vmem:[%s783 + $0x1e9] sm:$0xff]
  %v7800 = vld [vmem:[%s783 + $0x1f1] sm:$0xff]
  %v7801 = vld [vmem:[%s783 + $0x249] sm:$0xff]
  %v7802 = vld [vmem:[%s783 + $0x251] sm:$0xff]
  %v7803 = vld [vmem:[%s783 + $0x269] sm:$0xff]
  %v7804 = vld [vmem:[%s783 + $0x271] sm:$0xff]
  %v7805 = vld [vmem:[%s783 + $0x289] sm:$0xff]
  %v7806 = vld [vmem:[%s783 + $0x291] sm:$0xff]
  %v7807 = vld [vmem:[%s783 + $0x2a9] sm:$0xff]
  %v7808 = vld [vmem:[%s783 + $0x2b1] sm:$0xff]
  %v7809 = vld [vmem:[%s783 + $0x2c9] sm:$0xff]
  %v7810 = vld [vmem:[%s783 + $0x2d1] sm:$0xff]
  %v7811 = vld [vmem:[%s783 + $0x2e9] sm:$0xff]
  %v7812 = vld [vmem:[%s783 + $0x2f1] sm:$0xff]
  %v7813 = vld [vmem:[%s783 + $0x309] sm:$0xff]
  %v7814 = vld [vmem:[%s783 + $0x311] sm:$0xff]
  %v7815 = vld [vmem:[%s783 + $0x329] sm:$0xff]
  %v7816 = vld [vmem:[%s783 + $0x331] sm:$0xff]
  %v7817 = vld [vmem:[%s783 + $0x349] sm:$0xff]
  %v7818 = vld [vmem:[%s783 + $0x351] sm:$0xff]
  %v7819 = vld [vmem:[%s783 + $0x369] sm:$0xff]
  %v7820 = vld [vmem:[%s783 + $0x371] sm:$0xff]
  %v7821 = vld [vmem:[%s783 + $0x389] sm:$0xff]
  %v7822 = vld [vmem:[%s783 + $0x391] sm:$0xff]
  %v7823 = vld [vmem:[%s783 + $0x3a9] sm:$0xff]
  %v7824 = vld [vmem:[%s783 + $0x3b1] sm:$0xff]
  %v7825 = vld [vmem:[%s783 + $0x3c9] sm:$0xff]
  %v7826 = vld [vmem:[%s783 + $0x3d1] sm:$0xff]
  %v7827 = vld [vmem:[%s783 + $0x3e9] sm:$0xff]
  %v7828 = vld [vmem:[%s783 + $0x3f1] sm:$0xff]
  %v7829 = vld [vmem:[%s783 + $0x409] sm:$0xff]
  %v7830 = vld [vmem:[%s783 + $0x411] sm:$0xff]
  %v7831 = vld [vmem:[%s783 + $0x429] sm:$0xff]
  %v7832 = vld [vmem:[%s783 + $0x431] sm:$0xff]
  %7897 = vrot.lane.b32.xlu0 %v7321, 4
  %v7898 = vpop.permute.xlu0 %7897
  %7899 = vrot.lane.b32.xlu0 %v7322, 4
  %v7900 = vpop.permute.xlu0 %7899
  %7901 = vrot.lane.b32.xlu0 %v7323, 4
  %v7902 = vpop.permute.xlu0 %7901
  %7903 = vrot.lane.b32.xlu0 %v7324, 4
  %v7904 = vpop.permute.xlu0 %7903
  %7905 = vrot.lane.b32.xlu0 %v7325, 4
  %v7906 = vpop.permute.xlu0 %7905
  %7907 = vrot.lane.b32.xlu0 %v7326, 4
  %v7908 = vpop.permute.xlu0 %7907
  %7909 = vrot.lane.b32.xlu0 %v7327, 4
  %v7910 = vpop.permute.xlu0 %7909
  %7911 = vrot.lane.b32.xlu0 %v7328, 4
  %v7912 = vpop.permute.xlu0 %7911
  %7913 = vrot.lane.b32.xlu0 %v7329, 4
  %v7914 = vpop.permute.xlu0 %7913
  %7915 = vrot.lane.b32.xlu0 %v7330, 4
  %v7916 = vpop.permute.xlu0 %7915
  %7917 = vrot.lane.b32.xlu0 %v7331, 4
  %v7918 = vpop.permute.xlu0 %7917
  %7919 = vrot.lane.b32.xlu0 %v7332, 4
  %v7920 = vpop.permute.xlu0 %7919
  %7921 = vrot.lane.b32.xlu0 %v7333, 4
  %v7922 = vpop.permute.xlu0 %7921
  %7923 = vrot.lane.b32.xlu0 %v7334, 4
  %v7924 = vpop.permute.xlu0 %7923
  %7925 = vrot.lane.b32.xlu0 %v7335, 4
  %v7926 = vpop.permute.xlu0 %7925
  %7927 = vrot.lane.b32.xlu0 %v7336, 4
  %v7928 = vpop.permute.xlu0 %7927
  %7929 = vrot.lane.b32.xlu0 %v7337, 4
  %v7930 = vpop.permute.xlu0 %7929
  %7931 = vrot.lane.b32.xlu0 %v7338, 4
  %v7932 = vpop.permute.xlu0 %7931
  %7933 = vrot.lane.b32.xlu0 %v7339, 4
  %v7934 = vpop.permute.xlu0 %7933
  %7935 = vrot.lane.b32.xlu0 %v7340, 4
  %v7936 = vpop.permute.xlu0 %7935
  %7937 = vrot.lane.b32.xlu0 %v7341, 4
  %v7938 = vpop.permute.xlu0 %7937
  %7939 = vrot.lane.b32.xlu0 %v7342, 4
  %v7940 = vpop.permute.xlu0 %7939
  %7941 = vrot.lane.b32.xlu0 %v7343, 4
  %v7942 = vpop.permute.xlu0 %7941
  %7943 = vrot.lane.b32.xlu0 %v7344, 4
  %v7944 = vpop.permute.xlu0 %7943
  %7945 = vrot.lane.b32.xlu0 %v7345, 4
  %v7946 = vpop.permute.xlu0 %7945
  %7947 = vrot.lane.b32.xlu0 %v7346, 4
  %v7948 = vpop.permute.xlu0 %7947
  %7949 = vrot.lane.b32.xlu0 %v7347, 4
  %v7950 = vpop.permute.xlu0 %7949
  %7951 = vrot.lane.b32.xlu0 %v7348, 4
  %v7952 = vpop.permute.xlu0 %7951
  %7953 = vrot.lane.b32.xlu0 %v7349, 4
  %v7954 = vpop.permute.xlu0 %7953
  %7955 = vrot.lane.b32.xlu0 %v7350, 4
  %v7956 = vpop.permute.xlu0 %7955
  %7957 = vrot.lane.b32.xlu0 %v7351, 4
  %v7958 = vpop.permute.xlu0 %7957
  %7959 = vrot.lane.b32.xlu0 %v7352, 4
  %v7960 = vpop.permute.xlu0 %7959
  %7961 = vrot.lane.b32.xlu0 %v7353, 4
  %v7962 = vpop.permute.xlu0 %7961
  %7963 = vrot.lane.b32.xlu0 %v7354, 4
  %v7964 = vpop.permute.xlu0 %7963
  %7965 = vrot.lane.b32.xlu0 %v7355, 4
  %v7966 = vpop.permute.xlu0 %7965
  %7967 = vrot.lane.b32.xlu0 %v7356, 4
  %v7968 = vpop.permute.xlu0 %7967
  %7969 = vrot.lane.b32.xlu0 %v7357, 4
  %v7970 = vpop.permute.xlu0 %7969
  %7971 = vrot.lane.b32.xlu0 %v7358, 4
  %v7972 = vpop.permute.xlu0 %7971
  %7973 = vrot.lane.b32.xlu0 %v7359, 4
  %v7974 = vpop.permute.xlu0 %7973
  %7975 = vrot.lane.b32.xlu0 %v7360, 4
  %v7976 = vpop.permute.xlu0 %7975
  %7977 = vrot.lane.b32.xlu0 %v7361, 4
  %v7978 = vpop.permute.xlu0 %7977
  %7979 = vrot.lane.b32.xlu0 %v7362, 4
  %v7980 = vpop.permute.xlu0 %7979
  %7981 = vrot.lane.b32.xlu0 %v7363, 4
  %v7982 = vpop.permute.xlu0 %7981
  %7983 = vrot.lane.b32.xlu0 %v7364, 4
  %v7984 = vpop.permute.xlu0 %7983
  %7985 = vrot.lane.b32.xlu0 %v7365, 4
  %v7986 = vpop.permute.xlu0 %7985
  %7987 = vrot.lane.b32.xlu0 %v7366, 4
  %v7988 = vpop.permute.xlu0 %7987
  %7989 = vrot.lane.b32.xlu0 %v7367, 4
  %v7990 = vpop.permute.xlu0 %7989
  %7991 = vrot.lane.b32.xlu0 %v7368, 4
  %v7992 = vpop.permute.xlu0 %7991
  %7993 = vrot.lane.b32.xlu0 %v7369, 4
  %v7994 = vpop.permute.xlu0 %7993
  %7995 = vrot.lane.b32.xlu0 %v7370, 4
  %v7996 = vpop.permute.xlu0 %7995
  %7997 = vrot.lane.b32.xlu0 %v7371, 4
  %v7998 = vpop.permute.xlu0 %7997
  %7999 = vrot.lane.b32.xlu0 %v7372, 4
  %v8000 = vpop.permute.xlu0 %7999
  %8001 = vrot.lane.b32.xlu0 %v7373, 4
  %v8002 = vpop.permute.xlu0 %8001
  %8003 = vrot.lane.b32.xlu0 %v7374, 4
  %v8004 = vpop.permute.xlu0 %8003
  %8005 = vrot.lane.b32.xlu0 %v7375, 4
  %v8006 = vpop.permute.xlu0 %8005
  %8007 = vrot.lane.b32.xlu0 %v7376, 4
  %v8008 = vpop.permute.xlu0 %8007
  %8009 = vrot.lane.b32.xlu0 %v7377, 4
  %v8010 = vpop.permute.xlu0 %8009
  %8011 = vrot.lane.b32.xlu0 %v7378, 4
  %v8012 = vpop.permute.xlu0 %8011
  %8013 = vrot.lane.b32.xlu0 %v7379, 4
  %v8014 = vpop.permute.xlu0 %8013
  %8015 = vrot.lane.b32.xlu0 %v7380, 4
  %v8016 = vpop.permute.xlu0 %8015
  %8017 = vrot.lane.b32.xlu0 %v7381, 4
  %v8018 = vpop.permute.xlu0 %8017
  %8019 = vrot.lane.b32.xlu0 %v7382, 4
  %v8020 = vpop.permute.xlu0 %8019
  %8021 = vrot.lane.b32.xlu0 %v7383, 4
  %v8022 = vpop.permute.xlu0 %8021
  %8023 = vrot.lane.b32.xlu0 %v7384, 4
  %v8024 = vpop.permute.xlu0 %8023
  %8153 = vrot.lane.b32.xlu0 %v7385, 8
  %v8154 = vpop.permute.xlu0 %8153
  %8155 = vrot.lane.b32.xlu0 %v7386, 8
  %v8156 = vpop.permute.xlu0 %8155
  %8157 = vrot.lane.b32.xlu0 %v7387, 8
  %v8158 = vpop.permute.xlu0 %8157
  %8159 = vrot.lane.b32.xlu0 %v7388, 8
  %v8160 = vpop.permute.xlu0 %8159
  %8161 = vrot.lane.b32.xlu0 %v7389, 8
  %v8162 = vpop.permute.xlu0 %8161
  %8163 = vrot.lane.b32.xlu0 %v7390, 8
  %v8164 = vpop.permute.xlu0 %8163
  %8165 = vrot.lane.b32.xlu0 %v7391, 8
  %v8166 = vpop.permute.xlu0 %8165
  %8167 = vrot.lane.b32.xlu0 %v7392, 8
  %v8168 = vpop.permute.xlu0 %8167
  %8169 = vrot.lane.b32.xlu0 %v7393, 8
  %v8170 = vpop.permute.xlu0 %8169
  %8171 = vrot.lane.b32.xlu0 %v7394, 8
  %v8172 = vpop.permute.xlu0 %8171
  %8173 = vrot.lane.b32.xlu0 %v7395, 8
  %v8174 = vpop.permute.xlu0 %8173
  %8175 = vrot.lane.b32.xlu0 %v7396, 8
  %v8176 = vpop.permute.xlu0 %8175
  %8177 = vrot.lane.b32.xlu0 %v7397, 8
  %v8178 = vpop.permute.xlu0 %8177
  %8179 = vrot.lane.b32.xlu0 %v7398, 8
  %v8180 = vpop.permute.xlu0 %8179
  %8181 = vrot.lane.b32.xlu0 %v7399, 8
  %v8182 = vpop.permute.xlu0 %8181
  %8183 = vrot.lane.b32.xlu0 %v7400, 8
  %v8184 = vpop.permute.xlu0 %8183
  %8185 = vrot.lane.b32.xlu0 %v7401, 8
  %v8186 = vpop.permute.xlu0 %8185
  %8187 = vrot.lane.b32.xlu0 %v7402, 8
  %v8188 = vpop.permute.xlu0 %8187
  %8189 = vrot.lane.b32.xlu0 %v7403, 8
  %v8190 = vpop.permute.xlu0 %8189
  %8191 = vrot.lane.b32.xlu0 %v7404, 8
  %v8192 = vpop.permute.xlu0 %8191
  %8193 = vrot.lane.b32.xlu0 %v7405, 8
  %v8194 = vpop.permute.xlu0 %8193
  %8195 = vrot.lane.b32.xlu0 %v7406, 8
  %v8196 = vpop.permute.xlu0 %8195
  %8197 = vrot.lane.b32.xlu0 %v7407, 8
  %v8198 = vpop.permute.xlu0 %8197
  %8199 = vrot.lane.b32.xlu0 %v7408, 8
  %v8200 = vpop.permute.xlu0 %8199
  %8201 = vrot.lane.b32.xlu0 %v7409, 8
  %v8202 = vpop.permute.xlu0 %8201
  %8203 = vrot.lane.b32.xlu0 %v7410, 8
  %v8204 = vpop.permute.xlu0 %8203
  %8205 = vrot.lane.b32.xlu0 %v7411, 8
  %v8206 = vpop.permute.xlu0 %8205
  %8207 = vrot.lane.b32.xlu0 %v7412, 8
  %v8208 = vpop.permute.xlu0 %8207
  %8209 = vrot.lane.b32.xlu0 %v7413, 8
  %v8210 = vpop.permute.xlu0 %8209
  %8211 = vrot.lane.b32.xlu0 %v7414, 8
  %v8212 = vpop.permute.xlu0 %8211
  %8213 = vrot.lane.b32.xlu0 %v7415, 8
  %v8214 = vpop.permute.xlu0 %8213
  %8215 = vrot.lane.b32.xlu0 %v7416, 8
  %v8216 = vpop.permute.xlu0 %8215
  %8217 = vrot.lane.b32.xlu0 %v7417, 8
  %v8218 = vpop.permute.xlu0 %8217
  %8219 = vrot.lane.b32.xlu0 %v7418, 8
  %v8220 = vpop.permute.xlu0 %8219
  %8221 = vrot.lane.b32.xlu0 %v7419, 8
  %v8222 = vpop.permute.xlu0 %8221
  %8223 = vrot.lane.b32.xlu0 %v7420, 8
  %v8224 = vpop.permute.xlu0 %8223
  %8225 = vrot.lane.b32.xlu0 %v7421, 8
  %v8226 = vpop.permute.xlu0 %8225
  %8227 = vrot.lane.b32.xlu0 %v7422, 8
  %v8228 = vpop.permute.xlu0 %8227
  %8229 = vrot.lane.b32.xlu0 %v7423, 8
  %v8230 = vpop.permute.xlu0 %8229
  %8231 = vrot.lane.b32.xlu0 %v7424, 8
  %v8232 = vpop.permute.xlu0 %8231
  %8233 = vrot.lane.b32.xlu0 %v7425, 8
  %v8234 = vpop.permute.xlu0 %8233
  %8235 = vrot.lane.b32.xlu0 %v7426, 8
  %v8236 = vpop.permute.xlu0 %8235
  %8237 = vrot.lane.b32.xlu0 %v7427, 8
  %v8238 = vpop.permute.xlu0 %8237
  %8239 = vrot.lane.b32.xlu0 %v7428, 8
  %v8240 = vpop.permute.xlu0 %8239
  %8241 = vrot.lane.b32.xlu0 %v7429, 8
  %v8242 = vpop.permute.xlu0 %8241
  %8243 = vrot.lane.b32.xlu0 %v7430, 8
  %v8244 = vpop.permute.xlu0 %8243
  %8245 = vrot.lane.b32.xlu0 %v7431, 8
  %v8246 = vpop.permute.xlu0 %8245
  %8247 = vrot.lane.b32.xlu0 %v7432, 8
  %v8248 = vpop.permute.xlu0 %8247
  %8249 = vrot.lane.b32.xlu0 %v7433, 8
  %v8250 = vpop.permute.xlu0 %8249
  %8251 = vrot.lane.b32.xlu0 %v7434, 8
  %v8252 = vpop.permute.xlu0 %8251
  %8253 = vrot.lane.b32.xlu0 %v7435, 8
  %v8254 = vpop.permute.xlu0 %8253
  %8255 = vrot.lane.b32.xlu0 %v7436, 8
  %v8256 = vpop.permute.xlu0 %8255
  %8257 = vrot.lane.b32.xlu0 %v7437, 8
  %v8258 = vpop.permute.xlu0 %8257
  %8259 = vrot.lane.b32.xlu0 %v7438, 8
  %v8260 = vpop.permute.xlu0 %8259
  %8261 = vrot.lane.b32.xlu0 %v7439, 8
  %v8262 = vpop.permute.xlu0 %8261
  %8263 = vrot.lane.b32.xlu0 %v7440, 8
  %v8264 = vpop.permute.xlu0 %8263
  %8265 = vrot.lane.b32.xlu0 %v7441, 8
  %v8266 = vpop.permute.xlu0 %8265
  %8267 = vrot.lane.b32.xlu0 %v7442, 8
  %v8268 = vpop.permute.xlu0 %8267
  %8269 = vrot.lane.b32.xlu0 %v7443, 8
  %v8270 = vpop.permute.xlu0 %8269
  %8271 = vrot.lane.b32.xlu0 %v7444, 8
  %v8272 = vpop.permute.xlu0 %8271
  %8273 = vrot.lane.b32.xlu0 %v7445, 8
  %v8274 = vpop.permute.xlu0 %8273
  %8275 = vrot.lane.b32.xlu0 %v7446, 8
  %v8276 = vpop.permute.xlu0 %8275
  %8277 = vrot.lane.b32.xlu0 %v7447, 8
  %v8278 = vpop.permute.xlu0 %8277
  %8279 = vrot.lane.b32.xlu0 %v7448, 8
  %v8280 = vpop.permute.xlu0 %8279
  %8409 = vrot.lane.b32.xlu0 %v7449, 12
  %v8410 = vpop.permute.xlu0 %8409
  %8411 = vrot.lane.b32.xlu0 %v7450, 12
  %v8412 = vpop.permute.xlu0 %8411
  %8413 = vrot.lane.b32.xlu0 %v7451, 12
  %v8414 = vpop.permute.xlu0 %8413
  %8415 = vrot.lane.b32.xlu0 %v7452, 12
  %v8416 = vpop.permute.xlu0 %8415
  %8417 = vrot.lane.b32.xlu0 %v7453, 12
  %v8418 = vpop.permute.xlu0 %8417
  %8419 = vrot.lane.b32.xlu0 %v7454, 12
  %v8420 = vpop.permute.xlu0 %8419
  %8421 = vrot.lane.b32.xlu0 %v7455, 12
  %v8422 = vpop.permute.xlu0 %8421
  %8423 = vrot.lane.b32.xlu0 %v7456, 12
  %v8424 = vpop.permute.xlu0 %8423
  %8425 = vrot.lane.b32.xlu0 %v7457, 12
  %v8426 = vpop.permute.xlu0 %8425
  %8427 = vrot.lane.b32.xlu0 %v7458, 12
  %v8428 = vpop.permute.xlu0 %8427
  %8429 = vrot.lane.b32.xlu0 %v7459, 12
  %v8430 = vpop.permute.xlu0 %8429
  %8431 = vrot.lane.b32.xlu0 %v7460, 12
  %v8432 = vpop.permute.xlu0 %8431
  %8433 = vrot.lane.b32.xlu0 %v7461, 12
  %v8434 = vpop.permute.xlu0 %8433
  %8435 = vrot.lane.b32.xlu0 %v7462, 12
  %v8436 = vpop.permute.xlu0 %8435
  %8437 = vrot.lane.b32.xlu0 %v7463, 12
  %v8438 = vpop.permute.xlu0 %8437
  %8439 = vrot.lane.b32.xlu0 %v7464, 12
  %v8440 = vpop.permute.xlu0 %8439
  %8441 = vrot.lane.b32.xlu0 %v7465, 12
  %v8442 = vpop.permute.xlu0 %8441
  %8443 = vrot.lane.b32.xlu0 %v7466, 12
  %v8444 = vpop.permute.xlu0 %8443
  %8445 = vrot.lane.b32.xlu0 %v7467, 12
  %v8446 = vpop.permute.xlu0 %8445
  %8447 = vrot.lane.b32.xlu0 %v7468, 12
  %v8448 = vpop.permute.xlu0 %8447
  %8449 = vrot.lane.b32.xlu0 %v7469, 12
  %v8450 = vpop.permute.xlu0 %8449
  %8451 = vrot.lane.b32.xlu0 %v7470, 12
  %v8452 = vpop.permute.xlu0 %8451
  %8453 = vrot.lane.b32.xlu0 %v7471, 12
  %v8454 = vpop.permute.xlu0 %8453
  %8455 = vrot.lane.b32.xlu0 %v7472, 12
  %v8456 = vpop.permute.xlu0 %8455
  %8457 = vrot.lane.b32.xlu0 %v7473, 12
  %v8458 = vpop.permute.xlu0 %8457
  %8459 = vrot.lane.b32.xlu0 %v7474, 12
  %v8460 = vpop.permute.xlu0 %8459
  %8461 = vrot.lane.b32.xlu0 %v7475, 12
  %v8462 = vpop.permute.xlu0 %8461
  %8463 = vrot.lane.b32.xlu0 %v7476, 12
  %v8464 = vpop.permute.xlu0 %8463
  %8465 = vrot.lane.b32.xlu0 %v7477, 12
  %v8466 = vpop.permute.xlu0 %8465
  %8467 = vrot.lane.b32.xlu0 %v7478, 12
  %v8468 = vpop.permute.xlu0 %8467
  %8469 = vrot.lane.b32.xlu0 %v7479, 12
  %v8470 = vpop.permute.xlu0 %8469
  %8471 = vrot.lane.b32.xlu0 %v7480, 12
  %v8472 = vpop.permute.xlu0 %8471
  %8473 = vrot.lane.b32.xlu0 %v7481, 12
  %v8474 = vpop.permute.xlu0 %8473
  %8475 = vrot.lane.b32.xlu0 %v7482, 12
  %v8476 = vpop.permute.xlu0 %8475
  %8477 = vrot.lane.b32.xlu0 %v7483, 12
  %v8478 = vpop.permute.xlu0 %8477
  %8479 = vrot.lane.b32.xlu0 %v7484, 12
  %v8480 = vpop.permute.xlu0 %8479
  %8481 = vrot.lane.b32.xlu0 %v7485, 12
  %v8482 = vpop.permute.xlu0 %8481
  %8483 = vrot.lane.b32.xlu0 %v7486, 12
  %v8484 = vpop.permute.xlu0 %8483
  %8485 = vrot.lane.b32.xlu0 %v7487, 12
  %v8486 = vpop.permute.xlu0 %8485
  %8487 = vrot.lane.b32.xlu0 %v7488, 12
  %v8488 = vpop.permute.xlu0 %8487
  %8489 = vrot.lane.b32.xlu0 %v7489, 12
  %v8490 = vpop.permute.xlu0 %8489
  %8491 = vrot.lane.b32.xlu0 %v7490, 12
  %v8492 = vpop.permute.xlu0 %8491
  %8493 = vrot.lane.b32.xlu0 %v7491, 12
  %v8494 = vpop.permute.xlu0 %8493
  %8495 = vrot.lane.b32.xlu0 %v7492, 12
  %v8496 = vpop.permute.xlu0 %8495
  %8497 = vrot.lane.b32.xlu0 %v7493, 12
  %v8498 = vpop.permute.xlu0 %8497
  %8499 = vrot.lane.b32.xlu0 %v7494, 12
  %v8500 = vpop.permute.xlu0 %8499
  %8501 = vrot.lane.b32.xlu0 %v7495, 12
  %v8502 = vpop.permute.xlu0 %8501
  %8503 = vrot.lane.b32.xlu0 %v7496, 12
  %v8504 = vpop.permute.xlu0 %8503
  %8505 = vrot.lane.b32.xlu0 %v7497, 12
  %v8506 = vpop.permute.xlu0 %8505
  %8507 = vrot.lane.b32.xlu0 %v7498, 12
  %v8508 = vpop.permute.xlu0 %8507
  %8509 = vrot.lane.b32.xlu0 %v7499, 12
  %v8510 = vpop.permute.xlu0 %8509
  %8511 = vrot.lane.b32.xlu0 %v7500, 12
  %v8512 = vpop.permute.xlu0 %8511
  %8513 = vrot.lane.b32.xlu0 %v7501, 12
  %v8514 = vpop.permute.xlu0 %8513
  %8515 = vrot.lane.b32.xlu0 %v7502, 12
  %v8516 = vpop.permute.xlu0 %8515
  %8517 = vrot.lane.b32.xlu0 %v7503, 12
  %v8518 = vpop.permute.xlu0 %8517
  %8519 = vrot.lane.b32.xlu0 %v7504, 12
  %v8520 = vpop.permute.xlu0 %8519
  %8521 = vrot.lane.b32.xlu0 %v7505, 12
  %v8522 = vpop.permute.xlu0 %8521
  %8523 = vrot.lane.b32.xlu0 %v7506, 12
  %v8524 = vpop.permute.xlu0 %8523
  %8525 = vrot.lane.b32.xlu0 %v7507, 12
  %v8526 = vpop.permute.xlu0 %8525
  %8527 = vrot.lane.b32.xlu0 %v7508, 12
  %v8528 = vpop.permute.xlu0 %8527
  %8529 = vrot.lane.b32.xlu0 %v7509, 12
  %v8530 = vpop.permute.xlu0 %8529
  %8531 = vrot.lane.b32.xlu0 %v7510, 12
  %v8532 = vpop.permute.xlu0 %8531
  %8533 = vrot.lane.b32.xlu0 %v7511, 12
  %v8534 = vpop.permute.xlu0 %8533
  %8535 = vrot.lane.b32.xlu0 %v7512, 12
  %v8536 = vpop.permute.xlu0 %8535
  %8665 = vrot.lane.b32.xlu0 %v7513, 16
  %v8666 = vpop.permute.xlu0 %8665
  %8667 = vrot.lane.b32.xlu0 %v7514, 16
  %v8668 = vpop.permute.xlu0 %8667
  %8669 = vrot.lane.b32.xlu0 %v7515, 16
  %v8670 = vpop.permute.xlu0 %8669
  %8671 = vrot.lane.b32.xlu0 %v7516, 16
  %v8672 = vpop.permute.xlu0 %8671
  %8673 = vrot.lane.b32.xlu0 %v7517, 16
  %v8674 = vpop.permute.xlu0 %8673
  %8675 = vrot.lane.b32.xlu0 %v7518, 16
  %v8676 = vpop.permute.xlu0 %8675
  %8677 = vrot.lane.b32.xlu0 %v7519, 16
  %v8678 = vpop.permute.xlu0 %8677
  %8679 = vrot.lane.b32.xlu0 %v7520, 16
  %v8680 = vpop.permute.xlu0 %8679
  %8681 = vrot.lane.b32.xlu0 %v7521, 16
  %v8682 = vpop.permute.xlu0 %8681
  %8683 = vrot.lane.b32.xlu0 %v7522, 16
  %v8684 = vpop.permute.xlu0 %8683
  %8685 = vrot.lane.b32.xlu0 %v7523, 16
  %v8686 = vpop.permute.xlu0 %8685
  %8687 = vrot.lane.b32.xlu0 %v7524, 16
  %v8688 = vpop.permute.xlu0 %8687
  %8689 = vrot.lane.b32.xlu0 %v7525, 16
  %v8690 = vpop.permute.xlu0 %8689
  %8691 = vrot.lane.b32.xlu0 %v7526, 16
  %v8692 = vpop.permute.xlu0 %8691
  %8693 = vrot.lane.b32.xlu0 %v7527, 16
  %v8694 = vpop.permute.xlu0 %8693
  %8695 = vrot.lane.b32.xlu0 %v7528, 16
  %v8696 = vpop.permute.xlu0 %8695
  %8697 = vrot.lane.b32.xlu0 %v7529, 16
  %v8698 = vpop.permute.xlu0 %8697
  %8699 = vrot.lane.b32.xlu0 %v7530, 16
  %v8700 = vpop.permute.xlu0 %8699
  %8701 = vrot.lane.b32.xlu0 %v7531, 16
  %v8702 = vpop.permute.xlu0 %8701
  %8703 = vrot.lane.b32.xlu0 %v7532, 16
  %v8704 = vpop.permute.xlu0 %8703
  %8705 = vrot.lane.b32.xlu0 %v7533, 16
  %v8706 = vpop.permute.xlu0 %8705
  %8707 = vrot.lane.b32.xlu0 %v7534, 16
  %v8708 = vpop.permute.xlu0 %8707
  %8709 = vrot.lane.b32.xlu0 %v7535, 16
  %v8710 = vpop.permute.xlu0 %8709
  %8711 = vrot.lane.b32.xlu0 %v7536, 16
  %v8712 = vpop.permute.xlu0 %8711
  %8713 = vrot.lane.b32.xlu0 %v7537, 16
  %v8714 = vpop.permute.xlu0 %8713
  %8715 = vrot.lane.b32.xlu0 %v7538, 16
  %v8716 = vpop.permute.xlu0 %8715
  %8717 = vrot.lane.b32.xlu0 %v7539, 16
  %v8718 = vpop.permute.xlu0 %8717
  %8719 = vrot.lane.b32.xlu0 %v7540, 16
  %v8720 = vpop.permute.xlu0 %8719
  %8721 = vrot.lane.b32.xlu0 %v7541, 16
  %v8722 = vpop.permute.xlu0 %8721
  %8723 = vrot.lane.b32.xlu0 %v7542, 16
  %v8724 = vpop.permute.xlu0 %8723
  %8725 = vrot.lane.b32.xlu0 %v7543, 16
  %v8726 = vpop.permute.xlu0 %8725
  %8727 = vrot.lane.b32.xlu0 %v7544, 16
  %v8728 = vpop.permute.xlu0 %8727
  %8729 = vrot.lane.b32.xlu0 %v7545, 16
  %v8730 = vpop.permute.xlu0 %8729
  %8731 = vrot.lane.b32.xlu0 %v7546, 16
  %v8732 = vpop.permute.xlu0 %8731
  %8733 = vrot.lane.b32.xlu0 %v7547, 16
  %v8734 = vpop.permute.xlu0 %8733
  %8735 = vrot.lane.b32.xlu0 %v7548, 16
  %v8736 = vpop.permute.xlu0 %8735
  %8737 = vrot.lane.b32.xlu0 %v7549, 16
  %v8738 = vpop.permute.xlu0 %8737
  %8739 = vrot.lane.b32.xlu0 %v7550, 16
  %v8740 = vpop.permute.xlu0 %8739
  %8741 = vrot.lane.b32.xlu0 %v7551, 16
  %v8742 = vpop.permute.xlu0 %8741
  %8743 = vrot.lane.b32.xlu0 %v7552, 16
  %v8744 = vpop.permute.xlu0 %8743
  %8745 = vrot.lane.b32.xlu0 %v7553, 16
  %v8746 = vpop.permute.xlu0 %8745
  %8747 = vrot.lane.b32.xlu0 %v7554, 16
  %v8748 = vpop.permute.xlu0 %8747
  %8749 = vrot.lane.b32.xlu0 %v7555, 16
  %v8750 = vpop.permute.xlu0 %8749
  %8751 = vrot.lane.b32.xlu0 %v7556, 16
  %v8752 = vpop.permute.xlu0 %8751
  %8753 = vrot.lane.b32.xlu0 %v7557, 16
  %v8754 = vpop.permute.xlu0 %8753
  %8755 = vrot.lane.b32.xlu0 %v7558, 16
  %v8756 = vpop.permute.xlu0 %8755
  %8757 = vrot.lane.b32.xlu0 %v7559, 16
  %v8758 = vpop.permute.xlu0 %8757
  %8759 = vrot.lane.b32.xlu0 %v7560, 16
  %v8760 = vpop.permute.xlu0 %8759
  %8761 = vrot.lane.b32.xlu0 %v7561, 16
  %v8762 = vpop.permute.xlu0 %8761
  %8763 = vrot.lane.b32.xlu0 %v7562, 16
  %v8764 = vpop.permute.xlu0 %8763
  %8765 = vrot.lane.b32.xlu0 %v7563, 16
  %v8766 = vpop.permute.xlu0 %8765
  %8767 = vrot.lane.b32.xlu0 %v7564, 16
  %v8768 = vpop.permute.xlu0 %8767
  %8769 = vrot.lane.b32.xlu0 %v7565, 16
  %v8770 = vpop.permute.xlu0 %8769
  %8771 = vrot.lane.b32.xlu0 %v7566, 16
  %v8772 = vpop.permute.xlu0 %8771
  %8773 = vrot.lane.b32.xlu0 %v7567, 16
  %v8774 = vpop.permute.xlu0 %8773
  %8775 = vrot.lane.b32.xlu0 %v7568, 16
  %v8776 = vpop.permute.xlu0 %8775
  %8777 = vrot.lane.b32.xlu0 %v7569, 16
  %v8778 = vpop.permute.xlu0 %8777
  %8779 = vrot.lane.b32.xlu0 %v7570, 16
  %v8780 = vpop.permute.xlu0 %8779
  %8781 = vrot.lane.b32.xlu0 %v7571, 16
  %v8782 = vpop.permute.xlu0 %8781
  %8783 = vrot.lane.b32.xlu0 %v7572, 16
  %v8784 = vpop.permute.xlu0 %8783
  %8785 = vrot.lane.b32.xlu0 %v7573, 16
  %v8786 = vpop.permute.xlu0 %8785
  %8787 = vrot.lane.b32.xlu0 %v7574, 16
  %v8788 = vpop.permute.xlu0 %8787
  %8789 = vrot.lane.b32.xlu0 %v7575, 16
  %v8790 = vpop.permute.xlu0 %8789
  %8791 = vrot.lane.b32.xlu0 %v7576, 16
  %v8792 = vpop.permute.xlu0 %8791
  %8921 = vrot.lane.b32.xlu0 %v7577, 20
  %v8922 = vpop.permute.xlu0 %8921
  %8923 = vrot.lane.b32.xlu0 %v7578, 20
  %v8924 = vpop.permute.xlu0 %8923
  %8925 = vrot.lane.b32.xlu0 %v7579, 20
  %v8926 = vpop.permute.xlu0 %8925
  %8927 = vrot.lane.b32.xlu0 %v7580, 20
  %v8928 = vpop.permute.xlu0 %8927
  %8929 = vrot.lane.b32.xlu0 %v7581, 20
  %v8930 = vpop.permute.xlu0 %8929
  %8931 = vrot.lane.b32.xlu0 %v7582, 20
  %v8932 = vpop.permute.xlu0 %8931
  %8933 = vrot.lane.b32.xlu0 %v7583, 20
  %v8934 = vpop.permute.xlu0 %8933
  %8935 = vrot.lane.b32.xlu0 %v7584, 20
  %v8936 = vpop.permute.xlu0 %8935
  %8937 = vrot.lane.b32.xlu0 %v7585, 20
  %v8938 = vpop.permute.xlu0 %8937
  %8939 = vrot.lane.b32.xlu0 %v7586, 20
  %v8940 = vpop.permute.xlu0 %8939
  %8941 = vrot.lane.b32.xlu0 %v7587, 20
  %v8942 = vpop.permute.xlu0 %8941
  %8943 = vrot.lane.b32.xlu0 %v7588, 20
  %v8944 = vpop.permute.xlu0 %8943
  %8945 = vrot.lane.b32.xlu0 %v7589, 20
  %v8946 = vpop.permute.xlu0 %8945
  %8947 = vrot.lane.b32.xlu0 %v7590, 20
  %v8948 = vpop.permute.xlu0 %8947
  %8949 = vrot.lane.b32.xlu0 %v7591, 20
  %v8950 = vpop.permute.xlu0 %8949
  %8951 = vrot.lane.b32.xlu0 %v7592, 20
  %v8952 = vpop.permute.xlu0 %8951
  %8953 = vrot.lane.b32.xlu0 %v7593, 20
  %v8954 = vpop.permute.xlu0 %8953
  %8955 = vrot.lane.b32.xlu0 %v7594, 20
  %v8956 = vpop.permute.xlu0 %8955
  %8957 = vrot.lane.b32.xlu0 %v7595, 20
  %v8958 = vpop.permute.xlu0 %8957
  %8959 = vrot.lane.b32.xlu0 %v7596, 20
  %v8960 = vpop.permute.xlu0 %8959
  %8961 = vrot.lane.b32.xlu0 %v7597, 20
  %v8962 = vpop.permute.xlu0 %8961
  %8963 = vrot.lane.b32.xlu0 %v7598, 20
  %v8964 = vpop.permute.xlu0 %8963
  %8965 = vrot.lane.b32.xlu0 %v7599, 20
  %v8966 = vpop.permute.xlu0 %8965
  %8967 = vrot.lane.b32.xlu0 %v7600, 20
  %v8968 = vpop.permute.xlu0 %8967
  %8969 = vrot.lane.b32.xlu0 %v7601, 20
  %v8970 = vpop.permute.xlu0 %8969
  %8971 = vrot.lane.b32.xlu0 %v7602, 20
  %v8972 = vpop.permute.xlu0 %8971
  %8973 = vrot.lane.b32.xlu0 %v7603, 20
  %v8974 = vpop.permute.xlu0 %8973
  %8975 = vrot.lane.b32.xlu0 %v7604, 20
  %v8976 = vpop.permute.xlu0 %8975
  %8977 = vrot.lane.b32.xlu0 %v7605, 20
  %v8978 = vpop.permute.xlu0 %8977
  %8979 = vrot.lane.b32.xlu0 %v7606, 20
  %v8980 = vpop.permute.xlu0 %8979
  %8981 = vrot.lane.b32.xlu0 %v7607, 20
  %v8982 = vpop.permute.xlu0 %8981
  %8983 = vrot.lane.b32.xlu0 %v7608, 20
  %v8984 = vpop.permute.xlu0 %8983
  %8985 = vrot.lane.b32.xlu0 %v7609, 20
  %v8986 = vpop.permute.xlu0 %8985
  %8987 = vrot.lane.b32.xlu0 %v7610, 20
  %v8988 = vpop.permute.xlu0 %8987
  %8989 = vrot.lane.b32.xlu0 %v7611, 20
  %v8990 = vpop.permute.xlu0 %8989
  %8991 = vrot.lane.b32.xlu0 %v7612, 20
  %v8992 = vpop.permute.xlu0 %8991
  %8993 = vrot.lane.b32.xlu0 %v7613, 20
  %v8994 = vpop.permute.xlu0 %8993
  %8995 = vrot.lane.b32.xlu0 %v7614, 20
  %v8996 = vpop.permute.xlu0 %8995
  %8997 = vrot.lane.b32.xlu0 %v7615, 20
  %v8998 = vpop.permute.xlu0 %8997
  %8999 = vrot.lane.b32.xlu0 %v7616, 20
  %v9000 = vpop.permute.xlu0 %8999
  %9001 = vrot.lane.b32.xlu0 %v7617, 20
  %v9002 = vpop.permute.xlu0 %9001
  %9003 = vrot.lane.b32.xlu0 %v7618, 20
  %v9004 = vpop.permute.xlu0 %9003
  %9005 = vrot.lane.b32.xlu0 %v7619, 20
  %v9006 = vpop.permute.xlu0 %9005
  %9007 = vrot.lane.b32.xlu0 %v7620, 20
  %v9008 = vpop.permute.xlu0 %9007
  %9009 = vrot.lane.b32.xlu0 %v7621, 20
  %v9010 = vpop.permute.xlu0 %9009
  %9011 = vrot.lane.b32.xlu0 %v7622, 20
  %v9012 = vpop.permute.xlu0 %9011
  %9013 = vrot.lane.b32.xlu0 %v7623, 20
  %v9014 = vpop.permute.xlu0 %9013
  %9015 = vrot.lane.b32.xlu0 %v7624, 20
  %v9016 = vpop.permute.xlu0 %9015
  %9017 = vrot.lane.b32.xlu0 %v7625, 20
  %v9018 = vpop.permute.xlu0 %9017
  %9019 = vrot.lane.b32.xlu0 %v7626, 20
  %v9020 = vpop.permute.xlu0 %9019
  %9021 = vrot.lane.b32.xlu0 %v7627, 20
  %v9022 = vpop.permute.xlu0 %9021
  %9023 = vrot.lane.b32.xlu0 %v7628, 20
  %v9024 = vpop.permute.xlu0 %9023
  %9025 = vrot.lane.b32.xlu0 %v7629, 20
  %v9026 = vpop.permute.xlu0 %9025
  %9027 = vrot.lane.b32.xlu0 %v7630, 20
  %v9028 = vpop.permute.xlu0 %9027
  %9029 = vrot.lane.b32.xlu0 %v7631, 20
  %v9030 = vpop.permute.xlu0 %9029
  %9031 = vrot.lane.b32.xlu0 %v7632, 20
  %v9032 = vpop.permute.xlu0 %9031
  %9033 = vrot.lane.b32.xlu0 %v7633, 20
  %v9034 = vpop.permute.xlu0 %9033
  %9035 = vrot.lane.b32.xlu0 %v7634, 20
  %v9036 = vpop.permute.xlu0 %9035
  %9037 = vrot.lane.b32.xlu0 %v7635, 20
  %v9038 = vpop.permute.xlu0 %9037
  %9039 = vrot.lane.b32.xlu0 %v7636, 20
  %v9040 = vpop.permute.xlu0 %9039
  %9041 = vrot.lane.b32.xlu0 %v7637, 20
  %v9042 = vpop.permute.xlu0 %9041
  %9043 = vrot.lane.b32.xlu0 %v7638, 20
  %v9044 = vpop.permute.xlu0 %9043
  %9045 = vrot.lane.b32.xlu0 %v7639, 20
  %v9046 = vpop.permute.xlu0 %9045
  %9047 = vrot.lane.b32.xlu0 %v7640, 20
  %v9048 = vpop.permute.xlu0 %9047
  %9177 = vrot.lane.b32.xlu0 %v7641, 24
  %v9178 = vpop.permute.xlu0 %9177
  %9179 = vrot.lane.b32.xlu0 %v7642, 24
  %v9180 = vpop.permute.xlu0 %9179
  %9181 = vrot.lane.b32.xlu0 %v7643, 24
  %v9182 = vpop.permute.xlu0 %9181
  %9183 = vrot.lane.b32.xlu0 %v7644, 24
  %v9184 = vpop.permute.xlu0 %9183
  %9185 = vrot.lane.b32.xlu0 %v7645, 24
  %v9186 = vpop.permute.xlu0 %9185
  %9187 = vrot.lane.b32.xlu0 %v7646, 24
  %v9188 = vpop.permute.xlu0 %9187
  %9189 = vrot.lane.b32.xlu0 %v7647, 24
  %v9190 = vpop.permute.xlu0 %9189
  %9191 = vrot.lane.b32.xlu0 %v7648, 24
  %v9192 = vpop.permute.xlu0 %9191
  %9193 = vrot.lane.b32.xlu0 %v7649, 24
  %v9194 = vpop.permute.xlu0 %9193
  %9195 = vrot.lane.b32.xlu0 %v7650, 24
  %v9196 = vpop.permute.xlu0 %9195
  %9197 = vrot.lane.b32.xlu0 %v7651, 24
  %v9198 = vpop.permute.xlu0 %9197
  %9199 = vrot.lane.b32.xlu0 %v7652, 24
  %v9200 = vpop.permute.xlu0 %9199
  %9201 = vrot.lane.b32.xlu0 %v7653, 24
  %v9202 = vpop.permute.xlu0 %9201
  %9203 = vrot.lane.b32.xlu0 %v7654, 24
  %v9204 = vpop.permute.xlu0 %9203
  %9205 = vrot.lane.b32.xlu0 %v7655, 24
  %v9206 = vpop.permute.xlu0 %9205
  %9207 = vrot.lane.b32.xlu0 %v7656, 24
  %v9208 = vpop.permute.xlu0 %9207
  %9209 = vrot.lane.b32.xlu0 %v7657, 24
  %v9210 = vpop.permute.xlu0 %9209
  %9211 = vrot.lane.b32.xlu0 %v7658, 24
  %v9212 = vpop.permute.xlu0 %9211
  %9213 = vrot.lane.b32.xlu0 %v7659, 24
  %v9214 = vpop.permute.xlu0 %9213
  %9215 = vrot.lane.b32.xlu0 %v7660, 24
  %v9216 = vpop.permute.xlu0 %9215
  %9217 = vrot.lane.b32.xlu0 %v7661, 24
  %v9218 = vpop.permute.xlu0 %9217
  %9219 = vrot.lane.b32.xlu0 %v7662, 24
  %v9220 = vpop.permute.xlu0 %9219
  %9221 = vrot.lane.b32.xlu0 %v7663, 24
  %v9222 = vpop.permute.xlu0 %9221
  %9223 = vrot.lane.b32.xlu0 %v7664, 24
  %v9224 = vpop.permute.xlu0 %9223
  %9225 = vrot.lane.b32.xlu0 %v7665, 24
  %v9226 = vpop.permute.xlu0 %9225
  %9227 = vrot.lane.b32.xlu0 %v7666, 24
  %v9228 = vpop.permute.xlu0 %9227
  %9229 = vrot.lane.b32.xlu0 %v7667, 24
  %v9230 = vpop.permute.xlu0 %9229
  %9231 = vrot.lane.b32.xlu0 %v7668, 24
  %v9232 = vpop.permute.xlu0 %9231
  %9233 = vrot.lane.b32.xlu0 %v7669, 24
  %v9234 = vpop.permute.xlu0 %9233
  %9235 = vrot.lane.b32.xlu0 %v7670, 24
  %v9236 = vpop.permute.xlu0 %9235
  %9237 = vrot.lane.b32.xlu0 %v7671, 24
  %v9238 = vpop.permute.xlu0 %9237
  %9239 = vrot.lane.b32.xlu0 %v7672, 24
  %v9240 = vpop.permute.xlu0 %9239
  %9241 = vrot.lane.b32.xlu0 %v7673, 24
  %v9242 = vpop.permute.xlu0 %9241
  %9243 = vrot.lane.b32.xlu0 %v7674, 24
  %v9244 = vpop.permute.xlu0 %9243
  %9245 = vrot.lane.b32.xlu0 %v7675, 24
  %v9246 = vpop.permute.xlu0 %9245
  %9247 = vrot.lane.b32.xlu0 %v7676, 24
  %v9248 = vpop.permute.xlu0 %9247
  %9249 = vrot.lane.b32.xlu0 %v7677, 24
  %v9250 = vpop.permute.xlu0 %9249
  %9251 = vrot.lane.b32.xlu0 %v7678, 24
  %v9252 = vpop.permute.xlu0 %9251
  %9253 = vrot.lane.b32.xlu0 %v7679, 24
  %v9254 = vpop.permute.xlu0 %9253
  %9255 = vrot.lane.b32.xlu0 %v7680, 24
  %v9256 = vpop.permute.xlu0 %9255
  %9257 = vrot.lane.b32.xlu0 %v7681, 24
  %v9258 = vpop.permute.xlu0 %9257
  %9259 = vrot.lane.b32.xlu0 %v7682, 24
  %v9260 = vpop.permute.xlu0 %9259
  %9261 = vrot.lane.b32.xlu0 %v7683, 24
  %v9262 = vpop.permute.xlu0 %9261
  %9263 = vrot.lane.b32.xlu0 %v7684, 24
  %v9264 = vpop.permute.xlu0 %9263
  %9265 = vrot.lane.b32.xlu0 %v7685, 24
  %v9266 = vpop.permute.xlu0 %9265
  %9267 = vrot.lane.b32.xlu0 %v7686, 24
  %v9268 = vpop.permute.xlu0 %9267
  %9269 = vrot.lane.b32.xlu0 %v7687, 24
  %v9270 = vpop.permute.xlu0 %9269
  %9271 = vrot.lane.b32.xlu0 %v7688, 24
  %v9272 = vpop.permute.xlu0 %9271
  %9273 = vrot.lane.b32.xlu0 %v7689, 24
  %v9274 = vpop.permute.xlu0 %9273
  %9275 = vrot.lane.b32.xlu0 %v7690, 24
  %v9276 = vpop.permute.xlu0 %9275
  %9277 = vrot.lane.b32.xlu0 %v7691, 24
  %v9278 = vpop.permute.xlu0 %9277
  %9279 = vrot.lane.b32.xlu0 %v7692, 24
  %v9280 = vpop.permute.xlu0 %9279
  %9281 = vrot.lane.b32.xlu0 %v7693, 24
  %v9282 = vpop.permute.xlu0 %9281
  %9283 = vrot.lane.b32.xlu0 %v7694, 24
  %v9284 = vpop.permute.xlu0 %9283
  %9285 = vrot.lane.b32.xlu0 %v7695, 24
  %v9286 = vpop.permute.xlu0 %9285
  %9287 = vrot.lane.b32.xlu0 %v7696, 24
  %v9288 = vpop.permute.xlu0 %9287
  %9289 = vrot.lane.b32.xlu0 %v7697, 24
  %v9290 = vpop.permute.xlu0 %9289
  %9291 = vrot.lane.b32.xlu0 %v7698, 24
  %v9292 = vpop.permute.xlu0 %9291
  %9293 = vrot.lane.b32.xlu0 %v7699, 24
  %v9294 = vpop.permute.xlu0 %9293
  %9295 = vrot.lane.b32.xlu0 %v7700, 24
  %v9296 = vpop.permute.xlu0 %9295
  %9297 = vrot.lane.b32.xlu0 %v7701, 24
  %v9298 = vpop.permute.xlu0 %9297
  %9299 = vrot.lane.b32.xlu0 %v7702, 24
  %v9300 = vpop.permute.xlu0 %9299
  %9301 = vrot.lane.b32.xlu0 %v7703, 24
  %v9302 = vpop.permute.xlu0 %9301
  %9303 = vrot.lane.b32.xlu0 %v7704, 24
  %v9304 = vpop.permute.xlu0 %9303
  %9433 = vrot.lane.b32.xlu0 %v7705, 28
  %v9434 = vpop.permute.xlu0 %9433
  %9435 = vrot.lane.b32.xlu0 %v7706, 28
  %v9436 = vpop.permute.xlu0 %9435
  %9437 = vrot.lane.b32.xlu0 %v7707, 28
  %v9438 = vpop.permute.xlu0 %9437
  %9439 = vrot.lane.b32.xlu0 %v7708, 28
  %v9440 = vpop.permute.xlu0 %9439
  %9441 = vrot.lane.b32.xlu0 %v7709, 28
  %v9442 = vpop.permute.xlu0 %9441
  %9443 = vrot.lane.b32.xlu0 %v7710, 28
  %v9444 = vpop.permute.xlu0 %9443
  %9445 = vrot.lane.b32.xlu0 %v7711, 28
  %v9446 = vpop.permute.xlu0 %9445
  %9447 = vrot.lane.b32.xlu0 %v7712, 28
  %v9448 = vpop.permute.xlu0 %9447
  %9449 = vrot.lane.b32.xlu0 %v7713, 28
  %v9450 = vpop.permute.xlu0 %9449
  %9451 = vrot.lane.b32.xlu0 %v7714, 28
  %v9452 = vpop.permute.xlu0 %9451
  %9453 = vrot.lane.b32.xlu0 %v7715, 28
  %v9454 = vpop.permute.xlu0 %9453
  %9455 = vrot.lane.b32.xlu0 %v7716, 28
  %v9456 = vpop.permute.xlu0 %9455
  %9457 = vrot.lane.b32.xlu0 %v7717, 28
  %v9458 = vpop.permute.xlu0 %9457
  %9459 = vrot.lane.b32.xlu0 %v7718, 28
  %v9460 = vpop.permute.xlu0 %9459
  %9461 = vrot.lane.b32.xlu0 %v7719, 28
  %v9462 = vpop.permute.xlu0 %9461
  %9463 = vrot.lane.b32.xlu0 %v7720, 28
  %v9464 = vpop.permute.xlu0 %9463
  %9465 = vrot.lane.b32.xlu0 %v7721, 28
  %v9466 = vpop.permute.xlu0 %9465
  %9467 = vrot.lane.b32.xlu0 %v7722, 28
  %v9468 = vpop.permute.xlu0 %9467
  %9469 = vrot.lane.b32.xlu0 %v7723, 28
  %v9470 = vpop.permute.xlu0 %9469
  %9471 = vrot.lane.b32.xlu0 %v7724, 28
  %v9472 = vpop.permute.xlu0 %9471
  %9473 = vrot.lane.b32.xlu0 %v7725, 28
  %v9474 = vpop.permute.xlu0 %9473
  %9475 = vrot.lane.b32.xlu0 %v7726, 28
  %v9476 = vpop.permute.xlu0 %9475
  %9477 = vrot.lane.b32.xlu0 %v7727, 28
  %v9478 = vpop.permute.xlu0 %9477
  %9479 = vrot.lane.b32.xlu0 %v7728, 28
  %v9480 = vpop.permute.xlu0 %9479
  %9481 = vrot.lane.b32.xlu0 %v7729, 28
  %v9482 = vpop.permute.xlu0 %9481
  %9483 = vrot.lane.b32.xlu0 %v7730, 28
  %v9484 = vpop.permute.xlu0 %9483
  %9485 = vrot.lane.b32.xlu0 %v7731, 28
  %v9486 = vpop.permute.xlu0 %9485
  %9487 = vrot.lane.b32.xlu0 %v7732, 28
  %v9488 = vpop.permute.xlu0 %9487
  %9489 = vrot.lane.b32.xlu0 %v7733, 28
  %v9490 = vpop.permute.xlu0 %9489
  %9491 = vrot.lane.b32.xlu0 %v7734, 28
  %v9492 = vpop.permute.xlu0 %9491
  %9493 = vrot.lane.b32.xlu0 %v7735, 28
  %v9494 = vpop.permute.xlu0 %9493
  %9495 = vrot.lane.b32.xlu0 %v7736, 28
  %v9496 = vpop.permute.xlu0 %9495
  %9497 = vrot.lane.b32.xlu0 %v7737, 28
  %v9498 = vpop.permute.xlu0 %9497
  %9499 = vrot.lane.b32.xlu0 %v7738, 28
  %v9500 = vpop.permute.xlu0 %9499
  %9501 = vrot.lane.b32.xlu0 %v7739, 28
  %v9502 = vpop.permute.xlu0 %9501
  %9503 = vrot.lane.b32.xlu0 %v7740, 28
  %v9504 = vpop.permute.xlu0 %9503
  %9505 = vrot.lane.b32.xlu0 %v7741, 28
  %v9506 = vpop.permute.xlu0 %9505
  %9507 = vrot.lane.b32.xlu0 %v7742, 28
  %v9508 = vpop.permute.xlu0 %9507
  %9509 = vrot.lane.b32.xlu0 %v7743, 28
  %v9510 = vpop.permute.xlu0 %9509
  %9511 = vrot.lane.b32.xlu0 %v7744, 28
  %v9512 = vpop.permute.xlu0 %9511
  %9513 = vrot.lane.b32.xlu0 %v7745, 28
  %v9514 = vpop.permute.xlu0 %9513
  %9515 = vrot.lane.b32.xlu0 %v7746, 28
  %v9516 = vpop.permute.xlu0 %9515
  %9517 = vrot.lane.b32.xlu0 %v7747, 28
  %v9518 = vpop.permute.xlu0 %9517
  %9519 = vrot.lane.b32.xlu0 %v7748, 28
  %v9520 = vpop.permute.xlu0 %9519
  %9521 = vrot.lane.b32.xlu0 %v7749, 28
  %v9522 = vpop.permute.xlu0 %9521
  %9523 = vrot.lane.b32.xlu0 %v7750, 28
  %v9524 = vpop.permute.xlu0 %9523
  %9525 = vrot.lane.b32.xlu0 %v7751, 28
  %v9526 = vpop.permute.xlu0 %9525
  %9527 = vrot.lane.b32.xlu0 %v7752, 28
  %v9528 = vpop.permute.xlu0 %9527
  %9529 = vrot.lane.b32.xlu0 %v7753, 28
  %v9530 = vpop.permute.xlu0 %9529
  %9531 = vrot.lane.b32.xlu0 %v7754, 28
  %v9532 = vpop.permute.xlu0 %9531
  %9533 = vrot.lane.b32.xlu0 %v7755, 28
  %v9534 = vpop.permute.xlu0 %9533
  %9535 = vrot.lane.b32.xlu0 %v7756, 28
  %v9536 = vpop.permute.xlu0 %9535
  %9537 = vrot.lane.b32.xlu0 %v7757, 28
  %v9538 = vpop.permute.xlu0 %9537
  %9539 = vrot.lane.b32.xlu0 %v7758, 28
  %v9540 = vpop.permute.xlu0 %9539
  %9541 = vrot.lane.b32.xlu0 %v7759, 28
  %v9542 = vpop.permute.xlu0 %9541
  %9543 = vrot.lane.b32.xlu0 %v7760, 28
  %v9544 = vpop.permute.xlu0 %9543
  %9545 = vrot.lane.b32.xlu0 %v7761, 28
  %v9546 = vpop.permute.xlu0 %9545
  %9547 = vrot.lane.b32.xlu0 %v7762, 28
  %v9548 = vpop.permute.xlu0 %9547
  %9549 = vrot.lane.b32.xlu0 %v7763, 28
  %v9550 = vpop.permute.xlu0 %9549
  %9551 = vrot.lane.b32.xlu0 %v7764, 28
  %v9552 = vpop.permute.xlu0 %9551
  %9553 = vrot.lane.b32.xlu0 %v7765, 28
  %v9554 = vpop.permute.xlu0 %9553
  %9555 = vrot.lane.b32.xlu0 %v7766, 28
  %v9556 = vpop.permute.xlu0 %9555
  %9557 = vrot.lane.b32.xlu0 %v7767, 28
  %v9558 = vpop.permute.xlu0 %9557
  %9559 = vrot.lane.b32.xlu0 %v7768, 28
  %v9560 = vpop.permute.xlu0 %9559
  %9689 = vrot.lane.b32.xlu0 %v7769, 32
  %v9690 = vpop.permute.xlu0 %9689
  %9691 = vrot.lane.b32.xlu0 %v7770, 32
  %v9692 = vpop.permute.xlu0 %9691
  %9693 = vrot.lane.b32.xlu0 %v7771, 32
  %v9694 = vpop.permute.xlu0 %9693
  %9695 = vrot.lane.b32.xlu0 %v7772, 32
  %v9696 = vpop.permute.xlu0 %9695
  %9697 = vrot.lane.b32.xlu0 %v7773, 32
  %v9698 = vpop.permute.xlu0 %9697
  %9699 = vrot.lane.b32.xlu0 %v7774, 32
  %v9700 = vpop.permute.xlu0 %9699
  %9701 = vrot.lane.b32.xlu0 %v7775, 32
  %v9702 = vpop.permute.xlu0 %9701
  %9703 = vrot.lane.b32.xlu0 %v7776, 32
  %v9704 = vpop.permute.xlu0 %9703
  %9705 = vrot.lane.b32.xlu0 %v7777, 32
  %v9706 = vpop.permute.xlu0 %9705
  %9707 = vrot.lane.b32.xlu0 %v7778, 32
  %v9708 = vpop.permute.xlu0 %9707
  %9709 = vrot.lane.b32.xlu0 %v7779, 32
  %v9710 = vpop.permute.xlu0 %9709
  %9711 = vrot.lane.b32.xlu0 %v7780, 32
  %v9712 = vpop.permute.xlu0 %9711
  %9713 = vrot.lane.b32.xlu0 %v7781, 32
  %v9714 = vpop.permute.xlu0 %9713
  %9715 = vrot.lane.b32.xlu0 %v7782, 32
  %v9716 = vpop.permute.xlu0 %9715
  %9717 = vrot.lane.b32.xlu0 %v7783, 32
  %v9718 = vpop.permute.xlu0 %9717
  %9719 = vrot.lane.b32.xlu0 %v7784, 32
  %v9720 = vpop.permute.xlu0 %9719
  %9721 = vrot.lane.b32.xlu0 %v7785, 32
  %v9722 = vpop.permute.xlu0 %9721
  %9723 = vrot.lane.b32.xlu0 %v7786, 32
  %v9724 = vpop.permute.xlu0 %9723
  %9725 = vrot.lane.b32.xlu0 %v7787, 32
  %v9726 = vpop.permute.xlu0 %9725
  %9727 = vrot.lane.b32.xlu0 %v7788, 32
  %v9728 = vpop.permute.xlu0 %9727
  %9729 = vrot.lane.b32.xlu0 %v7789, 32
  %v9730 = vpop.permute.xlu0 %9729
  %9731 = vrot.lane.b32.xlu0 %v7790, 32
  %v9732 = vpop.permute.xlu0 %9731
  %9733 = vrot.lane.b32.xlu0 %v7791, 32
  %v9734 = vpop.permute.xlu0 %9733
  %9735 = vrot.lane.b32.xlu0 %v7792, 32
  %v9736 = vpop.permute.xlu0 %9735
  %9737 = vrot.lane.b32.xlu0 %v7793, 32
  %v9738 = vpop.permute.xlu0 %9737
  %9739 = vrot.lane.b32.xlu0 %v7794, 32
  %v9740 = vpop.permute.xlu0 %9739
  %9741 = vrot.lane.b32.xlu0 %v7795, 32
  %v9742 = vpop.permute.xlu0 %9741
  %9743 = vrot.lane.b32.xlu0 %v7796, 32
  %v9744 = vpop.permute.xlu0 %9743
  %9745 = vrot.lane.b32.xlu0 %v7797, 32
  %v9746 = vpop.permute.xlu0 %9745
  %9747 = vrot.lane.b32.xlu0 %v7798, 32
  %v9748 = vpop.permute.xlu0 %9747
  %9749 = vrot.lane.b32.xlu0 %v7799, 32
  %v9750 = vpop.permute.xlu0 %9749
  %9751 = vrot.lane.b32.xlu0 %v7800, 32
  %v9752 = vpop.permute.xlu0 %9751
  %9753 = vrot.lane.b32.xlu0 %v7801, 32
  %v9754 = vpop.permute.xlu0 %9753
  %9755 = vrot.lane.b32.xlu0 %v7802, 32
  %v9756 = vpop.permute.xlu0 %9755
  %9757 = vrot.lane.b32.xlu0 %v7803, 32
  %v9758 = vpop.permute.xlu0 %9757
  %9759 = vrot.lane.b32.xlu0 %v7804, 32
  %v9760 = vpop.permute.xlu0 %9759
  %9761 = vrot.lane.b32.xlu0 %v7805, 32
  %v9762 = vpop.permute.xlu0 %9761
  %9763 = vrot.lane.b32.xlu0 %v7806, 32
  %v9764 = vpop.permute.xlu0 %9763
  %9765 = vrot.lane.b32.xlu0 %v7807, 32
  %v9766 = vpop.permute.xlu0 %9765
  %9767 = vrot.lane.b32.xlu0 %v7808, 32
  %v9768 = vpop.permute.xlu0 %9767
  %9769 = vrot.lane.b32.xlu0 %v7809, 32
  %v9770 = vpop.permute.xlu0 %9769
  %9771 = vrot.lane.b32.xlu0 %v7810, 32
  %v9772 = vpop.permute.xlu0 %9771
  %9773 = vrot.lane.b32.xlu0 %v7811, 32
  %v9774 = vpop.permute.xlu0 %9773
  %9775 = vrot.lane.b32.xlu0 %v7812, 32
  %v9776 = vpop.permute.xlu0 %9775
  %9777 = vrot.lane.b32.xlu0 %v7813, 32
  %v9778 = vpop.permute.xlu0 %9777
  %9779 = vrot.lane.b32.xlu0 %v7814, 32
  %v9780 = vpop.permute.xlu0 %9779
  %9781 = vrot.lane.b32.xlu0 %v7815, 32
  %v9782 = vpop.permute.xlu0 %9781
  %9783 = vrot.lane.b32.xlu0 %v7816, 32
  %v9784 = vpop.permute.xlu0 %9783
  %9785 = vrot.lane.b32.xlu0 %v7817, 32
  %v9786 = vpop.permute.xlu0 %9785
  %9787 = vrot.lane.b32.xlu0 %v7818, 32
  %v9788 = vpop.permute.xlu0 %9787
  %9789 = vrot.lane.b32.xlu0 %v7819, 32
  %v9790 = vpop.permute.xlu0 %9789
  %9791 = vrot.lane.b32.xlu0 %v7820, 32
  %v9792 = vpop.permute.xlu0 %9791
  %9793 = vrot.lane.b32.xlu0 %v7821, 32
  %v9794 = vpop.permute.xlu0 %9793
  %9795 = vrot.lane.b32.xlu0 %v7822, 32
  %v9796 = vpop.permute.xlu0 %9795
  %9797 = vrot.lane.b32.xlu0 %v7823, 32
  %v9798 = vpop.permute.xlu0 %9797
  %9799 = vrot.lane.b32.xlu0 %v7824, 32
  %v9800 = vpop.permute.xlu0 %9799
  %9801 = vrot.lane.b32.xlu0 %v7825, 32
  %v9802 = vpop.permute.xlu0 %9801
  %9803 = vrot.lane.b32.xlu0 %v7826, 32
  %v9804 = vpop.permute.xlu0 %9803
  %9805 = vrot.lane.b32.xlu0 %v7827, 32
  %v9806 = vpop.permute.xlu0 %9805
  %9807 = vrot.lane.b32.xlu0 %v7828, 32
  %v9808 = vpop.permute.xlu0 %9807
  %9809 = vrot.lane.b32.xlu0 %v7829, 32
  %v9810 = vpop.permute.xlu0 %9809
  %9811 = vrot.lane.b32.xlu0 %v7830, 32
  %v9812 = vpop.permute.xlu0 %9811
  %9813 = vrot.lane.b32.xlu0 %v7831, 32
  %v9814 = vpop.permute.xlu0 %9813
  %9815 = vrot.lane.b32.xlu0 %v7832, 32
  %v9816 = vpop.permute.xlu0 %9815
  %v9881 = vsel %vm49, %v7257, %v7898
  %v9882 = vsel %vm49, %v7258, %v7900
  %v9883 = vsel %vm49, %v7259, %v7902
  %v9884 = vsel %vm49, %v7260, %v7904
  %v9885 = vsel %vm49, %v7261, %v7906
  %v9886 = vsel %vm49, %v7262, %v7908
  %v9887 = vsel %vm49, %v7263, %v7910
  %v9888 = vsel %vm49, %v7264, %v7912
  %v9889 = vsel %vm49, %v7265, %v7914
  %v9890 = vsel %vm49, %v7266, %v7916
  %v9891 = vsel %vm49, %v7267, %v7918
  %v9892 = vsel %vm49, %v7268, %v7920
  %v9893 = vsel %vm49, %v7269, %v7922
  %v9894 = vsel %vm49, %v7270, %v7924
  %v9895 = vsel %vm49, %v7271, %v7926
  %v9896 = vsel %vm49, %v7272, %v7928
  %v9897 = vsel %vm49, %v7273, %v7930
  %v9898 = vsel %vm49, %v7274, %v7932
  %v9899 = vsel %vm49, %v7275, %v7934
  %v9900 = vsel %vm49, %v7276, %v7936
  %v9901 = vsel %vm49, %v7277, %v7938
  %v9902 = vsel %vm49, %v7278, %v7940
  %v9903 = vsel %vm49, %v7279, %v7942
  %v9904 = vsel %vm49, %v7280, %v7944
  %v9905 = vsel %vm49, %v7281, %v7946
  %v9906 = vsel %vm49, %v7282, %v7948
  %v9907 = vsel %vm49, %v7283, %v7950
  %v9908 = vsel %vm49, %v7284, %v7952
  %v9909 = vsel %vm49, %v7285, %v7954
  %v9910 = vsel %vm49, %v7286, %v7956
  %v9911 = vsel %vm49, %v7287, %v7958
  %v9912 = vsel %vm49, %v7288, %v7960
  %v9913 = vsel %vm49, %v7289, %v7962
  %v9914 = vsel %vm49, %v7290, %v7964
  %v9915 = vsel %vm49, %v7291, %v7966
  %v9916 = vsel %vm49, %v7292, %v7968
  %v9917 = vsel %vm49, %v7293, %v7970
  %v9918 = vsel %vm49, %v7294, %v7972
  %v9919 = vsel %vm49, %v7295, %v7974
  %v9920 = vsel %vm49, %v7296, %v7976
  %v9921 = vsel %vm49, %v7297, %v7978
  %v9922 = vsel %vm49, %v7298, %v7980
  %v9923 = vsel %vm49, %v7299, %v7982
  %v9924 = vsel %vm49, %v7300, %v7984
  %v9925 = vsel %vm49, %v7301, %v7986
  %v9926 = vsel %vm49, %v7302, %v7988
  %v9927 = vsel %vm49, %v7303, %v7990
  %v9928 = vsel %vm49, %v7304, %v7992
  %v9929 = vsel %vm49, %v7305, %v7994
  %v9930 = vsel %vm49, %v7306, %v7996
  %v9931 = vsel %vm49, %v7307, %v7998
  %v9932 = vsel %vm49, %v7308, %v8000
  %v9933 = vsel %vm49, %v7309, %v8002
  %v9934 = vsel %vm49, %v7310, %v8004
  %v9935 = vsel %vm49, %v7311, %v8006
  %v9936 = vsel %vm49, %v7312, %v8008
  %v9937 = vsel %vm49, %v7313, %v8010
  %v9938 = vsel %vm49, %v7314, %v8012
  %v9939 = vsel %vm49, %v7315, %v8014
  %v9940 = vsel %vm49, %v7316, %v8016
  %v9941 = vsel %vm49, %v7317, %v8018
  %v9942 = vsel %vm49, %v7318, %v8020
  %v9943 = vsel %vm49, %v7319, %v8022
  %v9944 = vsel %vm49, %v7320, %v8024
  %v9945 = vsel %vm3088, %v9881, %v8154
  %v9946 = vsel %vm3088, %v9882, %v8156
  %v9947 = vsel %vm3088, %v9883, %v8158
  %v9948 = vsel %vm3088, %v9884, %v8160
  %v9949 = vsel %vm3088, %v9885, %v8162
  %v9950 = vsel %vm3088, %v9886, %v8164
  %v9951 = vsel %vm3088, %v9887, %v8166
  %v9952 = vsel %vm3088, %v9888, %v8168
  %v9953 = vsel %vm3088, %v9889, %v8170
  %v9954 = vsel %vm3088, %v9890, %v8172
  %v9955 = vsel %vm3088, %v9891, %v8174
  %v9956 = vsel %vm3088, %v9892, %v8176
  %v9957 = vsel %vm3088, %v9893, %v8178
  %v9958 = vsel %vm3088, %v9894, %v8180
  %v9959 = vsel %vm3088, %v9895, %v8182
  %v9960 = vsel %vm3088, %v9896, %v8184
  %v9961 = vsel %vm3088, %v9897, %v8186
  %v9962 = vsel %vm3088, %v9898, %v8188
  %v9963 = vsel %vm3088, %v9899, %v8190
  %v9964 = vsel %vm3088, %v9900, %v8192
  %v9965 = vsel %vm3088, %v9901, %v8194
  %v9966 = vsel %vm3088, %v9902, %v8196
  %v9967 = vsel %vm3088, %v9903, %v8198
  %v9968 = vsel %vm3088, %v9904, %v8200
  %v9969 = vsel %vm3088, %v9905, %v8202
  %v9970 = vsel %vm3088, %v9906, %v8204
  %v9971 = vsel %vm3088, %v9907, %v8206
  %v9972 = vsel %vm3088, %v9908, %v8208
  %v9973 = vsel %vm3088, %v9909, %v8210
  %v9974 = vsel %vm3088, %v9910, %v8212
  %v9975 = vsel %vm3088, %v9911, %v8214
  %v9976 = vsel %vm3088, %v9912, %v8216
  %v9977 = vsel %vm3088, %v9913, %v8218
  %v9978 = vsel %vm3088, %v9914, %v8220
  %v9979 = vsel %vm3088, %v9915, %v8222
  %v9980 = vsel %vm3088, %v9916, %v8224
  %v9981 = vsel %vm3088, %v9917, %v8226
  %v9982 = vsel %vm3088, %v9918, %v8228
  %v9983 = vsel %vm3088, %v9919, %v8230
  %v9984 = vsel %vm3088, %v9920, %v8232
  %v9985 = vsel %vm3088, %v9921, %v8234
  %v9986 = vsel %vm3088, %v9922, %v8236
  %v9987 = vsel %vm3088, %v9923, %v8238
  %v9988 = vsel %vm3088, %v9924, %v8240
  %v9989 = vsel %vm3088, %v9925, %v8242
  %v9990 = vsel %vm3088, %v9926, %v8244
  %v9991 = vsel %vm3088, %v9927, %v8246
  %v9992 = vsel %vm3088, %v9928, %v8248
  %v9993 = vsel %vm3088, %v9929, %v8250
  %v9994 = vsel %vm3088, %v9930, %v8252
  %v9995 = vsel %vm3088, %v9931, %v8254
  %v9996 = vsel %vm3088, %v9932, %v8256
  %v9997 = vsel %vm3088, %v9933, %v8258
  %v9998 = vsel %vm3088, %v9934, %v8260
  %v9999 = vsel %vm3088, %v9935, %v8262
  %v10000 = vsel %vm3088, %v9936, %v8264
  %v10001 = vsel %vm3088, %v9937, %v8266
  %v10002 = vsel %vm3088, %v9938, %v8268
  %v10003 = vsel %vm3088, %v9939, %v8270
  %v10004 = vsel %vm3088, %v9940, %v8272
  %v10005 = vsel %vm3088, %v9941, %v8274
  %v10006 = vsel %vm3088, %v9942, %v8276
  %v10007 = vsel %vm3088, %v9943, %v8278
  %v10008 = vsel %vm3088, %v9944, %v8280
  %v10009 = vsel %vm3153, %v9945, %v8410
  %v10010 = vsel %vm3153, %v9946, %v8412
  %v10011 = vsel %vm3153, %v9947, %v8414
  %v10012 = vsel %vm3153, %v9948, %v8416
  %v10013 = vsel %vm3153, %v9949, %v8418
  %v10014 = vsel %vm3153, %v9950, %v8420
  %v10015 = vsel %vm3153, %v9951, %v8422
  %v10016 = vsel %vm3153, %v9952, %v8424
  %v10017 = vsel %vm3153, %v9953, %v8426
  %v10018 = vsel %vm3153, %v9954, %v8428
  %v10019 = vsel %vm3153, %v9955, %v8430
  %v10020 = vsel %vm3153, %v9956, %v8432
  %v10021 = vsel %vm3153, %v9957, %v8434
  %v10022 = vsel %vm3153, %v9958, %v8436
  %v10023 = vsel %vm3153, %v9959, %v8438
  %v10024 = vsel %vm3153, %v9960, %v8440
  %v10025 = vsel %vm3153, %v9961, %v8442
  %v10026 = vsel %vm3153, %v9962, %v8444
  %v10027 = vsel %vm3153, %v9963, %v8446
  %v10028 = vsel %vm3153, %v9964, %v8448
  %v10029 = vsel %vm3153, %v9965, %v8450
  %v10030 = vsel %vm3153, %v9966, %v8452
  %v10031 = vsel %vm3153, %v9967, %v8454
  %v10032 = vsel %vm3153, %v9968, %v8456
  %v10033 = vsel %vm3153, %v9969, %v8458
  %v10034 = vsel %vm3153, %v9970, %v8460
  %v10035 = vsel %vm3153, %v9971, %v8462
  %v10036 = vsel %vm3153, %v9972, %v8464
  %v10037 = vsel %vm3153, %v9973, %v8466
  %v10038 = vsel %vm3153, %v9974, %v8468
  %v10039 = vsel %vm3153, %v9975, %v8470
  %v10040 = vsel %vm3153, %v9976, %v8472
  %v10041 = vsel %vm3153, %v9977, %v8474
  %v10042 = vsel %vm3153, %v9978, %v8476
  %v10043 = vsel %vm3153, %v9979, %v8478
  %v10044 = vsel %vm3153, %v9980, %v8480
  %v10045 = vsel %vm3153, %v9981, %v8482
  %v10046 = vsel %vm3153, %v9982, %v8484
  %v10047 = vsel %vm3153, %v9983, %v8486
  %v10048 = vsel %vm3153, %v9984, %v8488
  %v10049 = vsel %vm3153, %v9985, %v8490
  %v10050 = vsel %vm3153, %v9986, %v8492
  %v10051 = vsel %vm3153, %v9987, %v8494
  %v10052 = vsel %vm3153, %v9988, %v8496
  %v10053 = vsel %vm3153, %v9989, %v8498
  %v10054 = vsel %vm3153, %v9990, %v8500
  %v10055 = vsel %vm3153, %v9991, %v8502
  %v10056 = vsel %vm3153, %v9992, %v8504
  %v10057 = vsel %vm3153, %v9993, %v8506
  %v10058 = vsel %vm3153, %v9994, %v8508
  %v10059 = vsel %vm3153, %v9995, %v8510
  %v10060 = vsel %vm3153, %v9996, %v8512
  %v10061 = vsel %vm3153, %v9997, %v8514
  %v10062 = vsel %vm3153, %v9998, %v8516
  %v10063 = vsel %vm3153, %v9999, %v8518
  %v10064 = vsel %vm3153, %v10000, %v8520
  %v10065 = vsel %vm3153, %v10001, %v8522
  %v10066 = vsel %vm3153, %v10002, %v8524
  %v10067 = vsel %vm3153, %v10003, %v8526
  %v10068 = vsel %vm3153, %v10004, %v8528
  %v10069 = vsel %vm3153, %v10005, %v8530
  %v10070 = vsel %vm3153, %v10006, %v8532
  %v10071 = vsel %vm3153, %v10007, %v8534
  %v10072 = vsel %vm3153, %v10008, %v8536
  %v10073 = vsel %vm3218, %v10009, %v8666
  %v10074 = vsel %vm3218, %v10010, %v8668
  %v10075 = vsel %vm3218, %v10011, %v8670
  %v10076 = vsel %vm3218, %v10012, %v8672
  %v10077 = vsel %vm3218, %v10013, %v8674
  %v10078 = vsel %vm3218, %v10014, %v8676
  %v10079 = vsel %vm3218, %v10015, %v8678
  %v10080 = vsel %vm3218, %v10016, %v8680
  %v10081 = vsel %vm3218, %v10017, %v8682
  %v10082 = vsel %vm3218, %v10018, %v8684
  %v10083 = vsel %vm3218, %v10019, %v8686
  %v10084 = vsel %vm3218, %v10020, %v8688
  %v10085 = vsel %vm3218, %v10021, %v8690
  %v10086 = vsel %vm3218, %v10022, %v8692
  %v10087 = vsel %vm3218, %v10023, %v8694
  %v10088 = vsel %vm3218, %v10024, %v8696
  %v10089 = vsel %vm3218, %v10025, %v8698
  %v10090 = vsel %vm3218, %v10026, %v8700
  %v10091 = vsel %vm3218, %v10027, %v8702
  %v10092 = vsel %vm3218, %v10028, %v8704
  %v10093 = vsel %vm3218, %v10029, %v8706
  %v10094 = vsel %vm3218, %v10030, %v8708
  %v10095 = vsel %vm3218, %v10031, %v8710
  %v10096 = vsel %vm3218, %v10032, %v8712
  %v10097 = vsel %vm3218, %v10033, %v8714
  %v10098 = vsel %vm3218, %v10034, %v8716
  %v10099 = vsel %vm3218, %v10035, %v8718
  %v10100 = vsel %vm3218, %v10036, %v8720
  %v10101 = vsel %vm3218, %v10037, %v8722
  %v10102 = vsel %vm3218, %v10038, %v8724
  %v10103 = vsel %vm3218, %v10039, %v8726
  %v10104 = vsel %vm3218, %v10040, %v8728
  %v10105 = vsel %vm3218, %v10041, %v8730
  %v10106 = vsel %vm3218, %v10042, %v8732
  %v10107 = vsel %vm3218, %v10043, %v8734
  %v10108 = vsel %vm3218, %v10044, %v8736
  %v10109 = vsel %vm3218, %v10045, %v8738
  %v10110 = vsel %vm3218, %v10046, %v8740
  %v10111 = vsel %vm3218, %v10047, %v8742
  %v10112 = vsel %vm3218, %v10048, %v8744
  %v10113 = vsel %vm3218, %v10049, %v8746
  %v10114 = vsel %vm3218, %v10050, %v8748
  %v10115 = vsel %vm3218, %v10051, %v8750
  %v10116 = vsel %vm3218, %v10052, %v8752
  %v10117 = vsel %vm3218, %v10053, %v8754
  %v10118 = vsel %vm3218, %v10054, %v8756
  %v10119 = vsel %vm3218, %v10055, %v8758
  %v10120 = vsel %vm3218, %v10056, %v8760
  %v10121 = vsel %vm3218, %v10057, %v8762
  %v10122 = vsel %vm3218, %v10058, %v8764
  %v10123 = vsel %vm3218, %v10059, %v8766
  %v10124 = vsel %vm3218, %v10060, %v8768
  %v10125 = vsel %vm3218, %v10061, %v8770
  %v10126 = vsel %vm3218, %v10062, %v8772
  %v10127 = vsel %vm3218, %v10063, %v8774
  %v10128 = vsel %vm3218, %v10064, %v8776
  %v10129 = vsel %vm3218, %v10065, %v8778
  %v10130 = vsel %vm3218, %v10066, %v8780
  %v10131 = vsel %vm3218, %v10067, %v8782
  %v10132 = vsel %vm3218, %v10068, %v8784
  %v10133 = vsel %vm3218, %v10069, %v8786
  %v10134 = vsel %vm3218, %v10070, %v8788
  %v10135 = vsel %vm3218, %v10071, %v8790
  %v10136 = vsel %vm3218, %v10072, %v8792
  %v10137 = vsel %vm3283, %v10073, %v8922
  %v10138 = vsel %vm3283, %v10074, %v8924
  %v10139 = vsel %vm3283, %v10075, %v8926
  %v10140 = vsel %vm3283, %v10076, %v8928
  %v10141 = vsel %vm3283, %v10077, %v8930
  %v10142 = vsel %vm3283, %v10078, %v8932
  %v10143 = vsel %vm3283, %v10079, %v8934
  %v10144 = vsel %vm3283, %v10080, %v8936
  %v10145 = vsel %vm3283, %v10081, %v8938
  %v10146 = vsel %vm3283, %v10082, %v8940
  %v10147 = vsel %vm3283, %v10083, %v8942
  %v10148 = vsel %vm3283, %v10084, %v8944
  %v10149 = vsel %vm3283, %v10085, %v8946
  %v10150 = vsel %vm3283, %v10086, %v8948
  %v10151 = vsel %vm3283, %v10087, %v8950
  %v10152 = vsel %vm3283, %v10088, %v8952
  %v10153 = vsel %vm3283, %v10089, %v8954
  %v10154 = vsel %vm3283, %v10090, %v8956
  %v10155 = vsel %vm3283, %v10091, %v8958
  %v10156 = vsel %vm3283, %v10092, %v8960
  %v10157 = vsel %vm3283, %v10093, %v8962
  %v10158 = vsel %vm3283, %v10094, %v8964
  %v10159 = vsel %vm3283, %v10095, %v8966
  %v10160 = vsel %vm3283, %v10096, %v8968
  %v10161 = vsel %vm3283, %v10097, %v8970
  %v10162 = vsel %vm3283, %v10098, %v8972
  %v10163 = vsel %vm3283, %v10099, %v8974
  %v10164 = vsel %vm3283, %v10100, %v8976
  %v10165 = vsel %vm3283, %v10101, %v8978
  %v10166 = vsel %vm3283, %v10102, %v8980
  %v10167 = vsel %vm3283, %v10103, %v8982
  %v10168 = vsel %vm3283, %v10104, %v8984
  %v10169 = vsel %vm3283, %v10105, %v8986
  %v10170 = vsel %vm3283, %v10106, %v8988
  %v10171 = vsel %vm3283, %v10107, %v8990
  %v10172 = vsel %vm3283, %v10108, %v8992
  %v10173 = vsel %vm3283, %v10109, %v8994
  %v10174 = vsel %vm3283, %v10110, %v8996
  %v10175 = vsel %vm3283, %v10111, %v8998
  %v10176 = vsel %vm3283, %v10112, %v9000
  %v10177 = vsel %vm3283, %v10113, %v9002
  %v10178 = vsel %vm3283, %v10114, %v9004
  %v10179 = vsel %vm3283, %v10115, %v9006
  %v10180 = vsel %vm3283, %v10116, %v9008
  %v10181 = vsel %vm3283, %v10117, %v9010
  %v10182 = vsel %vm3283, %v10118, %v9012
  %v10183 = vsel %vm3283, %v10119, %v9014
  %v10184 = vsel %vm3283, %v10120, %v9016
  %v10185 = vsel %vm3283, %v10121, %v9018
  %v10186 = vsel %vm3283, %v10122, %v9020
  %v10187 = vsel %vm3283, %v10123, %v9022
  %v10188 = vsel %vm3283, %v10124, %v9024
  %v10189 = vsel %vm3283, %v10125, %v9026
  %v10190 = vsel %vm3283, %v10126, %v9028
  %v10191 = vsel %vm3283, %v10127, %v9030
  %v10192 = vsel %vm3283, %v10128, %v9032
  %v10193 = vsel %vm3283, %v10129, %v9034
  %v10194 = vsel %vm3283, %v10130, %v9036
  %v10195 = vsel %vm3283, %v10131, %v9038
  %v10196 = vsel %vm3283, %v10132, %v9040
  %v10197 = vsel %vm3283, %v10133, %v9042
  %v10198 = vsel %vm3283, %v10134, %v9044
  %v10199 = vsel %vm3283, %v10135, %v9046
  %v10200 = vsel %vm3283, %v10136, %v9048
  %v10201 = vsel %vm3348, %v10137, %v9178
  %v10202 = vsel %vm3348, %v10138, %v9180
  %v10203 = vsel %vm3348, %v10139, %v9182
  %v10204 = vsel %vm3348, %v10140, %v9184
  %v10205 = vsel %vm3348, %v10141, %v9186
  %v10206 = vsel %vm3348, %v10142, %v9188
  %v10207 = vsel %vm3348, %v10143, %v9190
  %v10208 = vsel %vm3348, %v10144, %v9192
  %v10209 = vsel %vm3348, %v10145, %v9194
  %v10210 = vsel %vm3348, %v10146, %v9196
  %v10211 = vsel %vm3348, %v10147, %v9198
  %v10212 = vsel %vm3348, %v10148, %v9200
  %v10213 = vsel %vm3348, %v10149, %v9202
  %v10214 = vsel %vm3348, %v10150, %v9204
  %v10215 = vsel %vm3348, %v10151, %v9206
  %v10216 = vsel %vm3348, %v10152, %v9208
  %v10217 = vsel %vm3348, %v10153, %v9210
  %v10218 = vsel %vm3348, %v10154, %v9212
  %v10219 = vsel %vm3348, %v10155, %v9214
  %v10220 = vsel %vm3348, %v10156, %v9216
  %v10221 = vsel %vm3348, %v10157, %v9218
  %v10222 = vsel %vm3348, %v10158, %v9220
  %v10223 = vsel %vm3348, %v10159, %v9222
  %v10224 = vsel %vm3348, %v10160, %v9224
  %v10225 = vsel %vm3348, %v10161, %v9226
  %v10226 = vsel %vm3348, %v10162, %v9228
  %v10227 = vsel %vm3348, %v10163, %v9230
  %v10228 = vsel %vm3348, %v10164, %v9232
  %v10229 = vsel %vm3348, %v10165, %v9234
  %v10230 = vsel %vm3348, %v10166, %v9236
  %v10231 = vsel %vm3348, %v10167, %v9238
  %v10232 = vsel %vm3348, %v10168, %v9240
  %v10233 = vsel %vm3348, %v10169, %v9242
  %v10234 = vsel %vm3348, %v10170, %v9244
  %v10235 = vsel %vm3348, %v10171, %v9246
  %v10236 = vsel %vm3348, %v10172, %v9248
  %v10237 = vsel %vm3348, %v10173, %v9250
  %v10238 = vsel %vm3348, %v10174, %v9252
  %v10239 = vsel %vm3348, %v10175, %v9254
  %v10240 = vsel %vm3348, %v10176, %v9256
  %v10241 = vsel %vm3348, %v10177, %v9258
  %v10242 = vsel %vm3348, %v10178, %v9260
  %v10243 = vsel %vm3348, %v10179, %v9262
  %v10244 = vsel %vm3348, %v10180, %v9264
  %v10245 = vsel %vm3348, %v10181, %v9266
  %v10246 = vsel %vm3348, %v10182, %v9268
  %v10247 = vsel %vm3348, %v10183, %v9270
  %v10248 = vsel %vm3348, %v10184, %v9272
  %v10249 = vsel %vm3348, %v10185, %v9274
  %v10250 = vsel %vm3348, %v10186, %v9276
  %v10251 = vsel %vm3348, %v10187, %v9278
  %v10252 = vsel %vm3348, %v10188, %v9280
  %v10253 = vsel %vm3348, %v10189, %v9282
  %v10254 = vsel %vm3348, %v10190, %v9284
  %v10255 = vsel %vm3348, %v10191, %v9286
  %v10256 = vsel %vm3348, %v10192, %v9288
  %v10257 = vsel %vm3348, %v10193, %v9290
  %v10258 = vsel %vm3348, %v10194, %v9292
  %v10259 = vsel %vm3348, %v10195, %v9294
  %v10260 = vsel %vm3348, %v10196, %v9296
  %v10261 = vsel %vm3348, %v10197, %v9298
  %v10262 = vsel %vm3348, %v10198, %v9300
  %v10263 = vsel %vm3348, %v10199, %v9302
  %v10264 = vsel %vm3348, %v10200, %v9304
  %v10265 = vsel %vm3413, %v10201, %v9434
  %v10266 = vsel %vm3413, %v10202, %v9436
  %v10267 = vsel %vm3413, %v10203, %v9438
  %v10268 = vsel %vm3413, %v10204, %v9440
  %v10269 = vsel %vm3413, %v10205, %v9442
  %v10270 = vsel %vm3413, %v10206, %v9444
  %v10271 = vsel %vm3413, %v10207, %v9446
  %v10272 = vsel %vm3413, %v10208, %v9448
  %v10273 = vsel %vm3413, %v10209, %v9450
  %v10274 = vsel %vm3413, %v10210, %v9452
  %v10275 = vsel %vm3413, %v10211, %v9454
  %v10276 = vsel %vm3413, %v10212, %v9456
  %v10277 = vsel %vm3413, %v10213, %v9458
  %v10278 = vsel %vm3413, %v10214, %v9460
  %v10279 = vsel %vm3413, %v10215, %v9462
  %v10280 = vsel %vm3413, %v10216, %v9464
  %v10281 = vsel %vm3413, %v10217, %v9466
  %v10282 = vsel %vm3413, %v10218, %v9468
  %v10283 = vsel %vm3413, %v10219, %v9470
  %v10284 = vsel %vm3413, %v10220, %v9472
  %v10285 = vsel %vm3413, %v10221, %v9474
  %v10286 = vsel %vm3413, %v10222, %v9476
  %v10287 = vsel %vm3413, %v10223, %v9478
  %v10288 = vsel %vm3413, %v10224, %v9480
  %v10289 = vsel %vm3413, %v10225, %v9482
  %v10290 = vsel %vm3413, %v10226, %v9484
  %v10291 = vsel %vm3413, %v10227, %v9486
  %v10292 = vsel %vm3413, %v10228, %v9488
  %v10293 = vsel %vm3413, %v10229, %v9490
  %v10294 = vsel %vm3413, %v10230, %v9492
  %v10295 = vsel %vm3413, %v10231, %v9494
  %v10296 = vsel %vm3413, %v10232, %v9496
  %v10297 = vsel %vm3413, %v10233, %v9498
  %v10298 = vsel %vm3413, %v10234, %v9500
  %v10299 = vsel %vm3413, %v10235, %v9502
  %v10300 = vsel %vm3413, %v10236, %v9504
  %v10301 = vsel %vm3413, %v10237, %v9506
  %v10302 = vsel %vm3413, %v10238, %v9508
  %v10303 = vsel %vm3413, %v10239, %v9510
  %v10304 = vsel %vm3413, %v10240, %v9512
  %v10305 = vsel %vm3413, %v10241, %v9514
  %v10306 = vsel %vm3413, %v10242, %v9516
  %v10307 = vsel %vm3413, %v10243, %v9518
  %v10308 = vsel %vm3413, %v10244, %v9520
  %v10309 = vsel %vm3413, %v10245, %v9522
  %v10310 = vsel %vm3413, %v10246, %v9524
  %v10311 = vsel %vm3413, %v10247, %v9526
  %v10312 = vsel %vm3413, %v10248, %v9528
  %v10313 = vsel %vm3413, %v10249, %v9530
  %v10314 = vsel %vm3413, %v10250, %v9532
  %v10315 = vsel %vm3413, %v10251, %v9534
  %v10316 = vsel %vm3413, %v10252, %v9536
  %v10317 = vsel %vm3413, %v10253, %v9538
  %v10318 = vsel %vm3413, %v10254, %v9540
  %v10319 = vsel %vm3413, %v10255, %v9542
  %v10320 = vsel %vm3413, %v10256, %v9544
  %v10321 = vsel %vm3413, %v10257, %v9546
  %v10322 = vsel %vm3413, %v10258, %v9548
  %v10323 = vsel %vm3413, %v10259, %v9550
  %v10324 = vsel %vm3413, %v10260, %v9552
  %v10325 = vsel %vm3413, %v10261, %v9554
  %v10326 = vsel %vm3413, %v10262, %v9556
  %v10327 = vsel %vm3413, %v10263, %v9558
  %v10328 = vsel %vm3413, %v10264, %v9560
  %v10329 = vsel %vm3478, %v10265, %v9690
  %v10330 = vsel %vm3478, %v10266, %v9692
  %v10331 = vsel %vm3478, %v10267, %v9694
  %v10332 = vsel %vm3478, %v10268, %v9696
  %v10333 = vsel %vm3478, %v10269, %v9698
  %v10334 = vsel %vm3478, %v10270, %v9700
  %v10335 = vsel %vm3478, %v10271, %v9702
  %v10336 = vsel %vm3478, %v10272, %v9704
  %v10337 = vsel %vm3478, %v10273, %v9706
  %v10338 = vsel %vm3478, %v10274, %v9708
  %v10339 = vsel %vm3478, %v10275, %v9710
  %v10340 = vsel %vm3478, %v10276, %v9712
  %v10341 = vsel %vm3478, %v10277, %v9714
  %v10342 = vsel %vm3478, %v10278, %v9716
  %v10343 = vsel %vm3478, %v10279, %v9718
  %v10344 = vsel %vm3478, %v10280, %v9720
  %v10345 = vsel %vm3478, %v10281, %v9722
  %v10346 = vsel %vm3478, %v10282, %v9724
  %v10347 = vsel %vm3478, %v10283, %v9726
  %v10348 = vsel %vm3478, %v10284, %v9728
  %v10349 = vsel %vm3478, %v10285, %v9730
  %v10350 = vsel %vm3478, %v10286, %v9732
  %v10351 = vsel %vm3478, %v10287, %v9734
  %v10352 = vsel %vm3478, %v10288, %v9736
  %v10353 = vsel %vm3478, %v10289, %v9738
  %v10354 = vsel %vm3478, %v10290, %v9740
  %v10355 = vsel %vm3478, %v10291, %v9742
  %v10356 = vsel %vm3478, %v10292, %v9744
  %v10357 = vsel %vm3478, %v10293, %v9746
  %v10358 = vsel %vm3478, %v10294, %v9748
  %v10359 = vsel %vm3478, %v10295, %v9750
  %v10360 = vsel %vm3478, %v10296, %v9752
  %v10361 = vsel %vm3478, %v10297, %v9754
  %v10362 = vsel %vm3478, %v10298, %v9756
  %v10363 = vsel %vm3478, %v10299, %v9758
  %v10364 = vsel %vm3478, %v10300, %v9760
  %v10365 = vsel %vm3478, %v10301, %v9762
  %v10366 = vsel %vm3478, %v10302, %v9764
  %v10367 = vsel %vm3478, %v10303, %v9766
  %v10368 = vsel %vm3478, %v10304, %v9768
  %v10369 = vsel %vm3478, %v10305, %v9770
  %v10370 = vsel %vm3478, %v10306, %v9772
  %v10371 = vsel %vm3478, %v10307, %v9774
  %v10372 = vsel %vm3478, %v10308, %v9776
  %v10373 = vsel %vm3478, %v10309, %v9778
  %v10374 = vsel %vm3478, %v10310, %v9780
  %v10375 = vsel %vm3478, %v10311, %v9782
  %v10376 = vsel %vm3478, %v10312, %v9784
  %v10377 = vsel %vm3478, %v10313, %v9786
  %v10378 = vsel %vm3478, %v10314, %v9788
  %v10379 = vsel %vm3478, %v10315, %v9790
  %v10380 = vsel %vm3478, %v10316, %v9792
  %v10381 = vsel %vm3478, %v10317, %v9794
  %v10382 = vsel %vm3478, %v10318, %v9796
  %v10383 = vsel %vm3478, %v10319, %v9798
  %v10384 = vsel %vm3478, %v10320, %v9800
  %v10385 = vsel %vm3478, %v10321, %v9802
  %v10386 = vsel %vm3478, %v10322, %v9804
  %v10387 = vsel %vm3478, %v10323, %v9806
  %v10388 = vsel %vm3478, %v10324, %v9808
  %v10389 = vsel %vm3478, %v10325, %v9810
  %v10390 = vsel %vm3478, %v10326, %v9812
  %v10391 = vsel %vm3478, %v10327, %v9814
  %v10392 = vsel %vm3478, %v10328, %v9816
  %v10393 = vld [vmem:[%s9] sm:$0xff]
  %v10394 = vld [vmem:[%s9 + $0x8] sm:$0xff]
  %v10395 = vld [vmem:[%s9 + $0x10] sm:$0xff]
  %v10396 = vld [vmem:[%s9 + $0x18] sm:$0xff]
  %v10397 = vld [vmem:[%s9 + $0x20] sm:$0xf]
  %10414 = vrot.lane.b32.xlu0 %v7177, 124
  %v10415 = vpop.permute.xlu0 %10414
  %10416 = vrot.lane.b32.xlu0 %v7178, 124
  %v10417 = vpop.permute.xlu0 %10416
  %10418 = vrot.lane.b32.xlu0 %v7179, 124
  %v10419 = vpop.permute.xlu0 %10418
  %10420 = vrot.lane.b32.xlu0 %v7180, 124
  %v10421 = vpop.permute.xlu0 %10420
  %10422 = vrot.lane.b32.xlu0 %v7181, 124
  %v10423 = vpop.permute.xlu0 %10422
  %10424 = vrot.lane.b32.xlu0 %v7182, 124
  %v10425 = vpop.permute.xlu0 %10424
  %10426 = vrot.lane.b32.xlu0 %v7183, 124
  %v10427 = vpop.permute.xlu0 %10426
  %10428 = vrot.lane.b32.xlu0 %v7184, 124
  %v10429 = vpop.permute.xlu0 %10428
  %10430 = vrot.lane.b32.xlu0 %v7185, 124
  %v10431 = vpop.permute.xlu0 %10430
  %10432 = vrot.lane.b32.xlu0 %v7186, 124
  %v10433 = vpop.permute.xlu0 %10432
  %10434 = vrot.lane.b32.xlu0 %v7187, 124
  %v10435 = vpop.permute.xlu0 %10434
  %10436 = vrot.lane.b32.xlu0 %v7188, 124
  %v10437 = vpop.permute.xlu0 %10436
  %10438 = vrot.lane.b32.xlu0 %v7189, 124
  %v10439 = vpop.permute.xlu0 %10438
  %10440 = vrot.lane.b32.xlu0 %v7190, 124
  %v10441 = vpop.permute.xlu0 %10440
  %10442 = vrot.lane.b32.xlu0 %v7191, 124
  %v10443 = vpop.permute.xlu0 %10442
  %10444 = vrot.lane.b32.xlu0 %v7192, 124
  %v10445 = vpop.permute.xlu0 %10444
  %10462 = vst.msk [vmem:[%s3548 + $0x8] sm:$0xff] %vm49, %v10415
  %10463 = vst.msk [vmem:[%s3548 + $0x20] sm:$0xff] %vm49, %v10417
  %10464 = vst.msk [vmem:[%s3548 + $0x38] sm:$0xff] %vm49, %v10419
  %10465 = vst.msk [vmem:[%s3548 + $0x50] sm:$0xff] %vm49, %v10421
  %10466 = vst.msk [vmem:[%s3548 + $0x68] sm:$0xff] %vm49, %v10423
  %10467 = vst.msk [vmem:[%s3548 + $0x80] sm:$0xff] %vm49, %v10425
  %10468 = vst.msk [vmem:[%s3548 + $0x98] sm:$0xff] %vm49, %v10427
  %10469 = vst.msk [vmem:[%s3548 + $0xb0] sm:$0xff] %vm49, %v10429
  %10470 = vst.msk [vmem:[%s3548 + $0xf8] sm:$0xff] %vm49, %v10431
  %10471 = vst.msk [vmem:[%s3548 + $0x110] sm:$0xff] %vm49, %v10433
  %10472 = vst.msk [vmem:[%s3548 + $0x128] sm:$0xff] %vm49, %v10435
  %10473 = vst.msk [vmem:[%s3548 + $0x140] sm:$0xff] %vm49, %v10437
  %10474 = vst.msk [vmem:[%s3548 + $0x158] sm:$0xff] %vm49, %v10439
  %10475 = vst.msk [vmem:[%s3548 + $0x170] sm:$0xff] %vm49, %v10441
  %10476 = vst.msk [vmem:[%s3548 + $0x188] sm:$0xff] %vm49, %v10443
  %10477 = vst.msk [vmem:[%s3548 + $0x1a0] sm:$0xff] %vm49, %v10445
  %v10478 = vld [vmem:[#allocation3 + $0x7] sm:$0xff]
  %v10479 = vld [vmem:[#allocation3 + $0x1f] sm:$0xff]
  %v10480 = vld [vmem:[#allocation3 + $0x37] sm:$0xff]
  %v10481 = vld [vmem:[#allocation3 + $0x4f] sm:$0xff]
  %v10482 = vld [vmem:[#allocation3 + $0x67] sm:$0xff]
  %v10483 = vld [vmem:[#allocation3 + $0x7f] sm:$0xff]
  %v10484 = vld [vmem:[#allocation3 + $0x97] sm:$0xff]
  %v10485 = vld [vmem:[#allocation3 + $0xaf] sm:$0xff]
  %v10486 = vld [vmem:[#allocation3 + $0xf7] sm:$0xff]
  %v10487 = vld [vmem:[#allocation3 + $0x10f] sm:$0xff]
  %v10488 = vld [vmem:[#allocation3 + $0x127] sm:$0xff]
  %v10489 = vld [vmem:[#allocation3 + $0x13f] sm:$0xff]
  %v10490 = vld [vmem:[#allocation3 + $0x157] sm:$0xff]
  %v10491 = vld [vmem:[#allocation3 + $0x16f] sm:$0xff]
  %v10492 = vld [vmem:[#allocation3 + $0x187] sm:$0xff]
  %v10493 = vld [vmem:[#allocation3 + $0x19f] sm:$0xff]
  %v10494 = vld [vmem:[#allocation3 + $0x8] sm:$0xff]
  %v10495 = vld [vmem:[#allocation3 + $0x20] sm:$0xff]
  %v10496 = vld [vmem:[#allocation3 + $0x38] sm:$0xff]
  %v10497 = vld [vmem:[#allocation3 + $0x50] sm:$0xff]
  %v10498 = vld [vmem:[#allocation3 + $0x68] sm:$0xff]
  %v10499 = vld [vmem:[#allocation3 + $0x80] sm:$0xff]
  %v10500 = vld [vmem:[#allocation3 + $0x98] sm:$0xff]
  %v10501 = vld [vmem:[#allocation3 + $0xb0] sm:$0xff]
  %v10502 = vld [vmem:[#allocation3 + $0xf8] sm:$0xff]
  %v10503 = vld [vmem:[#allocation3 + $0x110] sm:$0xff]
  %v10504 = vld [vmem:[#allocation3 + $0x128] sm:$0xff]
  %v10505 = vld [vmem:[#allocation3 + $0x140] sm:$0xff]
  %v10506 = vld [vmem:[#allocation3 + $0x158] sm:$0xff]
  %v10507 = vld [vmem:[#allocation3 + $0x170] sm:$0xff]
  %v10508 = vld [vmem:[#allocation3 + $0x188] sm:$0xff]
  %v10509 = vld [vmem:[#allocation3 + $0x1a0] sm:$0xff]
  %v10510 = vld [vmem:[#allocation3 + $0x9] sm:$0xff]
  %v10511 = vld [vmem:[#allocation3 + $0x21] sm:$0xff]
  %v10512 = vld [vmem:[#allocation3 + $0x39] sm:$0xff]
  %v10513 = vld [vmem:[#allocation3 + $0x51] sm:$0xff]
  %v10514 = vld [vmem:[#allocation3 + $0x69] sm:$0xff]
  %v10515 = vld [vmem:[#allocation3 + $0x81] sm:$0xff]
  %v10516 = vld [vmem:[#allocation3 + $0x99] sm:$0xff]
  %v10517 = vld [vmem:[#allocation3 + $0xb1] sm:$0xff]
  %v10518 = vld [vmem:[#allocation3 + $0xf9] sm:$0xff]
  %v10519 = vld [vmem:[#allocation3 + $0x111] sm:$0xff]
  %v10520 = vld [vmem:[#allocation3 + $0x129] sm:$0xff]
  %v10521 = vld [vmem:[#allocation3 + $0x141] sm:$0xff]
  %v10522 = vld [vmem:[#allocation3 + $0x159] sm:$0xff]
  %v10523 = vld [vmem:[#allocation3 + $0x171] sm:$0xff]
  %v10524 = vld [vmem:[#allocation3 + $0x189] sm:$0xff]
  %v10525 = vld [vmem:[#allocation3 + $0x1a1] sm:$0xff]
  %v10526 = vld [vmem:[%s3548 + $0x7] sm:$0xff]
  %v10527 = vld [vmem:[%s3548 + $0x1f] sm:$0xff]
  %v10528 = vld [vmem:[%s3548 + $0x37] sm:$0xff]
  %v10529 = vld [vmem:[%s3548 + $0x4f] sm:$0xff]
  %v10530 = vld [vmem:[%s3548 + $0x67] sm:$0xff]
  %v10531 = vld [vmem:[%s3548 + $0x7f] sm:$0xff]
  %v10532 = vld [vmem:[%s3548 + $0x97] sm:$0xff]
  %v10533 = vld [vmem:[%s3548 + $0xaf] sm:$0xff]
  %v10534 = vld [vmem:[%s3548 + $0xf7] sm:$0xff]
  %v10535 = vld [vmem:[%s3548 + $0x10f] sm:$0xff]
  %v10536 = vld [vmem:[%s3548 + $0x127] sm:$0xff]
  %v10537 = vld [vmem:[%s3548 + $0x13f] sm:$0xff]
  %v10538 = vld [vmem:[%s3548 + $0x157] sm:$0xff]
  %v10539 = vld [vmem:[%s3548 + $0x16f] sm:$0xff]
  %v10540 = vld [vmem:[%s3548 + $0x187] sm:$0xff]
  %v10541 = vld [vmem:[%s3548 + $0x19f] sm:$0xff]
  %v10542 = vld [vmem:[%s3548 + $0x8] sm:$0xff]
  %v10543 = vld [vmem:[%s3548 + $0x20] sm:$0xff]
  %v10544 = vld [vmem:[%s3548 + $0x38] sm:$0xff]
  %v10545 = vld [vmem:[%s3548 + $0x50] sm:$0xff]
  %v10546 = vld [vmem:[%s3548 + $0x68] sm:$0xff]
  %v10547 = vld [vmem:[%s3548 + $0x80] sm:$0xff]
  %v10548 = vld [vmem:[%s3548 + $0x98] sm:$0xff]
  %v10549 = vld [vmem:[%s3548 + $0xb0] sm:$0xff]
  %v10550 = vld [vmem:[%s3548 + $0xf8] sm:$0xff]
  %v10551 = vld [vmem:[%s3548 + $0x110] sm:$0xff]
  %v10552 = vld [vmem:[%s3548 + $0x128] sm:$0xff]
  %v10553 = vld [vmem:[%s3548 + $0x140] sm:$0xff]
  %v10554 = vld [vmem:[%s3548 + $0x158] sm:$0xff]
  %v10555 = vld [vmem:[%s3548 + $0x170] sm:$0xff]
  %v10556 = vld [vmem:[%s3548 + $0x188] sm:$0xff]
  %v10557 = vld [vmem:[%s3548 + $0x1a0] sm:$0xff]
  %v10558 = vld [vmem:[%s3548 + $0x9] sm:$0xff]
  %v10559 = vld [vmem:[%s3548 + $0x21] sm:$0xff]
  %v10560 = vld [vmem:[%s3548 + $0x39] sm:$0xff]
  %v10561 = vld [vmem:[%s3548 + $0x51] sm:$0xff]
  %v10562 = vld [vmem:[%s3548 + $0x69] sm:$0xff]
  %v10563 = vld [vmem:[%s3548 + $0x81] sm:$0xff]
  %v10564 = vld [vmem:[%s3548 + $0x99] sm:$0xff]
  %v10565 = vld [vmem:[%s3548 + $0xb1] sm:$0xff]
  %v10566 = vld [vmem:[%s3548 + $0xf9] sm:$0xff]
  %v10567 = vld [vmem:[%s3548 + $0x111] sm:$0xff]
  %v10568 = vld [vmem:[%s3548 + $0x129] sm:$0xff]
  %v10569 = vld [vmem:[%s3548 + $0x141] sm:$0xff]
  %v10570 = vld [vmem:[%s3548 + $0x159] sm:$0xff]
  %v10571 = vld [vmem:[%s3548 + $0x171] sm:$0xff]
  %v10572 = vld [vmem:[%s3548 + $0x189] sm:$0xff]
  %v10573 = vld [vmem:[%s3548 + $0x1a1] sm:$0xff]
  %v10574 = vld [vmem:[%s3661 + $0x7] sm:$0xff]
  %v10575 = vld [vmem:[%s3661 + $0x1f] sm:$0xff]
  %v10576 = vld [vmem:[%s3661 + $0x37] sm:$0xff]
  %v10577 = vld [vmem:[%s3661 + $0x4f] sm:$0xff]
  %v10578 = vld [vmem:[%s3661 + $0x67] sm:$0xff]
  %v10579 = vld [vmem:[%s3661 + $0x7f] sm:$0xff]
  %v10580 = vld [vmem:[%s3661 + $0x97] sm:$0xff]
  %v10581 = vld [vmem:[%s3661 + $0xaf] sm:$0xff]
  %v10582 = vld [vmem:[%s3661 + $0xf7] sm:$0xff]
  %v10583 = vld [vmem:[%s3661 + $0x10f] sm:$0xff]
  %v10584 = vld [vmem:[%s3661 + $0x127] sm:$0xff]
  %v10585 = vld [vmem:[%s3661 + $0x13f] sm:$0xff]
  %v10586 = vld [vmem:[%s3661 + $0x157] sm:$0xff]
  %v10587 = vld [vmem:[%s3661 + $0x16f] sm:$0xff]
  %v10588 = vld [vmem:[%s3661 + $0x187] sm:$0xff]
  %v10589 = vld [vmem:[%s3661 + $0x19f] sm:$0xff]
  %v10590 = vld [vmem:[%s3661 + $0x8] sm:$0xff]
  %v10591 = vld [vmem:[%s3661 + $0x20] sm:$0xff]
  %v10592 = vld [vmem:[%s3661 + $0x38] sm:$0xff]
  %v10593 = vld [vmem:[%s3661 + $0x50] sm:$0xff]
  %v10594 = vld [vmem:[%s3661 + $0x68] sm:$0xff]
  %v10595 = vld [vmem:[%s3661 + $0x80] sm:$0xff]
  %v10596 = vld [vmem:[%s3661 + $0x98] sm:$0xff]
  %v10597 = vld [vmem:[%s3661 + $0xb0] sm:$0xff]
  %v10598 = vld [vmem:[%s3661 + $0xf8] sm:$0xff]
  %v10599 = vld [vmem:[%s3661 + $0x110] sm:$0xff]
  %v10600 = vld [vmem:[%s3661 + $0x128] sm:$0xff]
  %v10601 = vld [vmem:[%s3661 + $0x140] sm:$0xff]
  %v10602 = vld [vmem:[%s3661 + $0x158] sm:$0xff]
  %v10603 = vld [vmem:[%s3661 + $0x170] sm:$0xff]
  %v10604 = vld [vmem:[%s3661 + $0x188] sm:$0xff]
  %v10605 = vld [vmem:[%s3661 + $0x1a0] sm:$0xff]
  %v10606 = vld [vmem:[%s3661 + $0x9] sm:$0xff]
  %v10607 = vld [vmem:[%s3661 + $0x21] sm:$0xff]
  %v10608 = vld [vmem:[%s3661 + $0x39] sm:$0xff]
  %v10609 = vld [vmem:[%s3661 + $0x51] sm:$0xff]
  %v10610 = vld [vmem:[%s3661 + $0x69] sm:$0xff]
  %v10611 = vld [vmem:[%s3661 + $0x81] sm:$0xff]
  %v10612 = vld [vmem:[%s3661 + $0x99] sm:$0xff]
  %v10613 = vld [vmem:[%s3661 + $0xb1] sm:$0xff]
  %v10614 = vld [vmem:[%s3661 + $0xf9] sm:$0xff]
  %v10615 = vld [vmem:[%s3661 + $0x111] sm:$0xff]
  %v10616 = vld [vmem:[%s3661 + $0x129] sm:$0xff]
  %v10617 = vld [vmem:[%s3661 + $0x141] sm:$0xff]
  %v10618 = vld [vmem:[%s3661 + $0x159] sm:$0xff]
  %v10619 = vld [vmem:[%s3661 + $0x171] sm:$0xff]
  %v10620 = vld [vmem:[%s3661 + $0x189] sm:$0xff]
  %v10621 = vld [vmem:[%s3661 + $0x1a1] sm:$0xff]
  %10638 = vrot.lane.b32.xlu0 %v10494, 4
  %v10639 = vpop.permute.xlu0 %10638
  %10640 = vrot.lane.b32.xlu0 %v10495, 4
  %v10641 = vpop.permute.xlu0 %10640
  %10642 = vrot.lane.b32.xlu0 %v10496, 4
  %v10643 = vpop.permute.xlu0 %10642
  %10644 = vrot.lane.b32.xlu0 %v10497, 4
  %v10645 = vpop.permute.xlu0 %10644
  %10646 = vrot.lane.b32.xlu0 %v10498, 4
  %v10647 = vpop.permute.xlu0 %10646
  %10648 = vrot.lane.b32.xlu0 %v10499, 4
  %v10649 = vpop.permute.xlu0 %10648
  %10650 = vrot.lane.b32.xlu0 %v10500, 4
  %v10651 = vpop.permute.xlu0 %10650
  %10652 = vrot.lane.b32.xlu0 %v10501, 4
  %v10653 = vpop.permute.xlu0 %10652
  %10654 = vrot.lane.b32.xlu0 %v10502, 4
  %v10655 = vpop.permute.xlu0 %10654
  %10656 = vrot.lane.b32.xlu0 %v10503, 4
  %v10657 = vpop.permute.xlu0 %10656
  %10658 = vrot.lane.b32.xlu0 %v10504, 4
  %v10659 = vpop.permute.xlu0 %10658
  %10660 = vrot.lane.b32.xlu0 %v10505, 4
  %v10661 = vpop.permute.xlu0 %10660
  %10662 = vrot.lane.b32.xlu0 %v10506, 4
  %v10663 = vpop.permute.xlu0 %10662
  %10664 = vrot.lane.b32.xlu0 %v10507, 4
  %v10665 = vpop.permute.xlu0 %10664
  %10666 = vrot.lane.b32.xlu0 %v10508, 4
  %v10667 = vpop.permute.xlu0 %10666
  %10668 = vrot.lane.b32.xlu0 %v10509, 4
  %v10669 = vpop.permute.xlu0 %10668
  %10702 = vrot.lane.b32.xlu0 %v10510, 8
  %v10703 = vpop.permute.xlu0 %10702
  %10704 = vrot.lane.b32.xlu0 %v10511, 8
  %v10705 = vpop.permute.xlu0 %10704
  %10706 = vrot.lane.b32.xlu0 %v10512, 8
  %v10707 = vpop.permute.xlu0 %10706
  %10708 = vrot.lane.b32.xlu0 %v10513, 8
  %v10709 = vpop.permute.xlu0 %10708
  %10710 = vrot.lane.b32.xlu0 %v10514, 8
  %v10711 = vpop.permute.xlu0 %10710
  %10712 = vrot.lane.b32.xlu0 %v10515, 8
  %v10713 = vpop.permute.xlu0 %10712
  %10714 = vrot.lane.b32.xlu0 %v10516, 8
  %v10715 = vpop.permute.xlu0 %10714
  %10716 = vrot.lane.b32.xlu0 %v10517, 8
  %v10717 = vpop.permute.xlu0 %10716
  %10718 = vrot.lane.b32.xlu0 %v10518, 8
  %v10719 = vpop.permute.xlu0 %10718
  %10720 = vrot.lane.b32.xlu0 %v10519, 8
  %v10721 = vpop.permute.xlu0 %10720
  %10722 = vrot.lane.b32.xlu0 %v10520, 8
  %v10723 = vpop.permute.xlu0 %10722
  %10724 = vrot.lane.b32.xlu0 %v10521, 8
  %v10725 = vpop.permute.xlu0 %10724
  %10726 = vrot.lane.b32.xlu0 %v10522, 8
  %v10727 = vpop.permute.xlu0 %10726
  %10728 = vrot.lane.b32.xlu0 %v10523, 8
  %v10729 = vpop.permute.xlu0 %10728
  %10730 = vrot.lane.b32.xlu0 %v10524, 8
  %v10731 = vpop.permute.xlu0 %10730
  %10732 = vrot.lane.b32.xlu0 %v10525, 8
  %v10733 = vpop.permute.xlu0 %10732
  %10766 = vrot.lane.b32.xlu0 %v10526, 12
  %v10767 = vpop.permute.xlu0 %10766
  %10768 = vrot.lane.b32.xlu0 %v10527, 12
  %v10769 = vpop.permute.xlu0 %10768
  %10770 = vrot.lane.b32.xlu0 %v10528, 12
  %v10771 = vpop.permute.xlu0 %10770
  %10772 = vrot.lane.b32.xlu0 %v10529, 12
  %v10773 = vpop.permute.xlu0 %10772
  %10774 = vrot.lane.b32.xlu0 %v10530, 12
  %v10775 = vpop.permute.xlu0 %10774
  %10776 = vrot.lane.b32.xlu0 %v10531, 12
  %v10777 = vpop.permute.xlu0 %10776
  %10778 = vrot.lane.b32.xlu0 %v10532, 12
  %v10779 = vpop.permute.xlu0 %10778
  %10780 = vrot.lane.b32.xlu0 %v10533, 12
  %v10781 = vpop.permute.xlu0 %10780
  %10782 = vrot.lane.b32.xlu0 %v10534, 12
  %v10783 = vpop.permute.xlu0 %10782
  %10784 = vrot.lane.b32.xlu0 %v10535, 12
  %v10785 = vpop.permute.xlu0 %10784
  %10786 = vrot.lane.b32.xlu0 %v10536, 12
  %v10787 = vpop.permute.xlu0 %10786
  %10788 = vrot.lane.b32.xlu0 %v10537, 12
  %v10789 = vpop.permute.xlu0 %10788
  %10790 = vrot.lane.b32.xlu0 %v10538, 12
  %v10791 = vpop.permute.xlu0 %10790
  %10792 = vrot.lane.b32.xlu0 %v10539, 12
  %v10793 = vpop.permute.xlu0 %10792
  %10794 = vrot.lane.b32.xlu0 %v10540, 12
  %v10795 = vpop.permute.xlu0 %10794
  %10796 = vrot.lane.b32.xlu0 %v10541, 12
  %v10797 = vpop.permute.xlu0 %10796
  %10830 = vrot.lane.b32.xlu0 %v10542, 16
  %v10831 = vpop.permute.xlu0 %10830
  %10832 = vrot.lane.b32.xlu0 %v10543, 16
  %v10833 = vpop.permute.xlu0 %10832
  %10834 = vrot.lane.b32.xlu0 %v10544, 16
  %v10835 = vpop.permute.xlu0 %10834
  %10836 = vrot.lane.b32.xlu0 %v10545, 16
  %v10837 = vpop.permute.xlu0 %10836
  %10838 = vrot.lane.b32.xlu0 %v10546, 16
  %v10839 = vpop.permute.xlu0 %10838
  %10840 = vrot.lane.b32.xlu0 %v10547, 16
  %v10841 = vpop.permute.xlu0 %10840
  %10842 = vrot.lane.b32.xlu0 %v10548, 16
  %v10843 = vpop.permute.xlu0 %10842
  %10844 = vrot.lane.b32.xlu0 %v10549, 16
  %v10845 = vpop.permute.xlu0 %10844
  %10846 = vrot.lane.b32.xlu0 %v10550, 16
  %v10847 = vpop.permute.xlu0 %10846
  %10848 = vrot.lane.b32.xlu0 %v10551, 16
  %v10849 = vpop.permute.xlu0 %10848
  %10850 = vrot.lane.b32.xlu0 %v10552, 16
  %v10851 = vpop.permute.xlu0 %10850
  %10852 = vrot.lane.b32.xlu0 %v10553, 16
  %v10853 = vpop.permute.xlu0 %10852
  %10854 = vrot.lane.b32.xlu0 %v10554, 16
  %v10855 = vpop.permute.xlu0 %10854
  %10856 = vrot.lane.b32.xlu0 %v10555, 16
  %v10857 = vpop.permute.xlu0 %10856
  %10858 = vrot.lane.b32.xlu0 %v10556, 16
  %v10859 = vpop.permute.xlu0 %10858
  %10860 = vrot.lane.b32.xlu0 %v10557, 16
  %v10861 = vpop.permute.xlu0 %10860
  %10894 = vrot.lane.b32.xlu0 %v10558, 20
  %v10895 = vpop.permute.xlu0 %10894
  %10896 = vrot.lane.b32.xlu0 %v10559, 20
  %v10897 = vpop.permute.xlu0 %10896
  %10898 = vrot.lane.b32.xlu0 %v10560, 20
  %v10899 = vpop.permute.xlu0 %10898
  %10900 = vrot.lane.b32.xlu0 %v10561, 20
  %v10901 = vpop.permute.xlu0 %10900
  %10902 = vrot.lane.b32.xlu0 %v10562, 20
  %v10903 = vpop.permute.xlu0 %10902
  %10904 = vrot.lane.b32.xlu0 %v10563, 20
  %v10905 = vpop.permute.xlu0 %10904
  %10906 = vrot.lane.b32.xlu0 %v10564, 20
  %v10907 = vpop.permute.xlu0 %10906
  %10908 = vrot.lane.b32.xlu0 %v10565, 20
  %v10909 = vpop.permute.xlu0 %10908
  %10910 = vrot.lane.b32.xlu0 %v10566, 20
  %v10911 = vpop.permute.xlu0 %10910
  %10912 = vrot.lane.b32.xlu0 %v10567, 20
  %v10913 = vpop.permute.xlu0 %10912
  %10914 = vrot.lane.b32.xlu0 %v10568, 20
  %v10915 = vpop.permute.xlu0 %10914
  %10916 = vrot.lane.b32.xlu0 %v10569, 20
  %v10917 = vpop.permute.xlu0 %10916
  %10918 = vrot.lane.b32.xlu0 %v10570, 20
  %v10919 = vpop.permute.xlu0 %10918
  %10920 = vrot.lane.b32.xlu0 %v10571, 20
  %v10921 = vpop.permute.xlu0 %10920
  %10922 = vrot.lane.b32.xlu0 %v10572, 20
  %v10923 = vpop.permute.xlu0 %10922
  %10924 = vrot.lane.b32.xlu0 %v10573, 20
  %v10925 = vpop.permute.xlu0 %10924
  %10958 = vrot.lane.b32.xlu0 %v10574, 24
  %v10959 = vpop.permute.xlu0 %10958
  %10960 = vrot.lane.b32.xlu0 %v10575, 24
  %v10961 = vpop.permute.xlu0 %10960
  %10962 = vrot.lane.b32.xlu0 %v10576, 24
  %v10963 = vpop.permute.xlu0 %10962
  %10964 = vrot.lane.b32.xlu0 %v10577, 24
  %v10965 = vpop.permute.xlu0 %10964
  %10966 = vrot.lane.b32.xlu0 %v10578, 24
  %v10967 = vpop.permute.xlu0 %10966
  %10968 = vrot.lane.b32.xlu0 %v10579, 24
  %v10969 = vpop.permute.xlu0 %10968
  %10970 = vrot.lane.b32.xlu0 %v10580, 24
  %v10971 = vpop.permute.xlu0 %10970
  %10972 = vrot.lane.b32.xlu0 %v10581, 24
  %v10973 = vpop.permute.xlu0 %10972
  %10974 = vrot.lane.b32.xlu0 %v10582, 24
  %v10975 = vpop.permute.xlu0 %10974
  %10976 = vrot.lane.b32.xlu0 %v10583, 24
  %v10977 = vpop.permute.xlu0 %10976
  %10978 = vrot.lane.b32.xlu0 %v10584, 24
  %v10979 = vpop.permute.xlu0 %10978
  %10980 = vrot.lane.b32.xlu0 %v10585, 24
  %v10981 = vpop.permute.xlu0 %10980
  %10982 = vrot.lane.b32.xlu0 %v10586, 24
  %v10983 = vpop.permute.xlu0 %10982
  %10984 = vrot.lane.b32.xlu0 %v10587, 24
  %v10985 = vpop.permute.xlu0 %10984
  %10986 = vrot.lane.b32.xlu0 %v10588, 24
  %v10987 = vpop.permute.xlu0 %10986
  %10988 = vrot.lane.b32.xlu0 %v10589, 24
  %v10989 = vpop.permute.xlu0 %10988
  %11022 = vrot.lane.b32.xlu0 %v10590, 28
  %v11023 = vpop.permute.xlu0 %11022
  %11024 = vrot.lane.b32.xlu0 %v10591, 28
  %v11025 = vpop.permute.xlu0 %11024
  %11026 = vrot.lane.b32.xlu0 %v10592, 28
  %v11027 = vpop.permute.xlu0 %11026
  %11028 = vrot.lane.b32.xlu0 %v10593, 28
  %v11029 = vpop.permute.xlu0 %11028
  %11030 = vrot.lane.b32.xlu0 %v10594, 28
  %v11031 = vpop.permute.xlu0 %11030
  %11032 = vrot.lane.b32.xlu0 %v10595, 28
  %v11033 = vpop.permute.xlu0 %11032
  %11034 = vrot.lane.b32.xlu0 %v10596, 28
  %v11035 = vpop.permute.xlu0 %11034
  %11036 = vrot.lane.b32.xlu0 %v10597, 28
  %v11037 = vpop.permute.xlu0 %11036
  %11038 = vrot.lane.b32.xlu0 %v10598, 28
  %v11039 = vpop.permute.xlu0 %11038
  %11040 = vrot.lane.b32.xlu0 %v10599, 28
  %v11041 = vpop.permute.xlu0 %11040
  %11042 = vrot.lane.b32.xlu0 %v10600, 28
  %v11043 = vpop.permute.xlu0 %11042
  %11044 = vrot.lane.b32.xlu0 %v10601, 28
  %v11045 = vpop.permute.xlu0 %11044
  %11046 = vrot.lane.b32.xlu0 %v10602, 28
  %v11047 = vpop.permute.xlu0 %11046
  %11048 = vrot.lane.b32.xlu0 %v10603, 28
  %v11049 = vpop.permute.xlu0 %11048
  %11050 = vrot.lane.b32.xlu0 %v10604, 28
  %v11051 = vpop.permute.xlu0 %11050
  %11052 = vrot.lane.b32.xlu0 %v10605, 28
  %v11053 = vpop.permute.xlu0 %11052
  %11086 = vrot.lane.b32.xlu0 %v10606, 32
  %v11087 = vpop.permute.xlu0 %11086
  %11088 = vrot.lane.b32.xlu0 %v10607, 32
  %v11089 = vpop.permute.xlu0 %11088
  %11090 = vrot.lane.b32.xlu0 %v10608, 32
  %v11091 = vpop.permute.xlu0 %11090
  %11092 = vrot.lane.b32.xlu0 %v10609, 32
  %v11093 = vpop.permute.xlu0 %11092
  %11094 = vrot.lane.b32.xlu0 %v10610, 32
  %v11095 = vpop.permute.xlu0 %11094
  %11096 = vrot.lane.b32.xlu0 %v10611, 32
  %v11097 = vpop.permute.xlu0 %11096
  %11098 = vrot.lane.b32.xlu0 %v10612, 32
  %v11099 = vpop.permute.xlu0 %11098
  %11100 = vrot.lane.b32.xlu0 %v10613, 32
  %v11101 = vpop.permute.xlu0 %11100
  %11102 = vrot.lane.b32.xlu0 %v10614, 32
  %v11103 = vpop.permute.xlu0 %11102
  %11104 = vrot.lane.b32.xlu0 %v10615, 32
  %v11105 = vpop.permute.xlu0 %11104
  %11106 = vrot.lane.b32.xlu0 %v10616, 32
  %v11107 = vpop.permute.xlu0 %11106
  %11108 = vrot.lane.b32.xlu0 %v10617, 32
  %v11109 = vpop.permute.xlu0 %11108
  %11110 = vrot.lane.b32.xlu0 %v10618, 32
  %v11111 = vpop.permute.xlu0 %11110
  %11112 = vrot.lane.b32.xlu0 %v10619, 32
  %v11113 = vpop.permute.xlu0 %11112
  %11114 = vrot.lane.b32.xlu0 %v10620, 32
  %v11115 = vpop.permute.xlu0 %11114
  %11116 = vrot.lane.b32.xlu0 %v10621, 32
  %v11117 = vpop.permute.xlu0 %11116
  %v11134 = vsel %vm49, %v10478, %v10639
  %v11135 = vsel %vm49, %v10479, %v10641
  %v11136 = vsel %vm49, %v10480, %v10643
  %v11137 = vsel %vm49, %v10481, %v10645
  %v11138 = vsel %vm49, %v10482, %v10647
  %v11139 = vsel %vm49, %v10483, %v10649
  %v11140 = vsel %vm49, %v10484, %v10651
  %v11141 = vsel %vm49, %v10485, %v10653
  %v11142 = vsel %vm49, %v10486, %v10655
  %v11143 = vsel %vm49, %v10487, %v10657
  %v11144 = vsel %vm49, %v10488, %v10659
  %v11145 = vsel %vm49, %v10489, %v10661
  %v11146 = vsel %vm49, %v10490, %v10663
  %v11147 = vsel %vm49, %v10491, %v10665
  %v11148 = vsel %vm49, %v10492, %v10667
  %v11149 = vsel %vm49, %v10493, %v10669
  %v11150 = vsel %vm3088, %v11134, %v10703
  %v11151 = vsel %vm3088, %v11135, %v10705
  %v11152 = vsel %vm3088, %v11136, %v10707
  %v11153 = vsel %vm3088, %v11137, %v10709
  %v11154 = vsel %vm3088, %v11138, %v10711
  %v11155 = vsel %vm3088, %v11139, %v10713
  %v11156 = vsel %vm3088, %v11140, %v10715
  %v11157 = vsel %vm3088, %v11141, %v10717
  %v11158 = vsel %vm3088, %v11142, %v10719
  %v11159 = vsel %vm3088, %v11143, %v10721
  %v11160 = vsel %vm3088, %v11144, %v10723
  %v11161 = vsel %vm3088, %v11145, %v10725
  %v11162 = vsel %vm3088, %v11146, %v10727
  %v11163 = vsel %vm3088, %v11147, %v10729
  %v11164 = vsel %vm3088, %v11148, %v10731
  %v11165 = vsel %vm3088, %v11149, %v10733
  %v11166 = vsel %vm3153, %v11150, %v10767
  %v11167 = vsel %vm3153, %v11151, %v10769
  %v11168 = vsel %vm3153, %v11152, %v10771
  %v11169 = vsel %vm3153, %v11153, %v10773
  %v11170 = vsel %vm3153, %v11154, %v10775
  %v11171 = vsel %vm3153, %v11155, %v10777
  %v11172 = vsel %vm3153, %v11156, %v10779
  %v11173 = vsel %vm3153, %v11157, %v10781
  %v11174 = vsel %vm3153, %v11158, %v10783
  %v11175 = vsel %vm3153, %v11159, %v10785
  %v11176 = vsel %vm3153, %v11160, %v10787
  %v11177 = vsel %vm3153, %v11161, %v10789
  %v11178 = vsel %vm3153, %v11162, %v10791
  %v11179 = vsel %vm3153, %v11163, %v10793
  %v11180 = vsel %vm3153, %v11164, %v10795
  %v11181 = vsel %vm3153, %v11165, %v10797
  %v11182 = vsel %vm3218, %v11166, %v10831
  %v11183 = vsel %vm3218, %v11167, %v10833
  %v11184 = vsel %vm3218, %v11168, %v10835
  %v11185 = vsel %vm3218, %v11169, %v10837
  %v11186 = vsel %vm3218, %v11170, %v10839
  %v11187 = vsel %vm3218, %v11171, %v10841
  %v11188 = vsel %vm3218, %v11172, %v10843
  %v11189 = vsel %vm3218, %v11173, %v10845
  %v11190 = vsel %vm3218, %v11174, %v10847
  %v11191 = vsel %vm3218, %v11175, %v10849
  %v11192 = vsel %vm3218, %v11176, %v10851
  %v11193 = vsel %vm3218, %v11177, %v10853
  %v11194 = vsel %vm3218, %v11178, %v10855
  %v11195 = vsel %vm3218, %v11179, %v10857
  %v11196 = vsel %vm3218, %v11180, %v10859
  %v11197 = vsel %vm3218, %v11181, %v10861
  %v11198 = vsel %vm3283, %v11182, %v10895
  %v11199 = vsel %vm3283, %v11183, %v10897
  %v11200 = vsel %vm3283, %v11184, %v10899
  %v11201 = vsel %vm3283, %v11185, %v10901
  %v11202 = vsel %vm3283, %v11186, %v10903
  %v11203 = vsel %vm3283, %v11187, %v10905
  %v11204 = vsel %vm3283, %v11188, %v10907
  %v11205 = vsel %vm3283, %v11189, %v10909
  %v11206 = vsel %vm3283, %v11190, %v10911
  %v11207 = vsel %vm3283, %v11191, %v10913
  %v11208 = vsel %vm3283, %v11192, %v10915
  %v11209 = vsel %vm3283, %v11193, %v10917
  %v11210 = vsel %vm3283, %v11194, %v10919
  %v11211 = vsel %vm3283, %v11195, %v10921
  %v11212 = vsel %vm3283, %v11196, %v10923
  %v11213 = vsel %vm3283, %v11197, %v10925
  %v11214 = vsel %vm3348, %v11198, %v10959
  %v11215 = vsel %vm3348, %v11199, %v10961
  %v11216 = vsel %vm3348, %v11200, %v10963
  %v11217 = vsel %vm3348, %v11201, %v10965
  %v11218 = vsel %vm3348, %v11202, %v10967
  %v11219 = vsel %vm3348, %v11203, %v10969
  %v11220 = vsel %vm3348, %v11204, %v10971
  %v11221 = vsel %vm3348, %v11205, %v10973
  %v11222 = vsel %vm3348, %v11206, %v10975
  %v11223 = vsel %vm3348, %v11207, %v10977
  %v11224 = vsel %vm3348, %v11208, %v10979
  %v11225 = vsel %vm3348, %v11209, %v10981
  %v11226 = vsel %vm3348, %v11210, %v10983
  %v11227 = vsel %vm3348, %v11211, %v10985
  %v11228 = vsel %vm3348, %v11212, %v10987
  %v11229 = vsel %vm3348, %v11213, %v10989
  %v11230 = vsel %vm3413, %v11214, %v11023
  %v11231 = vsel %vm3413, %v11215, %v11025
  %v11232 = vsel %vm3413, %v11216, %v11027
  %v11233 = vsel %vm3413, %v11217, %v11029
  %v11234 = vsel %vm3413, %v11218, %v11031
  %v11235 = vsel %vm3413, %v11219, %v11033
  %v11236 = vsel %vm3413, %v11220, %v11035
  %v11237 = vsel %vm3413, %v11221, %v11037
  %v11238 = vsel %vm3413, %v11222, %v11039
  %v11239 = vsel %vm3413, %v11223, %v11041
  %v11240 = vsel %vm3413, %v11224, %v11043
  %v11241 = vsel %vm3413, %v11225, %v11045
  %v11242 = vsel %vm3413, %v11226, %v11047
  %v11243 = vsel %vm3413, %v11227, %v11049
  %v11244 = vsel %vm3413, %v11228, %v11051
  %v11245 = vsel %vm3413, %v11229, %v11053
  %v11246 = vsel %vm3478, %v11230, %v11087
  %v11247 = vsel %vm3478, %v11231, %v11089
  %v11248 = vsel %vm3478, %v11232, %v11091
  %v11249 = vsel %vm3478, %v11233, %v11093
  %v11250 = vsel %vm3478, %v11234, %v11095
  %v11251 = vsel %vm3478, %v11235, %v11097
  %v11252 = vsel %vm3478, %v11236, %v11099
  %v11253 = vsel %vm3478, %v11237, %v11101
  %v11254 = vsel %vm3478, %v11238, %v11103
  %v11255 = vsel %vm3478, %v11239, %v11105
  %v11256 = vsel %vm3478, %v11240, %v11107
  %v11257 = vsel %vm3478, %v11241, %v11109
  %v11258 = vsel %vm3478, %v11242, %v11111
  %v11259 = vsel %vm3478, %v11243, %v11113
  %v11260 = vsel %vm3478, %v11244, %v11115
  %v11261 = vsel %vm3478, %v11245, %v11117
  %v11262 = vld [vmem:[%s10] sm:$0xff]
  %v11263 = vld [vmem:[%s10 + $0x8] sm:$0xff]
  %v11264 = vld [vmem:[%s10 + $0x10] sm:$0xff]
  %v11265 = vld [vmem:[%s10 + $0x18] sm:$0xff]
  %v11266 = vld [vmem:[%s10 + $0x20] sm:$0xf]
  %v11268 = vsel %vm4355, %v11246, 0
  %v11271 = vsel %vm4355, %v11247, 0
  %v11274 = vsel %vm4355, %v11248, 0
  %v11277 = vsel %vm4355, %v11249, 0
  %v11280 = vsel %vm4355, %v11250, 0
  %v11283 = vsel %vm4355, %v11251, 0
  %v11286 = vsel %vm4355, %v11252, 0
  %v11289 = vsel %vm4355, %v11253, 0
  %v11292 = vsel %vm4355, %v11254, 0
  %v11295 = vsel %vm4355, %v11255, 0
  %v11298 = vsel %vm4355, %v11256, 0
  %v11301 = vsel %vm4355, %v11257, 0
  %v11304 = vsel %vm4355, %v11258, 0
  %v11307 = vsel %vm4355, %v11259, 0
  %v11310 = vsel %vm4355, %v11260, 0
  %v11313 = vsel %vm4355, %v11261, 0
  %v11316 = vsel %vm4404, %v11266, 0
  %11318 = vmatprep.subr.mxu0 0.0
  %11319 = vmatpush1.msra.mxu0 %v11262
  %11320 = vmatprep.subr.mxu0 0.0
  %11321 = vmatpush1.msra.mxu0 %v11263
  %11322 = vmatprep.subr.mxu0 0.0
  %11323 = vmatpush1.msra.mxu0 %v11264
  %11324 = vmatprep.subr.mxu0 0.0
  %11325 = vmatpush1.msra.mxu0 %v11265
  %11326 = vmatprep.subr.mxu0 0.0
  %11327 = vmatpush1.msra.mxu0 %v11316
  %11328 = vmatprep.subr.mxu0 0.0
  %11329 = vmatpush1.msra.mxu0 0.0
  %11330 = vmatprep.subr.mxu0 0.0
  %11331 = vmatpush1.msra.mxu0 0.0
  %11332 = vmatprep.subr.mxu0 0.0
  %11333 = vmatpush1.msra.mxu0 0.0
  %11334 = vmatprep.subr.mxu0 0.0
  %11335 = vmatpush1.msra.mxu0 0.0
  %11336 = vmatprep.subr.mxu0 0.0
  %11337 = vmatpush1.msra.mxu0 0.0
  %11338 = vmatprep.subr.mxu0 0.0
  %11339 = vmatpush1.msra.mxu0 0.0
  %11340 = vmatprep.subr.mxu0 0.0
  %11341 = vmatpush1.msra.mxu0 0.0
  %11342 = vmatprep.subr.mxu0 0.0
  %11343 = vmatpush1.msra.mxu0 0.0
  %11344 = vmatprep.subr.mxu0 0.0
  %11345 = vmatpush1.msra.mxu0 0.0
  %11346 = vmatprep.subr.mxu0 0.0
  %11347 = vmatpush1.msra.mxu0 0.0
  %11348 = vmatprep.subr.mxu0 0.0
  %11349 = vmatpush1.msra.mxu0 0.0
  %11350 = vmatprep.subr.mxu0 0.0
  %11351 = vmatpush1.msra.mxu0 0.0
  %11352 = vmatprep.subr.mxu0 0.0
  %11353 = vmatpush1.msra.mxu0 0.0
  %11354 = vmatprep.subr.mxu0 0.0
  %11355 = vmatpush1.msra.mxu0 0.0
  %11356 = vmatprep.subr.mxu0 0.0
  %11357 = vmatpush1.msra.mxu0 0.0
  %11358 = vmatprep.subr.mxu0 0.0
  %11359 = vmatpush1.msra.mxu0 0.0
  %11360 = vmatprep.subr.mxu0 0.0
  %11361 = vmatpush1.msra.mxu0 0.0
  %11362 = vmatprep.subr.mxu0 0.0
  %11363 = vmatpush1.msra.mxu0 0.0
  %11364 = vmatprep.subr.mxu0 0.0
  %11365 = vmatpush1.msra.mxu0 0.0
  %11366 = vmatprep.subr.mxu0 0.0
  %11367 = vmatpush1.msra.mxu0 0.0
  %11368 = vmatprep.subr.mxu0 0.0
  %11369 = vmatpush1.msra.mxu0 0.0
  %11370 = vmatprep.subr.mxu0 0.0
  %11371 = vmatpush1.msra.mxu0 0.0
  %11372 = vmatprep.subr.mxu0 0.0
  %11373 = vmatpush1.msra.mxu0 0.0
  %11374 = vmatprep.subr.mxu0 0.0
  %11375 = vmatpush1.msra.mxu0 0.0
  %11376 = vmatprep.subr.mxu0 0.0
  %11377 = vmatpush1.msra.mxu0 0.0
  %11378 = vmatprep.subr.mxu0 0.0
  %11379 = vmatpush1.msra.mxu0 0.0
  %11380 = vmatprep.subr.mxu0 0.0
  %11381 = vmatpush1.msra.mxu0 0.0
  %11382 = vmatprep.mubr.f32.mxu0 0.0
  %11383 = vmatmul.mubr.f32.gmra.mrb[0].mxu0 %v11268
  %v11384 = vpop.f32.mrb[0].mxu0
  %v11385 = vadd.f32 0.0, %v11384
  %v11386 = vpop.f32.mrb[0].mxu0
  %11387 = vmatprep.mubr.f32.mxu0 0.0
  %11388 = vmatmul.mubr.f32.gmra.mrb[0].mxu0 %v11271
  %v11389 = vpop.f32.mrb[0].mxu0
  %v11390 = vadd.f32 0.0, %v11389
  %v11391 = vpop.f32.mrb[0].mxu0
  %11392 = vmatprep.mubr.f32.mxu0 0.0
  %11393 = vmatmul.mubr.f32.gmra.mrb[0].mxu0 %v11274
  %v11394 = vpop.f32.mrb[0].mxu0
  %v11395 = vadd.f32 0.0, %v11394
  %v11396 = vpop.f32.mrb[0].mxu0
  %11397 = vmatprep.mubr.f32.mxu0 0.0
  %11398 = vmatmul.mubr.f32.gmra.mrb[0].mxu0 %v11277
  %v11399 = vpop.f32.mrb[0].mxu0
  %v11400 = vadd.f32 0.0, %v11399
  %v11401 = vpop.f32.mrb[0].mxu0
  %11402 = vmatprep.mubr.f32.mxu0 0.0
  %11403 = vmatmul.mubr.f32.gmra.mrb[0].mxu0 %v11280
  %v11404 = vpop.f32.mrb[0].mxu0
  %v11405 = vadd.f32 0.0, %v11404
  %v11406 = vpop.f32.mrb[0].mxu0
  %11407 = vmatprep.mubr.f32.mxu0 0.0
  %11408 = vmatmul.mubr.f32.gmra.mrb[0].mxu0 %v11283
  %v11409 = vpop.f32.mrb[0].mxu0
  %v11410 = vadd.f32 0.0, %v11409
  %v11411 = vpop.f32.mrb[0].mxu0
  %11412 = vmatprep.mubr.f32.mxu0 0.0
  %11413 = vmatmul.mubr.f32.gmra.mrb[0].mxu0 %v11286
  %v11414 = vpop.f32.mrb[0].mxu0
  %v11415 = vadd.f32 0.0, %v11414
  %v11416 = vpop.f32.mrb[0].mxu0
  %11417 = vmatprep.mubr.f32.mxu0 0.0
  %11418 = vmatmul.mubr.f32.gmra.mrb[0].mxu0 %v11289
  %v11419 = vpop.f32.mrb[0].mxu0
  %v11420 = vadd.f32 0.0, %v11419
  %v11421 = vpop.f32.mrb[0].mxu0
  %11422 = vmatprep.mubr.f32.mxu0 0.0
  %11423 = vmatmul.mubr.f32.gmra.mrb[0].mxu0 %v11292
  %v11424 = vpop.f32.mrb[0].mxu0
  %v11425 = vadd.f32 0.0, %v11424
  %v11426 = vpop.f32.mrb[0].mxu0
  %11427 = vmatprep.mubr.f32.mxu0 0.0
  %11428 = vmatmul.mubr.f32.gmra.mrb[0].mxu0 %v11295
  %v11429 = vpop.f32.mrb[0].mxu0
  %v11430 = vadd.f32 0.0, %v11429
  %v11431 = vpop.f32.mrb[0].mxu0
  %11432 = vmatprep.mubr.f32.mxu0 0.0
  %11433 = vmatmul.mubr.f32.gmra.mrb[0].mxu0 %v11298
  %v11434 = vpop.f32.mrb[0].mxu0
  %v11435 = vadd.f32 0.0, %v11434
  %v11436 = vpop.f32.mrb[0].mxu0
  %11437 = vmatprep.mubr.f32.mxu0 0.0
  %11438 = vmatmul.mubr.f32.gmra.mrb[0].mxu0 %v11301
  %v11439 = vpop.f32.mrb[0].mxu0
  %v11440 = vadd.f32 0.0, %v11439
  %v11441 = vpop.f32.mrb[0].mxu0
  %11442 = vmatprep.mubr.f32.mxu0 0.0
  %11443 = vmatmul.mubr.f32.gmra.mrb[0].mxu0 %v11304
  %v11444 = vpop.f32.mrb[0].mxu0
  %v11445 = vadd.f32 0.0, %v11444
  %v11446 = vpop.f32.mrb[0].mxu0
  %11447 = vmatprep.mubr.f32.mxu0 0.0
  %11448 = vmatmul.mubr.f32.gmra.mrb[0].mxu0 %v11307
  %v11449 = vpop.f32.mrb[0].mxu0
  %v11450 = vadd.f32 0.0, %v11449
  %v11451 = vpop.f32.mrb[0].mxu0
  %11452 = vmatprep.mubr.f32.mxu0 0.0
  %11453 = vmatmul.mubr.f32.gmra.mrb[0].mxu0 %v11310
  %v11454 = vpop.f32.mrb[0].mxu0
  %v11455 = vadd.f32 0.0, %v11454
  %v11456 = vpop.f32.mrb[0].mxu0
  %11457 = vmatprep.mubr.f32.mxu0 0.0
  %11458 = vmatmul.mubr.f32.gmra.mrb[0].mxu0 %v11313
  %v11459 = vpop.f32.mrb[0].mxu0
  %v11460 = vadd.f32 0.0, %v11459
  %v11461 = vpop.f32.mrb[0].mxu0
  %11462 = vdwg.mxu0
  %v11463 = vld [vmem:[%s2] sm:$0xff]
  %v11464 = vld [vmem:[%s2 + $0x8] sm:$0xff]
  %v11465 = vld [vmem:[%s2 + $0x10] sm:$0xff]
  %v11466 = vld [vmem:[%s2 + $0x18] sm:$0xff]
  %v11467 = vld [vmem:[%s2 + $0x20] sm:$0xff]
  %v11468 = vld [vmem:[%s2 + $0x28] sm:$0xff]
  %v11469 = vld [vmem:[%s2 + $0x30] sm:$0xff]
  %v11470 = vld [vmem:[%s2 + $0x38] sm:$0xff]
  %v11471 = vld [vmem:[%s2 + $0x40] sm:$0xff]
  %v11472 = vld [vmem:[%s2 + $0x48] sm:$0xff]
  %v11473 = vld [vmem:[%s2 + $0x50] sm:$0xff]
  %v11474 = vld [vmem:[%s2 + $0x58] sm:$0xff]
  %v11475 = vld [vmem:[%s2 + $0x60] sm:$0xff]
  %v11476 = vld [vmem:[%s2 + $0x68] sm:$0xff]
  %v11477 = vld [vmem:[%s2 + $0x70] sm:$0xff]
  %v11478 = vld [vmem:[%s2 + $0x78] sm:$0xff]
  %v11479 = vld [vmem:[%s2 + $0x80] sm:$0xff]
  %v11480 = vld [vmem:[%s2 + $0x88] sm:$0xff]
  %v11481 = vld [vmem:[%s2 + $0x90] sm:$0xff]
  %v11482 = vld [vmem:[%s2 + $0x98] sm:$0xff]
  %v11483 = vld [vmem:[%s2 + $0xa0] sm:$0xff]
  %v11484 = vld [vmem:[%s2 + $0xa8] sm:$0xff]
  %v11485 = vld [vmem:[%s2 + $0xb0] sm:$0xff]
  %v11486 = vld [vmem:[%s2 + $0xb8] sm:$0xff]
  %v11487 = vld [vmem:[%s2 + $0xc0] sm:$0xff]
  %v11488 = vld [vmem:[%s2 + $0xc8] sm:$0xff]
  %v11489 = vld [vmem:[%s2 + $0xd0] sm:$0xff]
  %v11490 = vld [vmem:[%s2 + $0xd8] sm:$0xff]
  %v11491 = vld [vmem:[%s2 + $0xe0] sm:$0xff]
  %v11492 = vld [vmem:[%s2 + $0xe8] sm:$0xff]
  %v11493 = vld [vmem:[%s2 + $0xf0] sm:$0xff]
  %v11494 = vld [vmem:[%s2 + $0xf8] sm:$0xff]
  %v11495 = vld [vmem:[%s2 + $0x100] sm:$0xff]
  %v11496 = vld [vmem:[%s2 + $0x108] sm:$0xff]
  %v11497 = vld [vmem:[%s2 + $0x110] sm:$0xff]
  %v11498 = vld [vmem:[%s2 + $0x118] sm:$0xff]
  %v11499 = vld [vmem:[%s2 + $0x120] sm:$0xff]
  %v11500 = vld [vmem:[%s2 + $0x128] sm:$0xff]
  %v11501 = vld [vmem:[%s2 + $0x130] sm:$0xff]
  %v11502 = vld [vmem:[%s2 + $0x138] sm:$0xff]
  %v11503 = vld [vmem:[%s2 + $0x140] sm:$0xff]
  %v11504 = vld [vmem:[%s2 + $0x148] sm:$0xff]
  %v11505 = vld [vmem:[%s2 + $0x150] sm:$0xff]
  %v11506 = vld [vmem:[%s2 + $0x158] sm:$0xff]
  %v11507 = vld [vmem:[%s2 + $0x160] sm:$0xff]
  %v11508 = vld [vmem:[%s2 + $0x168] sm:$0xff]
  %v11509 = vld [vmem:[%s2 + $0x170] sm:$0xff]
  %v11510 = vld [vmem:[%s2 + $0x178] sm:$0xff]
  %v11511 = vld [vmem:[%s2 + $0x180] sm:$0xff]
  %v11512 = vld [vmem:[%s2 + $0x188] sm:$0xff]
  %v11513 = vld [vmem:[%s2 + $0x190] sm:$0xff]
  %v11514 = vld [vmem:[%s2 + $0x198] sm:$0xff]
  %v11515 = vld [vmem:[%s2 + $0x1a0] sm:$0xff]
  %v11516 = vld [vmem:[%s2 + $0x1a8] sm:$0xff]
  %v11517 = vld [vmem:[%s2 + $0x1b0] sm:$0xff]
  %v11518 = vld [vmem:[%s2 + $0x1b8] sm:$0xff]
  %v11519 = vld [vmem:[%s2 + $0x1c0] sm:$0xff]
  %v11520 = vld [vmem:[%s2 + $0x1c8] sm:$0xff]
  %v11521 = vld [vmem:[%s2 + $0x1d0] sm:$0xff]
  %v11522 = vld [vmem:[%s2 + $0x1d8] sm:$0xff]
  %v11523 = vld [vmem:[%s2 + $0x1e0] sm:$0xff]
  %v11524 = vld [vmem:[%s2 + $0x1e8] sm:$0xff]
  %v11525 = vld [vmem:[%s2 + $0x1f0] sm:$0xff]
  %v11526 = vld [vmem:[%s2 + $0x1f8] sm:$0xff]
  %11527 = vmatprep.subr.mxu0 0.0
  %11528 = vmatpush1.msra.mxu0 %v7088
  %11529 = vmatprep.subr.mxu0 0.0
  %11530 = vmatpush1.msra.mxu0 %v7089
  %11531 = vmatprep.subr.mxu0 0.0
  %11532 = vmatpush1.msra.mxu0 %v7090
  %11533 = vmatprep.subr.mxu0 0.0
  %11534 = vmatpush1.msra.mxu0 %v7091
  %11535 = vmatprep.subr.mxu0 0.0
  %11536 = vmatpush1.msra.mxu0 %v7092
  %11537 = vmatprep.subr.mxu0 0.0
  %11538 = vmatpush1.msra.mxu0 %v7093
  %11539 = vmatprep.subr.mxu0 0.0
  %11540 = vmatpush1.msra.mxu0 %v7094
  %11541 = vmatprep.subr.mxu0 0.0
  %11542 = vmatpush1.msra.mxu0 %v7095
  %11543 = vmatprep.subr.mxu0 0.0
  %11544 = vmatpush1.msra.mxu0 %v7096
  %11545 = vmatprep.subr.mxu0 0.0
  %11546 = vmatpush1.msra.mxu0 %v7097
  %11547 = vmatprep.subr.mxu0 0.0
  %11548 = vmatpush1.msra.mxu0 %v7098
  %11549 = vmatprep.subr.mxu0 0.0
  %11550 = vmatpush1.msra.mxu0 %v7099
  %11551 = vmatprep.subr.mxu0 0.0
  %11552 = vmatpush1.msra.mxu0 %v7100
  %11553 = vmatprep.subr.mxu0 0.0
  %11554 = vmatpush1.msra.mxu0 %v7101
  %11555 = vmatprep.subr.mxu0 0.0
  %11556 = vmatpush1.msra.mxu0 %v7102
  %11557 = vmatprep.subr.mxu0 0.0
  %11558 = vmatpush1.msra.mxu0 %v7103
  %11559 = vmatprep.subr.mxu0 0.0
  %11560 = vmatpush1.msra.mxu0 %v7104
  %11561 = vmatprep.subr.mxu0 0.0
  %11562 = vmatpush1.msra.mxu0 %v7105
  %11563 = vmatprep.subr.mxu0 0.0
  %11564 = vmatpush1.msra.mxu0 %v7106
  %11565 = vmatprep.subr.mxu0 0.0
  %11566 = vmatpush1.msra.mxu0 %v7107
  %11567 = vmatprep.subr.mxu0 0.0
  %11568 = vmatpush1.msra.mxu0 %v7108
  %11569 = vmatprep.subr.mxu0 0.0
  %11570 = vmatpush1.msra.mxu0 %v7109
  %11571 = vmatprep.subr.mxu0 0.0
  %11572 = vmatpush1.msra.mxu0 %v7110
  %11573 = vmatprep.subr.mxu0 0.0
  %11574 = vmatpush1.msra.mxu0 %v7111
  %11575 = vmatprep.subr.mxu0 0.0
  %11576 = vmatpush1.msra.mxu0 %v7112
  %11577 = vmatprep.subr.mxu0 0.0
  %11578 = vmatpush1.msra.mxu0 %v7113
  %11579 = vmatprep.subr.mxu0 0.0
  %11580 = vmatpush1.msra.mxu0 %v7114
  %11581 = vmatprep.subr.mxu0 0.0
  %11582 = vmatpush1.msra.mxu0 %v7115
  %11583 = vmatprep.subr.mxu0 0.0
  %11584 = vmatpush1.msra.mxu0 %v7116
  %11585 = vmatprep.subr.mxu0 0.0
  %11586 = vmatpush1.msra.mxu0 %v7117
  %11587 = vmatprep.subr.mxu0 0.0
  %11588 = vmatpush1.msra.mxu0 %v7118
  %11589 = vmatprep.subr.mxu0 0.0
  %11590 = vmatpush1.msra.mxu0 %v7119
  %11591 = vmatprep.mubr.f32.mxu0 %v11464
  %11592 = vmatmul.mubr.f32.gmra.mrb[0].mxu0 %v11463
  %v11593 = vpop.f32.mrb[0].mxu0
  %v11594 = vadd.f32 0.0, %v11593
  %v11595 = vpop.f32.mrb[0].mxu0
  %11596 = vmatprep.mubr.f32.mxu0 %v11468
  %11597 = vmatmul.mubr.f32.gmra.mrb[0].mxu0 %v11467
  %v11598 = vpop.f32.mrb[0].mxu0
  %v11599 = vadd.f32 0.0, %v11598
  %v11600 = vpop.f32.mrb[0].mxu0
  %11601 = vmatprep.mubr.f32.mxu0 %v11472
  %11602 = vmatmul.mubr.f32.gmra.mrb[0].mxu0 %v11471
  %v11603 = vpop.f32.mrb[0].mxu0
  %v11604 = vadd.f32 0.0, %v11603
  %v11605 = vpop.f32.mrb[0].mxu0
  %11606 = vmatprep.mubr.f32.mxu0 %v11476
  %11607 = vmatmul.mubr.f32.gmra.mrb[0].mxu0 %v11475
  %v11608 = vpop.f32.mrb[0].mxu0
  %v11609 = vadd.f32 0.0, %v11608
  %v11610 = vpop.f32.mrb[0].mxu0
  %11611 = vmatprep.mubr.f32.mxu0 %v11480
  %11612 = vmatmul.mubr.f32.gmra.mrb[0].mxu0 %v11479
  %v11613 = vpop.f32.mrb[0].mxu0
  %v11614 = vadd.f32 0.0, %v11613
  %v11615 = vpop.f32.mrb[0].mxu0
  %11616 = vmatprep.mubr.f32.mxu0 %v11484
  %11617 = vmatmul.mubr.f32.gmra.mrb[0].mxu0 %v11483
  %v11618 = vpop.f32.mrb[0].mxu0
  %v11619 = vadd.f32 0.0, %v11618
  %v11620 = vpop.f32.mrb[0].mxu0
  %11621 = vmatprep.mubr.f32.mxu0 %v11488
  %11622 = vmatmul.mubr.f32.gmra.mrb[0].mxu0 %v11487
  %v11623 = vpop.f32.mrb[0].mxu0
  %v11624 = vadd.f32 0.0, %v11623
  %v11625 = vpop.f32.mrb[0].mxu0
  %11626 = vmatprep.mubr.f32.mxu0 %v11492
  %11627 = vmatmul.mubr.f32.gmra.mrb[0].mxu0 %v11491
  %v11628 = vpop.f32.mrb[0].mxu0
  %v11629 = vadd.f32 0.0, %v11628
  %v11630 = vpop.f32.mrb[0].mxu0
  %11631 = vmatprep.mubr.f32.mxu0 %v11496
  %11632 = vmatmul.mubr.f32.gmra.mrb[0].mxu0 %v11495
  %v11633 = vpop.f32.mrb[0].mxu0
  %v11634 = vadd.f32 0.0, %v11633
  %v11635 = vpop.f32.mrb[0].mxu0
  %11636 = vmatprep.mubr.f32.mxu0 %v11500
  %11637 = vmatmul.mubr.f32.gmra.mrb[0].mxu0 %v11499
  %v11638 = vpop.f32.mrb[0].mxu0
  %v11639 = vadd.f32 0.0, %v11638
  %v11640 = vpop.f32.mrb[0].mxu0
  %11641 = vmatprep.mubr.f32.mxu0 %v11504
  %11642 = vmatmul.mubr.f32.gmra.mrb[0].mxu0 %v11503
  %v11643 = vpop.f32.mrb[0].mxu0
  %v11644 = vadd.f32 0.0, %v11643
  %v11645 = vpop.f32.mrb[0].mxu0
  %11646 = vmatprep.mubr.f32.mxu0 %v11508
  %11647 = vmatmul.mubr.f32.gmra.mrb[0].mxu0 %v11507
  %v11648 = vpop.f32.mrb[0].mxu0
  %v11649 = vadd.f32 0.0, %v11648
  %v11650 = vpop.f32.mrb[0].mxu0
  %11651 = vmatprep.mubr.f32.mxu0 %v11512
  %11652 = vmatmul.mubr.f32.gmra.mrb[0].mxu0 %v11511
  %v11653 = vpop.f32.mrb[0].mxu0
  %v11654 = vadd.f32 0.0, %v11653
  %v11655 = vpop.f32.mrb[0].mxu0
  %11656 = vmatprep.mubr.f32.mxu0 %v11516
  %11657 = vmatmul.mubr.f32.gmra.mrb[0].mxu0 %v11515
  %v11658 = vpop.f32.mrb[0].mxu0
  %v11659 = vadd.f32 0.0, %v11658
  %v11660 = vpop.f32.mrb[0].mxu0
  %11661 = vmatprep.mubr.f32.mxu0 %v11520
  %11662 = vmatmul.mubr.f32.gmra.mrb[0].mxu0 %v11519
  %v11663 = vpop.f32.mrb[0].mxu0
  %v11664 = vadd.f32 0.0, %v11663
  %v11665 = vpop.f32.mrb[0].mxu0
  %11666 = vmatprep.mubr.f32.mxu0 %v11524
  %11667 = vmatmul.mubr.f32.gmra.mrb[0].mxu0 %v11523
  %v11668 = vpop.f32.mrb[0].mxu0
  %v11669 = vadd.f32 0.0, %v11668
  %v11670 = vpop.f32.mrb[0].mxu0
  %11671 = vdwg.mxu0
  %11672 = vmatprep.subr.mxu0 0.0
  %11673 = vmatpush1.msra.mxu0 %v7120
  %11674 = vmatprep.subr.mxu0 0.0
  %11675 = vmatpush1.msra.mxu0 %v7121
  %11676 = vmatprep.subr.mxu0 0.0
  %11677 = vmatpush1.msra.mxu0 %v7122
  %11678 = vmatprep.subr.mxu0 0.0
  %11679 = vmatpush1.msra.mxu0 %v7123
  %11680 = vmatprep.subr.mxu0 0.0
  %11681 = vmatpush1.msra.mxu0 %v7124
  %11682 = vmatprep.subr.mxu0 0.0
  %11683 = vmatpush1.msra.mxu0 %v7125
  %11684 = vmatprep.subr.mxu0 0.0
  %11685 = vmatpush1.msra.mxu0 %v7126
  %11686 = vmatprep.subr.mxu0 0.0
  %11687 = vmatpush1.msra.mxu0 %v7127
  %11688 = vmatprep.subr.mxu0 0.0
  %11689 = vmatpush1.msra.mxu0 %v7128
  %11690 = vmatprep.subr.mxu0 0.0
  %11691 = vmatpush1.msra.mxu0 %v7129
  %11692 = vmatprep.subr.mxu0 0.0
  %11693 = vmatpush1.msra.mxu0 %v7130
  %11694 = vmatprep.subr.mxu0 0.0
  %11695 = vmatpush1.msra.mxu0 %v7131
  %11696 = vmatprep.subr.mxu0 0.0
  %11697 = vmatpush1.msra.mxu0 %v7132
  %11698 = vmatprep.subr.mxu0 0.0
  %11699 = vmatpush1.msra.mxu0 %v7133
  %11700 = vmatprep.subr.mxu0 0.0
  %11701 = vmatpush1.msra.mxu0 %v7134
  %11702 = vmatprep.subr.mxu0 0.0
  %11703 = vmatpush1.msra.mxu0 %v7135
  %11704 = vmatprep.subr.mxu0 0.0
  %11705 = vmatpush1.msra.mxu0 %v7136
  %11706 = vmatprep.subr.mxu0 0.0
  %11707 = vmatpush1.msra.mxu0 %v7137
  %11708 = vmatprep.subr.mxu0 0.0
  %11709 = vmatpush1.msra.mxu0 %v7138
  %11710 = vmatprep.subr.mxu0 0.0
  %11711 = vmatpush1.msra.mxu0 %v7139
  %11712 = vmatprep.subr.mxu0 0.0
  %11713 = vmatpush1.msra.mxu0 %v7140
  %11714 = vmatprep.subr.mxu0 0.0
  %11715 = vmatpush1.msra.mxu0 %v7141
  %11716 = vmatprep.subr.mxu0 0.0
  %11717 = vmatpush1.msra.mxu0 %v7142
  %11718 = vmatprep.subr.mxu0 0.0
  %11719 = vmatpush1.msra.mxu0 %v7143
  %11720 = vmatprep.subr.mxu0 0.0
  %11721 = vmatpush1.msra.mxu0 %v7144
  %11722 = vmatprep.subr.mxu0 0.0
  %11723 = vmatpush1.msra.mxu0 %v7145
  %11724 = vmatprep.subr.mxu0 0.0
  %11725 = vmatpush1.msra.mxu0 %v7146
  %11726 = vmatprep.subr.mxu0 0.0
  %11727 = vmatpush1.msra.mxu0 %v7147
  %11728 = vmatprep.subr.mxu0 0.0
  %11729 = vmatpush1.msra.mxu0 %v7148
  %11730 = vmatprep.subr.mxu0 0.0
  %11731 = vmatpush1.msra.mxu0 %v7149
  %11732 = vmatprep.subr.mxu0 0.0
  %11733 = vmatpush1.msra.mxu0 %v7150
  %11734 = vmatprep.subr.mxu0 0.0
  %11735 = vmatpush1.msra.mxu0 %v7151
  %11736 = vmatprep.mubr.f32.mxu0 %v11466
  %11737 = vmatmul.mubr.f32.gmra.mrb[0].mxu0 %v11465
  %v11738 = vpop.f32.mrb[0].mxu0
  %v11739 = vadd.f32 %v11594, %v11738
  %v11740 = vpop.f32.mrb[0].mxu0
  %11741 = vmatprep.mubr.f32.mxu0 %v11470
  %11742 = vmatmul.mubr.f32.gmra.mrb[0].mxu0 %v11469
  %v11743 = vpop.f32.mrb[0].mxu0
  %v11744 = vadd.f32 %v11599, %v11743
  %v11745 = vpop.f32.mrb[0].mxu0
  %11746 = vmatprep.mubr.f32.mxu0 %v11474
  %11747 = vmatmul.mubr.f32.gmra.mrb[0].mxu0 %v11473
  %v11748 = vpop.f32.mrb[0].mxu0
  %v11749 = vadd.f32 %v11604, %v11748
  %v11750 = vpop.f32.mrb[0].mxu0
  %11751 = vmatprep.mubr.f32.mxu0 %v11478
  %11752 = vmatmul.mubr.f32.gmra.mrb[0].mxu0 %v11477
  %v11753 = vpop.f32.mrb[0].mxu0
  %v11754 = vadd.f32 %v11609, %v11753
  %v11755 = vpop.f32.mrb[0].mxu0
  %11756 = vmatprep.mubr.f32.mxu0 %v11482
  %11757 = vmatmul.mubr.f32.gmra.mrb[0].mxu0 %v11481
  %v11758 = vpop.f32.mrb[0].mxu0
  %v11759 = vadd.f32 %v11614, %v11758
  %v11760 = vpop.f32.mrb[0].mxu0
  %11761 = vmatprep.mubr.f32.mxu0 %v11486
  %11762 = vmatmul.mubr.f32.gmra.mrb[0].mxu0 %v11485
  %v11763 = vpop.f32.mrb[0].mxu0
  %v11764 = vadd.f32 %v11619, %v11763
  %v11765 = vpop.f32.mrb[0].mxu0
  %11766 = vmatprep.mubr.f32.mxu0 %v11490
  %11767 = vmatmul.mubr.f32.gmra.mrb[0].mxu0 %v11489
  %v11768 = vpop.f32.mrb[0].mxu0
  %v11769 = vadd.f32 %v11624, %v11768
  %v11770 = vpop.f32.mrb[0].mxu0
  %11771 = vmatprep.mubr.f32.mxu0 %v11494
  %11772 = vmatmul.mubr.f32.gmra.mrb[0].mxu0 %v11493
  %v11773 = vpop.f32.mrb[0].mxu0
  %v11774 = vadd.f32 %v11629, %v11773
  %v11775 = vpop.f32.mrb[0].mxu0
  %11776 = vmatprep.mubr.f32.mxu0 %v11498
  %11777 = vmatmul.mubr.f32.gmra.mrb[0].mxu0 %v11497
  %v11778 = vpop.f32.mrb[0].mxu0
  %v11779 = vadd.f32 %v11634, %v11778
  %v11780 = vpop.f32.mrb[0].mxu0
  %11781 = vmatprep.mubr.f32.mxu0 %v11502
  %11782 = vmatmul.mubr.f32.gmra.mrb[0].mxu0 %v11501
  %v11783 = vpop.f32.mrb[0].mxu0
  %v11784 = vadd.f32 %v11639, %v11783
  %v11785 = vpop.f32.mrb[0].mxu0
  %11786 = vmatprep.mubr.f32.mxu0 %v11506
  %11787 = vmatmul.mubr.f32.gmra.mrb[0].mxu0 %v11505
  %v11788 = vpop.f32.mrb[0].mxu0
  %v11789 = vadd.f32 %v11644, %v11788
  %v11790 = vpop.f32.mrb[0].mxu0
  %11791 = vmatprep.mubr.f32.mxu0 %v11510
  %11792 = vmatmul.mubr.f32.gmra.mrb[0].mxu0 %v11509
  %v11793 = vpop.f32.mrb[0].mxu0
  %v11794 = vadd.f32 %v11649, %v11793
  %v11795 = vpop.f32.mrb[0].mxu0
  %11796 = vmatprep.mubr.f32.mxu0 %v11514
  %11797 = vmatmul.mubr.f32.gmra.mrb[0].mxu0 %v11513
  %v11798 = vpop.f32.mrb[0].mxu0
  %v11799 = vadd.f32 %v11654, %v11798
  %v11800 = vpop.f32.mrb[0].mxu0
  %11801 = vmatprep.mubr.f32.mxu0 %v11518
  %11802 = vmatmul.mubr.f32.gmra.mrb[0].mxu0 %v11517
  %v11803 = vpop.f32.mrb[0].mxu0
  %v11804 = vadd.f32 %v11659, %v11803
  %v11805 = vpop.f32.mrb[0].mxu0
  %11806 = vmatprep.mubr.f32.mxu0 %v11522
  %11807 = vmatmul.mubr.f32.gmra.mrb[0].mxu0 %v11521
  %v11808 = vpop.f32.mrb[0].mxu0
  %v11809 = vadd.f32 %v11664, %v11808
  %v11810 = vpop.f32.mrb[0].mxu0
  %11811 = vmatprep.mubr.f32.mxu0 %v11526
  %11812 = vmatmul.mubr.f32.gmra.mrb[0].mxu0 %v11525
  %v11813 = vpop.f32.mrb[0].mxu0
  %v11814 = vadd.f32 %v11669, %v11813
  %v11815 = vpop.f32.mrb[0].mxu0
  %11816 = vdwg.mxu0
  %11817 = vst.msk [vmem:[%s3548 + $0x8] sm:$0xff] %vm49, %v11739
  %11818 = vst.msk [vmem:[%s3548 + $0x20] sm:$0xff] %vm49, %v11744
  %11819 = vst.msk [vmem:[%s3548 + $0x38] sm:$0xff] %vm49, %v11749
  %11820 = vst.msk [vmem:[%s3548 + $0x50] sm:$0xff] %vm49, %v11754
  %11821 = vst.msk [vmem:[%s3548 + $0x68] sm:$0xff] %vm49, %v11759
  %11822 = vst.msk [vmem:[%s3548 + $0x80] sm:$0xff] %vm49, %v11764
  %11823 = vst.msk [vmem:[%s3548 + $0x98] sm:$0xff] %vm49, %v11769
  %11824 = vst.msk [vmem:[%s3548 + $0xb0] sm:$0xff] %vm49, %v11774
  %11825 = vst.msk [vmem:[%s3548 + $0xf8] sm:$0xff] %vm49, %v11779
  %11826 = vst.msk [vmem:[%s3548 + $0x110] sm:$0xff] %vm49, %v11784
  %11827 = vst.msk [vmem:[%s3548 + $0x128] sm:$0xff] %vm49, %v11789
  %11828 = vst.msk [vmem:[%s3548 + $0x140] sm:$0xff] %vm49, %v11794
  %11829 = vst.msk [vmem:[%s3548 + $0x158] sm:$0xff] %vm49, %v11799
  %11830 = vst.msk [vmem:[%s3548 + $0x170] sm:$0xff] %vm49, %v11804
  %11831 = vst.msk [vmem:[%s3548 + $0x188] sm:$0xff] %vm49, %v11809
  %11832 = vst.msk [vmem:[%s3548 + $0x1a0] sm:$0xff] %vm49, %v11814
  %v11833 = vld [vmem:[#allocation3 + $0x7] sm:$0xff]
  %v11834 = vld [vmem:[#allocation3 + $0x1f] sm:$0xff]
  %v11835 = vld [vmem:[#allocation3 + $0x37] sm:$0xff]
  %v11836 = vld [vmem:[#allocation3 + $0x4f] sm:$0xff]
  %v11837 = vld [vmem:[#allocation3 + $0x67] sm:$0xff]
  %v11838 = vld [vmem:[#allocation3 + $0x7f] sm:$0xff]
  %v11839 = vld [vmem:[#allocation3 + $0x97] sm:$0xff]
  %v11840 = vld [vmem:[#allocation3 + $0xaf] sm:$0xff]
  %v11841 = vld [vmem:[#allocation3 + $0xf7] sm:$0xff]
  %v11842 = vld [vmem:[#allocation3 + $0x10f] sm:$0xff]
  %v11843 = vld [vmem:[#allocation3 + $0x127] sm:$0xff]
  %v11844 = vld [vmem:[#allocation3 + $0x13f] sm:$0xff]
  %v11845 = vld [vmem:[#allocation3 + $0x157] sm:$0xff]
  %v11846 = vld [vmem:[#allocation3 + $0x16f] sm:$0xff]
  %v11847 = vld [vmem:[#allocation3 + $0x187] sm:$0xff]
  %v11848 = vld [vmem:[#allocation3 + $0x19f] sm:$0xff]
  %v11849 = vld [vmem:[#allocation3 + $0x8] sm:$0xff]
  %v11850 = vld [vmem:[#allocation3 + $0x20] sm:$0xff]
  %v11851 = vld [vmem:[#allocation3 + $0x38] sm:$0xff]
  %v11852 = vld [vmem:[#allocation3 + $0x50] sm:$0xff]
  %v11853 = vld [vmem:[#allocation3 + $0x68] sm:$0xff]
  %v11854 = vld [vmem:[#allocation3 + $0x80] sm:$0xff]
  %v11855 = vld [vmem:[#allocation3 + $0x98] sm:$0xff]
  %v11856 = vld [vmem:[#allocation3 + $0xb0] sm:$0xff]
  %v11857 = vld [vmem:[#allocation3 + $0xf8] sm:$0xff]
  %v11858 = vld [vmem:[#allocation3 + $0x110] sm:$0xff]
  %v11859 = vld [vmem:[#allocation3 + $0x128] sm:$0xff]
  %v11860 = vld [vmem:[#allocation3 + $0x140] sm:$0xff]
  %v11861 = vld [vmem:[#allocation3 + $0x158] sm:$0xff]
  %v11862 = vld [vmem:[#allocation3 + $0x170] sm:$0xff]
  %v11863 = vld [vmem:[#allocation3 + $0x188] sm:$0xff]
  %v11864 = vld [vmem:[#allocation3 + $0x1a0] sm:$0xff]
  %v11865 = vld [vmem:[#allocation3 + $0x9] sm:$0xff]
  %v11866 = vld [vmem:[#allocation3 + $0x21] sm:$0xff]
  %v11867 = vld [vmem:[#allocation3 + $0x39] sm:$0xff]
  %v11868 = vld [vmem:[#allocation3 + $0x51] sm:$0xff]
  %v11869 = vld [vmem:[#allocation3 + $0x69] sm:$0xff]
  %v11870 = vld [vmem:[#allocation3 + $0x81] sm:$0xff]
  %v11871 = vld [vmem:[#allocation3 + $0x99] sm:$0xff]
  %v11872 = vld [vmem:[#allocation3 + $0xb1] sm:$0xff]
  %v11873 = vld [vmem:[#allocation3 + $0xf9] sm:$0xff]
  %v11874 = vld [vmem:[#allocation3 + $0x111] sm:$0xff]
  %v11875 = vld [vmem:[#allocation3 + $0x129] sm:$0xff]
  %v11876 = vld [vmem:[#allocation3 + $0x141] sm:$0xff]
  %v11877 = vld [vmem:[#allocation3 + $0x159] sm:$0xff]
  %v11878 = vld [vmem:[#allocation3 + $0x171] sm:$0xff]
  %v11879 = vld [vmem:[#allocation3 + $0x189] sm:$0xff]
  %v11880 = vld [vmem:[#allocation3 + $0x1a1] sm:$0xff]
  %v11881 = vld [vmem:[%s3548 + $0x7] sm:$0xff]
  %v11882 = vld [vmem:[%s3548 + $0x1f] sm:$0xff]
  %v11883 = vld [vmem:[%s3548 + $0x37] sm:$0xff]
  %v11884 = vld [vmem:[%s3548 + $0x4f] sm:$0xff]
  %v11885 = vld [vmem:[%s3548 + $0x67] sm:$0xff]
  %v11886 = vld [vmem:[%s3548 + $0x7f] sm:$0xff]
  %v11887 = vld [vmem:[%s3548 + $0x97] sm:$0xff]
  %v11888 = vld [vmem:[%s3548 + $0xaf] sm:$0xff]
  %v11889 = vld [vmem:[%s3548 + $0xf7] sm:$0xff]
  %v11890 = vld [vmem:[%s3548 + $0x10f] sm:$0xff]
  %v11891 = vld [vmem:[%s3548 + $0x127] sm:$0xff]
  %v11892 = vld [vmem:[%s3548 + $0x13f] sm:$0xff]
  %v11893 = vld [vmem:[%s3548 + $0x157] sm:$0xff]
  %v11894 = vld [vmem:[%s3548 + $0x16f] sm:$0xff]
  %v11895 = vld [vmem:[%s3548 + $0x187] sm:$0xff]
  %v11896 = vld [vmem:[%s3548 + $0x19f] sm:$0xff]
  %v11897 = vld [vmem:[%s3548 + $0x8] sm:$0xff]
  %v11898 = vld [vmem:[%s3548 + $0x20] sm:$0xff]
  %v11899 = vld [vmem:[%s3548 + $0x38] sm:$0xff]
  %v11900 = vld [vmem:[%s3548 + $0x50] sm:$0xff]
  %v11901 = vld [vmem:[%s3548 + $0x68] sm:$0xff]
  %v11902 = vld [vmem:[%s3548 + $0x80] sm:$0xff]
  %v11903 = vld [vmem:[%s3548 + $0x98] sm:$0xff]
  %v11904 = vld [vmem:[%s3548 + $0xb0] sm:$0xff]
  %v11905 = vld [vmem:[%s3548 + $0xf8] sm:$0xff]
  %v11906 = vld [vmem:[%s3548 + $0x110] sm:$0xff]
  %v11907 = vld [vmem:[%s3548 + $0x128] sm:$0xff]
  %v11908 = vld [vmem:[%s3548 + $0x140] sm:$0xff]
  %v11909 = vld [vmem:[%s3548 + $0x158] sm:$0xff]
  %v11910 = vld [vmem:[%s3548 + $0x170] sm:$0xff]
  %v11911 = vld [vmem:[%s3548 + $0x188] sm:$0xff]
  %v11912 = vld [vmem:[%s3548 + $0x1a0] sm:$0xff]
  %v11913 = vld [vmem:[%s3548 + $0x9] sm:$0xff]
  %v11914 = vld [vmem:[%s3548 + $0x21] sm:$0xff]
  %v11915 = vld [vmem:[%s3548 + $0x39] sm:$0xff]
  %v11916 = vld [vmem:[%s3548 + $0x51] sm:$0xff]
  %v11917 = vld [vmem:[%s3548 + $0x69] sm:$0xff]
  %v11918 = vld [vmem:[%s3548 + $0x81] sm:$0xff]
  %v11919 = vld [vmem:[%s3548 + $0x99] sm:$0xff]
  %v11920 = vld [vmem:[%s3548 + $0xb1] sm:$0xff]
  %v11921 = vld [vmem:[%s3548 + $0xf9] sm:$0xff]
  %v11922 = vld [vmem:[%s3548 + $0x111] sm:$0xff]
  %v11923 = vld [vmem:[%s3548 + $0x129] sm:$0xff]
  %v11924 = vld [vmem:[%s3548 + $0x141] sm:$0xff]
  %v11925 = vld [vmem:[%s3548 + $0x159] sm:$0xff]
  %v11926 = vld [vmem:[%s3548 + $0x171] sm:$0xff]
  %v11927 = vld [vmem:[%s3548 + $0x189] sm:$0xff]
  %v11928 = vld [vmem:[%s3548 + $0x1a1] sm:$0xff]
  %v11929 = vld [vmem:[%s3661 + $0x7] sm:$0xff]
  %v11930 = vld [vmem:[%s3661 + $0x1f] sm:$0xff]
  %v11931 = vld [vmem:[%s3661 + $0x37] sm:$0xff]
  %v11932 = vld [vmem:[%s3661 + $0x4f] sm:$0xff]
  %v11933 = vld [vmem:[%s3661 + $0x67] sm:$0xff]
  %v11934 = vld [vmem:[%s3661 + $0x7f] sm:$0xff]
  %v11935 = vld [vmem:[%s3661 + $0x97] sm:$0xff]
  %v11936 = vld [vmem:[%s3661 + $0xaf] sm:$0xff]
  %v11937 = vld [vmem:[%s3661 + $0xf7] sm:$0xff]
  %v11938 = vld [vmem:[%s3661 + $0x10f] sm:$0xff]
  %v11939 = vld [vmem:[%s3661 + $0x127] sm:$0xff]
  %v11940 = vld [vmem:[%s3661 + $0x13f] sm:$0xff]
  %v11941 = vld [vmem:[%s3661 + $0x157] sm:$0xff]
  %v11942 = vld [vmem:[%s3661 + $0x16f] sm:$0xff]
  %v11943 = vld [vmem:[%s3661 + $0x187] sm:$0xff]
  %v11944 = vld [vmem:[%s3661 + $0x19f] sm:$0xff]
  %v11945 = vld [vmem:[%s3661 + $0x8] sm:$0xff]
  %v11946 = vld [vmem:[%s3661 + $0x20] sm:$0xff]
  %v11947 = vld [vmem:[%s3661 + $0x38] sm:$0xff]
  %v11948 = vld [vmem:[%s3661 + $0x50] sm:$0xff]
  %v11949 = vld [vmem:[%s3661 + $0x68] sm:$0xff]
  %v11950 = vld [vmem:[%s3661 + $0x80] sm:$0xff]
  %v11951 = vld [vmem:[%s3661 + $0x98] sm:$0xff]
  %v11952 = vld [vmem:[%s3661 + $0xb0] sm:$0xff]
  %v11953 = vld [vmem:[%s3661 + $0xf8] sm:$0xff]
  %v11954 = vld [vmem:[%s3661 + $0x110] sm:$0xff]
  %v11955 = vld [vmem:[%s3661 + $0x128] sm:$0xff]
  %v11956 = vld [vmem:[%s3661 + $0x140] sm:$0xff]
  %v11957 = vld [vmem:[%s3661 + $0x158] sm:$0xff]
  %v11958 = vld [vmem:[%s3661 + $0x170] sm:$0xff]
  %v11959 = vld [vmem:[%s3661 + $0x188] sm:$0xff]
  %v11960 = vld [vmem:[%s3661 + $0x1a0] sm:$0xff]
  %v11961 = vld [vmem:[%s3661 + $0x9] sm:$0xff]
  %v11962 = vld [vmem:[%s3661 + $0x21] sm:$0xff]
  %v11963 = vld [vmem:[%s3661 + $0x39] sm:$0xff]
  %v11964 = vld [vmem:[%s3661 + $0x51] sm:$0xff]
  %v11965 = vld [vmem:[%s3661 + $0x69] sm:$0xff]
  %v11966 = vld [vmem:[%s3661 + $0x81] sm:$0xff]
  %v11967 = vld [vmem:[%s3661 + $0x99] sm:$0xff]
  %v11968 = vld [vmem:[%s3661 + $0xb1] sm:$0xff]
  %v11969 = vld [vmem:[%s3661 + $0xf9] sm:$0xff]
  %v11970 = vld [vmem:[%s3661 + $0x111] sm:$0xff]
  %v11971 = vld [vmem:[%s3661 + $0x129] sm:$0xff]
  %v11972 = vld [vmem:[%s3661 + $0x141] sm:$0xff]
  %v11973 = vld [vmem:[%s3661 + $0x159] sm:$0xff]
  %v11974 = vld [vmem:[%s3661 + $0x171] sm:$0xff]
  %v11975 = vld [vmem:[%s3661 + $0x189] sm:$0xff]
  %v11976 = vld [vmem:[%s3661 + $0x1a1] sm:$0xff]
  %11993 = vrot.lane.b32.xlu0 %v11849, 4
  %v11994 = vpop.permute.xlu0 %11993
  %11995 = vrot.lane.b32.xlu0 %v11850, 4
  %v11996 = vpop.permute.xlu0 %11995
  %11997 = vrot.lane.b32.xlu0 %v11851, 4
  %v11998 = vpop.permute.xlu0 %11997
  %11999 = vrot.lane.b32.xlu0 %v11852, 4
  %v12000 = vpop.permute.xlu0 %11999
  %12001 = vrot.lane.b32.xlu0 %v11853, 4
  %v12002 = vpop.permute.xlu0 %12001
  %12003 = vrot.lane.b32.xlu0 %v11854, 4
  %v12004 = vpop.permute.xlu0 %12003
  %12005 = vrot.lane.b32.xlu0 %v11855, 4
  %v12006 = vpop.permute.xlu0 %12005
  %12007 = vrot.lane.b32.xlu0 %v11856, 4
  %v12008 = vpop.permute.xlu0 %12007
  %12009 = vrot.lane.b32.xlu0 %v11857, 4
  %v12010 = vpop.permute.xlu0 %12009
  %12011 = vrot.lane.b32.xlu0 %v11858, 4
  %v12012 = vpop.permute.xlu0 %12011
  %12013 = vrot.lane.b32.xlu0 %v11859, 4
  %v12014 = vpop.permute.xlu0 %12013
  %12015 = vrot.lane.b32.xlu0 %v11860, 4
  %v12016 = vpop.permute.xlu0 %12015
  %12017 = vrot.lane.b32.xlu0 %v11861, 4
  %v12018 = vpop.permute.xlu0 %12017
  %12019 = vrot.lane.b32.xlu0 %v11862, 4
  %v12020 = vpop.permute.xlu0 %12019
  %12021 = vrot.lane.b32.xlu0 %v11863, 4
  %v12022 = vpop.permute.xlu0 %12021
  %12023 = vrot.lane.b32.xlu0 %v11864, 4
  %v12024 = vpop.permute.xlu0 %12023
  %12057 = vrot.lane.b32.xlu0 %v11865, 8
  %v12058 = vpop.permute.xlu0 %12057
  %12059 = vrot.lane.b32.xlu0 %v11866, 8
  %v12060 = vpop.permute.xlu0 %12059
  %12061 = vrot.lane.b32.xlu0 %v11867, 8
  %v12062 = vpop.permute.xlu0 %12061
  %12063 = vrot.lane.b32.xlu0 %v11868, 8
  %v12064 = vpop.permute.xlu0 %12063
  %12065 = vrot.lane.b32.xlu0 %v11869, 8
  %v12066 = vpop.permute.xlu0 %12065
  %12067 = vrot.lane.b32.xlu0 %v11870, 8
  %v12068 = vpop.permute.xlu0 %12067
  %12069 = vrot.lane.b32.xlu0 %v11871, 8
  %v12070 = vpop.permute.xlu0 %12069
  %12071 = vrot.lane.b32.xlu0 %v11872, 8
  %v12072 = vpop.permute.xlu0 %12071
  %12073 = vrot.lane.b32.xlu0 %v11873, 8
  %v12074 = vpop.permute.xlu0 %12073
  %12075 = vrot.lane.b32.xlu0 %v11874, 8
  %v12076 = vpop.permute.xlu0 %12075
  %12077 = vrot.lane.b32.xlu0 %v11875, 8
  %v12078 = vpop.permute.xlu0 %12077
  %12079 = vrot.lane.b32.xlu0 %v11876, 8
  %v12080 = vpop.permute.xlu0 %12079
  %12081 = vrot.lane.b32.xlu0 %v11877, 8
  %v12082 = vpop.permute.xlu0 %12081
  %12083 = vrot.lane.b32.xlu0 %v11878, 8
  %v12084 = vpop.permute.xlu0 %12083
  %12085 = vrot.lane.b32.xlu0 %v11879, 8
  %v12086 = vpop.permute.xlu0 %12085
  %12087 = vrot.lane.b32.xlu0 %v11880, 8
  %v12088 = vpop.permute.xlu0 %12087
  %12121 = vrot.lane.b32.xlu0 %v11881, 12
  %v12122 = vpop.permute.xlu0 %12121
  %12123 = vrot.lane.b32.xlu0 %v11882, 12
  %v12124 = vpop.permute.xlu0 %12123
  %12125 = vrot.lane.b32.xlu0 %v11883, 12
  %v12126 = vpop.permute.xlu0 %12125
  %12127 = vrot.lane.b32.xlu0 %v11884, 12
  %v12128 = vpop.permute.xlu0 %12127
  %12129 = vrot.lane.b32.xlu0 %v11885, 12
  %v12130 = vpop.permute.xlu0 %12129
  %12131 = vrot.lane.b32.xlu0 %v11886, 12
  %v12132 = vpop.permute.xlu0 %12131
  %12133 = vrot.lane.b32.xlu0 %v11887, 12
  %v12134 = vpop.permute.xlu0 %12133
  %12135 = vrot.lane.b32.xlu0 %v11888, 12
  %v12136 = vpop.permute.xlu0 %12135
  %12137 = vrot.lane.b32.xlu0 %v11889, 12
  %v12138 = vpop.permute.xlu0 %12137
  %12139 = vrot.lane.b32.xlu0 %v11890, 12
  %v12140 = vpop.permute.xlu0 %12139
  %12141 = vrot.lane.b32.xlu0 %v11891, 12
  %v12142 = vpop.permute.xlu0 %12141
  %12143 = vrot.lane.b32.xlu0 %v11892, 12
  %v12144 = vpop.permute.xlu0 %12143
  %12145 = vrot.lane.b32.xlu0 %v11893, 12
  %v12146 = vpop.permute.xlu0 %12145
  %12147 = vrot.lane.b32.xlu0 %v11894, 12
  %v12148 = vpop.permute.xlu0 %12147
  %12149 = vrot.lane.b32.xlu0 %v11895, 12
  %v12150 = vpop.permute.xlu0 %12149
  %12151 = vrot.lane.b32.xlu0 %v11896, 12
  %v12152 = vpop.permute.xlu0 %12151
  %12185 = vrot.lane.b32.xlu0 %v11897, 16
  %v12186 = vpop.permute.xlu0 %12185
  %12187 = vrot.lane.b32.xlu0 %v11898, 16
  %v12188 = vpop.permute.xlu0 %12187
  %12189 = vrot.lane.b32.xlu0 %v11899, 16
  %v12190 = vpop.permute.xlu0 %12189
  %12191 = vrot.lane.b32.xlu0 %v11900, 16
  %v12192 = vpop.permute.xlu0 %12191
  %12193 = vrot.lane.b32.xlu0 %v11901, 16
  %v12194 = vpop.permute.xlu0 %12193
  %12195 = vrot.lane.b32.xlu0 %v11902, 16
  %v12196 = vpop.permute.xlu0 %12195
  %12197 = vrot.lane.b32.xlu0 %v11903, 16
  %v12198 = vpop.permute.xlu0 %12197
  %12199 = vrot.lane.b32.xlu0 %v11904, 16
  %v12200 = vpop.permute.xlu0 %12199
  %12201 = vrot.lane.b32.xlu0 %v11905, 16
  %v12202 = vpop.permute.xlu0 %12201
  %12203 = vrot.lane.b32.xlu0 %v11906, 16
  %v12204 = vpop.permute.xlu0 %12203
  %12205 = vrot.lane.b32.xlu0 %v11907, 16
  %v12206 = vpop.permute.xlu0 %12205
  %12207 = vrot.lane.b32.xlu0 %v11908, 16
  %v12208 = vpop.permute.xlu0 %12207
  %12209 = vrot.lane.b32.xlu0 %v11909, 16
  %v12210 = vpop.permute.xlu0 %12209
  %12211 = vrot.lane.b32.xlu0 %v11910, 16
  %v12212 = vpop.permute.xlu0 %12211
  %12213 = vrot.lane.b32.xlu0 %v11911, 16
  %v12214 = vpop.permute.xlu0 %12213
  %12215 = vrot.lane.b32.xlu0 %v11912, 16
  %v12216 = vpop.permute.xlu0 %12215
  %12249 = vrot.lane.b32.xlu0 %v11913, 20
  %v12250 = vpop.permute.xlu0 %12249
  %12251 = vrot.lane.b32.xlu0 %v11914, 20
  %v12252 = vpop.permute.xlu0 %12251
  %12253 = vrot.lane.b32.xlu0 %v11915, 20
  %v12254 = vpop.permute.xlu0 %12253
  %12255 = vrot.lane.b32.xlu0 %v11916, 20
  %v12256 = vpop.permute.xlu0 %12255
  %12257 = vrot.lane.b32.xlu0 %v11917, 20
  %v12258 = vpop.permute.xlu0 %12257
  %12259 = vrot.lane.b32.xlu0 %v11918, 20
  %v12260 = vpop.permute.xlu0 %12259
  %12261 = vrot.lane.b32.xlu0 %v11919, 20
  %v12262 = vpop.permute.xlu0 %12261
  %12263 = vrot.lane.b32.xlu0 %v11920, 20
  %v12264 = vpop.permute.xlu0 %12263
  %12265 = vrot.lane.b32.xlu0 %v11921, 20
  %v12266 = vpop.permute.xlu0 %12265
  %12267 = vrot.lane.b32.xlu0 %v11922, 20
  %v12268 = vpop.permute.xlu0 %12267
  %12269 = vrot.lane.b32.xlu0 %v11923, 20
  %v12270 = vpop.permute.xlu0 %12269
  %12271 = vrot.lane.b32.xlu0 %v11924, 20
  %v12272 = vpop.permute.xlu0 %12271
  %12273 = vrot.lane.b32.xlu0 %v11925, 20
  %v12274 = vpop.permute.xlu0 %12273
  %12275 = vrot.lane.b32.xlu0 %v11926, 20
  %v12276 = vpop.permute.xlu0 %12275
  %12277 = vrot.lane.b32.xlu0 %v11927, 20
  %v12278 = vpop.permute.xlu0 %12277
  %12279 = vrot.lane.b32.xlu0 %v11928, 20
  %v12280 = vpop.permute.xlu0 %12279
  %12313 = vrot.lane.b32.xlu0 %v11929, 24
  %v12314 = vpop.permute.xlu0 %12313
  %12315 = vrot.lane.b32.xlu0 %v11930, 24
  %v12316 = vpop.permute.xlu0 %12315
  %12317 = vrot.lane.b32.xlu0 %v11931, 24
  %v12318 = vpop.permute.xlu0 %12317
  %12319 = vrot.lane.b32.xlu0 %v11932, 24
  %v12320 = vpop.permute.xlu0 %12319
  %12321 = vrot.lane.b32.xlu0 %v11933, 24
  %v12322 = vpop.permute.xlu0 %12321
  %12323 = vrot.lane.b32.xlu0 %v11934, 24
  %v12324 = vpop.permute.xlu0 %12323
  %12325 = vrot.lane.b32.xlu0 %v11935, 24
  %v12326 = vpop.permute.xlu0 %12325
  %12327 = vrot.lane.b32.xlu0 %v11936, 24
  %v12328 = vpop.permute.xlu0 %12327
  %12329 = vrot.lane.b32.xlu0 %v11937, 24
  %v12330 = vpop.permute.xlu0 %12329
  %12331 = vrot.lane.b32.xlu0 %v11938, 24
  %v12332 = vpop.permute.xlu0 %12331
  %12333 = vrot.lane.b32.xlu0 %v11939, 24
  %v12334 = vpop.permute.xlu0 %12333
  %12335 = vrot.lane.b32.xlu0 %v11940, 24
  %v12336 = vpop.permute.xlu0 %12335
  %12337 = vrot.lane.b32.xlu0 %v11941, 24
  %v12338 = vpop.permute.xlu0 %12337
  %12339 = vrot.lane.b32.xlu0 %v11942, 24
  %v12340 = vpop.permute.xlu0 %12339
  %12341 = vrot.lane.b32.xlu0 %v11943, 24
  %v12342 = vpop.permute.xlu0 %12341
  %12343 = vrot.lane.b32.xlu0 %v11944, 24
  %v12344 = vpop.permute.xlu0 %12343
  %12377 = vrot.lane.b32.xlu0 %v11945, 28
  %v12378 = vpop.permute.xlu0 %12377
  %12379 = vrot.lane.b32.xlu0 %v11946, 28
  %v12380 = vpop.permute.xlu0 %12379
  %12381 = vrot.lane.b32.xlu0 %v11947, 28
  %v12382 = vpop.permute.xlu0 %12381
  %12383 = vrot.lane.b32.xlu0 %v11948, 28
  %v12384 = vpop.permute.xlu0 %12383
  %12385 = vrot.lane.b32.xlu0 %v11949, 28
  %v12386 = vpop.permute.xlu0 %12385
  %12387 = vrot.lane.b32.xlu0 %v11950, 28
  %v12388 = vpop.permute.xlu0 %12387
  %12389 = vrot.lane.b32.xlu0 %v11951, 28
  %v12390 = vpop.permute.xlu0 %12389
  %12391 = vrot.lane.b32.xlu0 %v11952, 28
  %v12392 = vpop.permute.xlu0 %12391
  %12393 = vrot.lane.b32.xlu0 %v11953, 28
  %v12394 = vpop.permute.xlu0 %12393
  %12395 = vrot.lane.b32.xlu0 %v11954, 28
  %v12396 = vpop.permute.xlu0 %12395
  %12397 = vrot.lane.b32.xlu0 %v11955, 28
  %v12398 = vpop.permute.xlu0 %12397
  %12399 = vrot.lane.b32.xlu0 %v11956, 28
  %v12400 = vpop.permute.xlu0 %12399
  %12401 = vrot.lane.b32.xlu0 %v11957, 28
  %v12402 = vpop.permute.xlu0 %12401
  %12403 = vrot.lane.b32.xlu0 %v11958, 28
  %v12404 = vpop.permute.xlu0 %12403
  %12405 = vrot.lane.b32.xlu0 %v11959, 28
  %v12406 = vpop.permute.xlu0 %12405
  %12407 = vrot.lane.b32.xlu0 %v11960, 28
  %v12408 = vpop.permute.xlu0 %12407
  %12441 = vrot.lane.b32.xlu0 %v11961, 32
  %v12442 = vpop.permute.xlu0 %12441
  %12443 = vrot.lane.b32.xlu0 %v11962, 32
  %v12444 = vpop.permute.xlu0 %12443
  %12445 = vrot.lane.b32.xlu0 %v11963, 32
  %v12446 = vpop.permute.xlu0 %12445
  %12447 = vrot.lane.b32.xlu0 %v11964, 32
  %v12448 = vpop.permute.xlu0 %12447
  %12449 = vrot.lane.b32.xlu0 %v11965, 32
  %v12450 = vpop.permute.xlu0 %12449
  %12451 = vrot.lane.b32.xlu0 %v11966, 32
  %v12452 = vpop.permute.xlu0 %12451
  %12453 = vrot.lane.b32.xlu0 %v11967, 32
  %v12454 = vpop.permute.xlu0 %12453
  %12455 = vrot.lane.b32.xlu0 %v11968, 32
  %v12456 = vpop.permute.xlu0 %12455
  %12457 = vrot.lane.b32.xlu0 %v11969, 32
  %v12458 = vpop.permute.xlu0 %12457
  %12459 = vrot.lane.b32.xlu0 %v11970, 32
  %v12460 = vpop.permute.xlu0 %12459
  %12461 = vrot.lane.b32.xlu0 %v11971, 32
  %v12462 = vpop.permute.xlu0 %12461
  %12463 = vrot.lane.b32.xlu0 %v11972, 32
  %v12464 = vpop.permute.xlu0 %12463
  %12465 = vrot.lane.b32.xlu0 %v11973, 32
  %v12466 = vpop.permute.xlu0 %12465
  %12467 = vrot.lane.b32.xlu0 %v11974, 32
  %v12468 = vpop.permute.xlu0 %12467
  %12469 = vrot.lane.b32.xlu0 %v11975, 32
  %v12470 = vpop.permute.xlu0 %12469
  %12471 = vrot.lane.b32.xlu0 %v11976, 32
  %v12472 = vpop.permute.xlu0 %12471
  %v12489 = vsel %vm49, %v11833, %v11994
  %v12490 = vsel %vm49, %v11834, %v11996
  %v12491 = vsel %vm49, %v11835, %v11998
  %v12492 = vsel %vm49, %v11836, %v12000
  %v12493 = vsel %vm49, %v11837, %v12002
  %v12494 = vsel %vm49, %v11838, %v12004
  %v12495 = vsel %vm49, %v11839, %v12006
  %v12496 = vsel %vm49, %v11840, %v12008
  %v12497 = vsel %vm49, %v11841, %v12010
  %v12498 = vsel %vm49, %v11842, %v12012
  %v12499 = vsel %vm49, %v11843, %v12014
  %v12500 = vsel %vm49, %v11844, %v12016
  %v12501 = vsel %vm49, %v11845, %v12018
  %v12502 = vsel %vm49, %v11846, %v12020
  %v12503 = vsel %vm49, %v11847, %v12022
  %v12504 = vsel %vm49, %v11848, %v12024
  %v12505 = vsel %vm3088, %v12489, %v12058
  %v12506 = vsel %vm3088, %v12490, %v12060
  %v12507 = vsel %vm3088, %v12491, %v12062
  %v12508 = vsel %vm3088, %v12492, %v12064
  %v12509 = vsel %vm3088, %v12493, %v12066
  %v12510 = vsel %vm3088, %v12494, %v12068
  %v12511 = vsel %vm3088, %v12495, %v12070
  %v12512 = vsel %vm3088, %v12496, %v12072
  %v12513 = vsel %vm3088, %v12497, %v12074
  %v12514 = vsel %vm3088, %v12498, %v12076
  %v12515 = vsel %vm3088, %v12499, %v12078
  %v12516 = vsel %vm3088, %v12500, %v12080
  %v12517 = vsel %vm3088, %v12501, %v12082
  %v12518 = vsel %vm3088, %v12502, %v12084
  %v12519 = vsel %vm3088, %v12503, %v12086
  %v12520 = vsel %vm3088, %v12504, %v12088
  %v12521 = vsel %vm3153, %v12505, %v12122
  %v12522 = vsel %vm3153, %v12506, %v12124
  %v12523 = vsel %vm3153, %v12507, %v12126
  %v12524 = vsel %vm3153, %v12508, %v12128
  %v12525 = vsel %vm3153, %v12509, %v12130
  %v12526 = vsel %vm3153, %v12510, %v12132
  %v12527 = vsel %vm3153, %v12511, %v12134
  %v12528 = vsel %vm3153, %v12512, %v12136
  %v12529 = vsel %vm3153, %v12513, %v12138
  %v12530 = vsel %vm3153, %v12514, %v12140
  %v12531 = vsel %vm3153, %v12515, %v12142
  %v12532 = vsel %vm3153, %v12516, %v12144
  %v12533 = vsel %vm3153, %v12517, %v12146
  %v12534 = vsel %vm3153, %v12518, %v12148
  %v12535 = vsel %vm3153, %v12519, %v12150
  %v12536 = vsel %vm3153, %v12520, %v12152
  %v12537 = vsel %vm3218, %v12521, %v12186
  %v12538 = vsel %vm3218, %v12522, %v12188
  %v12539 = vsel %vm3218, %v12523, %v12190
  %v12540 = vsel %vm3218, %v12524, %v12192
  %v12541 = vsel %vm3218, %v12525, %v12194
  %v12542 = vsel %vm3218, %v12526, %v12196
  %v12543 = vsel %vm3218, %v12527, %v12198
  %v12544 = vsel %vm3218, %v12528, %v12200
  %v12545 = vsel %vm3218, %v12529, %v12202
  %v12546 = vsel %vm3218, %v12530, %v12204
  %v12547 = vsel %vm3218, %v12531, %v12206
  %v12548 = vsel %vm3218, %v12532, %v12208
  %v12549 = vsel %vm3218, %v12533, %v12210
  %v12550 = vsel %vm3218, %v12534, %v12212
  %v12551 = vsel %vm3218, %v12535, %v12214
  %v12552 = vsel %vm3218, %v12536, %v12216
  %v12553 = vsel %vm3283, %v12537, %v12250
  %v12554 = vsel %vm3283, %v12538, %v12252
  %v12555 = vsel %vm3283, %v12539, %v12254
  %v12556 = vsel %vm3283, %v12540, %v12256
  %v12557 = vsel %vm3283, %v12541, %v12258
  %v12558 = vsel %vm3283, %v12542, %v12260
  %v12559 = vsel %vm3283, %v12543, %v12262
  %v12560 = vsel %vm3283, %v12544, %v12264
  %v12561 = vsel %vm3283, %v12545, %v12266
  %v12562 = vsel %vm3283, %v12546, %v12268
  %v12563 = vsel %vm3283, %v12547, %v12270
  %v12564 = vsel %vm3283, %v12548, %v12272
  %v12565 = vsel %vm3283, %v12549, %v12274
  %v12566 = vsel %vm3283, %v12550, %v12276
  %v12567 = vsel %vm3283, %v12551, %v12278
  %v12568 = vsel %vm3283, %v12552, %v12280
  %v12569 = vsel %vm3348, %v12553, %v12314
  %v12570 = vsel %vm3348, %v12554, %v12316
  %v12571 = vsel %vm3348, %v12555, %v12318
  %v12572 = vsel %vm3348, %v12556, %v12320
  %v12573 = vsel %vm3348, %v12557, %v12322
  %v12574 = vsel %vm3348, %v12558, %v12324
  %v12575 = vsel %vm3348, %v12559, %v12326
  %v12576 = vsel %vm3348, %v12560, %v12328
  %v12577 = vsel %vm3348, %v12561, %v12330
  %v12578 = vsel %vm3348, %v12562, %v12332
  %v12579 = vsel %vm3348, %v12563, %v12334
  %v12580 = vsel %vm3348, %v12564, %v12336
  %v12581 = vsel %vm3348, %v12565, %v12338
  %v12582 = vsel %vm3348, %v12566, %v12340
  %v12583 = vsel %vm3348, %v12567, %v12342
  %v12584 = vsel %vm3348, %v12568, %v12344
  %v12585 = vsel %vm3413, %v12569, %v12378
  %v12586 = vsel %vm3413, %v12570, %v12380
  %v12587 = vsel %vm3413, %v12571, %v12382
  %v12588 = vsel %vm3413, %v12572, %v12384
  %v12589 = vsel %vm3413, %v12573, %v12386
  %v12590 = vsel %vm3413, %v12574, %v12388
  %v12591 = vsel %vm3413, %v12575, %v12390
  %v12592 = vsel %vm3413, %v12576, %v12392
  %v12593 = vsel %vm3413, %v12577, %v12394
  %v12594 = vsel %vm3413, %v12578, %v12396
  %v12595 = vsel %vm3413, %v12579, %v12398
  %v12596 = vsel %vm3413, %v12580, %v12400
  %v12597 = vsel %vm3413, %v12581, %v12402
  %v12598 = vsel %vm3413, %v12582, %v12404
  %v12599 = vsel %vm3413, %v12583, %v12406
  %v12600 = vsel %vm3413, %v12584, %v12408
  %v12601 = vsel %vm3478, %v12585, %v12442
  %v12602 = vsel %vm3478, %v12586, %v12444
  %v12603 = vsel %vm3478, %v12587, %v12446
  %v12604 = vsel %vm3478, %v12588, %v12448
  %v12605 = vsel %vm3478, %v12589, %v12450
  %v12606 = vsel %vm3478, %v12590, %v12452
  %v12607 = vsel %vm3478, %v12591, %v12454
  %v12608 = vsel %vm3478, %v12592, %v12456
  %v12609 = vsel %vm3478, %v12593, %v12458
  %v12610 = vsel %vm3478, %v12594, %v12460
  %v12611 = vsel %vm3478, %v12595, %v12462
  %v12612 = vsel %vm3478, %v12596, %v12464
  %v12613 = vsel %vm3478, %v12597, %v12466
  %v12614 = vsel %vm3478, %v12598, %v12468
  %v12615 = vsel %vm3478, %v12599, %v12470
  %v12616 = vsel %vm3478, %v12600, %v12472
  %v12617 = vld [vmem:[%s11] sm:$0xff]
  %v12618 = vld [vmem:[%s11 + $0x8] sm:$0xff]
  %v12619 = vld [vmem:[%s11 + $0x10] sm:$0xff]
  %v12620 = vld [vmem:[%s11 + $0x18] sm:$0xff]
  %v12621 = vld [vmem:[%s11 + $0x20] sm:$0xf]
  %v12623 = vsel %vm4355, %v12601, 0
  %v12626 = vsel %vm4355, %v12602, 0
  %v12629 = vsel %vm4355, %v12603, 0
  %v12632 = vsel %vm4355, %v12604, 0
  %v12635 = vsel %vm4355, %v12605, 0
  %v12638 = vsel %vm4355, %v12606, 0
  %v12641 = vsel %vm4355, %v12607, 0
  %v12644 = vsel %vm4355, %v12608, 0
  %v12647 = vsel %vm4355, %v12609, 0
  %v12650 = vsel %vm4355, %v12610, 0
  %v12653 = vsel %vm4355, %v12611, 0
  %v12656 = vsel %vm4355, %v12612, 0
  %v12659 = vsel %vm4355, %v12613, 0
  %v12662 = vsel %vm4355, %v12614, 0
  %v12665 = vsel %vm4355, %v12615, 0
  %v12668 = vsel %vm4355, %v12616, 0
  %v12671 = vsel %vm4404, %v12621, 0
  %12673 = vmatprep.subr.mxu0 0.0
  %12674 = vmatpush1.msra.mxu0 %v12617
  %12675 = vmatprep.subr.mxu0 0.0
  %12676 = vmatpush1.msra.mxu0 %v12618
  %12677 = vmatprep.subr.mxu0 0.0
  %12678 = vmatpush1.msra.mxu0 %v12619
  %12679 = vmatprep.subr.mxu0 0.0
  %12680 = vmatpush1.msra.mxu0 %v12620
  %12681 = vmatprep.subr.mxu0 0.0
  %12682 = vmatpush1.msra.mxu0 %v12671
  %12683 = vmatprep.subr.mxu0 0.0
  %12684 = vmatpush1.msra.mxu0 0.0
  %12685 = vmatprep.subr.mxu0 0.0
  %12686 = vmatpush1.msra.mxu0 0.0
  %12687 = vmatprep.subr.mxu0 0.0
  %12688 = vmatpush1.msra.mxu0 0.0
  %12689 = vmatprep.subr.mxu0 0.0
  %12690 = vmatpush1.msra.mxu0 0.0
  %12691 = vmatprep.subr.mxu0 0.0
  %12692 = vmatpush1.msra.mxu0 0.0
  %12693 = vmatprep.subr.mxu0 0.0
  %12694 = vmatpush1.msra.mxu0 0.0
  %12695 = vmatprep.subr.mxu0 0.0
  %12696 = vmatpush1.msra.mxu0 0.0
  %12697 = vmatprep.subr.mxu0 0.0
  %12698 = vmatpush1.msra.mxu0 0.0
  %12699 = vmatprep.subr.mxu0 0.0
  %12700 = vmatpush1.msra.mxu0 0.0
  %12701 = vmatprep.subr.mxu0 0.0
  %12702 = vmatpush1.msra.mxu0 0.0
  %12703 = vmatprep.subr.mxu0 0.0
  %12704 = vmatpush1.msra.mxu0 0.0
  %12705 = vmatprep.subr.mxu0 0.0
  %12706 = vmatpush1.msra.mxu0 0.0
  %12707 = vmatprep.subr.mxu0 0.0
  %12708 = vmatpush1.msra.mxu0 0.0
  %12709 = vmatprep.subr.mxu0 0.0
  %12710 = vmatpush1.msra.mxu0 0.0
  %12711 = vmatprep.subr.mxu0 0.0
  %12712 = vmatpush1.msra.mxu0 0.0
  %12713 = vmatprep.subr.mxu0 0.0
  %12714 = vmatpush1.msra.mxu0 0.0
  %12715 = vmatprep.subr.mxu0 0.0
  %12716 = vmatpush1.msra.mxu0 0.0
  %12717 = vmatprep.subr.mxu0 0.0
  %12718 = vmatpush1.msra.mxu0 0.0
  %12719 = vmatprep.subr.mxu0 0.0
  %12720 = vmatpush1.msra.mxu0 0.0
  %12721 = vmatprep.subr.mxu0 0.0
  %12722 = vmatpush1.msra.mxu0 0.0
  %12723 = vmatprep.subr.mxu0 0.0
  %12724 = vmatpush1.msra.mxu0 0.0
  %12725 = vmatprep.subr.mxu0 0.0
  %12726 = vmatpush1.msra.mxu0 0.0
  %12727 = vmatprep.subr.mxu0 0.0
  %12728 = vmatpush1.msra.mxu0 0.0
  %12729 = vmatprep.subr.mxu0 0.0
  %12730 = vmatpush1.msra.mxu0 0.0
  %12731 = vmatprep.subr.mxu0 0.0
  %12732 = vmatpush1.msra.mxu0 0.0
  %12733 = vmatprep.subr.mxu0 0.0
  %12734 = vmatpush1.msra.mxu0 0.0
  %12735 = vmatprep.subr.mxu0 0.0
  %12736 = vmatpush1.msra.mxu0 0.0
  %12737 = vmatprep.mubr.f32.mxu0 0.0
  %12738 = vmatmul.mubr.f32.gmra.mrb[0].mxu0 %v12623
  %v12739 = vpop.f32.mrb[0].mxu0
  %v12740 = vadd.f32 0.0, %v12739
  %v12741 = vpop.f32.mrb[0].mxu0
  %12742 = vmatprep.mubr.f32.mxu0 0.0
  %12743 = vmatmul.mubr.f32.gmra.mrb[0].mxu0 %v12626
  %v12744 = vpop.f32.mrb[0].mxu0
  %v12745 = vadd.f32 0.0, %v12744
  %v12746 = vpop.f32.mrb[0].mxu0
  %12747 = vmatprep.mubr.f32.mxu0 0.0
  %12748 = vmatmul.mubr.f32.gmra.mrb[0].mxu0 %v12629
  %v12749 = vpop.f32.mrb[0].mxu0
  %v12750 = vadd.f32 0.0, %v12749
  %v12751 = vpop.f32.mrb[0].mxu0
  %12752 = vmatprep.mubr.f32.mxu0 0.0
  %12753 = vmatmul.mubr.f32.gmra.mrb[0].mxu0 %v12632
  %v12754 = vpop.f32.mrb[0].mxu0
  %v12755 = vadd.f32 0.0, %v12754
  %v12756 = vpop.f32.mrb[0].mxu0
  %12757 = vmatprep.mubr.f32.mxu0 0.0
  %12758 = vmatmul.mubr.f32.gmra.mrb[0].mxu0 %v12635
  %v12759 = vpop.f32.mrb[0].mxu0
  %v12760 = vadd.f32 0.0, %v12759
  %v12761 = vpop.f32.mrb[0].mxu0
  %12762 = vmatprep.mubr.f32.mxu0 0.0
  %12763 = vmatmul.mubr.f32.gmra.mrb[0].mxu0 %v12638
  %v12764 = vpop.f32.mrb[0].mxu0
  %v12765 = vadd.f32 0.0, %v12764
  %v12766 = vpop.f32.mrb[0].mxu0
  %12767 = vmatprep.mubr.f32.mxu0 0.0
  %12768 = vmatmul.mubr.f32.gmra.mrb[0].mxu0 %v12641
  %v12769 = vpop.f32.mrb[0].mxu0
  %v12770 = vadd.f32 0.0, %v12769
  %v12771 = vpop.f32.mrb[0].mxu0
  %12772 = vmatprep.mubr.f32.mxu0 0.0
  %12773 = vmatmul.mubr.f32.gmra.mrb[0].mxu0 %v12644
  %v12774 = vpop.f32.mrb[0].mxu0
  %v12775 = vadd.f32 0.0, %v12774
  %v12776 = vpop.f32.mrb[0].mxu0
  %12777 = vmatprep.mubr.f32.mxu0 0.0
  %12778 = vmatmul.mubr.f32.gmra.mrb[0].mxu0 %v12647
  %v12779 = vpop.f32.mrb[0].mxu0
  %v12780 = vadd.f32 0.0, %v12779
  %v12781 = vpop.f32.mrb[0].mxu0
  %12782 = vmatprep.mubr.f32.mxu0 0.0
  %12783 = vmatmul.mubr.f32.gmra.mrb[0].mxu0 %v12650
  %v12784 = vpop.f32.mrb[0].mxu0
  %v12785 = vadd.f32 0.0, %v12784
  %v12786 = vpop.f32.mrb[0].mxu0
  %12787 = vmatprep.mubr.f32.mxu0 0.0
  %12788 = vmatmul.mubr.f32.gmra.mrb[0].mxu0 %v12653
  %v12789 = vpop.f32.mrb[0].mxu0
  %v12790 = vadd.f32 0.0, %v12789
  %v12791 = vpop.f32.mrb[0].mxu0
  %12792 = vmatprep.mubr.f32.mxu0 0.0
  %12793 = vmatmul.mubr.f32.gmra.mrb[0].mxu0 %v12656
  %v12794 = vpop.f32.mrb[0].mxu0
  %v12795 = vadd.f32 0.0, %v12794
  %v12796 = vpop.f32.mrb[0].mxu0
  %12797 = vmatprep.mubr.f32.mxu0 0.0
  %12798 = vmatmul.mubr.f32.gmra.mrb[0].mxu0 %v12659
  %v12799 = vpop.f32.mrb[0].mxu0
  %v12800 = vadd.f32 0.0, %v12799
  %v12801 = vpop.f32.mrb[0].mxu0
  %12802 = vmatprep.mubr.f32.mxu0 0.0
  %12803 = vmatmul.mubr.f32.gmra.mrb[0].mxu0 %v12662
  %v12804 = vpop.f32.mrb[0].mxu0
  %v12805 = vadd.f32 0.0, %v12804
  %v12806 = vpop.f32.mrb[0].mxu0
  %12807 = vmatprep.mubr.f32.mxu0 0.0
  %12808 = vmatmul.mubr.f32.gmra.mrb[0].mxu0 %v12665
  %v12809 = vpop.f32.mrb[0].mxu0
  %v12810 = vadd.f32 0.0, %v12809
  %v12811 = vpop.f32.mrb[0].mxu0
  %12812 = vmatprep.mubr.f32.mxu0 0.0
  %12813 = vmatmul.mubr.f32.gmra.mrb[0].mxu0 %v12668
  %v12814 = vpop.f32.mrb[0].mxu0
  %v12815 = vadd.f32 0.0, %v12814
  %v12816 = vpop.f32.mrb[0].mxu0
  %12817 = vdwg.mxu0
  %v12818 = vld [vmem:[%s3] sm:$0xff]
  %v12819 = vld [vmem:[%s3 + $0x8] sm:$0xff]
  %v12820 = vld [vmem:[%s3 + $0x10] sm:$0xff]
  %v12821 = vld [vmem:[%s3 + $0x18] sm:$0xff]
  %v12822 = vld [vmem:[%s3 + $0x20] sm:$0xff]
  %v12823 = vld [vmem:[%s3 + $0x28] sm:$0xff]
  %v12824 = vld [vmem:[%s3 + $0x30] sm:$0xff]
  %v12825 = vld [vmem:[%s3 + $0x38] sm:$0xff]
  %v12826 = vld [vmem:[%s3 + $0x40] sm:$0xff]
  %v12827 = vld [vmem:[%s3 + $0x48] sm:$0xff]
  %v12828 = vld [vmem:[%s3 + $0x50] sm:$0xff]
  %v12829 = vld [vmem:[%s3 + $0x58] sm:$0xff]
  %v12830 = vld [vmem:[%s3 + $0x60] sm:$0xff]
  %v12831 = vld [vmem:[%s3 + $0x68] sm:$0xff]
  %v12832 = vld [vmem:[%s3 + $0x70] sm:$0xff]
  %v12833 = vld [vmem:[%s3 + $0x78] sm:$0xff]
  %v12834 = vld [vmem:[%s3 + $0x80] sm:$0xff]
  %v12835 = vld [vmem:[%s3 + $0x88] sm:$0xff]
  %v12836 = vld [vmem:[%s3 + $0x90] sm:$0xff]
  %v12837 = vld [vmem:[%s3 + $0x98] sm:$0xff]
  %v12838 = vld [vmem:[%s3 + $0xa0] sm:$0xff]
  %v12839 = vld [vmem:[%s3 + $0xa8] sm:$0xff]
  %v12840 = vld [vmem:[%s3 + $0xb0] sm:$0xff]
  %v12841 = vld [vmem:[%s3 + $0xb8] sm:$0xff]
  %v12842 = vld [vmem:[%s3 + $0xc0] sm:$0xff]
  %v12843 = vld [vmem:[%s3 + $0xc8] sm:$0xff]
  %v12844 = vld [vmem:[%s3 + $0xd0] sm:$0xff]
  %v12845 = vld [vmem:[%s3 + $0xd8] sm:$0xff]
  %v12846 = vld [vmem:[%s3 + $0xe0] sm:$0xff]
  %v12847 = vld [vmem:[%s3 + $0xe8] sm:$0xff]
  %v12848 = vld [vmem:[%s3 + $0xf0] sm:$0xff]
  %v12849 = vld [vmem:[%s3 + $0xf8] sm:$0xff]
  %v12850 = vld [vmem:[%s3 + $0x100] sm:$0xff]
  %v12851 = vld [vmem:[%s3 + $0x108] sm:$0xff]
  %v12852 = vld [vmem:[%s3 + $0x110] sm:$0xff]
  %v12853 = vld [vmem:[%s3 + $0x118] sm:$0xff]
  %v12854 = vld [vmem:[%s3 + $0x120] sm:$0xff]
  %v12855 = vld [vmem:[%s3 + $0x128] sm:$0xff]
  %v12856 = vld [vmem:[%s3 + $0x130] sm:$0xff]
  %v12857 = vld [vmem:[%s3 + $0x138] sm:$0xff]
  %v12858 = vld [vmem:[%s3 + $0x140] sm:$0xff]
  %v12859 = vld [vmem:[%s3 + $0x148] sm:$0xff]
  %v12860 = vld [vmem:[%s3 + $0x150] sm:$0xff]
  %v12861 = vld [vmem:[%s3 + $0x158] sm:$0xff]
  %v12862 = vld [vmem:[%s3 + $0x160] sm:$0xff]
  %v12863 = vld [vmem:[%s3 + $0x168] sm:$0xff]
  %v12864 = vld [vmem:[%s3 + $0x170] sm:$0xff]
  %v12865 = vld [vmem:[%s3 + $0x178] sm:$0xff]
  %v12866 = vld [vmem:[%s3 + $0x180] sm:$0xff]
  %v12867 = vld [vmem:[%s3 + $0x188] sm:$0xff]
  %v12868 = vld [vmem:[%s3 + $0x190] sm:$0xff]
  %v12869 = vld [vmem:[%s3 + $0x198] sm:$0xff]
  %v12870 = vld [vmem:[%s3 + $0x1a0] sm:$0xff]
  %v12871 = vld [vmem:[%s3 + $0x1a8] sm:$0xff]
  %v12872 = vld [vmem:[%s3 + $0x1b0] sm:$0xff]
  %v12873 = vld [vmem:[%s3 + $0x1b8] sm:$0xff]
  %v12874 = vld [vmem:[%s3 + $0x1c0] sm:$0xff]
  %v12875 = vld [vmem:[%s3 + $0x1c8] sm:$0xff]
  %v12876 = vld [vmem:[%s3 + $0x1d0] sm:$0xff]
  %v12877 = vld [vmem:[%s3 + $0x1d8] sm:$0xff]
  %v12878 = vld [vmem:[%s3 + $0x1e0] sm:$0xff]
  %v12879 = vld [vmem:[%s3 + $0x1e8] sm:$0xff]
  %v12880 = vld [vmem:[%s3 + $0x1f0] sm:$0xff]
  %v12881 = vld [vmem:[%s3 + $0x1f8] sm:$0xff]
  %12882 = vmatprep.subr.mxu0 0.0
  %12883 = vmatpush1.msra.mxu0 %v11385
  %12884 = vmatprep.subr.mxu0 0.0
  %12885 = vmatpush1.msra.mxu0 %v11390
  %12886 = vmatprep.subr.mxu0 0.0
  %12887 = vmatpush1.msra.mxu0 %v11395
  %12888 = vmatprep.subr.mxu0 0.0
  %12889 = vmatpush1.msra.mxu0 %v11400
  %12890 = vmatprep.subr.mxu0 0.0
  %12891 = vmatpush1.msra.mxu0 %v11405
  %12892 = vmatprep.subr.mxu0 0.0
  %12893 = vmatpush1.msra.mxu0 %v11410
  %12894 = vmatprep.subr.mxu0 0.0
  %12895 = vmatpush1.msra.mxu0 %v11415
  %12896 = vmatprep.subr.mxu0 0.0
  %12897 = vmatpush1.msra.mxu0 %v11420
  %12898 = vmatprep.subr.mxu0 0.0
  %12899 = vmatpush1.msra.mxu0 %v11425
  %12900 = vmatprep.subr.mxu0 0.0
  %12901 = vmatpush1.msra.mxu0 %v11430
  %12902 = vmatprep.subr.mxu0 0.0
  %12903 = vmatpush1.msra.mxu0 %v11435
  %12904 = vmatprep.subr.mxu0 0.0
  %12905 = vmatpush1.msra.mxu0 %v11440
  %12906 = vmatprep.subr.mxu0 0.0
  %12907 = vmatpush1.msra.mxu0 %v11445
  %12908 = vmatprep.subr.mxu0 0.0
  %12909 = vmatpush1.msra.mxu0 %v11450
  %12910 = vmatprep.subr.mxu0 0.0
  %12911 = vmatpush1.msra.mxu0 %v11455
  %12912 = vmatprep.subr.mxu0 0.0
  %12913 = vmatpush1.msra.mxu0 %v11460
  %12914 = vmatprep.subr.mxu0 0.0
  %12915 = vmatpush1.msra.mxu0 0.0
  %12916 = vmatprep.subr.mxu0 0.0
  %12917 = vmatpush1.msra.mxu0 0.0
  %12918 = vmatprep.subr.mxu0 0.0
  %12919 = vmatpush1.msra.mxu0 0.0
  %12920 = vmatprep.subr.mxu0 0.0
  %12921 = vmatpush1.msra.mxu0 0.0
  %12922 = vmatprep.subr.mxu0 0.0
  %12923 = vmatpush1.msra.mxu0 0.0
  %12924 = vmatprep.subr.mxu0 0.0
  %12925 = vmatpush1.msra.mxu0 0.0
  %12926 = vmatprep.subr.mxu0 0.0
  %12927 = vmatpush1.msra.mxu0 0.0
  %12928 = vmatprep.subr.mxu0 0.0
  %12929 = vmatpush1.msra.mxu0 0.0
  %12930 = vmatprep.subr.mxu0 0.0
  %12931 = vmatpush1.msra.mxu0 0.0
  %12932 = vmatprep.subr.mxu0 0.0
  %12933 = vmatpush1.msra.mxu0 0.0
  %12934 = vmatprep.subr.mxu0 0.0
  %12935 = vmatpush1.msra.mxu0 0.0
  %12936 = vmatprep.subr.mxu0 0.0
  %12937 = vmatpush1.msra.mxu0 0.0
  %12938 = vmatprep.subr.mxu0 0.0
  %12939 = vmatpush1.msra.mxu0 0.0
  %12940 = vmatprep.subr.mxu0 0.0
  %12941 = vmatpush1.msra.mxu0 0.0
  %12942 = vmatprep.subr.mxu0 0.0
  %12943 = vmatpush1.msra.mxu0 0.0
  %12944 = vmatprep.subr.mxu0 0.0
  %12945 = vmatpush1.msra.mxu0 0.0
  %12946 = vmatprep.mubr.f32.mxu0 0.0
  %12947 = vmatmul.mubr.f32.gmra.mrb[0].mxu0 %v12818
  %v12948 = vpop.f32.mrb[0].mxu0
  %v12949 = vadd.f32 0.0, %v12948
  %v12950 = vpop.f32.mrb[0].mxu0
  %12951 = vmatprep.mubr.f32.mxu0 0.0
  %12952 = vmatmul.mubr.f32.gmra.mrb[0].mxu0 %v12819
  %v12953 = vpop.f32.mrb[0].mxu0
  %v12954 = vadd.f32 0.0, %v12953
  %v12955 = vpop.f32.mrb[0].mxu0
  %12956 = vmatprep.mubr.f32.mxu0 0.0
  %12957 = vmatmul.mubr.f32.gmra.mrb[0].mxu0 %v12820
  %v12958 = vpop.f32.mrb[0].mxu0
  %v12959 = vadd.f32 0.0, %v12958
  %v12960 = vpop.f32.mrb[0].mxu0
  %12961 = vmatprep.mubr.f32.mxu0 0.0
  %12962 = vmatmul.mubr.f32.gmra.mrb[0].mxu0 %v12821
  %v12963 = vpop.f32.mrb[0].mxu0
  %v12964 = vadd.f32 0.0, %v12963
  %v12965 = vpop.f32.mrb[0].mxu0
  %12966 = vmatprep.mubr.f32.mxu0 0.0
  %12967 = vmatmul.mubr.f32.gmra.mrb[0].mxu0 %v12822
  %v12968 = vpop.f32.mrb[0].mxu0
  %v12969 = vadd.f32 0.0, %v12968
  %v12970 = vpop.f32.mrb[0].mxu0
  %12971 = vmatprep.mubr.f32.mxu0 0.0
  %12972 = vmatmul.mubr.f32.gmra.mrb[0].mxu0 %v12823
  %v12973 = vpop.f32.mrb[0].mxu0
  %v12974 = vadd.f32 0.0, %v12973
  %v12975 = vpop.f32.mrb[0].mxu0
  %12976 = vmatprep.mubr.f32.mxu0 0.0
  %12977 = vmatmul.mubr.f32.gmra.mrb[0].mxu0 %v12824
  %v12978 = vpop.f32.mrb[0].mxu0
  %v12979 = vadd.f32 0.0, %v12978
  %v12980 = vpop.f32.mrb[0].mxu0
  %12981 = vmatprep.mubr.f32.mxu0 0.0
  %12982 = vmatmul.mubr.f32.gmra.mrb[0].mxu0 %v12825
  %v12983 = vpop.f32.mrb[0].mxu0
  %v12984 = vadd.f32 0.0, %v12983
  %v12985 = vpop.f32.mrb[0].mxu0
  %12986 = vmatprep.mubr.f32.mxu0 0.0
  %12987 = vmatmul.mubr.f32.gmra.mrb[0].mxu0 %v12826
  %v12988 = vpop.f32.mrb[0].mxu0
  %v12989 = vadd.f32 0.0, %v12988
  %v12990 = vpop.f32.mrb[0].mxu0
  %12991 = vmatprep.mubr.f32.mxu0 0.0
  %12992 = vmatmul.mubr.f32.gmra.mrb[0].mxu0 %v12827
  %v12993 = vpop.f32.mrb[0].mxu0
  %v12994 = vadd.f32 0.0, %v12993
  %v12995 = vpop.f32.mrb[0].mxu0
  %12996 = vmatprep.mubr.f32.mxu0 0.0
  %12997 = vmatmul.mubr.f32.gmra.mrb[0].mxu0 %v12828
  %v12998 = vpop.f32.mrb[0].mxu0
  %v12999 = vadd.f32 0.0, %v12998
  %v13000 = vpop.f32.mrb[0].mxu0
  %13001 = vmatprep.mubr.f32.mxu0 0.0
  %13002 = vmatmul.mubr.f32.gmra.mrb[0].mxu0 %v12829
  %v13003 = vpop.f32.mrb[0].mxu0
  %v13004 = vadd.f32 0.0, %v13003
  %v13005 = vpop.f32.mrb[0].mxu0
  %13006 = vmatprep.mubr.f32.mxu0 0.0
  %13007 = vmatmul.mubr.f32.gmra.mrb[0].mxu0 %v12830
  %v13008 = vpop.f32.mrb[0].mxu0
  %v13009 = vadd.f32 0.0, %v13008
  %v13010 = vpop.f32.mrb[0].mxu0
  %13011 = vmatprep.mubr.f32.mxu0 0.0
  %13012 = vmatmul.mubr.f32.gmra.mrb[0].mxu0 %v12831
  %v13013 = vpop.f32.mrb[0].mxu0
  %v13014 = vadd.f32 0.0, %v13013
  %v13015 = vpop.f32.mrb[0].mxu0
  %13016 = vmatprep.mubr.f32.mxu0 0.0
  %13017 = vmatmul.mubr.f32.gmra.mrb[0].mxu0 %v12832
  %v13018 = vpop.f32.mrb[0].mxu0
  %v13019 = vadd.f32 0.0, %v13018
  %v13020 = vpop.f32.mrb[0].mxu0
  %13021 = vmatprep.mubr.f32.mxu0 0.0
  %13022 = vmatmul.mubr.f32.gmra.mrb[0].mxu0 %v12833
  %v13023 = vpop.f32.mrb[0].mxu0
  %v13024 = vadd.f32 0.0, %v13023
  %v13025 = vpop.f32.mrb[0].mxu0
  %13026 = vmatprep.mubr.f32.mxu0 0.0
  %13027 = vmatmul.mubr.f32.gmra.mrb[0].mxu0 %v12834
  %v13028 = vpop.f32.mrb[0].mxu0
  %v13029 = vadd.f32 0.0, %v13028
  %v13030 = vpop.f32.mrb[0].mxu0
  %13031 = vmatprep.mubr.f32.mxu0 0.0
  %13032 = vmatmul.mubr.f32.gmra.mrb[0].mxu0 %v12835
  %v13033 = vpop.f32.mrb[0].mxu0
  %v13034 = vadd.f32 0.0, %v13033
  %v13035 = vpop.f32.mrb[0].mxu0
  %13036 = vmatprep.mubr.f32.mxu0 0.0
  %13037 = vmatmul.mubr.f32.gmra.mrb[0].mxu0 %v12836
  %v13038 = vpop.f32.mrb[0].mxu0
  %v13039 = vadd.f32 0.0, %v13038
  %v13040 = vpop.f32.mrb[0].mxu0
  %13041 = vmatprep.mubr.f32.mxu0 0.0
  %13042 = vmatmul.mubr.f32.gmra.mrb[0].mxu0 %v12837
  %v13043 = vpop.f32.mrb[0].mxu0
  %v13044 = vadd.f32 0.0, %v13043
  %v13045 = vpop.f32.mrb[0].mxu0
  %13046 = vmatprep.mubr.f32.mxu0 0.0
  %13047 = vmatmul.mubr.f32.gmra.mrb[0].mxu0 %v12838
  %v13048 = vpop.f32.mrb[0].mxu0
  %v13049 = vadd.f32 0.0, %v13048
  %v13050 = vpop.f32.mrb[0].mxu0
  %13051 = vmatprep.mubr.f32.mxu0 0.0
  %13052 = vmatmul.mubr.f32.gmra.mrb[0].mxu0 %v12839
  %v13053 = vpop.f32.mrb[0].mxu0
  %v13054 = vadd.f32 0.0, %v13053
  %v13055 = vpop.f32.mrb[0].mxu0
  %13056 = vmatprep.mubr.f32.mxu0 0.0
  %13057 = vmatmul.mubr.f32.gmra.mrb[0].mxu0 %v12840
  %v13058 = vpop.f32.mrb[0].mxu0
  %v13059 = vadd.f32 0.0, %v13058
  %v13060 = vpop.f32.mrb[0].mxu0
  %13061 = vmatprep.mubr.f32.mxu0 0.0
  %13062 = vmatmul.mubr.f32.gmra.mrb[0].mxu0 %v12841
  %v13063 = vpop.f32.mrb[0].mxu0
  %v13064 = vadd.f32 0.0, %v13063
  %v13065 = vpop.f32.mrb[0].mxu0
  %13066 = vmatprep.mubr.f32.mxu0 0.0
  %13067 = vmatmul.mubr.f32.gmra.mrb[0].mxu0 %v12842
  %v13068 = vpop.f32.mrb[0].mxu0
  %v13069 = vadd.f32 0.0, %v13068
  %v13070 = vpop.f32.mrb[0].mxu0
  %13071 = vmatprep.mubr.f32.mxu0 0.0
  %13072 = vmatmul.mubr.f32.gmra.mrb[0].mxu0 %v12843
  %v13073 = vpop.f32.mrb[0].mxu0
  %v13074 = vadd.f32 0.0, %v13073
  %v13075 = vpop.f32.mrb[0].mxu0
  %13076 = vmatprep.mubr.f32.mxu0 0.0
  %13077 = vmatmul.mubr.f32.gmra.mrb[0].mxu0 %v12844
  %v13078 = vpop.f32.mrb[0].mxu0
  %v13079 = vadd.f32 0.0, %v13078
  %v13080 = vpop.f32.mrb[0].mxu0
  %13081 = vmatprep.mubr.f32.mxu0 0.0
  %13082 = vmatmul.mubr.f32.gmra.mrb[0].mxu0 %v12845
  %v13083 = vpop.f32.mrb[0].mxu0
  %v13084 = vadd.f32 0.0, %v13083
  %v13085 = vpop.f32.mrb[0].mxu0
  %13086 = vmatprep.mubr.f32.mxu0 0.0
  %13087 = vmatmul.mubr.f32.gmra.mrb[0].mxu0 %v12846
  %v13088 = vpop.f32.mrb[0].mxu0
  %v13089 = vadd.f32 0.0, %v13088
  %v13090 = vpop.f32.mrb[0].mxu0
  %13091 = vmatprep.mubr.f32.mxu0 0.0
  %13092 = vmatmul.mubr.f32.gmra.mrb[0].mxu0 %v12847
  %v13093 = vpop.f32.mrb[0].mxu0
  %v13094 = vadd.f32 0.0, %v13093
  %v13095 = vpop.f32.mrb[0].mxu0
  %13096 = vmatprep.mubr.f32.mxu0 0.0
  %13097 = vmatmul.mubr.f32.gmra.mrb[0].mxu0 %v12848
  %v13098 = vpop.f32.mrb[0].mxu0
  %v13099 = vadd.f32 0.0, %v13098
  %v13100 = vpop.f32.mrb[0].mxu0
  %13101 = vmatprep.mubr.f32.mxu0 0.0
  %13102 = vmatmul.mubr.f32.gmra.mrb[0].mxu0 %v12849
  %v13103 = vpop.f32.mrb[0].mxu0
  %v13104 = vadd.f32 0.0, %v13103
  %v13105 = vpop.f32.mrb[0].mxu0
  %13106 = vmatprep.mubr.f32.mxu0 0.0
  %13107 = vmatmul.mubr.f32.gmra.mrb[0].mxu0 %v12850
  %v13108 = vpop.f32.mrb[0].mxu0
  %v13109 = vadd.f32 0.0, %v13108
  %v13110 = vpop.f32.mrb[0].mxu0
  %13111 = vmatprep.mubr.f32.mxu0 0.0
  %13112 = vmatmul.mubr.f32.gmra.mrb[0].mxu0 %v12851
  %v13113 = vpop.f32.mrb[0].mxu0
  %v13114 = vadd.f32 0.0, %v13113
  %v13115 = vpop.f32.mrb[0].mxu0
  %13116 = vmatprep.mubr.f32.mxu0 0.0
  %13117 = vmatmul.mubr.f32.gmra.mrb[0].mxu0 %v12852
  %v13118 = vpop.f32.mrb[0].mxu0
  %v13119 = vadd.f32 0.0, %v13118
  %v13120 = vpop.f32.mrb[0].mxu0
  %13121 = vmatprep.mubr.f32.mxu0 0.0
  %13122 = vmatmul.mubr.f32.gmra.mrb[0].mxu0 %v12853
  %v13123 = vpop.f32.mrb[0].mxu0
  %v13124 = vadd.f32 0.0, %v13123
  %v13125 = vpop.f32.mrb[0].mxu0
  %13126 = vmatprep.mubr.f32.mxu0 0.0
  %13127 = vmatmul.mubr.f32.gmra.mrb[0].mxu0 %v12854
  %v13128 = vpop.f32.mrb[0].mxu0
  %v13129 = vadd.f32 0.0, %v13128
  %v13130 = vpop.f32.mrb[0].mxu0
  %13131 = vmatprep.mubr.f32.mxu0 0.0
  %13132 = vmatmul.mubr.f32.gmra.mrb[0].mxu0 %v12855
  %v13133 = vpop.f32.mrb[0].mxu0
  %v13134 = vadd.f32 0.0, %v13133
  %v13135 = vpop.f32.mrb[0].mxu0
  %13136 = vmatprep.mubr.f32.mxu0 0.0
  %13137 = vmatmul.mubr.f32.gmra.mrb[0].mxu0 %v12856
  %v13138 = vpop.f32.mrb[0].mxu0
  %v13139 = vadd.f32 0.0, %v13138
  %v13140 = vpop.f32.mrb[0].mxu0
  %13141 = vmatprep.mubr.f32.mxu0 0.0
  %13142 = vmatmul.mubr.f32.gmra.mrb[0].mxu0 %v12857
  %v13143 = vpop.f32.mrb[0].mxu0
  %v13144 = vadd.f32 0.0, %v13143
  %v13145 = vpop.f32.mrb[0].mxu0
  %13146 = vmatprep.mubr.f32.mxu0 0.0
  %13147 = vmatmul.mubr.f32.gmra.mrb[0].mxu0 %v12858
  %v13148 = vpop.f32.mrb[0].mxu0
  %v13149 = vadd.f32 0.0, %v13148
  %v13150 = vpop.f32.mrb[0].mxu0
  %13151 = vmatprep.mubr.f32.mxu0 0.0
  %13152 = vmatmul.mubr.f32.gmra.mrb[0].mxu0 %v12859
  %v13153 = vpop.f32.mrb[0].mxu0
  %v13154 = vadd.f32 0.0, %v13153
  %v13155 = vpop.f32.mrb[0].mxu0
  %13156 = vmatprep.mubr.f32.mxu0 0.0
  %13157 = vmatmul.mubr.f32.gmra.mrb[0].mxu0 %v12860
  %v13158 = vpop.f32.mrb[0].mxu0
  %v13159 = vadd.f32 0.0, %v13158
  %v13160 = vpop.f32.mrb[0].mxu0
  %13161 = vmatprep.mubr.f32.mxu0 0.0
  %13162 = vmatmul.mubr.f32.gmra.mrb[0].mxu0 %v12861
  %v13163 = vpop.f32.mrb[0].mxu0
  %v13164 = vadd.f32 0.0, %v13163
  %v13165 = vpop.f32.mrb[0].mxu0
  %13166 = vmatprep.mubr.f32.mxu0 0.0
  %13167 = vmatmul.mubr.f32.gmra.mrb[0].mxu0 %v12862
  %v13168 = vpop.f32.mrb[0].mxu0
  %v13169 = vadd.f32 0.0, %v13168
  %v13170 = vpop.f32.mrb[0].mxu0
  %13171 = vmatprep.mubr.f32.mxu0 0.0
  %13172 = vmatmul.mubr.f32.gmra.mrb[0].mxu0 %v12863
  %v13173 = vpop.f32.mrb[0].mxu0
  %v13174 = vadd.f32 0.0, %v13173
  %v13175 = vpop.f32.mrb[0].mxu0
  %13176 = vmatprep.mubr.f32.mxu0 0.0
  %13177 = vmatmul.mubr.f32.gmra.mrb[0].mxu0 %v12864
  %v13178 = vpop.f32.mrb[0].mxu0
  %v13179 = vadd.f32 0.0, %v13178
  %v13180 = vpop.f32.mrb[0].mxu0
  %13181 = vmatprep.mubr.f32.mxu0 0.0
  %13182 = vmatmul.mubr.f32.gmra.mrb[0].mxu0 %v12865
  %v13183 = vpop.f32.mrb[0].mxu0
  %v13184 = vadd.f32 0.0, %v13183
  %v13185 = vpop.f32.mrb[0].mxu0
  %13186 = vmatprep.mubr.f32.mxu0 0.0
  %13187 = vmatmul.mubr.f32.gmra.mrb[0].mxu0 %v12866
  %v13188 = vpop.f32.mrb[0].mxu0
  %v13189 = vadd.f32 0.0, %v13188
  %v13190 = vpop.f32.mrb[0].mxu0
  %13191 = vmatprep.mubr.f32.mxu0 0.0
  %13192 = vmatmul.mubr.f32.gmra.mrb[0].mxu0 %v12867
  %v13193 = vpop.f32.mrb[0].mxu0
  %v13194 = vadd.f32 0.0, %v13193
  %v13195 = vpop.f32.mrb[0].mxu0
  %13196 = vmatprep.mubr.f32.mxu0 0.0
  %13197 = vmatmul.mubr.f32.gmra.mrb[0].mxu0 %v12868
  %v13198 = vpop.f32.mrb[0].mxu0
  %v13199 = vadd.f32 0.0, %v13198
  %v13200 = vpop.f32.mrb[0].mxu0
  %13201 = vmatprep.mubr.f32.mxu0 0.0
  %13202 = vmatmul.mubr.f32.gmra.mrb[0].mxu0 %v12869
  %v13203 = vpop.f32.mrb[0].mxu0
  %v13204 = vadd.f32 0.0, %v13203
  %v13205 = vpop.f32.mrb[0].mxu0
  %13206 = vmatprep.mubr.f32.mxu0 0.0
  %13207 = vmatmul.mubr.f32.gmra.mrb[0].mxu0 %v12870
  %v13208 = vpop.f32.mrb[0].mxu0
  %v13209 = vadd.f32 0.0, %v13208
  %v13210 = vpop.f32.mrb[0].mxu0
  %13211 = vmatprep.mubr.f32.mxu0 0.0
  %13212 = vmatmul.mubr.f32.gmra.mrb[0].mxu0 %v12871
  %v13213 = vpop.f32.mrb[0].mxu0
  %v13214 = vadd.f32 0.0, %v13213
  %v13215 = vpop.f32.mrb[0].mxu0
  %13216 = vmatprep.mubr.f32.mxu0 0.0
  %13217 = vmatmul.mubr.f32.gmra.mrb[0].mxu0 %v12872
  %v13218 = vpop.f32.mrb[0].mxu0
  %v13219 = vadd.f32 0.0, %v13218
  %v13220 = vpop.f32.mrb[0].mxu0
  %13221 = vmatprep.mubr.f32.mxu0 0.0
  %13222 = vmatmul.mubr.f32.gmra.mrb[0].mxu0 %v12873
  %v13223 = vpop.f32.mrb[0].mxu0
  %v13224 = vadd.f32 0.0, %v13223
  %v13225 = vpop.f32.mrb[0].mxu0
  %13226 = vmatprep.mubr.f32.mxu0 0.0
  %13227 = vmatmul.mubr.f32.gmra.mrb[0].mxu0 %v12874
  %v13228 = vpop.f32.mrb[0].mxu0
  %v13229 = vadd.f32 0.0, %v13228
  %v13230 = vpop.f32.mrb[0].mxu0
  %13231 = vmatprep.mubr.f32.mxu0 0.0
  %13232 = vmatmul.mubr.f32.gmra.mrb[0].mxu0 %v12875
  %v13233 = vpop.f32.mrb[0].mxu0
  %v13234 = vadd.f32 0.0, %v13233
  %v13235 = vpop.f32.mrb[0].mxu0
  %13236 = vmatprep.mubr.f32.mxu0 0.0
  %13237 = vmatmul.mubr.f32.gmra.mrb[0].mxu0 %v12876
  %v13238 = vpop.f32.mrb[0].mxu0
  %v13239 = vadd.f32 0.0, %v13238
  %v13240 = vpop.f32.mrb[0].mxu0
  %13241 = vmatprep.mubr.f32.mxu0 0.0
  %13242 = vmatmul.mubr.f32.gmra.mrb[0].mxu0 %v12877
  %v13243 = vpop.f32.mrb[0].mxu0
  %v13244 = vadd.f32 0.0, %v13243
  %v13245 = vpop.f32.mrb[0].mxu0
  %13246 = vmatprep.mubr.f32.mxu0 0.0
  %13247 = vmatmul.mubr.f32.gmra.mrb[0].mxu0 %v12878
  %v13248 = vpop.f32.mrb[0].mxu0
  %v13249 = vadd.f32 0.0, %v13248
  %v13250 = vpop.f32.mrb[0].mxu0
  %13251 = vmatprep.mubr.f32.mxu0 0.0
  %13252 = vmatmul.mubr.f32.gmra.mrb[0].mxu0 %v12879
  %v13253 = vpop.f32.mrb[0].mxu0
  %v13254 = vadd.f32 0.0, %v13253
  %v13255 = vpop.f32.mrb[0].mxu0
  %13256 = vmatprep.mubr.f32.mxu0 0.0
  %13257 = vmatmul.mubr.f32.gmra.mrb[0].mxu0 %v12880
  %v13258 = vpop.f32.mrb[0].mxu0
  %v13259 = vadd.f32 0.0, %v13258
  %v13260 = vpop.f32.mrb[0].mxu0
  %13261 = vmatprep.mubr.f32.mxu0 0.0
  %13262 = vmatmul.mubr.f32.gmra.mrb[0].mxu0 %v12881
  %v13263 = vpop.f32.mrb[0].mxu0
  %v13264 = vadd.f32 0.0, %v13263
  %v13265 = vpop.f32.mrb[0].mxu0
  %13266 = vdwg.mxu0
  %v13268 = vsel %vm4355, %v10329, 0
  %v13271 = vsel %vm4355, %v10330, 0
  %v13274 = vsel %vm4355, %v10331, 0
  %v13277 = vsel %vm4355, %v10332, 0
  %v13280 = vsel %vm4355, %v10333, 0
  %v13283 = vsel %vm4355, %v10334, 0
  %v13286 = vsel %vm4355, %v10335, 0
  %v13289 = vsel %vm4355, %v10336, 0
  %v13292 = vsel %vm4355, %v10337, 0
  %v13295 = vsel %vm4355, %v10338, 0
  %v13298 = vsel %vm4355, %v10339, 0
  %v13301 = vsel %vm4355, %v10340, 0
  %v13304 = vsel %vm4355, %v10341, 0
  %v13307 = vsel %vm4355, %v10342, 0
  %v13310 = vsel %vm4355, %v10343, 0
  %v13313 = vsel %vm4355, %v10344, 0
  %v13316 = vsel %vm4355, %v10345, 0
  %v13319 = vsel %vm4355, %v10346, 0
  %v13322 = vsel %vm4355, %v10347, 0
  %v13325 = vsel %vm4355, %v10348, 0
  %v13328 = vsel %vm4355, %v10349, 0
  %v13331 = vsel %vm4355, %v10350, 0
  %v13334 = vsel %vm4355, %v10351, 0
  %v13337 = vsel %vm4355, %v10352, 0
  %v13340 = vsel %vm4355, %v10353, 0
  %v13343 = vsel %vm4355, %v10354, 0
  %v13346 = vsel %vm4355, %v10355, 0
  %v13349 = vsel %vm4355, %v10356, 0
  %v13352 = vsel %vm4355, %v10357, 0
  %v13355 = vsel %vm4355, %v10358, 0
  %v13358 = vsel %vm4355, %v10359, 0
  %v13361 = vsel %vm4355, %v10360, 0
  %v13364 = vsel %vm4355, %v10361, 0
  %v13367 = vsel %vm4355, %v10362, 0
  %v13370 = vsel %vm4355, %v10363, 0
  %v13373 = vsel %vm4355, %v10364, 0
  %v13376 = vsel %vm4355, %v10365, 0
  %v13379 = vsel %vm4355, %v10366, 0
  %v13382 = vsel %vm4355, %v10367, 0
  %v13385 = vsel %vm4355, %v10368, 0
  %v13388 = vsel %vm4355, %v10369, 0
  %v13391 = vsel %vm4355, %v10370, 0
  %v13394 = vsel %vm4355, %v10371, 0
  %v13397 = vsel %vm4355, %v10372, 0
  %v13400 = vsel %vm4355, %v10373, 0
  %v13403 = vsel %vm4355, %v10374, 0
  %v13406 = vsel %vm4355, %v10375, 0
  %v13409 = vsel %vm4355, %v10376, 0
  %v13412 = vsel %vm4355, %v10377, 0
  %v13415 = vsel %vm4355, %v10378, 0
  %v13418 = vsel %vm4355, %v10379, 0
  %v13421 = vsel %vm4355, %v10380, 0
  %v13424 = vsel %vm4355, %v10381, 0
  %v13427 = vsel %vm4355, %v10382, 0
  %v13430 = vsel %vm4355, %v10383, 0
  %v13433 = vsel %vm4355, %v10384, 0
  %v13436 = vsel %vm4355, %v10385, 0
  %v13439 = vsel %vm4355, %v10386, 0
  %v13442 = vsel %vm4355, %v10387, 0
  %v13445 = vsel %vm4355, %v10388, 0
  %v13448 = vsel %vm4355, %v10389, 0
  %v13451 = vsel %vm4355, %v10390, 0
  %v13454 = vsel %vm4355, %v10391, 0
  %v13457 = vsel %vm4355, %v10392, 0
  %v13460 = vsel %vm4404, %v10397, 0
  %13462 = vmatprep.subr.mxu0 0.0
  %13463 = vmatpush1.msra.mxu0 %v10393
  %13464 = vmatprep.subr.mxu0 0.0
  %13465 = vmatpush1.msra.mxu0 %v10394
  %13466 = vmatprep.subr.mxu0 0.0
  %13467 = vmatpush1.msra.mxu0 %v10395
  %13468 = vmatprep.subr.mxu0 0.0
  %13469 = vmatpush1.msra.mxu0 %v10396
  %13470 = vmatprep.subr.mxu0 0.0
  %13471 = vmatpush1.msra.mxu0 %v13460
  %13472 = vmatprep.subr.mxu0 0.0
  %13473 = vmatpush1.msra.mxu0 0.0
  %13474 = vmatprep.subr.mxu0 0.0
  %13475 = vmatpush1.msra.mxu0 0.0
  %13476 = vmatprep.subr.mxu0 0.0
  %13477 = vmatpush1.msra.mxu0 0.0
  %13478 = vmatprep.subr.mxu0 0.0
  %13479 = vmatpush1.msra.mxu0 0.0
  %13480 = vmatprep.subr.mxu0 0.0
  %13481 = vmatpush1.msra.mxu0 0.0
  %13482 = vmatprep.subr.mxu0 0.0
  %13483 = vmatpush1.msra.mxu0 0.0
  %13484 = vmatprep.subr.mxu0 0.0
  %13485 = vmatpush1.msra.mxu0 0.0
  %13486 = vmatprep.subr.mxu0 0.0
  %13487 = vmatpush1.msra.mxu0 0.0
  %13488 = vmatprep.subr.mxu0 0.0
  %13489 = vmatpush1.msra.mxu0 0.0
  %13490 = vmatprep.subr.mxu0 0.0
  %13491 = vmatpush1.msra.mxu0 0.0
  %13492 = vmatprep.subr.mxu0 0.0
  %13493 = vmatpush1.msra.mxu0 0.0
  %13494 = vmatprep.subr.mxu0 0.0
  %13495 = vmatpush1.msra.mxu0 0.0
  %13496 = vmatprep.subr.mxu0 0.0
  %13497 = vmatpush1.msra.mxu0 0.0
  %13498 = vmatprep.subr.mxu0 0.0
  %13499 = vmatpush1.msra.mxu0 0.0
  %13500 = vmatprep.subr.mxu0 0.0
  %13501 = vmatpush1.msra.mxu0 0.0
  %13502 = vmatprep.subr.mxu0 0.0
  %13503 = vmatpush1.msra.mxu0 0.0
  %13504 = vmatprep.subr.mxu0 0.0
  %13505 = vmatpush1.msra.mxu0 0.0
  %13506 = vmatprep.subr.mxu0 0.0
  %13507 = vmatpush1.msra.mxu0 0.0
  %13508 = vmatprep.subr.mxu0 0.0
  %13509 = vmatpush1.msra.mxu0 0.0
  %13510 = vmatprep.subr.mxu0 0.0
  %13511 = vmatpush1.msra.mxu0 0.0
  %13512 = vmatprep.subr.mxu0 0.0
  %13513 = vmatpush1.msra.mxu0 0.0
  %13514 = vmatprep.subr.mxu0 0.0
  %13515 = vmatpush1.msra.mxu0 0.0
  %13516 = vmatprep.subr.mxu0 0.0
  %13517 = vmatpush1.msra.mxu0 0.0
  %13518 = vmatprep.subr.mxu0 0.0
  %13519 = vmatpush1.msra.mxu0 0.0
  %13520 = vmatprep.subr.mxu0 0.0
  %13521 = vmatpush1.msra.mxu0 0.0
  %13522 = vmatprep.subr.mxu0 0.0
  %13523 = vmatpush1.msra.mxu0 0.0
  %13524 = vmatprep.subr.mxu0 0.0
  %13525 = vmatpush1.msra.mxu0 0.0
  %13526 = vmatprep.mubr.f32.mxu0 0.0
  %13527 = vmatmul.mubr.f32.gmra.mrb[0].mxu0 %v13268
  %v13528 = vpop.f32.mrb[0].mxu0
  %v13529 = vadd.f32 %v12949, %v13528
  %v13530 = vpop.f32.mrb[0].mxu0
  %13531 = vmatprep.mubr.f32.mxu0 0.0
  %13532 = vmatmul.mubr.f32.gmra.mrb[0].mxu0 %v13271
  %v13533 = vpop.f32.mrb[0].mxu0
  %v13534 = vadd.f32 %v12954, %v13533
  %v13535 = vpop.f32.mrb[0].mxu0
  %13536 = vmatprep.mubr.f32.mxu0 0.0
  %13537 = vmatmul.mubr.f32.gmra.mrb[0].mxu0 %v13274
  %v13538 = vpop.f32.mrb[0].mxu0
  %v13539 = vadd.f32 %v12959, %v13538
  %v13540 = vpop.f32.mrb[0].mxu0
  %13541 = vmatprep.mubr.f32.mxu0 0.0
  %13542 = vmatmul.mubr.f32.gmra.mrb[0].mxu0 %v13277
  %v13543 = vpop.f32.mrb[0].mxu0
  %v13544 = vadd.f32 %v12964, %v13543
  %v13545 = vpop.f32.mrb[0].mxu0
  %13546 = vmatprep.mubr.f32.mxu0 0.0
  %13547 = vmatmul.mubr.f32.gmra.mrb[0].mxu0 %v13280
  %v13548 = vpop.f32.mrb[0].mxu0
  %v13549 = vadd.f32 %v12969, %v13548
  %v13550 = vpop.f32.mrb[0].mxu0
  %13551 = vmatprep.mubr.f32.mxu0 0.0
  %13552 = vmatmul.mubr.f32.gmra.mrb[0].mxu0 %v13283
  %v13553 = vpop.f32.mrb[0].mxu0
  %v13554 = vadd.f32 %v12974, %v13553
  %v13555 = vpop.f32.mrb[0].mxu0
  %13556 = vmatprep.mubr.f32.mxu0 0.0
  %13557 = vmatmul.mubr.f32.gmra.mrb[0].mxu0 %v13286
  %v13558 = vpop.f32.mrb[0].mxu0
  %v13559 = vadd.f32 %v12979, %v13558
  %v13560 = vpop.f32.mrb[0].mxu0
  %13561 = vmatprep.mubr.f32.mxu0 0.0
  %13562 = vmatmul.mubr.f32.gmra.mrb[0].mxu0 %v13289
  %v13563 = vpop.f32.mrb[0].mxu0
  %v13564 = vadd.f32 %v12984, %v13563
  %v13565 = vpop.f32.mrb[0].mxu0
  %13566 = vmatprep.mubr.f32.mxu0 0.0
  %13567 = vmatmul.mubr.f32.gmra.mrb[0].mxu0 %v13292
  %v13568 = vpop.f32.mrb[0].mxu0
  %v13569 = vadd.f32 %v12989, %v13568
  %v13570 = vpop.f32.mrb[0].mxu0
  %13571 = vmatprep.mubr.f32.mxu0 0.0
  %13572 = vmatmul.mubr.f32.gmra.mrb[0].mxu0 %v13295
  %v13573 = vpop.f32.mrb[0].mxu0
  %v13574 = vadd.f32 %v12994, %v13573
  %v13575 = vpop.f32.mrb[0].mxu0
  %13576 = vmatprep.mubr.f32.mxu0 0.0
  %13577 = vmatmul.mubr.f32.gmra.mrb[0].mxu0 %v13298
  %v13578 = vpop.f32.mrb[0].mxu0
  %v13579 = vadd.f32 %v12999, %v13578
  %v13580 = vpop.f32.mrb[0].mxu0
  %13581 = vmatprep.mubr.f32.mxu0 0.0
  %13582 = vmatmul.mubr.f32.gmra.mrb[0].mxu0 %v13301
  %v13583 = vpop.f32.mrb[0].mxu0
  %v13584 = vadd.f32 %v13004, %v13583
  %v13585 = vpop.f32.mrb[0].mxu0
  %13586 = vmatprep.mubr.f32.mxu0 0.0
  %13587 = vmatmul.mubr.f32.gmra.mrb[0].mxu0 %v13304
  %v13588 = vpop.f32.mrb[0].mxu0
  %v13589 = vadd.f32 %v13009, %v13588
  %v13590 = vpop.f32.mrb[0].mxu0
  %13591 = vmatprep.mubr.f32.mxu0 0.0
  %13592 = vmatmul.mubr.f32.gmra.mrb[0].mxu0 %v13307
  %v13593 = vpop.f32.mrb[0].mxu0
  %v13594 = vadd.f32 %v13014, %v13593
  %v13595 = vpop.f32.mrb[0].mxu0
  %13596 = vmatprep.mubr.f32.mxu0 0.0
  %13597 = vmatmul.mubr.f32.gmra.mrb[0].mxu0 %v13310
  %v13598 = vpop.f32.mrb[0].mxu0
  %v13599 = vadd.f32 %v13019, %v13598
  %v13600 = vpop.f32.mrb[0].mxu0
  %13601 = vmatprep.mubr.f32.mxu0 0.0
  %13602 = vmatmul.mubr.f32.gmra.mrb[0].mxu0 %v13313
  %v13603 = vpop.f32.mrb[0].mxu0
  %v13604 = vadd.f32 %v13024, %v13603
  %v13605 = vpop.f32.mrb[0].mxu0
  %13606 = vmatprep.mubr.f32.mxu0 0.0
  %13607 = vmatmul.mubr.f32.gmra.mrb[0].mxu0 %v13316
  %v13608 = vpop.f32.mrb[0].mxu0
  %v13609 = vadd.f32 %v13029, %v13608
  %v13610 = vpop.f32.mrb[0].mxu0
  %13611 = vmatprep.mubr.f32.mxu0 0.0
  %13612 = vmatmul.mubr.f32.gmra.mrb[0].mxu0 %v13319
  %v13613 = vpop.f32.mrb[0].mxu0
  %v13614 = vadd.f32 %v13034, %v13613
  %v13615 = vpop.f32.mrb[0].mxu0
  %13616 = vmatprep.mubr.f32.mxu0 0.0
  %13617 = vmatmul.mubr.f32.gmra.mrb[0].mxu0 %v13322
  %v13618 = vpop.f32.mrb[0].mxu0
  %v13619 = vadd.f32 %v13039, %v13618
  %v13620 = vpop.f32.mrb[0].mxu0
  %13621 = vmatprep.mubr.f32.mxu0 0.0
  %13622 = vmatmul.mubr.f32.gmra.mrb[0].mxu0 %v13325
  %v13623 = vpop.f32.mrb[0].mxu0
  %v13624 = vadd.f32 %v13044, %v13623
  %v13625 = vpop.f32.mrb[0].mxu0
  %13626 = vmatprep.mubr.f32.mxu0 0.0
  %13627 = vmatmul.mubr.f32.gmra.mrb[0].mxu0 %v13328
  %v13628 = vpop.f32.mrb[0].mxu0
  %v13629 = vadd.f32 %v13049, %v13628
  %v13630 = vpop.f32.mrb[0].mxu0
  %13631 = vmatprep.mubr.f32.mxu0 0.0
  %13632 = vmatmul.mubr.f32.gmra.mrb[0].mxu0 %v13331
  %v13633 = vpop.f32.mrb[0].mxu0
  %v13634 = vadd.f32 %v13054, %v13633
  %v13635 = vpop.f32.mrb[0].mxu0
  %13636 = vmatprep.mubr.f32.mxu0 0.0
  %13637 = vmatmul.mubr.f32.gmra.mrb[0].mxu0 %v13334
  %v13638 = vpop.f32.mrb[0].mxu0
  %v13639 = vadd.f32 %v13059, %v13638
  %v13640 = vpop.f32.mrb[0].mxu0
  %13641 = vmatprep.mubr.f32.mxu0 0.0
  %13642 = vmatmul.mubr.f32.gmra.mrb[0].mxu0 %v13337
  %v13643 = vpop.f32.mrb[0].mxu0
  %v13644 = vadd.f32 %v13064, %v13643
  %v13645 = vpop.f32.mrb[0].mxu0
  %13646 = vmatprep.mubr.f32.mxu0 0.0
  %13647 = vmatmul.mubr.f32.gmra.mrb[0].mxu0 %v13340
  %v13648 = vpop.f32.mrb[0].mxu0
  %v13649 = vadd.f32 %v13069, %v13648
  %v13650 = vpop.f32.mrb[0].mxu0
  %13651 = vmatprep.mubr.f32.mxu0 0.0
  %13652 = vmatmul.mubr.f32.gmra.mrb[0].mxu0 %v13343
  %v13653 = vpop.f32.mrb[0].mxu0
  %v13654 = vadd.f32 %v13074, %v13653
  %v13655 = vpop.f32.mrb[0].mxu0
  %13656 = vmatprep.mubr.f32.mxu0 0.0
  %13657 = vmatmul.mubr.f32.gmra.mrb[0].mxu0 %v13346
  %v13658 = vpop.f32.mrb[0].mxu0
  %v13659 = vadd.f32 %v13079, %v13658
  %v13660 = vpop.f32.mrb[0].mxu0
  %13661 = vmatprep.mubr.f32.mxu0 0.0
  %13662 = vmatmul.mubr.f32.gmra.mrb[0].mxu0 %v13349
  %v13663 = vpop.f32.mrb[0].mxu0
  %v13664 = vadd.f32 %v13084, %v13663
  %v13665 = vpop.f32.mrb[0].mxu0
  %13666 = vmatprep.mubr.f32.mxu0 0.0
  %13667 = vmatmul.mubr.f32.gmra.mrb[0].mxu0 %v13352
  %v13668 = vpop.f32.mrb[0].mxu0
  %v13669 = vadd.f32 %v13089, %v13668
  %v13670 = vpop.f32.mrb[0].mxu0
  %13671 = vmatprep.mubr.f32.mxu0 0.0
  %13672 = vmatmul.mubr.f32.gmra.mrb[0].mxu0 %v13355
  %v13673 = vpop.f32.mrb[0].mxu0
  %v13674 = vadd.f32 %v13094, %v13673
  %v13675 = vpop.f32.mrb[0].mxu0
  %13676 = vmatprep.mubr.f32.mxu0 0.0
  %13677 = vmatmul.mubr.f32.gmra.mrb[0].mxu0 %v13358
  %v13678 = vpop.f32.mrb[0].mxu0
  %v13679 = vadd.f32 %v13099, %v13678
  %v13680 = vpop.f32.mrb[0].mxu0
  %13681 = vmatprep.mubr.f32.mxu0 0.0
  %13682 = vmatmul.mubr.f32.gmra.mrb[0].mxu0 %v13361
  %v13683 = vpop.f32.mrb[0].mxu0
  %v13684 = vadd.f32 %v13104, %v13683
  %v13685 = vpop.f32.mrb[0].mxu0
  %13686 = vmatprep.mubr.f32.mxu0 0.0
  %13687 = vmatmul.mubr.f32.gmra.mrb[0].mxu0 %v13364
  %v13688 = vpop.f32.mrb[0].mxu0
  %v13689 = vadd.f32 %v13109, %v13688
  %v13690 = vpop.f32.mrb[0].mxu0
  %13691 = vmatprep.mubr.f32.mxu0 0.0
  %13692 = vmatmul.mubr.f32.gmra.mrb[0].mxu0 %v13367
  %v13693 = vpop.f32.mrb[0].mxu0
  %v13694 = vadd.f32 %v13114, %v13693
  %v13695 = vpop.f32.mrb[0].mxu0
  %13696 = vmatprep.mubr.f32.mxu0 0.0
  %13697 = vmatmul.mubr.f32.gmra.mrb[0].mxu0 %v13370
  %v13698 = vpop.f32.mrb[0].mxu0
  %v13699 = vadd.f32 %v13119, %v13698
  %v13700 = vpop.f32.mrb[0].mxu0
  %13701 = vmatprep.mubr.f32.mxu0 0.0
  %13702 = vmatmul.mubr.f32.gmra.mrb[0].mxu0 %v13373
  %v13703 = vpop.f32.mrb[0].mxu0
  %v13704 = vadd.f32 %v13124, %v13703
  %v13705 = vpop.f32.mrb[0].mxu0
  %13706 = vmatprep.mubr.f32.mxu0 0.0
  %13707 = vmatmul.mubr.f32.gmra.mrb[0].mxu0 %v13376
  %v13708 = vpop.f32.mrb[0].mxu0
  %v13709 = vadd.f32 %v13129, %v13708
  %v13710 = vpop.f32.mrb[0].mxu0
  %13711 = vmatprep.mubr.f32.mxu0 0.0
  %13712 = vmatmul.mubr.f32.gmra.mrb[0].mxu0 %v13379
  %v13713 = vpop.f32.mrb[0].mxu0
  %v13714 = vadd.f32 %v13134, %v13713
  %v13715 = vpop.f32.mrb[0].mxu0
  %13716 = vmatprep.mubr.f32.mxu0 0.0
  %13717 = vmatmul.mubr.f32.gmra.mrb[0].mxu0 %v13382
  %v13718 = vpop.f32.mrb[0].mxu0
  %v13719 = vadd.f32 %v13139, %v13718
  %v13720 = vpop.f32.mrb[0].mxu0
  %13721 = vmatprep.mubr.f32.mxu0 0.0
  %13722 = vmatmul.mubr.f32.gmra.mrb[0].mxu0 %v13385
  %v13723 = vpop.f32.mrb[0].mxu0
  %v13724 = vadd.f32 %v13144, %v13723
  %v13725 = vpop.f32.mrb[0].mxu0
  %13726 = vmatprep.mubr.f32.mxu0 0.0
  %13727 = vmatmul.mubr.f32.gmra.mrb[0].mxu0 %v13388
  %v13728 = vpop.f32.mrb[0].mxu0
  %v13729 = vadd.f32 %v13149, %v13728
  %v13730 = vpop.f32.mrb[0].mxu0
  %13731 = vmatprep.mubr.f32.mxu0 0.0
  %13732 = vmatmul.mubr.f32.gmra.mrb[0].mxu0 %v13391
  %v13733 = vpop.f32.mrb[0].mxu0
  %v13734 = vadd.f32 %v13154, %v13733
  %v13735 = vpop.f32.mrb[0].mxu0
  %13736 = vmatprep.mubr.f32.mxu0 0.0
  %13737 = vmatmul.mubr.f32.gmra.mrb[0].mxu0 %v13394
  %v13738 = vpop.f32.mrb[0].mxu0
  %v13739 = vadd.f32 %v13159, %v13738
  %v13740 = vpop.f32.mrb[0].mxu0
  %13741 = vmatprep.mubr.f32.mxu0 0.0
  %13742 = vmatmul.mubr.f32.gmra.mrb[0].mxu0 %v13397
  %v13743 = vpop.f32.mrb[0].mxu0
  %v13744 = vadd.f32 %v13164, %v13743
  %v13745 = vpop.f32.mrb[0].mxu0
  %13746 = vmatprep.mubr.f32.mxu0 0.0
  %13747 = vmatmul.mubr.f32.gmra.mrb[0].mxu0 %v13400
  %v13748 = vpop.f32.mrb[0].mxu0
  %v13749 = vadd.f32 %v13169, %v13748
  %v13750 = vpop.f32.mrb[0].mxu0
  %13751 = vmatprep.mubr.f32.mxu0 0.0
  %13752 = vmatmul.mubr.f32.gmra.mrb[0].mxu0 %v13403
  %v13753 = vpop.f32.mrb[0].mxu0
  %v13754 = vadd.f32 %v13174, %v13753
  %v13755 = vpop.f32.mrb[0].mxu0
  %13756 = vmatprep.mubr.f32.mxu0 0.0
  %13757 = vmatmul.mubr.f32.gmra.mrb[0].mxu0 %v13406
  %v13758 = vpop.f32.mrb[0].mxu0
  %v13759 = vadd.f32 %v13179, %v13758
  %v13760 = vpop.f32.mrb[0].mxu0
  %13761 = vmatprep.mubr.f32.mxu0 0.0
  %13762 = vmatmul.mubr.f32.gmra.mrb[0].mxu0 %v13409
  %v13763 = vpop.f32.mrb[0].mxu0
  %v13764 = vadd.f32 %v13184, %v13763
  %v13765 = vpop.f32.mrb[0].mxu0
  %13766 = vmatprep.mubr.f32.mxu0 0.0
  %13767 = vmatmul.mubr.f32.gmra.mrb[0].mxu0 %v13412
  %v13768 = vpop.f32.mrb[0].mxu0
  %v13769 = vadd.f32 %v13189, %v13768
  %v13770 = vpop.f32.mrb[0].mxu0
  %13771 = vmatprep.mubr.f32.mxu0 0.0
  %13772 = vmatmul.mubr.f32.gmra.mrb[0].mxu0 %v13415
  %v13773 = vpop.f32.mrb[0].mxu0
  %v13774 = vadd.f32 %v13194, %v13773
  %v13775 = vpop.f32.mrb[0].mxu0
  %13776 = vmatprep.mubr.f32.mxu0 0.0
  %13777 = vmatmul.mubr.f32.gmra.mrb[0].mxu0 %v13418
  %v13778 = vpop.f32.mrb[0].mxu0
  %v13779 = vadd.f32 %v13199, %v13778
  %v13780 = vpop.f32.mrb[0].mxu0
  %13781 = vmatprep.mubr.f32.mxu0 0.0
  %13782 = vmatmul.mubr.f32.gmra.mrb[0].mxu0 %v13421
  %v13783 = vpop.f32.mrb[0].mxu0
  %v13784 = vadd.f32 %v13204, %v13783
  %v13785 = vpop.f32.mrb[0].mxu0
  %13786 = vmatprep.mubr.f32.mxu0 0.0
  %13787 = vmatmul.mubr.f32.gmra.mrb[0].mxu0 %v13424
  %v13788 = vpop.f32.mrb[0].mxu0
  %v13789 = vadd.f32 %v13209, %v13788
  %v13790 = vpop.f32.mrb[0].mxu0
  %13791 = vmatprep.mubr.f32.mxu0 0.0
  %13792 = vmatmul.mubr.f32.gmra.mrb[0].mxu0 %v13427
  %v13793 = vpop.f32.mrb[0].mxu0
  %v13794 = vadd.f32 %v13214, %v13793
  %v13795 = vpop.f32.mrb[0].mxu0
  %13796 = vmatprep.mubr.f32.mxu0 0.0
  %13797 = vmatmul.mubr.f32.gmra.mrb[0].mxu0 %v13430
  %v13798 = vpop.f32.mrb[0].mxu0
  %v13799 = vadd.f32 %v13219, %v13798
  %v13800 = vpop.f32.mrb[0].mxu0
  %13801 = vmatprep.mubr.f32.mxu0 0.0
  %13802 = vmatmul.mubr.f32.gmra.mrb[0].mxu0 %v13433
  %v13803 = vpop.f32.mrb[0].mxu0
  %v13804 = vadd.f32 %v13224, %v13803
  %v13805 = vpop.f32.mrb[0].mxu0
  %13806 = vmatprep.mubr.f32.mxu0 0.0
  %13807 = vmatmul.mubr.f32.gmra.mrb[0].mxu0 %v13436
  %v13808 = vpop.f32.mrb[0].mxu0
  %v13809 = vadd.f32 %v13229, %v13808
  %v13810 = vpop.f32.mrb[0].mxu0
  %13811 = vmatprep.mubr.f32.mxu0 0.0
  %13812 = vmatmul.mubr.f32.gmra.mrb[0].mxu0 %v13439
  %v13813 = vpop.f32.mrb[0].mxu0
  %v13814 = vadd.f32 %v13234, %v13813
  %v13815 = vpop.f32.mrb[0].mxu0
  %13816 = vmatprep.mubr.f32.mxu0 0.0
  %13817 = vmatmul.mubr.f32.gmra.mrb[0].mxu0 %v13442
  %v13818 = vpop.f32.mrb[0].mxu0
  %v13819 = vadd.f32 %v13239, %v13818
  %v13820 = vpop.f32.mrb[0].mxu0
  %13821 = vmatprep.mubr.f32.mxu0 0.0
  %13822 = vmatmul.mubr.f32.gmra.mrb[0].mxu0 %v13445
  %v13823 = vpop.f32.mrb[0].mxu0
  %v13824 = vadd.f32 %v13244, %v13823
  %v13825 = vpop.f32.mrb[0].mxu0
  %13826 = vmatprep.mubr.f32.mxu0 0.0
  %13827 = vmatmul.mubr.f32.gmra.mrb[0].mxu0 %v13448
  %v13828 = vpop.f32.mrb[0].mxu0
  %v13829 = vadd.f32 %v13249, %v13828
  %v13830 = vpop.f32.mrb[0].mxu0
  %13831 = vmatprep.mubr.f32.mxu0 0.0
  %13832 = vmatmul.mubr.f32.gmra.mrb[0].mxu0 %v13451
  %v13833 = vpop.f32.mrb[0].mxu0
  %v13834 = vadd.f32 %v13254, %v13833
  %v13835 = vpop.f32.mrb[0].mxu0
  %13836 = vmatprep.mubr.f32.mxu0 0.0
  %13837 = vmatmul.mubr.f32.gmra.mrb[0].mxu0 %v13454
  %v13838 = vpop.f32.mrb[0].mxu0
  %v13839 = vadd.f32 %v13259, %v13838
  %v13840 = vpop.f32.mrb[0].mxu0
  %13841 = vmatprep.mubr.f32.mxu0 0.0
  %13842 = vmatmul.mubr.f32.gmra.mrb[0].mxu0 %v13457
  %v13843 = vpop.f32.mrb[0].mxu0
  %v13844 = vadd.f32 %v13264, %v13843
  %v13845 = vpop.f32.mrb[0].mxu0
  %13846 = vdwg.mxu0
  %13863 = vrot.lane.b32.xlu0 %v12740, 4
  %v13864 = vpop.permute.xlu0 %13863
  %13865 = vrot.lane.b32.xlu0 %v12745, 4
  %v13866 = vpop.permute.xlu0 %13865
  %13867 = vrot.lane.b32.xlu0 %v12750, 4
  %v13868 = vpop.permute.xlu0 %13867
  %13869 = vrot.lane.b32.xlu0 %v12755, 4
  %v13870 = vpop.permute.xlu0 %13869
  %13871 = vrot.lane.b32.xlu0 %v12760, 4
  %v13872 = vpop.permute.xlu0 %13871
  %13873 = vrot.lane.b32.xlu0 %v12765, 4
  %v13874 = vpop.permute.xlu0 %13873
  %13875 = vrot.lane.b32.xlu0 %v12770, 4
  %v13876 = vpop.permute.xlu0 %13875
  %13877 = vrot.lane.b32.xlu0 %v12775, 4
  %v13878 = vpop.permute.xlu0 %13877
  %13879 = vrot.lane.b32.xlu0 %v12780, 4
  %v13880 = vpop.permute.xlu0 %13879
  %13881 = vrot.lane.b32.xlu0 %v12785, 4
  %v13882 = vpop.permute.xlu0 %13881
  %13883 = vrot.lane.b32.xlu0 %v12790, 4
  %v13884 = vpop.permute.xlu0 %13883
  %13885 = vrot.lane.b32.xlu0 %v12795, 4
  %v13886 = vpop.permute.xlu0 %13885
  %13887 = vrot.lane.b32.xlu0 %v12800, 4
  %v13888 = vpop.permute.xlu0 %13887
  %13889 = vrot.lane.b32.xlu0 %v12805, 4
  %v13890 = vpop.permute.xlu0 %13889
  %13891 = vrot.lane.b32.xlu0 %v12810, 4
  %v13892 = vpop.permute.xlu0 %13891
  %13893 = vrot.lane.b32.xlu0 %v12815, 4
  %v13894 = vpop.permute.xlu0 %13893
  %v13911 = vadd.f32 %v11385, %v13864
  %v13912 = vadd.f32 %v11390, %v13866
  %v13913 = vadd.f32 %v11395, %v13868
  %v13914 = vadd.f32 %v11400, %v13870
  %v13915 = vadd.f32 %v11405, %v13872
  %v13916 = vadd.f32 %v11410, %v13874
  %v13917 = vadd.f32 %v11415, %v13876
  %v13918 = vadd.f32 %v11420, %v13878
  %v13919 = vadd.f32 %v11425, %v13880
  %v13920 = vadd.f32 %v11430, %v13882
  %v13921 = vadd.f32 %v11435, %v13884
  %v13922 = vadd.f32 %v11440, %v13886
  %v13923 = vadd.f32 %v11445, %v13888
  %v13924 = vadd.f32 %v11450, %v13890
  %v13925 = vadd.f32 %v11455, %v13892
  %v13926 = vadd.f32 %v11460, %v13894
  %v13927 = vld [vmem:[%s12] sm:$0x1]
  %v13929 = vlaneseq
  %v13930 = vshrl.u32 %v13929, 7
  %v13931 = vsub.s32 0, %v13930
  %v13932 = vrot.slane %v13927, %v13931
  %v13934 = vadd.f32 %v13529, %v13932
  %v13935 = vadd.f32 %v13534, %v13932
  %v13936 = vadd.f32 %v13539, %v13932
  %v13937 = vadd.f32 %v13544, %v13932
  %v13938 = vadd.f32 %v13549, %v13932
  %v13939 = vadd.f32 %v13554, %v13932
  %v13940 = vadd.f32 %v13559, %v13932
  %v13941 = vadd.f32 %v13564, %v13932
  %v13942 = vadd.f32 %v13569, %v13932
  %v13943 = vadd.f32 %v13574, %v13932
  %v13944 = vadd.f32 %v13579, %v13932
  %v13945 = vadd.f32 %v13584, %v13932
  %v13946 = vadd.f32 %v13589, %v13932
  %v13947 = vadd.f32 %v13594, %v13932
  %v13948 = vadd.f32 %v13599, %v13932
  %v13949 = vadd.f32 %v13604, %v13932
  %v13950 = vadd.f32 %v13609, %v13932
  %v13951 = vadd.f32 %v13614, %v13932
  %v13952 = vadd.f32 %v13619, %v13932
  %v13953 = vadd.f32 %v13624, %v13932
  %v13954 = vadd.f32 %v13629, %v13932
  %v13955 = vadd.f32 %v13634, %v13932
  %v13956 = vadd.f32 %v13639, %v13932
  %v13957 = vadd.f32 %v13644, %v13932
  %v13958 = vadd.f32 %v13649, %v13932
  %v13959 = vadd.f32 %v13654, %v13932
  %v13960 = vadd.f32 %v13659, %v13932
  %v13961 = vadd.f32 %v13664, %v13932
  %v13962 = vadd.f32 %v13669, %v13932
  %v13963 = vadd.f32 %v13674, %v13932
  %v13964 = vadd.f32 %v13679, %v13932
  %v13965 = vadd.f32 %v13684, %v13932
  %v13966 = vadd.f32 %v13689, %v13932
  %v13967 = vadd.f32 %v13694, %v13932
  %v13968 = vadd.f32 %v13699, %v13932
  %v13969 = vadd.f32 %v13704, %v13932
  %v13970 = vadd.f32 %v13709, %v13932
  %v13971 = vadd.f32 %v13714, %v13932
  %v13972 = vadd.f32 %v13719, %v13932
  %v13973 = vadd.f32 %v13724, %v13932
  %v13974 = vadd.f32 %v13729, %v13932
  %v13975 = vadd.f32 %v13734, %v13932
  %v13976 = vadd.f32 %v13739, %v13932
  %v13977 = vadd.f32 %v13744, %v13932
  %v13978 = vadd.f32 %v13749, %v13932
  %v13979 = vadd.f32 %v13754, %v13932
  %v13980 = vadd.f32 %v13759, %v13932
  %v13981 = vadd.f32 %v13764, %v13932
  %v13982 = vadd.f32 %v13769, %v13932
  %v13983 = vadd.f32 %v13774, %v13932
  %v13984 = vadd.f32 %v13779, %v13932
  %v13985 = vadd.f32 %v13784, %v13932
  %v13986 = vadd.f32 %v13789, %v13932
  %v13987 = vadd.f32 %v13794, %v13932
  %v13988 = vadd.f32 %v13799, %v13932
  %v13989 = vadd.f32 %v13804, %v13932
  %v13990 = vadd.f32 %v13809, %v13932
  %v13991 = vadd.f32 %v13814, %v13932
  %v13992 = vadd.f32 %v13819, %v13932
  %v13993 = vadd.f32 %v13824, %v13932
  %v13994 = vadd.f32 %v13829, %v13932
  %v13995 = vadd.f32 %v13834, %v13932
  %v13996 = vadd.f32 %v13839, %v13932
  %v13997 = vadd.f32 %v13844, %v13932
  %v13998 = vadd.f32 %v13934, %v254
  %v13999 = vadd.f32 %v13935, %v255
  %v14000 = vadd.f32 %v13936, %v256
  %v14001 = vadd.f32 %v13937, %v257
  %v14002 = vadd.f32 %v13938, %v258
  %v14003 = vadd.f32 %v13939, %v259
  %v14004 = vadd.f32 %v13940, %v260
  %v14005 = vadd.f32 %v13941, %v261
  %v14006 = vadd.f32 %v13942, %v262
  %v14007 = vadd.f32 %v13943, %v263
  %v14008 = vadd.f32 %v13944, %v264
  %v14009 = vadd.f32 %v13945, %v265
  %v14010 = vadd.f32 %v13946, %v266
  %v14011 = vadd.f32 %v13947, %v267
  %v14012 = vadd.f32 %v13948, %v268
  %v14013 = vadd.f32 %v13949, %v269
  %v14014 = vadd.f32 %v13950, %v270
  %v14015 = vadd.f32 %v13951, %v271
  %v14016 = vadd.f32 %v13952, %v272
  %v14017 = vadd.f32 %v13953, %v273
  %v14018 = vadd.f32 %v13954, %v274
  %v14019 = vadd.f32 %v13955, %v275
  %v14020 = vadd.f32 %v13956, %v276
  %v14021 = vadd.f32 %v13957, %v277
  %v14022 = vadd.f32 %v13958, %v278
  %v14023 = vadd.f32 %v13959, %v279
  %v14024 = vadd.f32 %v13960, %v280
  %v14025 = vadd.f32 %v13961, %v281
  %v14026 = vadd.f32 %v13962, %v282
  %v14027 = vadd.f32 %v13963, %v283
  %v14028 = vadd.f32 %v13964, %v284
  %v14029 = vadd.f32 %v13965, %v285
  %v14030 = vadd.f32 %v13966, %v286
  %v14031 = vadd.f32 %v13967, %v287
  %v14032 = vadd.f32 %v13968, %v288
  %v14033 = vadd.f32 %v13969, %v289
  %v14034 = vadd.f32 %v13970, %v290
  %v14035 = vadd.f32 %v13971, %v291
  %v14036 = vadd.f32 %v13972, %v292
  %v14037 = vadd.f32 %v13973, %v293
  %v14038 = vadd.f32 %v13974, %v294
  %v14039 = vadd.f32 %v13975, %v295
  %v14040 = vadd.f32 %v13976, %v296
  %v14041 = vadd.f32 %v13977, %v297
  %v14042 = vadd.f32 %v13978, %v298
  %v14043 = vadd.f32 %v13979, %v299
  %v14044 = vadd.f32 %v13980, %v300
  %v14045 = vadd.f32 %v13981, %v301
  %v14046 = vadd.f32 %v13982, %v302
  %v14047 = vadd.f32 %v13983, %v303
  %v14048 = vadd.f32 %v13984, %v304
  %v14049 = vadd.f32 %v13985, %v305
  %v14050 = vadd.f32 %v13986, %v306
  %v14051 = vadd.f32 %v13987, %v307
  %v14052 = vadd.f32 %v13988, %v308
  %v14053 = vadd.f32 %v13989, %v309
  %v14054 = vadd.f32 %v13990, %v310
  %v14055 = vadd.f32 %v13991, %v311
  %v14056 = vadd.f32 %v13992, %v312
  %v14057 = vadd.f32 %v13993, %v313
  %v14058 = vadd.f32 %v13994, %v314
  %v14059 = vadd.f32 %v13995, %v315
  %v14060 = vadd.f32 %v13996, %v316
  %v14061 = vadd.f32 %v13997, %v317
  %v14062 = vmax.f32 %v13998, 0.0
  %v14063 = vmax.f32 %v13999, 0.0
  %v14064 = vmax.f32 %v14000, 0.0
  %v14065 = vmax.f32 %v14001, 0.0
  %v14066 = vmax.f32 %v14002, 0.0
  %v14067 = vmax.f32 %v14003, 0.0
  %v14068 = vmax.f32 %v14004, 0.0
  %v14069 = vmax.f32 %v14005, 0.0
  %v14070 = vmax.f32 %v14006, 0.0
  %v14071 = vmax.f32 %v14007, 0.0
  %v14072 = vmax.f32 %v14008, 0.0
  %v14073 = vmax.f32 %v14009, 0.0
  %v14074 = vmax.f32 %v14010, 0.0
  %v14075 = vmax.f32 %v14011, 0.0
  %v14076 = vmax.f32 %v14012, 0.0
  %v14077 = vmax.f32 %v14013, 0.0
  %v14078 = vmax.f32 %v14014, 0.0
  %v14079 = vmax.f32 %v14015, 0.0
  %v14080 = vmax.f32 %v14016, 0.0
  %v14081 = vmax.f32 %v14017, 0.0
  %v14082 = vmax.f32 %v14018, 0.0
  %v14083 = vmax.f32 %v14019, 0.0
  %v14084 = vmax.f32 %v14020, 0.0
  %v14085 = vmax.f32 %v14021, 0.0
  %v14086 = vmax.f32 %v14022, 0.0
  %v14087 = vmax.f32 %v14023, 0.0
  %v14088 = vmax.f32 %v14024, 0.0
  %v14089 = vmax.f32 %v14025, 0.0
  %v14090 = vmax.f32 %v14026, 0.0
  %v14091 = vmax.f32 %v14027, 0.0
  %v14092 = vmax.f32 %v14028, 0.0
  %v14093 = vmax.f32 %v14029, 0.0
  %v14094 = vmax.f32 %v14030, 0.0
  %v14095 = vmax.f32 %v14031, 0.0
  %v14096 = vmax.f32 %v14032, 0.0
  %v14097 = vmax.f32 %v14033, 0.0
  %v14098 = vmax.f32 %v14034, 0.0
  %v14099 = vmax.f32 %v14035, 0.0
  %v14100 = vmax.f32 %v14036, 0.0
  %v14101 = vmax.f32 %v14037, 0.0
  %v14102 = vmax.f32 %v14038, 0.0
  %v14103 = vmax.f32 %v14039, 0.0
  %v14104 = vmax.f32 %v14040, 0.0
  %v14105 = vmax.f32 %v14041, 0.0
  %v14106 = vmax.f32 %v14042, 0.0
  %v14107 = vmax.f32 %v14043, 0.0
  %v14108 = vmax.f32 %v14044, 0.0
  %v14109 = vmax.f32 %v14045, 0.0
  %v14110 = vmax.f32 %v14046, 0.0
  %v14111 = vmax.f32 %v14047, 0.0
  %v14112 = vmax.f32 %v14048, 0.0
  %v14113 = vmax.f32 %v14049, 0.0
  %v14114 = vmax.f32 %v14050, 0.0
  %v14115 = vmax.f32 %v14051, 0.0
  %v14116 = vmax.f32 %v14052, 0.0
  %v14117 = vmax.f32 %v14053, 0.0
  %v14118 = vmax.f32 %v14054, 0.0
  %v14119 = vmax.f32 %v14055, 0.0
  %v14120 = vmax.f32 %v14056, 0.0
  %v14121 = vmax.f32 %v14057, 0.0
  %v14122 = vmax.f32 %v14058, 0.0
  %v14123 = vmax.f32 %v14059, 0.0
  %v14124 = vmax.f32 %v14060, 0.0
  %v14125 = vmax.f32 %v14061, 0.0
  %14126 = vst.msk [vmem:[%s14] sm:$0xff] %vm49, %v14062
  %14127 = vst.msk [vmem:[%s14 + $0x8] sm:$0xff] %vm49, %v14063
  %14128 = vst.msk [vmem:[%s14 + $0x10] sm:$0xff] %vm49, %v14064
  %14129 = vst.msk [vmem:[%s14 + $0x18] sm:$0xff] %vm49, %v14065
  %14130 = vst.msk [vmem:[%s14 + $0x20] sm:$0xff] %vm49, %v14066
  %14131 = vst.msk [vmem:[%s14 + $0x28] sm:$0xff] %vm49, %v14067
  %14132 = vst.msk [vmem:[%s14 + $0x30] sm:$0xff] %vm49, %v14068
  %14133 = vst.msk [vmem:[%s14 + $0x38] sm:$0xff] %vm49, %v14069
  %14134 = vst.msk [vmem:[%s14 + $0x40] sm:$0xff] %vm49, %v14070
  %14135 = vst.msk [vmem:[%s14 + $0x48] sm:$0xff] %vm49, %v14071
  %14136 = vst.msk [vmem:[%s14 + $0x50] sm:$0xff] %vm49, %v14072
  %14137 = vst.msk [vmem:[%s14 + $0x58] sm:$0xff] %vm49, %v14073
  %14138 = vst.msk [vmem:[%s14 + $0x60] sm:$0xff] %vm49, %v14074
  %14139 = vst.msk [vmem:[%s14 + $0x68] sm:$0xff] %vm49, %v14075
  %14140 = vst.msk [vmem:[%s14 + $0x70] sm:$0xff] %vm49, %v14076
  %14141 = vst.msk [vmem:[%s14 + $0x78] sm:$0xff] %vm49, %v14077
  %14142 = vst.msk [vmem:[%s14 + $0x80] sm:$0xff] %vm49, %v14078
  %14143 = vst.msk [vmem:[%s14 + $0x88] sm:$0xff] %vm49, %v14079
  %14144 = vst.msk [vmem:[%s14 + $0x90] sm:$0xff] %vm49, %v14080
  %14145 = vst.msk [vmem:[%s14 + $0x98] sm:$0xff] %vm49, %v14081
  %14146 = vst.msk [vmem:[%s14 + $0xa0] sm:$0xff] %vm49, %v14082
  %14147 = vst.msk [vmem:[%s14 + $0xa8] sm:$0xff] %vm49, %v14083
  %14148 = vst.msk [vmem:[%s14 + $0xb0] sm:$0xff] %vm49, %v14084
  %14149 = vst.msk [vmem:[%s14 + $0xb8] sm:$0xff] %vm49, %v14085
  %14150 = vst.msk [vmem:[%s14 + $0xc0] sm:$0xff] %vm49, %v14086
  %14151 = vst.msk [vmem:[%s14 + $0xc8] sm:$0xff] %vm49, %v14087
  %14152 = vst.msk [vmem:[%s14 + $0xd0] sm:$0xff] %vm49, %v14088
  %14153 = vst.msk [vmem:[%s14 + $0xd8] sm:$0xff] %vm49, %v14089
  %14154 = vst.msk [vmem:[%s14 + $0xe0] sm:$0xff] %vm49, %v14090
  %14155 = vst.msk [vmem:[%s14 + $0xe8] sm:$0xff] %vm49, %v14091
  %14156 = vst.msk [vmem:[%s14 + $0xf0] sm:$0xff] %vm49, %v14092
  %14157 = vst.msk [vmem:[%s14 + $0xf8] sm:$0xff] %vm49, %v14093
  %14158 = vst.msk [vmem:[%s14 + $0x100] sm:$0xff] %vm49, %v14094
  %14159 = vst.msk [vmem:[%s14 + $0x108] sm:$0xff] %vm49, %v14095
  %14160 = vst.msk [vmem:[%s14 + $0x110] sm:$0xff] %vm49, %v14096
  %14161 = vst.msk [vmem:[%s14 + $0x118] sm:$0xff] %vm49, %v14097
  %14162 = vst.msk [vmem:[%s14 + $0x120] sm:$0xff] %vm49, %v14098
  %14163 = vst.msk [vmem:[%s14 + $0x128] sm:$0xff] %vm49, %v14099
  %14164 = vst.msk [vmem:[%s14 + $0x130] sm:$0xff] %vm49, %v14100
  %14165 = vst.msk [vmem:[%s14 + $0x138] sm:$0xff] %vm49, %v14101
  %14166 = vst.msk [vmem:[%s14 + $0x140] sm:$0xff] %vm49, %v14102
  %14167 = vst.msk [vmem:[%s14 + $0x148] sm:$0xff] %vm49, %v14103
  %14168 = vst.msk [vmem:[%s14 + $0x150] sm:$0xff] %vm49, %v14104
  %14169 = vst.msk [vmem:[%s14 + $0x158] sm:$0xff] %vm49, %v14105
  %14170 = vst.msk [vmem:[%s14 + $0x160] sm:$0xff] %vm49, %v14106
  %14171 = vst.msk [vmem:[%s14 + $0x168] sm:$0xff] %vm49, %v14107
  %14172 = vst.msk [vmem:[%s14 + $0x170] sm:$0xff] %vm49, %v14108
  %14173 = vst.msk [vmem:[%s14 + $0x178] sm:$0xff] %vm49, %v14109
  %14174 = vst.msk [vmem:[%s14 + $0x180] sm:$0xff] %vm49, %v14110
  %14175 = vst.msk [vmem:[%s14 + $0x188] sm:$0xff] %vm49, %v14111
  %14176 = vst.msk [vmem:[%s14 + $0x190] sm:$0xff] %vm49, %v14112
  %14177 = vst.msk [vmem:[%s14 + $0x198] sm:$0xff] %vm49, %v14113
  %14178 = vst.msk [vmem:[%s14 + $0x1a0] sm:$0xff] %vm49, %v14114
  %14179 = vst.msk [vmem:[%s14 + $0x1a8] sm:$0xff] %vm49, %v14115
  %14180 = vst.msk [vmem:[%s14 + $0x1b0] sm:$0xff] %vm49, %v14116
  %14181 = vst.msk [vmem:[%s14 + $0x1b8] sm:$0xff] %vm49, %v14117
  %14182 = vst.msk [vmem:[%s14 + $0x1c0] sm:$0xff] %vm49, %v14118
  %14183 = vst.msk [vmem:[%s14 + $0x1c8] sm:$0xff] %vm49, %v14119
  %14184 = vst.msk [vmem:[%s14 + $0x1d0] sm:$0xff] %vm49, %v14120
  %14185 = vst.msk [vmem:[%s14 + $0x1d8] sm:$0xff] %vm49, %v14121
  %14186 = vst.msk [vmem:[%s14 + $0x1e0] sm:$0xff] %vm49, %v14122
  %14187 = vst.msk [vmem:[%s14 + $0x1e8] sm:$0xff] %vm49, %v14123
  %14188 = vst.msk [vmem:[%s14 + $0x1f0] sm:$0xff] %vm49, %v14124
  %14189 = vst.msk [vmem:[%s14 + $0x1f8] sm:$0xff] %vm49, %v14125
  %v14190 = vld [vmem:[%s13] sm:$0x1]
  %v14192 = vlaneseq
  %v14193 = vshrl.u32 %v14192, 7
  %v14194 = vsub.s32 0, %v14193
  %v14195 = vrot.slane %v14190, %v14194
  %14196 = vrot.lane.b32.xlu0 %v14195, 4
  %v14197 = vpop.permute.xlu0 %14196
  %v14199 = vadd.f32 %v13911, %v14197
  %v14200 = vadd.f32 %v13912, %v14197
  %v14201 = vadd.f32 %v13913, %v14197
  %v14202 = vadd.f32 %v13914, %v14197
  %v14203 = vadd.f32 %v13915, %v14197
  %v14204 = vadd.f32 %v13916, %v14197
  %v14205 = vadd.f32 %v13917, %v14197
  %v14206 = vadd.f32 %v13918, %v14197
  %v14207 = vadd.f32 %v13919, %v14197
  %v14208 = vadd.f32 %v13920, %v14197
  %v14209 = vadd.f32 %v13921, %v14197
  %v14210 = vadd.f32 %v13922, %v14197
  %v14211 = vadd.f32 %v13923, %v14197
  %v14212 = vadd.f32 %v13924, %v14197
  %v14213 = vadd.f32 %v13925, %v14197
  %v14214 = vadd.f32 %v13926, %v14197
  %14231 = vrot.lane.b32.xlu0 %v318, 4
  %v14232 = vpop.permute.xlu0 %14231
  %14233 = vrot.lane.b32.xlu0 %v319, 4
  %v14234 = vpop.permute.xlu0 %14233
  %14235 = vrot.lane.b32.xlu0 %v320, 4
  %v14236 = vpop.permute.xlu0 %14235
  %14237 = vrot.lane.b32.xlu0 %v321, 4
  %v14238 = vpop.permute.xlu0 %14237
  %14239 = vrot.lane.b32.xlu0 %v322, 4
  %v14240 = vpop.permute.xlu0 %14239
  %14241 = vrot.lane.b32.xlu0 %v323, 4
  %v14242 = vpop.permute.xlu0 %14241
  %14243 = vrot.lane.b32.xlu0 %v324, 4
  %v14244 = vpop.permute.xlu0 %14243
  %14245 = vrot.lane.b32.xlu0 %v325, 4
  %v14246 = vpop.permute.xlu0 %14245
  %14247 = vrot.lane.b32.xlu0 %v326, 4
  %v14248 = vpop.permute.xlu0 %14247
  %14249 = vrot.lane.b32.xlu0 %v327, 4
  %v14250 = vpop.permute.xlu0 %14249
  %14251 = vrot.lane.b32.xlu0 %v328, 4
  %v14252 = vpop.permute.xlu0 %14251
  %14253 = vrot.lane.b32.xlu0 %v329, 4
  %v14254 = vpop.permute.xlu0 %14253
  %14255 = vrot.lane.b32.xlu0 %v330, 4
  %v14256 = vpop.permute.xlu0 %14255
  %14257 = vrot.lane.b32.xlu0 %v331, 4
  %v14258 = vpop.permute.xlu0 %14257
  %14259 = vrot.lane.b32.xlu0 %v332, 4
  %v14260 = vpop.permute.xlu0 %14259
  %14261 = vrot.lane.b32.xlu0 %v333, 4
  %v14262 = vpop.permute.xlu0 %14261
  %v14279 = vadd.f32 %v14199, %v14232
  %v14280 = vadd.f32 %v14200, %v14234
  %v14281 = vadd.f32 %v14201, %v14236
  %v14282 = vadd.f32 %v14202, %v14238
  %v14283 = vadd.f32 %v14203, %v14240
  %v14284 = vadd.f32 %v14204, %v14242
  %v14285 = vadd.f32 %v14205, %v14244
  %v14286 = vadd.f32 %v14206, %v14246
  %v14287 = vadd.f32 %v14207, %v14248
  %v14288 = vadd.f32 %v14208, %v14250
  %v14289 = vadd.f32 %v14209, %v14252
  %v14290 = vadd.f32 %v14210, %v14254
  %v14291 = vadd.f32 %v14211, %v14256
  %v14292 = vadd.f32 %v14212, %v14258
  %v14293 = vadd.f32 %v14213, %v14260
  %v14294 = vadd.f32 %v14214, %v14262
  %v14295 = vmax.f32 %v14279, 0.0
  %v14296 = vmax.f32 %v14280, 0.0
  %v14297 = vmax.f32 %v14281, 0.0
  %v14298 = vmax.f32 %v14282, 0.0
  %v14299 = vmax.f32 %v14283, 0.0
  %v14300 = vmax.f32 %v14284, 0.0
  %v14301 = vmax.f32 %v14285, 0.0
  %v14302 = vmax.f32 %v14286, 0.0
  %v14303 = vmax.f32 %v14287, 0.0
  %v14304 = vmax.f32 %v14288, 0.0
  %v14305 = vmax.f32 %v14289, 0.0
  %v14306 = vmax.f32 %v14290, 0.0
  %v14307 = vmax.f32 %v14291, 0.0
  %v14308 = vmax.f32 %v14292, 0.0
  %v14309 = vmax.f32 %v14293, 0.0
  %v14310 = vmax.f32 %v14294, 0.0
  %14327 = vrot.lane.b32.xlu0 %v14295, 124
  %v14328 = vpop.permute.xlu0 %14327
  %14329 = vrot.lane.b32.xlu0 %v14296, 124
  %v14330 = vpop.permute.xlu0 %14329
  %14331 = vrot.lane.b32.xlu0 %v14297, 124
  %v14332 = vpop.permute.xlu0 %14331
  %14333 = vrot.lane.b32.xlu0 %v14298, 124
  %v14334 = vpop.permute.xlu0 %14333
  %14335 = vrot.lane.b32.xlu0 %v14299, 124
  %v14336 = vpop.permute.xlu0 %14335
  %14337 = vrot.lane.b32.xlu0 %v14300, 124
  %v14338 = vpop.permute.xlu0 %14337
  %14339 = vrot.lane.b32.xlu0 %v14301, 124
  %v14340 = vpop.permute.xlu0 %14339
  %14341 = vrot.lane.b32.xlu0 %v14302, 124
  %v14342 = vpop.permute.xlu0 %14341
  %14343 = vrot.lane.b32.xlu0 %v14303, 124
  %v14344 = vpop.permute.xlu0 %14343
  %14345 = vrot.lane.b32.xlu0 %v14304, 124
  %v14346 = vpop.permute.xlu0 %14345
  %14347 = vrot.lane.b32.xlu0 %v14305, 124
  %v14348 = vpop.permute.xlu0 %14347
  %14349 = vrot.lane.b32.xlu0 %v14306, 124
  %v14350 = vpop.permute.xlu0 %14349
  %14351 = vrot.lane.b32.xlu0 %v14307, 124
  %v14352 = vpop.permute.xlu0 %14351
  %14353 = vrot.lane.b32.xlu0 %v14308, 124
  %v14354 = vpop.permute.xlu0 %14353
  %14355 = vrot.lane.b32.xlu0 %v14309, 124
  %v14356 = vpop.permute.xlu0 %14355
  %14357 = vrot.lane.b32.xlu0 %v14310, 124
  %v14358 = vpop.permute.xlu0 %14357
  %14375 = vst.msk [vmem:[%s15] sm:$0xff] %vm49, %v14328
  %14376 = vst.msk [vmem:[%s15 + $0x8] sm:$0xff] %vm49, %v14330
  %14377 = vst.msk [vmem:[%s15 + $0x10] sm:$0xff] %vm49, %v14332
  %14378 = vst.msk [vmem:[%s15 + $0x18] sm:$0xff] %vm49, %v14334
  %14379 = vst.msk [vmem:[%s15 + $0x20] sm:$0xff] %vm49, %v14336
  %14380 = vst.msk [vmem:[%s15 + $0x28] sm:$0xff] %vm49, %v14338
  %14381 = vst.msk [vmem:[%s15 + $0x30] sm:$0xff] %vm49, %v14340
  %14382 = vst.msk [vmem:[%s15 + $0x38] sm:$0xff] %vm49, %v14342
  %14383 = vst.msk [vmem:[%s15 + $0x40] sm:$0xff] %vm49, %v14344
  %14384 = vst.msk [vmem:[%s15 + $0x48] sm:$0xff] %vm49, %v14346
  %14385 = vst.msk [vmem:[%s15 + $0x50] sm:$0xff] %vm49, %v14348
  %14386 = vst.msk [vmem:[%s15 + $0x58] sm:$0xff] %vm49, %v14350
  %14387 = vst.msk [vmem:[%s15 + $0x60] sm:$0xff] %vm49, %v14352
  %14388 = vst.msk [vmem:[%s15 + $0x68] sm:$0xff] %vm49, %v14354
  %14389 = vst.msk [vmem:[%s15 + $0x70] sm:$0xff] %vm49, %v14356
  %14390 = vst.msk [vmem:[%s15 + $0x78] sm:$0xff] %vm49, %v14358
  // Predicated region
  $region58: #{octave_basic_block.1} parent=0 // pred_check
    _
  $region59: #{octave_basic_block.1} parent=0 // pred_check_branch
    %14392 = sbr.rel (0) target = $region61
  $region60: #{octave_basic_block.1} parent=0 // pred_region
    _
  $region61: #{octave_basic_block.1} parent=0 // pred_fallthru
    _
  // Predicated region
  $region62: #{octave_basic_block.1} parent=0 // pred_check
    _
  $region63: #{octave_basic_block.1} parent=0 // pred_check_branch
    %14394 = sbr.rel (0) target = $region65
  $region64: #{octave_basic_block.1} parent=0 // pred_region
    _
  $region65: #{octave_basic_block.1} parent=0 // pred_fallthru
    _
  // Predicated region
  $region66: #{octave_basic_block.1} parent=0 // pred_check
    _
  $region67: #{octave_basic_block.1} parent=0 // pred_check_branch
    %14396 = sbr.rel (0) target = $region69
  $region68: #{octave_basic_block.1} parent=0 // pred_region
    _
  $region69: #{octave_basic_block.1} parent=0 // pred_fallthru
    _
  // Predicated region
  $region70: #{octave_basic_block.1} parent=0 // pred_check
    _
  $region71: #{octave_basic_block.1} parent=0 // pred_check_branch
    %14398 = sbr.rel (0) target = $region73
  $region72: #{octave_basic_block.1} parent=0 // pred_region
    _
  $region73: #{octave_basic_block.1} parent=0 // pred_fallthru
    _

</llo_original>
